<compile_context>
chip_gen: v7x
topology: tpu7x:2x2x1
jax: 0.10.0
libtpu: 0.0.40
codegen_flags: <defaults>
</compile_context>

<pallas_src>
import numpy as np
import jax
import jax.numpy as jnp
from jax import lax
from jax.experimental import pallas as pl
from jax.experimental.pallas import tpu as pltpu


# ----------------------------------------------------------------------------
# Fused 2-layer bidirectional LSTM + FC kernel
# ----------------------------------------------------------------------------
def _make_fused_kernel(T, Bp, H):
    G = 4 * H          # gates per direction
    R = 2 * Bp         # stacked state rows: [forward batch ; backward batch]

    def kernel(x_ref, len_ref, wih0_ref, whh0_ref, b0_ref,
               wih1_ref, whh1_ref, b1_ref, fcw_ref, fcb_ref,
               out_ref, pre_sc, hseq_sc):
        lens = len_ref[...]                                    # (Bp, 1) int32
        row = lax.broadcasted_iota(jnp.int32, (R, 1), 0)
        is_fwd = row < Bp                                      # (R, 1) bool

        def run_layer(whh_ref):
            # Step-invariant stacked RHS [W_hh_fwd; W_hh_bwd], loaded ONCE.
            whh = whh_ref[...]                                 # (2H, 4H) f32
            h = jnp.zeros((R, H), jnp.float32)
            c = jnp.zeros((R, H), jnp.float32)
            # T is small & static: fully unrolled so per-step MXU/EUP/VPU work
            # interleaves in the VLIW bundles.
            for i in range(T):
                t_f, t_b = i, T - 1 - i
                # Block-diagonal LHS [[h_f,0],[0,h_b]] x stacked RHS gives
                # [h_f @ W_hh_f ; h_b @ W_hh_b] in one matmul; RHS never
                # changes across steps (no per-step weight re-push), K=2H=256.
                lhs = jnp.concatenate(
                    [jnp.where(is_fwd, h, 0.0), jnp.where(is_fwd, 0.0, h)],
                    axis=1)                                    # (R, 2H)
                pre = jnp.concatenate(
                    [pre_sc[t_f * Bp:(t_f + 1) * Bp, 0:G],
                     pre_sc[t_b * Bp:(t_b + 1) * Bp, G:2 * G]],
                    axis=0)                                    # (R, 4H)
                gates = pre + jnp.dot(lhs, whh,
                                      preferred_element_type=jnp.float32)
                # Gate columns pre-permuted to [i, f, o | g]:
                # one sigmoid slab (R, 3H) + one tanh (R, H) per step.
                sg = jax.nn.sigmoid(gates[:, 0:3 * H])
                gg = jnp.tanh(gates[:, 3 * H:4 * H])
                c_new = sg[:, H:2 * H] * c + sg[:, 0:H] * gg
                h_new = sg[:, 2 * H:3 * H] * jnp.tanh(c_new)
                valid = jnp.concatenate([lens > t_f, lens > t_b], axis=0)
                h = jnp.where(valid, h_new, h)    # freeze state past length
                c = jnp.where(valid, c_new, c)
                emit = jnp.where(valid, h_new, 0.0)  # padded positions emit 0
                # 128-lane aligned, full-sublane (8 x 128) stores.
                hseq_sc[t_f * Bp:(t_f + 1) * Bp, 0:H] = emit[0:Bp]
                hseq_sc[t_b * Bp:(t_b + 1) * Bp, H:2 * H] = emit[Bp:R]

        # ---- layer 0: input projection hoisted out of the recurrence
        # (one (T*Bp, Dp) @ (Dp, 8H) MXU matmul for both directions).
        pre_sc[...] = jnp.dot(x_ref[...], wih0_ref[...],
                              preferred_element_type=jnp.float32) + b0_ref[...]
        run_layer(whh0_ref)

        # TODO(synk): inter-layer dropout (p=0.5) omitted -- eval-mode identity.

        # ---- layer 1: consumes layer-0 hidden sequence straight from VMEM.
        pre_sc[...] = jnp.dot(hseq_sc[...], wih1_ref[...],
                              preferred_element_type=jnp.float32) + b1_ref[...]
        run_layer(whh1_ref)

        # ---- FC epilogue: class dim kept lane-dense (Cp = 128 lanes);
        # the wrapper slices back to num_classes.
        out_ref[...] = jnp.dot(hseq_sc[...], fcw_ref[...],
                               preferred_element_type=jnp.float32) + fcb_ref[...]

    return kernel


@jax.jit
def _fused_forward(params, x, lens):
    """x: (B, T, D) f32 (batch_first); lens: (Bp, 1) int32.
    Returns (Bp, T, Cp) f32 logits (lane-padded classes)."""
    B, T, D = x.shape
    Bp = lens.shape[0]
    H = params["whh_l0"].shape[0] // 2
    Cp = params["fc_w"].shape[1]
    Dp = params["w_ih_l0"].shape[0]

    # batch_first (B,T,D) -> time-major (T,Bp,Dp) -> flat 2-D (T*Bp, Dp)
    x_t = jnp.transpose(x, (1, 0, 2)).astype(jnp.float32)
    x_t = jnp.pad(x_t, ((0, 0), (0, Bp - B), (0, Dp - D)))
    x2d = x_t.reshape(T * Bp, Dp)

    vmem = pl.BlockSpec(memory_space=pltpu.MemorySpace.VMEM)
    out2d = pl.pallas_call(
        _make_fused_kernel(T, Bp, H),
        out_shape=jax.ShapeDtypeStruct((T * Bp, Cp), jnp.float32),
        in_specs=[vmem] * 10,
        out_specs=vmem,
        scratch_shapes=[pltpu.VMEM((T * Bp, 8 * H), jnp.float32),   # pre-gates
                        pltpu.VMEM((T * Bp, 2 * H), jnp.float32)],  # hidden seq
    )(x2d, lens,
      params["w_ih_l0"], params["whh_l0"], params["b_l0"],
      params["w_ih_l1"], params["whh_l1"], params["b_l1"],
      params["fc_w"], params["fc_b"])

    return jnp.transpose(out2d.reshape(T, Bp, Cp), (1, 0, 2))   # (Bp, T, Cp)


# ----------------------------------------------------------------------------
# Parameter init (PyTorch-style uniform(-1/sqrt(H), 1/sqrt(H))).
# Kernel-friendly layout:
#  * weights pre-transposed for x @ W,
#  * per-direction gate columns permuted to [i, f, o, g] (PyTorch is [i,f,g,o]),
#  * w_ih: both directions concatenated on columns -> (d_in, 8H),
#  * w_hh: both directions stacked on rows       -> (2H, 4H),
#  * bias: b_ih + b_hh combined, both directions -> (1, 8H),
#  * layer-0 d_in zero-padded to a multiple of 8; FC output zero-padded to 128.
# ----------------------------------------------------------------------------
def init_params(key, input_size=3, hidden=128, num_classes=4, padded_classes=128):
    H = hidden
    params = {}
    for layer in range(2):
        d_in = input_size if layer == 0 else 2 * H
        k = 1.0 / np.sqrt(H)
        w_ih, w_hh, bias = [], [], []
        for _ in range(2):                      # forward, backward
            key, k1, k2, k3, k4 = jax.random.split(key, 5)
            w_ih.append(jax.random.uniform(k1, (d_in, 4 * H), jnp.float32, -k, k))
            w_hh.append(jax.random.uniform(k2, (H, 4 * H), jnp.float32, -k, k))
            b_ih = jax.random.uniform(k3, (4 * H,), jnp.float32, -k, k)
            b_hh = jax.random.uniform(k4, (4 * H,), jnp.float32, -k, k)
            bias.append(b_ih + b_hh)
        w_ih = jnp.concatenate(w_ih, axis=1)                       # (d_in, 8H)
        d_in_p = ((d_in + 7) // 8) * 8
        if d_in_p != d_in:
            w_ih = jnp.pad(w_ih, ((0, d_in_p - d_in), (0, 0)))
        params[f"w_ih_l{layer}"] = w_ih
        params[f"whh_l{layer}"] = jnp.concatenate(w_hh, axis=0)    # (2H, 4H)
        params[f"b_l{layer}"] = jnp.concatenate(bias).reshape(1, 8 * H)

    fc_in = 2 * H
    kf = 1.0 / np.sqrt(fc_in)
    key, k1, k2 = jax.random.split(key, 3)
    fc_w = jax.random.uniform(k1, (fc_in, num_classes), jnp.float32, -kf, kf)
    fc_b = jax.random.uniform(k2, (num_classes,), jnp.float32, -kf, kf)
    Cp = padded_classes
    params["fc_w"] = jnp.zeros((fc_in, Cp), jnp.float32).at[:, :num_classes].set(fc_w)
    params["fc_b"] = jnp.zeros((1, Cp), jnp.float32).at[0, :num_classes].set(fc_b)
    return params


# ----------------------------------------------------------------------------
# Forward pass (matches LSTMModel.forward, eval mode)
# ----------------------------------------------------------------------------
def lstm_model_forward(params, x, lengths, *, num_classes=4):
    """x: (B, T, input_size) f32 (batch_first), lengths: host int array (B,).
    Returns (B, max(lengths), num_classes)."""
    B, T, _ = x.shape
    lengths = np.asarray(lengths)
    t_out = int(lengths.max())
    Bp = ((B + 7) // 8) * 8               # pad batch to the f32 sublane tile
    lens = np.zeros((Bp, 1), np.int32)
    lens[:B, 0] = lengths                 # padded rows: length 0 -> fully masked
    out = _fused_forward(params, x, jnp.asarray(lens))     # (Bp, T, Cp)
    return out[:B, :t_out, :num_classes]  # pad_packed_sequence -> max(lengths)


# ----------------------------------------------------------------------------
if __name__ == "__main__":
    INPUT_SIZE = 3
    NUM_CLASSES = 4
    HIDDEN = 128
    B, T = 2, 8

    key = jax.random.PRNGKey(0)
    key, pkey, xkey = jax.random.split(key, 3)

    params = init_params(pkey, INPUT_SIZE, HIDDEN, NUM_CLASSES)
    x = jax.random.normal(xkey, (B, T, INPUT_SIZE), jnp.float32)
    lengths = np.array([8, 5], dtype=np.int64)   # pack_padded_sequence lengths

    out = lstm_model_forward(params, x, lengths, num_classes=NUM_CLASSES)
    out = jax.block_until_ready(out)
    assert out.shape == (B, int(lengths.max()), NUM_CLASSES), out.shape
    assert bool(jnp.all(jnp.isfinite(out)))
    print("KERNEL_OK")
</pallas_src>

<mosaic_0001>
module attributes {stable_mosaic.version = 11 : i64} {
  func.func @kernel(%arg0: memref<64x8xf32, #tpu.memory_space<vmem>>, %arg1: memref<8x1xi32, #tpu.memory_space<vmem>>, %arg2: memref<8x1024xf32, #tpu.memory_space<vmem>>, %arg3: memref<256x512xf32, #tpu.memory_space<vmem>>, %arg4: memref<1x1024xf32, #tpu.memory_space<vmem>>, %arg5: memref<256x1024xf32, #tpu.memory_space<vmem>>, %arg6: memref<256x512xf32, #tpu.memory_space<vmem>>, %arg7: memref<1x1024xf32, #tpu.memory_space<vmem>>, %arg8: memref<256x128xf32, #tpu.memory_space<vmem>>, %arg9: memref<1x128xf32, #tpu.memory_space<vmem>>, %arg10: memref<64x128xf32, #tpu.memory_space<vmem>>, %arg11: memref<64x1024xf32, #tpu.memory_space<vmem>>, %arg12: memref<64x256xf32, #tpu.memory_space<vmem>>) attributes {dimension_semantics = [], scalar_prefetch = 0 : i64, scratch_operands = 2 : i64, tpu.core_type = #tpu.core_type<tc>} {
    %c0 = arith.constant 0 : index
    %c0_0 = arith.constant 0 : index
    %0 = vector.load %arg1[%c0, %c0_0] : memref<8x1xi32, #tpu.memory_space<vmem>>, vector<8x1xi32>
    %1 = tpu.iota {dimensions = array<i32: 0>} : vector<16x1xi32>
    %c8_i32 = arith.constant 8 : i32
    %2 = vector.broadcast %c8_i32 : i32 to vector<16x1xi32>
    %3 = arith.cmpi slt, %1, %2 : vector<16x1xi32>
    %c0_1 = arith.constant 0 : index
    %c0_2 = arith.constant 0 : index
    %4 = vector.load %arg0[%c0_1, %c0_2] : memref<64x8xf32, #tpu.memory_space<vmem>>, vector<64x8xf32>
    %c0_3 = arith.constant 0 : index
    %c0_4 = arith.constant 0 : index
    %5 = vector.load %arg2[%c0_3, %c0_4] : memref<8x1024xf32, #tpu.memory_space<vmem>>, vector<8x1024xf32>
    %cst = arith.constant dense<0.000000e+00> : vector<64x1024xf32>
    %6 = tpu.matmul %4, %5, %cst {dimension_numbers = #tpu.dot_dimension_numbers<[1], [0], [0], [1], [0, 0, 1, 1], [], []>} : vector<64x8xf32>, vector<8x1024xf32>, vector<64x1024xf32> -> vector<64x1024xf32>
    %c0_5 = arith.constant 0 : index
    %c0_6 = arith.constant 0 : index
    %7 = vector.load %arg4[%c0_5, %c0_6] : memref<1x1024xf32, #tpu.memory_space<vmem>>, vector<1x1024xf32>
    %8 = vector.broadcast %7 : vector<1x1024xf32> to vector<64x1024xf32>
    %9 = arith.addf %6, %8 : vector<64x1024xf32>
    %c0_7 = arith.constant 0 : index
    %c0_8 = arith.constant 0 : index
    %10 = vector.load %arg11[%c0_7, %c0_8] : memref<64x1024xf32, #tpu.memory_space<vmem>>, vector<64x1024xf32>
    tpu.vector_store %arg11[%c0_7, %c0_8], %9 {strides = array<i32>} : memref<64x1024xf32, #tpu.memory_space<vmem>>, vector<64x1024xf32>,
    %c0_9 = arith.constant 0 : index
    %c0_10 = arith.constant 0 : index
    %11 = vector.load %arg3[%c0_9, %c0_10] : memref<256x512xf32, #tpu.memory_space<vmem>>, vector<256x512xf32>
    %cst_11 = arith.constant 0.000000e+00 : f32
    %12 = vector.broadcast %cst_11 : f32 to vector<16x128xf32>
    %cst_12 = arith.constant 0.000000e+00 : f32
    %13 = vector.broadcast %cst_12 : f32 to vector<16x128xf32>
    %cst_13 = arith.constant 0.000000e+00 : f32
    %14 = vector.shape_cast %3 : vector<16x1xi1> to vector<16x1xi1>
    %15 = vector.broadcast %14 : vector<16x1xi1> to vector<16x128xi1>
    %16 = vector.broadcast %cst_13 : f32 to vector<16x128xf32>
    %17 = arith.select %15, %12, %16 : vector<16x128xi1>, vector<16x128xf32>
    %cst_14 = arith.constant 0.000000e+00 : f32
    %18 = vector.shape_cast %3 : vector<16x1xi1> to vector<16x1xi1>
    %19 = vector.broadcast %18 : vector<16x1xi1> to vector<16x128xi1>
    %20 = vector.broadcast %cst_14 : f32 to vector<16x128xf32>
    %21 = arith.select %19, %20, %12 : vector<16x128xi1>, vector<16x128xf32>
    %22 = tpu.concatenate %17, %21 in 1 : vector<16x128xf32>, vector<16x128xf32> -> vector<16x256xf32>
    %c0_15 = arith.constant 0 : index
    %c0_16 = arith.constant 0 : index
    %23 = vector.load %arg11[%c0_15, %c0_16] : memref<64x1024xf32, #tpu.memory_space<vmem>>, vector<8x512xf32>
    %c56 = arith.constant 56 : index
    %c512 = arith.constant 512 : index
    %24 = vector.load %arg11[%c56, %c512] : memref<64x1024xf32, #tpu.memory_space<vmem>>, vector<8x512xf32>
    %25 = tpu.concatenate %23, %24 in 0 : vector<8x512xf32>, vector<8x512xf32> -> vector<16x512xf32>
    %cst_17 = arith.constant dense<0.000000e+00> : vector<16x512xf32>
    %26 = tpu.matmul %22, %11, %cst_17 {dimension_numbers = #tpu.dot_dimension_numbers<[1], [0], [0], [1], [0, 0, 1, 1], [], []>} : vector<16x256xf32>, vector<256x512xf32>, vector<16x512xf32> -> vector<16x512xf32>
    %27 = arith.addf %25, %26 : vector<16x512xf32>
    %28 = vector.extract_strided_slice %27 {offsets = [0, 0], sizes = [16, 384], strides = [1, 1]} : vector<16x512xf32> to vector<16x384xf32>
    %29 = arith.negf %28 : vector<16x384xf32>
    %30 = math.exp %29 : vector<16x384xf32>
    %cst_18 = arith.constant 1.000000e+00 : f32
    %31 = vector.broadcast %cst_18 : f32 to vector<16x384xf32>
    %32 = arith.addf %31, %30 : vector<16x384xf32>
    %33 = arith.divf %31, %32 : vector<16x384xf32>
    %34 = vector.extract_strided_slice %27 {offsets = [0, 384], sizes = [16, 128], strides = [1, 1]} : vector<16x512xf32> to vector<16x128xf32>
    %35 = math.tanh %34 : vector<16x128xf32>
    %36 = vector.extract_strided_slice %33 {offsets = [0, 128], sizes = [16, 128], strides = [1, 1]} : vector<16x384xf32> to vector<16x128xf32>
    %37 = arith.mulf %36, %13 : vector<16x128xf32>
    %38 = vector.extract_strided_slice %33 {offsets = [0, 0], sizes = [16, 128], strides = [1, 1]} : vector<16x384xf32> to vector<16x128xf32>
    %39 = arith.mulf %38, %35 : vector<16x128xf32>
    %40 = arith.addf %37, %39 : vector<16x128xf32>
    %41 = vector.extract_strided_slice %33 {offsets = [0, 256], sizes = [16, 128], strides = [1, 1]} : vector<16x384xf32> to vector<16x128xf32>
    %42 = math.tanh %40 : vector<16x128xf32>
    %43 = arith.mulf %41, %42 : vector<16x128xf32>
    %c0_i32 = arith.constant 0 : i32
    %44 = vector.broadcast %c0_i32 : i32 to vector<8x1xi32>
    %45 = arith.cmpi sgt, %0, %44 : vector<8x1xi32>
    %c7_i32 = arith.constant 7 : i32
    %46 = vector.broadcast %c7_i32 : i32 to vector<8x1xi32>
    %47 = arith.cmpi sgt, %0, %46 : vector<8x1xi32>
    %48 = tpu.concatenate %45, %47 in 0 : vector<8x1xi1>, vector<8x1xi1> -> vector<16x1xi1>
    %49 = vector.shape_cast %48 : vector<16x1xi1> to vector<16x1xi1>
    %50 = vector.broadcast %49 : vector<16x1xi1> to vector<16x128xi1>
    %51 = arith.select %50, %43, %12 : vector<16x128xi1>, vector<16x128xf32>
    %52 = vector.shape_cast %48 : vector<16x1xi1> to vector<16x1xi1>
    %53 = vector.broadcast %52 : vector<16x1xi1> to vector<16x128xi1>
    %54 = arith.select %53, %40, %13 : vector<16x128xi1>, vector<16x128xf32>
    %cst_19 = arith.constant 0.000000e+00 : f32
    %55 = vector.shape_cast %48 : vector<16x1xi1> to vector<16x1xi1>
    %56 = vector.broadcast %55 : vector<16x1xi1> to vector<16x128xi1>
    %57 = vector.broadcast %cst_19 : f32 to vector<16x128xf32>
    %58 = arith.select %56, %43, %57 : vector<16x128xi1>, vector<16x128xf32>
    %59 = vector.extract_strided_slice %58 {offsets = [0, 0], sizes = [8, 128], strides = [1, 1]} : vector<16x128xf32> to vector<8x128xf32>
    %c0_20 = arith.constant 0 : index
    %c0_21 = arith.constant 0 : index
    %60 = vector.load %arg12[%c0_20, %c0_21] : memref<64x256xf32, #tpu.memory_space<vmem>>, vector<8x128xf32>
    tpu.vector_store %arg12[%c0_20, %c0_21], %59 {strides = array<i32>} : memref<64x256xf32, #tpu.memory_space<vmem>>, vector<8x128xf32>,
    %61 = vector.extract_strided_slice %58 {offsets = [8, 0], sizes = [8, 128], strides = [1, 1]} : vector<16x128xf32> to vector<8x128xf32>
    %c56_22 = arith.constant 56 : index
    %c128 = arith.constant 128 : index
    %62 = vector.load %arg12[%c56_22, %c128] : memref<64x256xf32, #tpu.memory_space<vmem>>, vector<8x128xf32>
    tpu.vector_store %arg12[%c56_22, %c128], %61 {strides = array<i32>} : memref<64x256xf32, #tpu.memory_space<vmem>>, vector<8x128xf32>,
    %cst_23 = arith.constant 0.000000e+00 : f32
    %63 = vector.shape_cast %3 : vector<16x1xi1> to vector<16x1xi1>
    %64 = vector.broadcast %63 : vector<16x1xi1> to vector<16x128xi1>
    %65 = vector.broadcast %cst_23 : f32 to vector<16x128xf32>
    %66 = arith.select %64, %51, %65 : vector<16x128xi1>, vector<16x128xf32>
    %cst_24 = arith.constant 0.000000e+00 : f32
    %67 = vector.shape_cast %3 : vector<16x1xi1> to vector<16x1xi1>
    %68 = vector.broadcast %67 : vector<16x1xi1> to vector<16x128xi1>
    %69 = vector.broadcast %cst_24 : f32 to vector<16x128xf32>
    %70 = arith.select %68, %69, %51 : vector<16x128xi1>, vector<16x128xf32>
    %71 = tpu.concatenate %66, %70 in 1 : vector<16x128xf32>, vector<16x128xf32> -> vector<16x256xf32>
    %c8 = arith.constant 8 : index
    %c0_25 = arith.constant 0 : index
    %72 = vector.load %arg11[%c8, %c0_25] : memref<64x1024xf32, #tpu.memory_space<vmem>>, vector<8x512xf32>
    %c48 = arith.constant 48 : index
    %c512_26 = arith.constant 512 : index
    %73 = vector.load %arg11[%c48, %c512_26] : memref<64x1024xf32, #tpu.memory_space<vmem>>, vector<8x512xf32>
    %74 = tpu.concatenate %72, %73 in 0 : vector<8x512xf32>, vector<8x512xf32> -> vector<16x512xf32>
    %cst_27 = arith.constant dense<0.000000e+00> : vector<16x512xf32>
    %75 = tpu.matmul %71, %11, %cst_27 {dimension_numbers = #tpu.dot_dimension_numbers<[1], [0], [0], [1], [0, 0, 1, 1], [], []>} : vector<16x256xf32>, vector<256x512xf32>, vector<16x512xf32> -> vector<16x512xf32>
    %76 = arith.addf %74, %75 : vector<16x512xf32>
    %77 = vector.extract_strided_slice %76 {offsets = [0, 0], sizes = [16, 384], strides = [1, 1]} : vector<16x512xf32> to vector<16x384xf32>
    %78 = arith.negf %77 : vector<16x384xf32>
    %79 = math.exp %78 : vector<16x384xf32>
    %cst_28 = arith.constant 1.000000e+00 : f32
    %80 = vector.broadcast %cst_28 : f32 to vector<16x384xf32>
    %81 = arith.addf %80, %79 : vector<16x384xf32>
    %82 = arith.divf %80, %81 : vector<16x384xf32>
    %83 = vector.extract_strided_slice %76 {offsets = [0, 384], sizes = [16, 128], strides = [1, 1]} : vector<16x512xf32> to vector<16x128xf32>
    %84 = math.tanh %83 : vector<16x128xf32>
    %85 = vector.extract_strided_slice %82 {offsets = [0, 128], sizes = [16, 128], strides = [1, 1]} : vector<16x384xf32> to vector<16x128xf32>
    %86 = arith.mulf %85, %54 : vector<16x128xf32>
    %87 = vector.extract_strided_slice %82 {offsets = [0, 0], sizes = [16, 128], strides = [1, 1]} : vector<16x384xf32> to vector<16x128xf32>
    %88 = arith.mulf %87, %84 : vector<16x128xf32>
    %89 = arith.addf %86, %88 : vector<16x128xf32>
    %90 = vector.extract_strided_slice %82 {offsets = [0, 256], sizes = [16, 128], strides = [1, 1]} : vector<16x384xf32> to vector<16x128xf32>
    %91 = math.tanh %89 : vector<16x128xf32>
    %92 = arith.mulf %90, %91 : vector<16x128xf32>
    %c1_i32 = arith.constant 1 : i32
    %93 = vector.broadcast %c1_i32 : i32 to vector<8x1xi32>
    %94 = arith.cmpi sgt, %0, %93 : vector<8x1xi32>
    %c6_i32 = arith.constant 6 : i32
    %95 = vector.broadcast %c6_i32 : i32 to vector<8x1xi32>
    %96 = arith.cmpi sgt, %0, %95 : vector<8x1xi32>
    %97 = tpu.concatenate %94, %96 in 0 : vector<8x1xi1>, vector<8x1xi1> -> vector<16x1xi1>
    %98 = vector.shape_cast %97 : vector<16x1xi1> to vector<16x1xi1>
    %99 = vector.broadcast %98 : vector<16x1xi1> to vector<16x128xi1>
    %100 = arith.select %99, %92, %51 : vector<16x128xi1>, vector<16x128xf32>
    %101 = vector.shape_cast %97 : vector<16x1xi1> to vector<16x1xi1>
    %102 = vector.broadcast %101 : vector<16x1xi1> to vector<16x128xi1>
    %103 = arith.select %102, %89, %54 : vector<16x128xi1>, vector<16x128xf32>
    %cst_29 = arith.constant 0.000000e+00 : f32
    %104 = vector.shape_cast %97 : vector<16x1xi1> to vector<16x1xi1>
    %105 = vector.broadcast %104 : vector<16x1xi1> to vector<16x128xi1>
    %106 = vector.broadcast %cst_29 : f32 to vector<16x128xf32>
    %107 = arith.select %105, %92, %106 : vector<16x128xi1>, vector<16x128xf32>
    %108 = vector.extract_strided_slice %107 {offsets = [0, 0], sizes = [8, 128], strides = [1, 1]} : vector<16x128xf32> to vector<8x128xf32>
    %c8_30 = arith.constant 8 : index
    %c0_31 = arith.constant 0 : index
    %109 = vector.load %arg12[%c8_30, %c0_31] : memref<64x256xf32, #tpu.memory_space<vmem>>, vector<8x128xf32>
    tpu.vector_store %arg12[%c8_30, %c0_31], %108 {strides = array<i32>} : memref<64x256xf32, #tpu.memory_space<vmem>>, vector<8x128xf32>,
    %110 = vector.extract_strided_slice %107 {offsets = [8, 0], sizes = [8, 128], strides = [1, 1]} : vector<16x128xf32> to vector<8x128xf32>
    %c48_32 = arith.constant 48 : index
    %c128_33 = arith.constant 128 : index
    %111 = vector.load %arg12[%c48_32, %c128_33] : memref<64x256xf32, #tpu.memory_space<vmem>>, vector<8x128xf32>
    tpu.vector_store %arg12[%c48_32, %c128_33], %110 {strides = array<i32>} : memref<64x256xf32, #tpu.memory_space<vmem>>, vector<8x128xf32>,
    %cst_34 = arith.constant 0.000000e+00 : f32
    %112 = vector.shape_cast %3 : vector<16x1xi1> to vector<16x1xi1>
    %113 = vector.broadcast %112 : vector<16x1xi1> to vector<16x128xi1>
    %114 = vector.broadcast %cst_34 : f32 to vector<16x128xf32>
    %115 = arith.select %113, %100, %114 : vector<16x128xi1>, vector<16x128xf32>
    %cst_35 = arith.constant 0.000000e+00 : f32
    %116 = vector.shape_cast %3 : vector<16x1xi1> to vector<16x1xi1>
    %117 = vector.broadcast %116 : vector<16x1xi1> to vector<16x128xi1>
    %118 = vector.broadcast %cst_35 : f32 to vector<16x128xf32>
    %119 = arith.select %117, %118, %100 : vector<16x128xi1>, vector<16x128xf32>
    %120 = tpu.concatenate %115, %119 in 1 : vector<16x128xf32>, vector<16x128xf32> -> vector<16x256xf32>
    %c16 = arith.constant 16 : index
    %c0_36 = arith.constant 0 : index
    %121 = vector.load %arg11[%c16, %c0_36] : memref<64x1024xf32, #tpu.memory_space<vmem>>, vector<8x512xf32>
    %c40 = arith.constant 40 : index
    %c512_37 = arith.constant 512 : index
    %122 = vector.load %arg11[%c40, %c512_37] : memref<64x1024xf32, #tpu.memory_space<vmem>>, vector<8x512xf32>
    %123 = tpu.concatenate %121, %122 in 0 : vector<8x512xf32>, vector<8x512xf32> -> vector<16x512xf32>
    %cst_38 = arith.constant dense<0.000000e+00> : vector<16x512xf32>
    %124 = tpu.matmul %120, %11, %cst_38 {dimension_numbers = #tpu.dot_dimension_numbers<[1], [0], [0], [1], [0, 0, 1, 1], [], []>} : vector<16x256xf32>, vector<256x512xf32>, vector<16x512xf32> -> vector<16x512xf32>
    %125 = arith.addf %123, %124 : vector<16x512xf32>
    %126 = vector.extract_strided_slice %125 {offsets = [0, 0], sizes = [16, 384], strides = [1, 1]} : vector<16x512xf32> to vector<16x384xf32>
    %127 = arith.negf %126 : vector<16x384xf32>
    %128 = math.exp %127 : vector<16x384xf32>
    %cst_39 = arith.constant 1.000000e+00 : f32
    %129 = vector.broadcast %cst_39 : f32 to vector<16x384xf32>
    %130 = arith.addf %129, %128 : vector<16x384xf32>
    %131 = arith.divf %129, %130 : vector<16x384xf32>
    %132 = vector.extract_strided_slice %125 {offsets = [0, 384], sizes = [16, 128], strides = [1, 1]} : vector<16x512xf32> to vector<16x128xf32>
    %133 = math.tanh %132 : vector<16x128xf32>
    %134 = vector.extract_strided_slice %131 {offsets = [0, 128], sizes = [16, 128], strides = [1, 1]} : vector<16x384xf32> to vector<16x128xf32>
    %135 = arith.mulf %134, %103 : vector<16x128xf32>
    %136 = vector.extract_strided_slice %131 {offsets = [0, 0], sizes = [16, 128], strides = [1, 1]} : vector<16x384xf32> to vector<16x128xf32>
    %137 = arith.mulf %136, %133 : vector<16x128xf32>
    %138 = arith.addf %135, %137 : vector<16x128xf32>
    %139 = vector.extract_strided_slice %131 {offsets = [0, 256], sizes = [16, 128], strides = [1, 1]} : vector<16x384xf32> to vector<16x128xf32>
    %140 = math.tanh %138 : vector<16x128xf32>
    %141 = arith.mulf %139, %140 : vector<16x128xf32>
    %c2_i32 = arith.constant 2 : i32
    %142 = vector.broadcast %c2_i32 : i32 to vector<8x1xi32>
    %143 = arith.cmpi sgt, %0, %142 : vector<8x1xi32>
    %c5_i32 = arith.constant 5 : i32
    %144 = vector.broadcast %c5_i32 : i32 to vector<8x1xi32>
    %145 = arith.cmpi sgt, %0, %144 : vector<8x1xi32>
    %146 = tpu.concatenate %143, %145 in 0 : vector<8x1xi1>, vector<8x1xi1> -> vector<16x1xi1>
    %147 = vector.shape_cast %146 : vector<16x1xi1> to vector<16x1xi1>
    %148 = vector.broadcast %147 : vector<16x1xi1> to vector<16x128xi1>
    %149 = arith.select %148, %141, %100 : vector<16x128xi1>, vector<16x128xf32>
    %150 = vector.shape_cast %146 : vector<16x1xi1> to vector<16x1xi1>
    %151 = vector.broadcast %150 : vector<16x1xi1> to vector<16x128xi1>
    %152 = arith.select %151, %138, %103 : vector<16x128xi1>, vector<16x128xf32>
    %cst_40 = arith.constant 0.000000e+00 : f32
    %153 = vector.shape_cast %146 : vector<16x1xi1> to vector<16x1xi1>
    %154 = vector.broadcast %153 : vector<16x1xi1> to vector<16x128xi1>
    %155 = vector.broadcast %cst_40 : f32 to vector<16x128xf32>
    %156 = arith.select %154, %141, %155 : vector<16x128xi1>, vector<16x128xf32>
    %157 = vector.extract_strided_slice %156 {offsets = [0, 0], sizes = [8, 128], strides = [1, 1]} : vector<16x128xf32> to vector<8x128xf32>
    %c16_41 = arith.constant 16 : index
    %c0_42 = arith.constant 0 : index
    %158 = vector.load %arg12[%c16_41, %c0_42] : memref<64x256xf32, #tpu.memory_space<vmem>>, vector<8x128xf32>
    tpu.vector_store %arg12[%c16_41, %c0_42], %157 {strides = array<i32>} : memref<64x256xf32, #tpu.memory_space<vmem>>, vector<8x128xf32>,
    %159 = vector.extract_strided_slice %156 {offsets = [8, 0], sizes = [8, 128], strides = [1, 1]} : vector<16x128xf32> to vector<8x128xf32>
    %c40_43 = arith.constant 40 : index
    %c128_44 = arith.constant 128 : index
    %160 = vector.load %arg12[%c40_43, %c128_44] : memref<64x256xf32, #tpu.memory_space<vmem>>, vector<8x128xf32>
    tpu.vector_store %arg12[%c40_43, %c128_44], %159 {strides = array<i32>} : memref<64x256xf32, #tpu.memory_space<vmem>>, vector<8x128xf32>,
    %cst_45 = arith.constant 0.000000e+00 : f32
    %161 = vector.shape_cast %3 : vector<16x1xi1> to vector<16x1xi1>
    %162 = vector.broadcast %161 : vector<16x1xi1> to vector<16x128xi1>
    %163 = vector.broadcast %cst_45 : f32 to vector<16x128xf32>
    %164 = arith.select %162, %149, %163 : vector<16x128xi1>, vector<16x128xf32>
    %cst_46 = arith.constant 0.000000e+00 : f32
    %165 = vector.shape_cast %3 : vector<16x1xi1> to vector<16x1xi1>
    %166 = vector.broadcast %165 : vector<16x1xi1> to vector<16x128xi1>
    %167 = vector.broadcast %cst_46 : f32 to vector<16x128xf32>
    %168 = arith.select %166, %167, %149 : vector<16x128xi1>, vector<16x128xf32>
    %169 = tpu.concatenate %164, %168 in 1 : vector<16x128xf32>, vector<16x128xf32> -> vector<16x256xf32>
    %c24 = arith.constant 24 : index
    %c0_47 = arith.constant 0 : index
    %170 = vector.load %arg11[%c24, %c0_47] : memref<64x1024xf32, #tpu.memory_space<vmem>>, vector<8x512xf32>
    %c32 = arith.constant 32 : index
    %c512_48 = arith.constant 512 : index
    %171 = vector.load %arg11[%c32, %c512_48] : memref<64x1024xf32, #tpu.memory_space<vmem>>, vector<8x512xf32>
    %172 = tpu.concatenate %170, %171 in 0 : vector<8x512xf32>, vector<8x512xf32> -> vector<16x512xf32>
    %cst_49 = arith.constant dense<0.000000e+00> : vector<16x512xf32>
    %173 = tpu.matmul %169, %11, %cst_49 {dimension_numbers = #tpu.dot_dimension_numbers<[1], [0], [0], [1], [0, 0, 1, 1], [], []>} : vector<16x256xf32>, vector<256x512xf32>, vector<16x512xf32> -> vector<16x512xf32>
    %174 = arith.addf %172, %173 : vector<16x512xf32>
    %175 = vector.extract_strided_slice %174 {offsets = [0, 0], sizes = [16, 384], strides = [1, 1]} : vector<16x512xf32> to vector<16x384xf32>
    %176 = arith.negf %175 : vector<16x384xf32>
    %177 = math.exp %176 : vector<16x384xf32>
    %cst_50 = arith.constant 1.000000e+00 : f32
    %178 = vector.broadcast %cst_50 : f32 to vector<16x384xf32>
    %179 = arith.addf %178, %177 : vector<16x384xf32>
    %180 = arith.divf %178, %179 : vector<16x384xf32>
    %181 = vector.extract_strided_slice %174 {offsets = [0, 384], sizes = [16, 128], strides = [1, 1]} : vector<16x512xf32> to vector<16x128xf32>
    %182 = math.tanh %181 : vector<16x128xf32>
    %183 = vector.extract_strided_slice %180 {offsets = [0, 128], sizes = [16, 128], strides = [1, 1]} : vector<16x384xf32> to vector<16x128xf32>
    %184 = arith.mulf %183, %152 : vector<16x128xf32>
    %185 = vector.extract_strided_slice %180 {offsets = [0, 0], sizes = [16, 128], strides = [1, 1]} : vector<16x384xf32> to vector<16x128xf32>
    %186 = arith.mulf %185, %182 : vector<16x128xf32>
    %187 = arith.addf %184, %186 : vector<16x128xf32>
    %188 = vector.extract_strided_slice %180 {offsets = [0, 256], sizes = [16, 128], strides = [1, 1]} : vector<16x384xf32> to vector<16x128xf32>
    %189 = math.tanh %187 : vector<16x128xf32>
    %190 = arith.mulf %188, %189 : vector<16x128xf32>
    %c3_i32 = arith.constant 3 : i32
    %191 = vector.broadcast %c3_i32 : i32 to vector<8x1xi32>
    %192 = arith.cmpi sgt, %0, %191 : vector<8x1xi32>
    %c4_i32 = arith.constant 4 : i32
    %193 = vector.broadcast %c4_i32 : i32 to vector<8x1xi32>
    %194 = arith.cmpi sgt, %0, %193 : vector<8x1xi32>
    %195 = tpu.concatenate %192, %194 in 0 : vector<8x1xi1>, vector<8x1xi1> -> vector<16x1xi1>
    %196 = vector.shape_cast %195 : vector<16x1xi1> to vector<16x1xi1>
    %197 = vector.broadcast %196 : vector<16x1xi1> to vector<16x128xi1>
    %198 = arith.select %197, %190, %149 : vector<16x128xi1>, vector<16x128xf32>
    %199 = vector.shape_cast %195 : vector<16x1xi1> to vector<16x1xi1>
    %200 = vector.broadcast %199 : vector<16x1xi1> to vector<16x128xi1>
    %201 = arith.select %200, %187, %152 : vector<16x128xi1>, vector<16x128xf32>
    %cst_51 = arith.constant 0.000000e+00 : f32
    %202 = vector.shape_cast %195 : vector<16x1xi1> to vector<16x1xi1>
    %203 = vector.broadcast %202 : vector<16x1xi1> to vector<16x128xi1>
    %204 = vector.broadcast %cst_51 : f32 to vector<16x128xf32>
    %205 = arith.select %203, %190, %204 : vector<16x128xi1>, vector<16x128xf32>
    %206 = vector.extract_strided_slice %205 {offsets = [0, 0], sizes = [8, 128], strides = [1, 1]} : vector<16x128xf32> to vector<8x128xf32>
    %c24_52 = arith.constant 24 : index
    %c0_53 = arith.constant 0 : index
    %207 = vector.load %arg12[%c24_52, %c0_53] : memref<64x256xf32, #tpu.memory_space<vmem>>, vector<8x128xf32>
    tpu.vector_store %arg12[%c24_52, %c0_53], %206 {strides = array<i32>} : memref<64x256xf32, #tpu.memory_space<vmem>>, vector<8x128xf32>,
    %208 = vector.extract_strided_slice %205 {offsets = [8, 0], sizes = [8, 128], strides = [1, 1]} : vector<16x128xf32> to vector<8x128xf32>
    %c32_54 = arith.constant 32 : index
    %c128_55 = arith.constant 128 : index
    %209 = vector.load %arg12[%c32_54, %c128_55] : memref<64x256xf32, #tpu.memory_space<vmem>>, vector<8x128xf32>
    tpu.vector_store %arg12[%c32_54, %c128_55], %208 {strides = array<i32>} : memref<64x256xf32, #tpu.memory_space<vmem>>, vector<8x128xf32>,
    %cst_56 = arith.constant 0.000000e+00 : f32
    %210 = vector.shape_cast %3 : vector<16x1xi1> to vector<16x1xi1>
    %211 = vector.broadcast %210 : vector<16x1xi1> to vector<16x128xi1>
    %212 = vector.broadcast %cst_56 : f32 to vector<16x128xf32>
    %213 = arith.select %211, %198, %212 : vector<16x128xi1>, vector<16x128xf32>
    %cst_57 = arith.constant 0.000000e+00 : f32
    %214 = vector.shape_cast %3 : vector<16x1xi1> to vector<16x1xi1>
    %215 = vector.broadcast %214 : vector<16x1xi1> to vector<16x128xi1>
    %216 = vector.broadcast %cst_57 : f32 to vector<16x128xf32>
    %217 = arith.select %215, %216, %198 : vector<16x128xi1>, vector<16x128xf32>
    %218 = tpu.concatenate %213, %217 in 1 : vector<16x128xf32>, vector<16x128xf32> -> vector<16x256xf32>
    %c32_58 = arith.constant 32 : index
    %c0_59 = arith.constant 0 : index
    %219 = vector.load %arg11[%c32_58, %c0_59] : memref<64x1024xf32, #tpu.memory_space<vmem>>, vector<8x512xf32>
    %c24_60 = arith.constant 24 : index
    %c512_61 = arith.constant 512 : index
    %220 = vector.load %arg11[%c24_60, %c512_61] : memref<64x1024xf32, #tpu.memory_space<vmem>>, vector<8x512xf32>
    %221 = tpu.concatenate %219, %220 in 0 : vector<8x512xf32>, vector<8x512xf32> -> vector<16x512xf32>
    %cst_62 = arith.constant dense<0.000000e+00> : vector<16x512xf32>
    %222 = tpu.matmul %218, %11, %cst_62 {dimension_numbers = #tpu.dot_dimension_numbers<[1], [0], [0], [1], [0, 0, 1, 1], [], []>} : vector<16x256xf32>, vector<256x512xf32>, vector<16x512xf32> -> vector<16x512xf32>
    %223 = arith.addf %221, %222 : vector<16x512xf32>
    %224 = vector.extract_strided_slice %223 {offsets = [0, 0], sizes = [16, 384], strides = [1, 1]} : vector<16x512xf32> to vector<16x384xf32>
    %225 = arith.negf %224 : vector<16x384xf32>
    %226 = math.exp %225 : vector<16x384xf32>
    %cst_63 = arith.constant 1.000000e+00 : f32
    %227 = vector.broadcast %cst_63 : f32 to vector<16x384xf32>
    %228 = arith.addf %227, %226 : vector<16x384xf32>
    %229 = arith.divf %227, %228 : vector<16x384xf32>
    %230 = vector.extract_strided_slice %223 {offsets = [0, 384], sizes = [16, 128], strides = [1, 1]} : vector<16x512xf32> to vector<16x128xf32>
    %231 = math.tanh %230 : vector<16x128xf32>
    %232 = vector.extract_strided_slice %229 {offsets = [0, 128], sizes = [16, 128], strides = [1, 1]} : vector<16x384xf32> to vector<16x128xf32>
    %233 = arith.mulf %232, %201 : vector<16x128xf32>
    %234 = vector.extract_strided_slice %229 {offsets = [0, 0], sizes = [16, 128], strides = [1, 1]} : vector<16x384xf32> to vector<16x128xf32>
    %235 = arith.mulf %234, %231 : vector<16x128xf32>
    %236 = arith.addf %233, %235 : vector<16x128xf32>
    %237 = vector.extract_strided_slice %229 {offsets = [0, 256], sizes = [16, 128], strides = [1, 1]} : vector<16x384xf32> to vector<16x128xf32>
    %238 = math.tanh %236 : vector<16x128xf32>
    %239 = arith.mulf %237, %238 : vector<16x128xf32>
    %c4_i32_64 = arith.constant 4 : i32
    %240 = vector.broadcast %c4_i32_64 : i32 to vector<8x1xi32>
    %241 = arith.cmpi sgt, %0, %240 : vector<8x1xi32>
    %c3_i32_65 = arith.constant 3 : i32
    %242 = vector.broadcast %c3_i32_65 : i32 to vector<8x1xi32>
    %243 = arith.cmpi sgt, %0, %242 : vector<8x1xi32>
    %244 = tpu.concatenate %241, %243 in 0 : vector<8x1xi1>, vector<8x1xi1> -> vector<16x1xi1>
    %245 = vector.shape_cast %244 : vector<16x1xi1> to vector<16x1xi1>
    %246 = vector.broadcast %245 : vector<16x1xi1> to vector<16x128xi1>
    %247 = arith.select %246, %239, %198 : vector<16x128xi1>, vector<16x128xf32>
    %248 = vector.shape_cast %244 : vector<16x1xi1> to vector<16x1xi1>
    %249 = vector.broadcast %248 : vector<16x1xi1> to vector<16x128xi1>
    %250 = arith.select %249, %236, %201 : vector<16x128xi1>, vector<16x128xf32>
    %cst_66 = arith.constant 0.000000e+00 : f32
    %251 = vector.shape_cast %244 : vector<16x1xi1> to vector<16x1xi1>
    %252 = vector.broadcast %251 : vector<16x1xi1> to vector<16x128xi1>
    %253 = vector.broadcast %cst_66 : f32 to vector<16x128xf32>
    %254 = arith.select %252, %239, %253 : vector<16x128xi1>, vector<16x128xf32>
    %255 = vector.extract_strided_slice %254 {offsets = [0, 0], sizes = [8, 128], strides = [1, 1]} : vector<16x128xf32> to vector<8x128xf32>
    %c32_67 = arith.constant 32 : index
    %c0_68 = arith.constant 0 : index
    %256 = vector.load %arg12[%c32_67, %c0_68] : memref<64x256xf32, #tpu.memory_space<vmem>>, vector<8x128xf32>
    tpu.vector_store %arg12[%c32_67, %c0_68], %255 {strides = array<i32>} : memref<64x256xf32, #tpu.memory_space<vmem>>, vector<8x128xf32>,
    %257 = vector.extract_strided_slice %254 {offsets = [8, 0], sizes = [8, 128], strides = [1, 1]} : vector<16x128xf32> to vector<8x128xf32>
    %c24_69 = arith.constant 24 : index
    %c128_70 = arith.constant 128 : index
    %258 = vector.load %arg12[%c24_69, %c128_70] : memref<64x256xf32, #tpu.memory_space<vmem>>, vector<8x128xf32>
    tpu.vector_store %arg12[%c24_69, %c128_70], %257 {strides = array<i32>} : memref<64x256xf32, #tpu.memory_space<vmem>>, vector<8x128xf32>,
    %cst_71 = arith.constant 0.000000e+00 : f32
    %259 = vector.shape_cast %3 : vector<16x1xi1> to vector<16x1xi1>
    %260 = vector.broadcast %259 : vector<16x1xi1> to vector<16x128xi1>
    %261 = vector.broadcast %cst_71 : f32 to vector<16x128xf32>
    %262 = arith.select %260, %247, %261 : vector<16x128xi1>, vector<16x128xf32>
    %cst_72 = arith.constant 0.000000e+00 : f32
    %263 = vector.shape_cast %3 : vector<16x1xi1> to vector<16x1xi1>
    %264 = vector.broadcast %263 : vector<16x1xi1> to vector<16x128xi1>
    %265 = vector.broadcast %cst_72 : f32 to vector<16x128xf32>
    %266 = arith.select %264, %265, %247 : vector<16x128xi1>, vector<16x128xf32>
    %267 = tpu.concatenate %262, %266 in 1 : vector<16x128xf32>, vector<16x128xf32> -> vector<16x256xf32>
    %c40_73 = arith.constant 40 : index
    %c0_74 = arith.constant 0 : index
    %268 = vector.load %arg11[%c40_73, %c0_74] : memref<64x1024xf32, #tpu.memory_space<vmem>>, vector<8x512xf32>
    %c16_75 = arith.constant 16 : index
    %c512_76 = arith.constant 512 : index
    %269 = vector.load %arg11[%c16_75, %c512_76] : memref<64x1024xf32, #tpu.memory_space<vmem>>, vector<8x512xf32>
    %270 = tpu.concatenate %268, %269 in 0 : vector<8x512xf32>, vector<8x512xf32> -> vector<16x512xf32>
    %cst_77 = arith.constant dense<0.000000e+00> : vector<16x512xf32>
    %271 = tpu.matmul %267, %11, %cst_77 {dimension_numbers = #tpu.dot_dimension_numbers<[1], [0], [0], [1], [0, 0, 1, 1], [], []>} : vector<16x256xf32>, vector<256x512xf32>, vector<16x512xf32> -> vector<16x512xf32>
    %272 = arith.addf %270, %271 : vector<16x512xf32>
    %273 = vector.extract_strided_slice %272 {offsets = [0, 0], sizes = [16, 384], strides = [1, 1]} : vector<16x512xf32> to vector<16x384xf32>
    %274 = arith.negf %273 : vector<16x384xf32>
    %275 = math.exp %274 : vector<16x384xf32>
    %cst_78 = arith.constant 1.000000e+00 : f32
    %276 = vector.broadcast %cst_78 : f32 to vector<16x384xf32>
    %277 = arith.addf %276, %275 : vector<16x384xf32>
    %278 = arith.divf %276, %277 : vector<16x384xf32>
    %279 = vector.extract_strided_slice %272 {offsets = [0, 384], sizes = [16, 128], strides = [1, 1]} : vector<16x512xf32> to vector<16x128xf32>
    %280 = math.tanh %279 : vector<16x128xf32>
    %281 = vector.extract_strided_slice %278 {offsets = [0, 128], sizes = [16, 128], strides = [1, 1]} : vector<16x384xf32> to vector<16x128xf32>
    %282 = arith.mulf %281, %250 : vector<16x128xf32>
    %283 = vector.extract_strided_slice %278 {offsets = [0, 0], sizes = [16, 128], strides = [1, 1]} : vector<16x384xf32> to vector<16x128xf32>
    %284 = arith.mulf %283, %280 : vector<16x128xf32>
    %285 = arith.addf %282, %284 : vector<16x128xf32>
    %286 = vector.extract_strided_slice %278 {offsets = [0, 256], sizes = [16, 128], strides = [1, 1]} : vector<16x384xf32> to vector<16x128xf32>
    %287 = math.tanh %285 : vector<16x128xf32>
    %288 = arith.mulf %286, %287 : vector<16x128xf32>
    %c5_i32_79 = arith.constant 5 : i32
    %289 = vector.broadcast %c5_i32_79 : i32 to vector<8x1xi32>
    %290 = arith.cmpi sgt, %0, %289 : vector<8x1xi32>
    %c2_i32_80 = arith.constant 2 : i32
    %291 = vector.broadcast %c2_i32_80 : i32 to vector<8x1xi32>
    %292 = arith.cmpi sgt, %0, %291 : vector<8x1xi32>
    %293 = tpu.concatenate %290, %292 in 0 : vector<8x1xi1>, vector<8x1xi1> -> vector<16x1xi1>
    %294 = vector.shape_cast %293 : vector<16x1xi1> to vector<16x1xi1>
    %295 = vector.broadcast %294 : vector<16x1xi1> to vector<16x128xi1>
    %296 = arith.select %295, %288, %247 : vector<16x128xi1>, vector<16x128xf32>
    %297 = vector.shape_cast %293 : vector<16x1xi1> to vector<16x1xi1>
    %298 = vector.broadcast %297 : vector<16x1xi1> to vector<16x128xi1>
    %299 = arith.select %298, %285, %250 : vector<16x128xi1>, vector<16x128xf32>
    %cst_81 = arith.constant 0.000000e+00 : f32
    %300 = vector.shape_cast %293 : vector<16x1xi1> to vector<16x1xi1>
    %301 = vector.broadcast %300 : vector<16x1xi1> to vector<16x128xi1>
    %302 = vector.broadcast %cst_81 : f32 to vector<16x128xf32>
    %303 = arith.select %301, %288, %302 : vector<16x128xi1>, vector<16x128xf32>
    %304 = vector.extract_strided_slice %303 {offsets = [0, 0], sizes = [8, 128], strides = [1, 1]} : vector<16x128xf32> to vector<8x128xf32>
    %c40_82 = arith.constant 40 : index
    %c0_83 = arith.constant 0 : index
    %305 = vector.load %arg12[%c40_82, %c0_83] : memref<64x256xf32, #tpu.memory_space<vmem>>, vector<8x128xf32>
    tpu.vector_store %arg12[%c40_82, %c0_83], %304 {strides = array<i32>} : memref<64x256xf32, #tpu.memory_space<vmem>>, vector<8x128xf32>,
    %306 = vector.extract_strided_slice %303 {offsets = [8, 0], sizes = [8, 128], strides = [1, 1]} : vector<16x128xf32> to vector<8x128xf32>
    %c16_84 = arith.constant 16 : index
    %c128_85 = arith.constant 128 : index
    %307 = vector.load %arg12[%c16_84, %c128_85] : memref<64x256xf32, #tpu.memory_space<vmem>>, vector<8x128xf32>
    tpu.vector_store %arg12[%c16_84, %c128_85], %306 {strides = array<i32>} : memref<64x256xf32, #tpu.memory_space<vmem>>, vector<8x128xf32>,
    %cst_86 = arith.constant 0.000000e+00 : f32
    %308 = vector.shape_cast %3 : vector<16x1xi1> to vector<16x1xi1>
    %309 = vector.broadcast %308 : vector<16x1xi1> to vector<16x128xi1>
    %310 = vector.broadcast %cst_86 : f32 to vector<16x128xf32>
    %311 = arith.select %309, %296, %310 : vector<16x128xi1>, vector<16x128xf32>
    %cst_87 = arith.constant 0.000000e+00 : f32
    %312 = vector.shape_cast %3 : vector<16x1xi1> to vector<16x1xi1>
    %313 = vector.broadcast %312 : vector<16x1xi1> to vector<16x128xi1>
    %314 = vector.broadcast %cst_87 : f32 to vector<16x128xf32>
    %315 = arith.select %313, %314, %296 : vector<16x128xi1>, vector<16x128xf32>
    %316 = tpu.concatenate %311, %315 in 1 : vector<16x128xf32>, vector<16x128xf32> -> vector<16x256xf32>
    %c48_88 = arith.constant 48 : index
    %c0_89 = arith.constant 0 : index
    %317 = vector.load %arg11[%c48_88, %c0_89] : memref<64x1024xf32, #tpu.memory_space<vmem>>, vector<8x512xf32>
    %c8_90 = arith.constant 8 : index
    %c512_91 = arith.constant 512 : index
    %318 = vector.load %arg11[%c8_90, %c512_91] : memref<64x1024xf32, #tpu.memory_space<vmem>>, vector<8x512xf32>
    %319 = tpu.concatenate %317, %318 in 0 : vector<8x512xf32>, vector<8x512xf32> -> vector<16x512xf32>
    %cst_92 = arith.constant dense<0.000000e+00> : vector<16x512xf32>
    %320 = tpu.matmul %316, %11, %cst_92 {dimension_numbers = #tpu.dot_dimension_numbers<[1], [0], [0], [1], [0, 0, 1, 1], [], []>} : vector<16x256xf32>, vector<256x512xf32>, vector<16x512xf32> -> vector<16x512xf32>
    %321 = arith.addf %319, %320 : vector<16x512xf32>
    %322 = vector.extract_strided_slice %321 {offsets = [0, 0], sizes = [16, 384], strides = [1, 1]} : vector<16x512xf32> to vector<16x384xf32>
    %323 = arith.negf %322 : vector<16x384xf32>
    %324 = math.exp %323 : vector<16x384xf32>
    %cst_93 = arith.constant 1.000000e+00 : f32
    %325 = vector.broadcast %cst_93 : f32 to vector<16x384xf32>
    %326 = arith.addf %325, %324 : vector<16x384xf32>
    %327 = arith.divf %325, %326 : vector<16x384xf32>
    %328 = vector.extract_strided_slice %321 {offsets = [0, 384], sizes = [16, 128], strides = [1, 1]} : vector<16x512xf32> to vector<16x128xf32>
    %329 = math.tanh %328 : vector<16x128xf32>
    %330 = vector.extract_strided_slice %327 {offsets = [0, 128], sizes = [16, 128], strides = [1, 1]} : vector<16x384xf32> to vector<16x128xf32>
    %331 = arith.mulf %330, %299 : vector<16x128xf32>
    %332 = vector.extract_strided_slice %327 {offsets = [0, 0], sizes = [16, 128], strides = [1, 1]} : vector<16x384xf32> to vector<16x128xf32>
    %333 = arith.mulf %332, %329 : vector<16x128xf32>
    %334 = arith.addf %331, %333 : vector<16x128xf32>
    %335 = vector.extract_strided_slice %327 {offsets = [0, 256], sizes = [16, 128], strides = [1, 1]} : vector<16x384xf32> to vector<16x128xf32>
    %336 = math.tanh %334 : vector<16x128xf32>
    %337 = arith.mulf %335, %336 : vector<16x128xf32>
    %c6_i32_94 = arith.constant 6 : i32
    %338 = vector.broadcast %c6_i32_94 : i32 to vector<8x1xi32>
    %339 = arith.cmpi sgt, %0, %338 : vector<8x1xi32>
    %c1_i32_95 = arith.constant 1 : i32
    %340 = vector.broadcast %c1_i32_95 : i32 to vector<8x1xi32>
    %341 = arith.cmpi sgt, %0, %340 : vector<8x1xi32>
    %342 = tpu.concatenate %339, %341 in 0 : vector<8x1xi1>, vector<8x1xi1> -> vector<16x1xi1>
    %343 = vector.shape_cast %342 : vector<16x1xi1> to vector<16x1xi1>
    %344 = vector.broadcast %343 : vector<16x1xi1> to vector<16x128xi1>
    %345 = arith.select %344, %337, %296 : vector<16x128xi1>, vector<16x128xf32>
    %346 = vector.shape_cast %342 : vector<16x1xi1> to vector<16x1xi1>
    %347 = vector.broadcast %346 : vector<16x1xi1> to vector<16x128xi1>
    %348 = arith.select %347, %334, %299 : vector<16x128xi1>, vector<16x128xf32>
    %cst_96 = arith.constant 0.000000e+00 : f32
    %349 = vector.shape_cast %342 : vector<16x1xi1> to vector<16x1xi1>
    %350 = vector.broadcast %349 : vector<16x1xi1> to vector<16x128xi1>
    %351 = vector.broadcast %cst_96 : f32 to vector<16x128xf32>
    %352 = arith.select %350, %337, %351 : vector<16x128xi1>, vector<16x128xf32>
    %353 = vector.extract_strided_slice %352 {offsets = [0, 0], sizes = [8, 128], strides = [1, 1]} : vector<16x128xf32> to vector<8x128xf32>
    %c48_97 = arith.constant 48 : index
    %c0_98 = arith.constant 0 : index
    %354 = vector.load %arg12[%c48_97, %c0_98] : memref<64x256xf32, #tpu.memory_space<vmem>>, vector<8x128xf32>
    tpu.vector_store %arg12[%c48_97, %c0_98], %353 {strides = array<i32>} : memref<64x256xf32, #tpu.memory_space<vmem>>, vector<8x128xf32>,
    %355 = vector.extract_strided_slice %352 {offsets = [8, 0], sizes = [8, 128], strides = [1, 1]} : vector<16x128xf32> to vector<8x128xf32>
    %c8_99 = arith.constant 8 : index
    %c128_100 = arith.constant 128 : index
    %356 = vector.load %arg12[%c8_99, %c128_100] : memref<64x256xf32, #tpu.memory_space<vmem>>, vector<8x128xf32>
    tpu.vector_store %arg12[%c8_99, %c128_100], %355 {strides = array<i32>} : memref<64x256xf32, #tpu.memory_space<vmem>>, vector<8x128xf32>,
    %cst_101 = arith.constant 0.000000e+00 : f32
    %357 = vector.shape_cast %3 : vector<16x1xi1> to vector<16x1xi1>
    %358 = vector.broadcast %357 : vector<16x1xi1> to vector<16x128xi1>
    %359 = vector.broadcast %cst_101 : f32 to vector<16x128xf32>
    %360 = arith.select %358, %345, %359 : vector<16x128xi1>, vector<16x128xf32>
    %cst_102 = arith.constant 0.000000e+00 : f32
    %361 = vector.shape_cast %3 : vector<16x1xi1> to vector<16x1xi1>
    %362 = vector.broadcast %361 : vector<16x1xi1> to vector<16x128xi1>
    %363 = vector.broadcast %cst_102 : f32 to vector<16x128xf32>
    %364 = arith.select %362, %363, %345 : vector<16x128xi1>, vector<16x128xf32>
    %365 = tpu.concatenate %360, %364 in 1 : vector<16x128xf32>, vector<16x128xf32> -> vector<16x256xf32>
    %c56_103 = arith.constant 56 : index
    %c0_104 = arith.constant 0 : index
    %366 = vector.load %arg11[%c56_103, %c0_104] : memref<64x1024xf32, #tpu.memory_space<vmem>>, vector<8x512xf32>
    %c0_105 = arith.constant 0 : index
    %c512_106 = arith.constant 512 : index
    %367 = vector.load %arg11[%c0_105, %c512_106] : memref<64x1024xf32, #tpu.memory_space<vmem>>, vector<8x512xf32>
    %368 = tpu.concatenate %366, %367 in 0 : vector<8x512xf32>, vector<8x512xf32> -> vector<16x512xf32>
    %cst_107 = arith.constant dense<0.000000e+00> : vector<16x512xf32>
    %369 = tpu.matmul %365, %11, %cst_107 {dimension_numbers = #tpu.dot_dimension_numbers<[1], [0], [0], [1], [0, 0, 1, 1], [], []>} : vector<16x256xf32>, vector<256x512xf32>, vector<16x512xf32> -> vector<16x512xf32>
    %370 = arith.addf %368, %369 : vector<16x512xf32>
    %371 = vector.extract_strided_slice %370 {offsets = [0, 0], sizes = [16, 384], strides = [1, 1]} : vector<16x512xf32> to vector<16x384xf32>
    %372 = arith.negf %371 : vector<16x384xf32>
    %373 = math.exp %372 : vector<16x384xf32>
    %cst_108 = arith.constant 1.000000e+00 : f32
    %374 = vector.broadcast %cst_108 : f32 to vector<16x384xf32>
    %375 = arith.addf %374, %373 : vector<16x384xf32>
    %376 = arith.divf %374, %375 : vector<16x384xf32>
    %377 = vector.extract_strided_slice %370 {offsets = [0, 384], sizes = [16, 128], strides = [1, 1]} : vector<16x512xf32> to vector<16x128xf32>
    %378 = math.tanh %377 : vector<16x128xf32>
    %379 = vector.extract_strided_slice %376 {offsets = [0, 128], sizes = [16, 128], strides = [1, 1]} : vector<16x384xf32> to vector<16x128xf32>
    %380 = arith.mulf %379, %348 : vector<16x128xf32>
    %381 = vector.extract_strided_slice %376 {offsets = [0, 0], sizes = [16, 128], strides = [1, 1]} : vector<16x384xf32> to vector<16x128xf32>
    %382 = arith.mulf %381, %378 : vector<16x128xf32>
    %383 = arith.addf %380, %382 : vector<16x128xf32>
    %384 = vector.extract_strided_slice %376 {offsets = [0, 256], sizes = [16, 128], strides = [1, 1]} : vector<16x384xf32> to vector<16x128xf32>
    %385 = math.tanh %383 : vector<16x128xf32>
    %386 = arith.mulf %384, %385 : vector<16x128xf32>
    %c7_i32_109 = arith.constant 7 : i32
    %387 = vector.broadcast %c7_i32_109 : i32 to vector<8x1xi32>
    %388 = arith.cmpi sgt, %0, %387 : vector<8x1xi32>
    %c0_i32_110 = arith.constant 0 : i32
    %389 = vector.broadcast %c0_i32_110 : i32 to vector<8x1xi32>
    %390 = arith.cmpi sgt, %0, %389 : vector<8x1xi32>
    %391 = tpu.concatenate %388, %390 in 0 : vector<8x1xi1>, vector<8x1xi1> -> vector<16x1xi1>
    %cst_111 = arith.constant 0.000000e+00 : f32
    %392 = vector.shape_cast %391 : vector<16x1xi1> to vector<16x1xi1>
    %393 = vector.broadcast %392 : vector<16x1xi1> to vector<16x128xi1>
    %394 = vector.broadcast %cst_111 : f32 to vector<16x128xf32>
    %395 = arith.select %393, %386, %394 : vector<16x128xi1>, vector<16x128xf32>
    %396 = vector.extract_strided_slice %395 {offsets = [0, 0], sizes = [8, 128], strides = [1, 1]} : vector<16x128xf32> to vector<8x128xf32>
    %c56_112 = arith.constant 56 : index
    %c0_113 = arith.constant 0 : index
    %397 = vector.load %arg12[%c56_112, %c0_113] : memref<64x256xf32, #tpu.memory_space<vmem>>, vector<8x128xf32>
    tpu.vector_store %arg12[%c56_112, %c0_113], %396 {strides = array<i32>} : memref<64x256xf32, #tpu.memory_space<vmem>>, vector<8x128xf32>,
    %398 = vector.extract_strided_slice %395 {offsets = [8, 0], sizes = [8, 128], strides = [1, 1]} : vector<16x128xf32> to vector<8x128xf32>
    %c0_114 = arith.constant 0 : index
    %c128_115 = arith.constant 128 : index
    %399 = vector.load %arg12[%c0_114, %c128_115] : memref<64x256xf32, #tpu.memory_space<vmem>>, vector<8x128xf32>
    tpu.vector_store %arg12[%c0_114, %c128_115], %398 {strides = array<i32>} : memref<64x256xf32, #tpu.memory_space<vmem>>, vector<8x128xf32>,
    %c0_116 = arith.constant 0 : index
    %c0_117 = arith.constant 0 : index
    %400 = vector.load %arg12[%c0_116, %c0_117] : memref<64x256xf32, #tpu.memory_space<vmem>>, vector<64x256xf32>
    %c0_118 = arith.constant 0 : index
    %c0_119 = arith.constant 0 : index
    %401 = vector.load %arg5[%c0_118, %c0_119] : memref<256x1024xf32, #tpu.memory_space<vmem>>, vector<256x1024xf32>
    %cst_120 = arith.constant dense<0.000000e+00> : vector<64x1024xf32>
    %402 = tpu.matmul %400, %401, %cst_120 {dimension_numbers = #tpu.dot_dimension_numbers<[1], [0], [0], [1], [0, 0, 1, 1], [], []>} : vector<64x256xf32>, vector<256x1024xf32>, vector<64x1024xf32> -> vector<64x1024xf32>
    %c0_121 = arith.constant 0 : index
    %c0_122 = arith.constant 0 : index
    %403 = vector.load %arg7[%c0_121, %c0_122] : memref<1x1024xf32, #tpu.memory_space<vmem>>, vector<1x1024xf32>
    %404 = vector.broadcast %403 : vector<1x1024xf32> to vector<64x1024xf32>
    %405 = arith.addf %402, %404 : vector<64x1024xf32>
    %c0_123 = arith.constant 0 : index
    %c0_124 = arith.constant 0 : index
    %406 = vector.load %arg11[%c0_123, %c0_124] : memref<64x1024xf32, #tpu.memory_space<vmem>>, vector<64x1024xf32>
    tpu.vector_store %arg11[%c0_123, %c0_124], %405 {strides = array<i32>} : memref<64x1024xf32, #tpu.memory_space<vmem>>, vector<64x1024xf32>,
    %c0_125 = arith.constant 0 : index
    %c0_126 = arith.constant 0 : index
    %407 = vector.load %arg6[%c0_125, %c0_126] : memref<256x512xf32, #tpu.memory_space<vmem>>, vector<256x512xf32>
    %cst_127 = arith.constant 0.000000e+00 : f32
    %408 = vector.broadcast %cst_127 : f32 to vector<16x128xf32>
    %cst_128 = arith.constant 0.000000e+00 : f32
    %409 = vector.broadcast %cst_128 : f32 to vector<16x128xf32>
    %cst_129 = arith.constant 0.000000e+00 : f32
    %410 = vector.shape_cast %3 : vector<16x1xi1> to vector<16x1xi1>
    %411 = vector.broadcast %410 : vector<16x1xi1> to vector<16x128xi1>
    %412 = vector.broadcast %cst_129 : f32 to vector<16x128xf32>
    %413 = arith.select %411, %408, %412 : vector<16x128xi1>, vector<16x128xf32>
    %cst_130 = arith.constant 0.000000e+00 : f32
    %414 = vector.shape_cast %3 : vector<16x1xi1> to vector<16x1xi1>
    %415 = vector.broadcast %414 : vector<16x1xi1> to vector<16x128xi1>
    %416 = vector.broadcast %cst_130 : f32 to vector<16x128xf32>
    %417 = arith.select %415, %416, %408 : vector<16x128xi1>, vector<16x128xf32>
    %418 = tpu.concatenate %413, %417 in 1 : vector<16x128xf32>, vector<16x128xf32> -> vector<16x256xf32>
    %c0_131 = arith.constant 0 : index
    %c0_132 = arith.constant 0 : index
    %419 = vector.load %arg11[%c0_131, %c0_132] : memref<64x1024xf32, #tpu.memory_space<vmem>>, vector<8x512xf32>
    %c56_133 = arith.constant 56 : index
    %c512_134 = arith.constant 512 : index
    %420 = vector.load %arg11[%c56_133, %c512_134] : memref<64x1024xf32, #tpu.memory_space<vmem>>, vector<8x512xf32>
    %421 = tpu.concatenate %419, %420 in 0 : vector<8x512xf32>, vector<8x512xf32> -> vector<16x512xf32>
    %cst_135 = arith.constant dense<0.000000e+00> : vector<16x512xf32>
    %422 = tpu.matmul %418, %407, %cst_135 {dimension_numbers = #tpu.dot_dimension_numbers<[1], [0], [0], [1], [0, 0, 1, 1], [], []>} : vector<16x256xf32>, vector<256x512xf32>, vector<16x512xf32> -> vector<16x512xf32>
    %423 = arith.addf %421, %422 : vector<16x512xf32>
    %424 = vector.extract_strided_slice %423 {offsets = [0, 0], sizes = [16, 384], strides = [1, 1]} : vector<16x512xf32> to vector<16x384xf32>
    %425 = arith.negf %424 : vector<16x384xf32>
    %426 = math.exp %425 : vector<16x384xf32>
    %cst_136 = arith.constant 1.000000e+00 : f32
    %427 = vector.broadcast %cst_136 : f32 to vector<16x384xf32>
    %428 = arith.addf %427, %426 : vector<16x384xf32>
    %429 = arith.divf %427, %428 : vector<16x384xf32>
    %430 = vector.extract_strided_slice %423 {offsets = [0, 384], sizes = [16, 128], strides = [1, 1]} : vector<16x512xf32> to vector<16x128xf32>
    %431 = math.tanh %430 : vector<16x128xf32>
    %432 = vector.extract_strided_slice %429 {offsets = [0, 128], sizes = [16, 128], strides = [1, 1]} : vector<16x384xf32> to vector<16x128xf32>
    %433 = arith.mulf %432, %409 : vector<16x128xf32>
    %434 = vector.extract_strided_slice %429 {offsets = [0, 0], sizes = [16, 128], strides = [1, 1]} : vector<16x384xf32> to vector<16x128xf32>
    %435 = arith.mulf %434, %431 : vector<16x128xf32>
    %436 = arith.addf %433, %435 : vector<16x128xf32>
    %437 = vector.extract_strided_slice %429 {offsets = [0, 256], sizes = [16, 128], strides = [1, 1]} : vector<16x384xf32> to vector<16x128xf32>
    %438 = math.tanh %436 : vector<16x128xf32>
    %439 = arith.mulf %437, %438 : vector<16x128xf32>
    %c0_i32_137 = arith.constant 0 : i32
    %440 = vector.broadcast %c0_i32_137 : i32 to vector<8x1xi32>
    %441 = arith.cmpi sgt, %0, %440 : vector<8x1xi32>
    %c7_i32_138 = arith.constant 7 : i32
    %442 = vector.broadcast %c7_i32_138 : i32 to vector<8x1xi32>
    %443 = arith.cmpi sgt, %0, %442 : vector<8x1xi32>
    %444 = tpu.concatenate %441, %443 in 0 : vector<8x1xi1>, vector<8x1xi1> -> vector<16x1xi1>
    %445 = vector.shape_cast %444 : vector<16x1xi1> to vector<16x1xi1>
    %446 = vector.broadcast %445 : vector<16x1xi1> to vector<16x128xi1>
    %447 = arith.select %446, %439, %408 : vector<16x128xi1>, vector<16x128xf32>
    %448 = vector.shape_cast %444 : vector<16x1xi1> to vector<16x1xi1>
    %449 = vector.broadcast %448 : vector<16x1xi1> to vector<16x128xi1>
    %450 = arith.select %449, %436, %409 : vector<16x128xi1>, vector<16x128xf32>
    %cst_139 = arith.constant 0.000000e+00 : f32
    %451 = vector.shape_cast %444 : vector<16x1xi1> to vector<16x1xi1>
    %452 = vector.broadcast %451 : vector<16x1xi1> to vector<16x128xi1>
    %453 = vector.broadcast %cst_139 : f32 to vector<16x128xf32>
    %454 = arith.select %452, %439, %453 : vector<16x128xi1>, vector<16x128xf32>
    %455 = vector.extract_strided_slice %454 {offsets = [0, 0], sizes = [8, 128], strides = [1, 1]} : vector<16x128xf32> to vector<8x128xf32>
    %c0_140 = arith.constant 0 : index
    %c0_141 = arith.constant 0 : index
    %456 = vector.load %arg12[%c0_140, %c0_141] : memref<64x256xf32, #tpu.memory_space<vmem>>, vector<8x128xf32>
    tpu.vector_store %arg12[%c0_140, %c0_141], %455 {strides = array<i32>} : memref<64x256xf32, #tpu.memory_space<vmem>>, vector<8x128xf32>,
    %457 = vector.extract_strided_slice %454 {offsets = [8, 0], sizes = [8, 128], strides = [1, 1]} : vector<16x128xf32> to vector<8x128xf32>
    %c56_142 = arith.constant 56 : index
    %c128_143 = arith.constant 128 : index
    %458 = vector.load %arg12[%c56_142, %c128_143] : memref<64x256xf32, #tpu.memory_space<vmem>>, vector<8x128xf32>
    tpu.vector_store %arg12[%c56_142, %c128_143], %457 {strides = array<i32>} : memref<64x256xf32, #tpu.memory_space<vmem>>, vector<8x128xf32>,
    %cst_144 = arith.constant 0.000000e+00 : f32
    %459 = vector.shape_cast %3 : vector<16x1xi1> to vector<16x1xi1>
    %460 = vector.broadcast %459 : vector<16x1xi1> to vector<16x128xi1>
    %461 = vector.broadcast %cst_144 : f32 to vector<16x128xf32>
    %462 = arith.select %460, %447, %461 : vector<16x128xi1>, vector<16x128xf32>
    %cst_145 = arith.constant 0.000000e+00 : f32
    %463 = vector.shape_cast %3 : vector<16x1xi1> to vector<16x1xi1>
    %464 = vector.broadcast %463 : vector<16x1xi1> to vector<16x128xi1>
    %465 = vector.broadcast %cst_145 : f32 to vector<16x128xf32>
    %466 = arith.select %464, %465, %447 : vector<16x128xi1>, vector<16x128xf32>
    %467 = tpu.concatenate %462, %466 in 1 : vector<16x128xf32>, vector<16x128xf32> -> vector<16x256xf32>
    %c8_146 = arith.constant 8 : index
    %c0_147 = arith.constant 0 : index
    %468 = vector.load %arg11[%c8_146, %c0_147] : memref<64x1024xf32, #tpu.memory_space<vmem>>, vector<8x512xf32>
    %c48_148 = arith.constant 48 : index
    %c512_149 = arith.constant 512 : index
    %469 = vector.load %arg11[%c48_148, %c512_149] : memref<64x1024xf32, #tpu.memory_space<vmem>>, vector<8x512xf32>
    %470 = tpu.concatenate %468, %469 in 0 : vector<8x512xf32>, vector<8x512xf32> -> vector<16x512xf32>
    %cst_150 = arith.constant dense<0.000000e+00> : vector<16x512xf32>
    %471 = tpu.matmul %467, %407, %cst_150 {dimension_numbers = #tpu.dot_dimension_numbers<[1], [0], [0], [1], [0, 0, 1, 1], [], []>} : vector<16x256xf32>, vector<256x512xf32>, vector<16x512xf32> -> vector<16x512xf32>
    %472 = arith.addf %470, %471 : vector<16x512xf32>
    %473 = vector.extract_strided_slice %472 {offsets = [0, 0], sizes = [16, 384], strides = [1, 1]} : vector<16x512xf32> to vector<16x384xf32>
    %474 = arith.negf %473 : vector<16x384xf32>
    %475 = math.exp %474 : vector<16x384xf32>
    %cst_151 = arith.constant 1.000000e+00 : f32
    %476 = vector.broadcast %cst_151 : f32 to vector<16x384xf32>
    %477 = arith.addf %476, %475 : vector<16x384xf32>
    %478 = arith.divf %476, %477 : vector<16x384xf32>
    %479 = vector.extract_strided_slice %472 {offsets = [0, 384], sizes = [16, 128], strides = [1, 1]} : vector<16x512xf32> to vector<16x128xf32>
    %480 = math.tanh %479 : vector<16x128xf32>
    %481 = vector.extract_strided_slice %478 {offsets = [0, 128], sizes = [16, 128], strides = [1, 1]} : vector<16x384xf32> to vector<16x128xf32>
    %482 = arith.mulf %481, %450 : vector<16x128xf32>
    %483 = vector.extract_strided_slice %478 {offsets = [0, 0], sizes = [16, 128], strides = [1, 1]} : vector<16x384xf32> to vector<16x128xf32>
    %484 = arith.mulf %483, %480 : vector<16x128xf32>
    %485 = arith.addf %482, %484 : vector<16x128xf32>
    %486 = vector.extract_strided_slice %478 {offsets = [0, 256], sizes = [16, 128], strides = [1, 1]} : vector<16x384xf32> to vector<16x128xf32>
    %487 = math.tanh %485 : vector<16x128xf32>
    %488 = arith.mulf %486, %487 : vector<16x128xf32>
    %c1_i32_152 = arith.constant 1 : i32
    %489 = vector.broadcast %c1_i32_152 : i32 to vector<8x1xi32>
    %490 = arith.cmpi sgt, %0, %489 : vector<8x1xi32>
    %c6_i32_153 = arith.constant 6 : i32
    %491 = vector.broadcast %c6_i32_153 : i32 to vector<8x1xi32>
    %492 = arith.cmpi sgt, %0, %491 : vector<8x1xi32>
    %493 = tpu.concatenate %490, %492 in 0 : vector<8x1xi1>, vector<8x1xi1> -> vector<16x1xi1>
    %494 = vector.shape_cast %493 : vector<16x1xi1> to vector<16x1xi1>
    %495 = vector.broadcast %494 : vector<16x1xi1> to vector<16x128xi1>
    %496 = arith.select %495, %488, %447 : vector<16x128xi1>, vector<16x128xf32>
    %497 = vector.shape_cast %493 : vector<16x1xi1> to vector<16x1xi1>
    %498 = vector.broadcast %497 : vector<16x1xi1> to vector<16x128xi1>
    %499 = arith.select %498, %485, %450 : vector<16x128xi1>, vector<16x128xf32>
    %cst_154 = arith.constant 0.000000e+00 : f32
    %500 = vector.shape_cast %493 : vector<16x1xi1> to vector<16x1xi1>
    %501 = vector.broadcast %500 : vector<16x1xi1> to vector<16x128xi1>
    %502 = vector.broadcast %cst_154 : f32 to vector<16x128xf32>
    %503 = arith.select %501, %488, %502 : vector<16x128xi1>, vector<16x128xf32>
    %504 = vector.extract_strided_slice %503 {offsets = [0, 0], sizes = [8, 128], strides = [1, 1]} : vector<16x128xf32> to vector<8x128xf32>
    %c8_155 = arith.constant 8 : index
    %c0_156 = arith.constant 0 : index
    %505 = vector.load %arg12[%c8_155, %c0_156] : memref<64x256xf32, #tpu.memory_space<vmem>>, vector<8x128xf32>
    tpu.vector_store %arg12[%c8_155, %c0_156], %504 {strides = array<i32>} : memref<64x256xf32, #tpu.memory_space<vmem>>, vector<8x128xf32>,
    %506 = vector.extract_strided_slice %503 {offsets = [8, 0], sizes = [8, 128], strides = [1, 1]} : vector<16x128xf32> to vector<8x128xf32>
    %c48_157 = arith.constant 48 : index
    %c128_158 = arith.constant 128 : index
    %507 = vector.load %arg12[%c48_157, %c128_158] : memref<64x256xf32, #tpu.memory_space<vmem>>, vector<8x128xf32>
    tpu.vector_store %arg12[%c48_157, %c128_158], %506 {strides = array<i32>} : memref<64x256xf32, #tpu.memory_space<vmem>>, vector<8x128xf32>,
    %cst_159 = arith.constant 0.000000e+00 : f32
    %508 = vector.shape_cast %3 : vector<16x1xi1> to vector<16x1xi1>
    %509 = vector.broadcast %508 : vector<16x1xi1> to vector<16x128xi1>
    %510 = vector.broadcast %cst_159 : f32 to vector<16x128xf32>
    %511 = arith.select %509, %496, %510 : vector<16x128xi1>, vector<16x128xf32>
    %cst_160 = arith.constant 0.000000e+00 : f32
    %512 = vector.shape_cast %3 : vector<16x1xi1> to vector<16x1xi1>
    %513 = vector.broadcast %512 : vector<16x1xi1> to vector<16x128xi1>
    %514 = vector.broadcast %cst_160 : f32 to vector<16x128xf32>
    %515 = arith.select %513, %514, %496 : vector<16x128xi1>, vector<16x128xf32>
    %516 = tpu.concatenate %511, %515 in 1 : vector<16x128xf32>, vector<16x128xf32> -> vector<16x256xf32>
    %c16_161 = arith.constant 16 : index
    %c0_162 = arith.constant 0 : index
    %517 = vector.load %arg11[%c16_161, %c0_162] : memref<64x1024xf32, #tpu.memory_space<vmem>>, vector<8x512xf32>
    %c40_163 = arith.constant 40 : index
    %c512_164 = arith.constant 512 : index
    %518 = vector.load %arg11[%c40_163, %c512_164] : memref<64x1024xf32, #tpu.memory_space<vmem>>, vector<8x512xf32>
    %519 = tpu.concatenate %517, %518 in 0 : vector<8x512xf32>, vector<8x512xf32> -> vector<16x512xf32>
    %cst_165 = arith.constant dense<0.000000e+00> : vector<16x512xf32>
    %520 = tpu.matmul %516, %407, %cst_165 {dimension_numbers = #tpu.dot_dimension_numbers<[1], [0], [0], [1], [0, 0, 1, 1], [], []>} : vector<16x256xf32>, vector<256x512xf32>, vector<16x512xf32> -> vector<16x512xf32>
    %521 = arith.addf %519, %520 : vector<16x512xf32>
    %522 = vector.extract_strided_slice %521 {offsets = [0, 0], sizes = [16, 384], strides = [1, 1]} : vector<16x512xf32> to vector<16x384xf32>
    %523 = arith.negf %522 : vector<16x384xf32>
    %524 = math.exp %523 : vector<16x384xf32>
    %cst_166 = arith.constant 1.000000e+00 : f32
    %525 = vector.broadcast %cst_166 : f32 to vector<16x384xf32>
    %526 = arith.addf %525, %524 : vector<16x384xf32>
    %527 = arith.divf %525, %526 : vector<16x384xf32>
    %528 = vector.extract_strided_slice %521 {offsets = [0, 384], sizes = [16, 128], strides = [1, 1]} : vector<16x512xf32> to vector<16x128xf32>
    %529 = math.tanh %528 : vector<16x128xf32>
    %530 = vector.extract_strided_slice %527 {offsets = [0, 128], sizes = [16, 128], strides = [1, 1]} : vector<16x384xf32> to vector<16x128xf32>
    %531 = arith.mulf %530, %499 : vector<16x128xf32>
    %532 = vector.extract_strided_slice %527 {offsets = [0, 0], sizes = [16, 128], strides = [1, 1]} : vector<16x384xf32> to vector<16x128xf32>
    %533 = arith.mulf %532, %529 : vector<16x128xf32>
    %534 = arith.addf %531, %533 : vector<16x128xf32>
    %535 = vector.extract_strided_slice %527 {offsets = [0, 256], sizes = [16, 128], strides = [1, 1]} : vector<16x384xf32> to vector<16x128xf32>
    %536 = math.tanh %534 : vector<16x128xf32>
    %537 = arith.mulf %535, %536 : vector<16x128xf32>
    %c2_i32_167 = arith.constant 2 : i32
    %538 = vector.broadcast %c2_i32_167 : i32 to vector<8x1xi32>
    %539 = arith.cmpi sgt, %0, %538 : vector<8x1xi32>
    %c5_i32_168 = arith.constant 5 : i32
    %540 = vector.broadcast %c5_i32_168 : i32 to vector<8x1xi32>
    %541 = arith.cmpi sgt, %0, %540 : vector<8x1xi32>
    %542 = tpu.concatenate %539, %541 in 0 : vector<8x1xi1>, vector<8x1xi1> -> vector<16x1xi1>
    %543 = vector.shape_cast %542 : vector<16x1xi1> to vector<16x1xi1>
    %544 = vector.broadcast %543 : vector<16x1xi1> to vector<16x128xi1>
    %545 = arith.select %544, %537, %496 : vector<16x128xi1>, vector<16x128xf32>
    %546 = vector.shape_cast %542 : vector<16x1xi1> to vector<16x1xi1>
    %547 = vector.broadcast %546 : vector<16x1xi1> to vector<16x128xi1>
    %548 = arith.select %547, %534, %499 : vector<16x128xi1>, vector<16x128xf32>
    %cst_169 = arith.constant 0.000000e+00 : f32
    %549 = vector.shape_cast %542 : vector<16x1xi1> to vector<16x1xi1>
    %550 = vector.broadcast %549 : vector<16x1xi1> to vector<16x128xi1>
    %551 = vector.broadcast %cst_169 : f32 to vector<16x128xf32>
    %552 = arith.select %550, %537, %551 : vector<16x128xi1>, vector<16x128xf32>
    %553 = vector.extract_strided_slice %552 {offsets = [0, 0], sizes = [8, 128], strides = [1, 1]} : vector<16x128xf32> to vector<8x128xf32>
    %c16_170 = arith.constant 16 : index
    %c0_171 = arith.constant 0 : index
    %554 = vector.load %arg12[%c16_170, %c0_171] : memref<64x256xf32, #tpu.memory_space<vmem>>, vector<8x128xf32>
    tpu.vector_store %arg12[%c16_170, %c0_171], %553 {strides = array<i32>} : memref<64x256xf32, #tpu.memory_space<vmem>>, vector<8x128xf32>,
    %555 = vector.extract_strided_slice %552 {offsets = [8, 0], sizes = [8, 128], strides = [1, 1]} : vector<16x128xf32> to vector<8x128xf32>
    %c40_172 = arith.constant 40 : index
    %c128_173 = arith.constant 128 : index
    %556 = vector.load %arg12[%c40_172, %c128_173] : memref<64x256xf32, #tpu.memory_space<vmem>>, vector<8x128xf32>
    tpu.vector_store %arg12[%c40_172, %c128_173], %555 {strides = array<i32>} : memref<64x256xf32, #tpu.memory_space<vmem>>, vector<8x128xf32>,
    %cst_174 = arith.constant 0.000000e+00 : f32
    %557 = vector.shape_cast %3 : vector<16x1xi1> to vector<16x1xi1>
    %558 = vector.broadcast %557 : vector<16x1xi1> to vector<16x128xi1>
    %559 = vector.broadcast %cst_174 : f32 to vector<16x128xf32>
    %560 = arith.select %558, %545, %559 : vector<16x128xi1>, vector<16x128xf32>
    %cst_175 = arith.constant 0.000000e+00 : f32
    %561 = vector.shape_cast %3 : vector<16x1xi1> to vector<16x1xi1>
    %562 = vector.broadcast %561 : vector<16x1xi1> to vector<16x128xi1>
    %563 = vector.broadcast %cst_175 : f32 to vector<16x128xf32>
    %564 = arith.select %562, %563, %545 : vector<16x128xi1>, vector<16x128xf32>
    %565 = tpu.concatenate %560, %564 in 1 : vector<16x128xf32>, vector<16x128xf32> -> vector<16x256xf32>
    %c24_176 = arith.constant 24 : index
    %c0_177 = arith.constant 0 : index
    %566 = vector.load %arg11[%c24_176, %c0_177] : memref<64x1024xf32, #tpu.memory_space<vmem>>, vector<8x512xf32>
    %c32_178 = arith.constant 32 : index
    %c512_179 = arith.constant 512 : index
    %567 = vector.load %arg11[%c32_178, %c512_179] : memref<64x1024xf32, #tpu.memory_space<vmem>>, vector<8x512xf32>
    %568 = tpu.concatenate %566, %567 in 0 : vector<8x512xf32>, vector<8x512xf32> -> vector<16x512xf32>
    %cst_180 = arith.constant dense<0.000000e+00> : vector<16x512xf32>
    %569 = tpu.matmul %565, %407, %cst_180 {dimension_numbers = #tpu.dot_dimension_numbers<[1], [0], [0], [1], [0, 0, 1, 1], [], []>} : vector<16x256xf32>, vector<256x512xf32>, vector<16x512xf32> -> vector<16x512xf32>
    %570 = arith.addf %568, %569 : vector<16x512xf32>
    %571 = vector.extract_strided_slice %570 {offsets = [0, 0], sizes = [16, 384], strides = [1, 1]} : vector<16x512xf32> to vector<16x384xf32>
    %572 = arith.negf %571 : vector<16x384xf32>
    %573 = math.exp %572 : vector<16x384xf32>
    %cst_181 = arith.constant 1.000000e+00 : f32
    %574 = vector.broadcast %cst_181 : f32 to vector<16x384xf32>
    %575 = arith.addf %574, %573 : vector<16x384xf32>
    %576 = arith.divf %574, %575 : vector<16x384xf32>
    %577 = vector.extract_strided_slice %570 {offsets = [0, 384], sizes = [16, 128], strides = [1, 1]} : vector<16x512xf32> to vector<16x128xf32>
    %578 = math.tanh %577 : vector<16x128xf32>
    %579 = vector.extract_strided_slice %576 {offsets = [0, 128], sizes = [16, 128], strides = [1, 1]} : vector<16x384xf32> to vector<16x128xf32>
    %580 = arith.mulf %579, %548 : vector<16x128xf32>
    %581 = vector.extract_strided_slice %576 {offsets = [0, 0], sizes = [16, 128], strides = [1, 1]} : vector<16x384xf32> to vector<16x128xf32>
    %582 = arith.mulf %581, %578 : vector<16x128xf32>
    %583 = arith.addf %580, %582 : vector<16x128xf32>
    %584 = vector.extract_strided_slice %576 {offsets = [0, 256], sizes = [16, 128], strides = [1, 1]} : vector<16x384xf32> to vector<16x128xf32>
    %585 = math.tanh %583 : vector<16x128xf32>
    %586 = arith.mulf %584, %585 : vector<16x128xf32>
    %c3_i32_182 = arith.constant 3 : i32
    %587 = vector.broadcast %c3_i32_182 : i32 to vector<8x1xi32>
    %588 = arith.cmpi sgt, %0, %587 : vector<8x1xi32>
    %c4_i32_183 = arith.constant 4 : i32
    %589 = vector.broadcast %c4_i32_183 : i32 to vector<8x1xi32>
    %590 = arith.cmpi sgt, %0, %589 : vector<8x1xi32>
    %591 = tpu.concatenate %588, %590 in 0 : vector<8x1xi1>, vector<8x1xi1> -> vector<16x1xi1>
    %592 = vector.shape_cast %591 : vector<16x1xi1> to vector<16x1xi1>
    %593 = vector.broadcast %592 : vector<16x1xi1> to vector<16x128xi1>
    %594 = arith.select %593, %586, %545 : vector<16x128xi1>, vector<16x128xf32>
    %595 = vector.shape_cast %591 : vector<16x1xi1> to vector<16x1xi1>
    %596 = vector.broadcast %595 : vector<16x1xi1> to vector<16x128xi1>
    %597 = arith.select %596, %583, %548 : vector<16x128xi1>, vector<16x128xf32>
    %cst_184 = arith.constant 0.000000e+00 : f32
    %598 = vector.shape_cast %591 : vector<16x1xi1> to vector<16x1xi1>
    %599 = vector.broadcast %598 : vector<16x1xi1> to vector<16x128xi1>
    %600 = vector.broadcast %cst_184 : f32 to vector<16x128xf32>
    %601 = arith.select %599, %586, %600 : vector<16x128xi1>, vector<16x128xf32>
    %602 = vector.extract_strided_slice %601 {offsets = [0, 0], sizes = [8, 128], strides = [1, 1]} : vector<16x128xf32> to vector<8x128xf32>
    %c24_185 = arith.constant 24 : index
    %c0_186 = arith.constant 0 : index
    %603 = vector.load %arg12[%c24_185, %c0_186] : memref<64x256xf32, #tpu.memory_space<vmem>>, vector<8x128xf32>
    tpu.vector_store %arg12[%c24_185, %c0_186], %602 {strides = array<i32>} : memref<64x256xf32, #tpu.memory_space<vmem>>, vector<8x128xf32>,
    %604 = vector.extract_strided_slice %601 {offsets = [8, 0], sizes = [8, 128], strides = [1, 1]} : vector<16x128xf32> to vector<8x128xf32>
    %c32_187 = arith.constant 32 : index
    %c128_188 = arith.constant 128 : index
    %605 = vector.load %arg12[%c32_187, %c128_188] : memref<64x256xf32, #tpu.memory_space<vmem>>, vector<8x128xf32>
    tpu.vector_store %arg12[%c32_187, %c128_188], %604 {strides = array<i32>} : memref<64x256xf32, #tpu.memory_space<vmem>>, vector<8x128xf32>,
    %cst_189 = arith.constant 0.000000e+00 : f32
    %606 = vector.shape_cast %3 : vector<16x1xi1> to vector<16x1xi1>
    %607 = vector.broadcast %606 : vector<16x1xi1> to vector<16x128xi1>
    %608 = vector.broadcast %cst_189 : f32 to vector<16x128xf32>
    %609 = arith.select %607, %594, %608 : vector<16x128xi1>, vector<16x128xf32>
    %cst_190 = arith.constant 0.000000e+00 : f32
    %610 = vector.shape_cast %3 : vector<16x1xi1> to vector<16x1xi1>
    %611 = vector.broadcast %610 : vector<16x1xi1> to vector<16x128xi1>
    %612 = vector.broadcast %cst_190 : f32 to vector<16x128xf32>
    %613 = arith.select %611, %612, %594 : vector<16x128xi1>, vector<16x128xf32>
    %614 = tpu.concatenate %609, %613 in 1 : vector<16x128xf32>, vector<16x128xf32> -> vector<16x256xf32>
    %c32_191 = arith.constant 32 : index
    %c0_192 = arith.constant 0 : index
    %615 = vector.load %arg11[%c32_191, %c0_192] : memref<64x1024xf32, #tpu.memory_space<vmem>>, vector<8x512xf32>
    %c24_193 = arith.constant 24 : index
    %c512_194 = arith.constant 512 : index
    %616 = vector.load %arg11[%c24_193, %c512_194] : memref<64x1024xf32, #tpu.memory_space<vmem>>, vector<8x512xf32>
    %617 = tpu.concatenate %615, %616 in 0 : vector<8x512xf32>, vector<8x512xf32> -> vector<16x512xf32>
    %cst_195 = arith.constant dense<0.000000e+00> : vector<16x512xf32>
    %618 = tpu.matmul %614, %407, %cst_195 {dimension_numbers = #tpu.dot_dimension_numbers<[1], [0], [0], [1], [0, 0, 1, 1], [], []>} : vector<16x256xf32>, vector<256x512xf32>, vector<16x512xf32> -> vector<16x512xf32>
    %619 = arith.addf %617, %618 : vector<16x512xf32>
    %620 = vector.extract_strided_slice %619 {offsets = [0, 0], sizes = [16, 384], strides = [1, 1]} : vector<16x512xf32> to vector<16x384xf32>
    %621 = arith.negf %620 : vector<16x384xf32>
    %622 = math.exp %621 : vector<16x384xf32>
    %cst_196 = arith.constant 1.000000e+00 : f32
    %623 = vector.broadcast %cst_196 : f32 to vector<16x384xf32>
    %624 = arith.addf %623, %622 : vector<16x384xf32>
    %625 = arith.divf %623, %624 : vector<16x384xf32>
    %626 = vector.extract_strided_slice %619 {offsets = [0, 384], sizes = [16, 128], strides = [1, 1]} : vector<16x512xf32> to vector<16x128xf32>
    %627 = math.tanh %626 : vector<16x128xf32>
    %628 = vector.extract_strided_slice %625 {offsets = [0, 128], sizes = [16, 128], strides = [1, 1]} : vector<16x384xf32> to vector<16x128xf32>
    %629 = arith.mulf %628, %597 : vector<16x128xf32>
    %630 = vector.extract_strided_slice %625 {offsets = [0, 0], sizes = [16, 128], strides = [1, 1]} : vector<16x384xf32> to vector<16x128xf32>
    %631 = arith.mulf %630, %627 : vector<16x128xf32>
    %632 = arith.addf %629, %631 : vector<16x128xf32>
    %633 = vector.extract_strided_slice %625 {offsets = [0, 256], sizes = [16, 128], strides = [1, 1]} : vector<16x384xf32> to vector<16x128xf32>
    %634 = math.tanh %632 : vector<16x128xf32>
    %635 = arith.mulf %633, %634 : vector<16x128xf32>
    %c4_i32_197 = arith.constant 4 : i32
    %636 = vector.broadcast %c4_i32_197 : i32 to vector<8x1xi32>
    %637 = arith.cmpi sgt, %0, %636 : vector<8x1xi32>
    %c3_i32_198 = arith.constant 3 : i32
    %638 = vector.broadcast %c3_i32_198 : i32 to vector<8x1xi32>
    %639 = arith.cmpi sgt, %0, %638 : vector<8x1xi32>
    %640 = tpu.concatenate %637, %639 in 0 : vector<8x1xi1>, vector<8x1xi1> -> vector<16x1xi1>
    %641 = vector.shape_cast %640 : vector<16x1xi1> to vector<16x1xi1>
    %642 = vector.broadcast %641 : vector<16x1xi1> to vector<16x128xi1>
    %643 = arith.select %642, %635, %594 : vector<16x128xi1>, vector<16x128xf32>
    %644 = vector.shape_cast %640 : vector<16x1xi1> to vector<16x1xi1>
    %645 = vector.broadcast %644 : vector<16x1xi1> to vector<16x128xi1>
    %646 = arith.select %645, %632, %597 : vector<16x128xi1>, vector<16x128xf32>
    %cst_199 = arith.constant 0.000000e+00 : f32
    %647 = vector.shape_cast %640 : vector<16x1xi1> to vector<16x1xi1>
    %648 = vector.broadcast %647 : vector<16x1xi1> to vector<16x128xi1>
    %649 = vector.broadcast %cst_199 : f32 to vector<16x128xf32>
    %650 = arith.select %648, %635, %649 : vector<16x128xi1>, vector<16x128xf32>
    %651 = vector.extract_strided_slice %650 {offsets = [0, 0], sizes = [8, 128], strides = [1, 1]} : vector<16x128xf32> to vector<8x128xf32>
    %c32_200 = arith.constant 32 : index
    %c0_201 = arith.constant 0 : index
    %652 = vector.load %arg12[%c32_200, %c0_201] : memref<64x256xf32, #tpu.memory_space<vmem>>, vector<8x128xf32>
    tpu.vector_store %arg12[%c32_200, %c0_201], %651 {strides = array<i32>} : memref<64x256xf32, #tpu.memory_space<vmem>>, vector<8x128xf32>,
    %653 = vector.extract_strided_slice %650 {offsets = [8, 0], sizes = [8, 128], strides = [1, 1]} : vector<16x128xf32> to vector<8x128xf32>
    %c24_202 = arith.constant 24 : index
    %c128_203 = arith.constant 128 : index
    %654 = vector.load %arg12[%c24_202, %c128_203] : memref<64x256xf32, #tpu.memory_space<vmem>>, vector<8x128xf32>
    tpu.vector_store %arg12[%c24_202, %c128_203], %653 {strides = array<i32>} : memref<64x256xf32, #tpu.memory_space<vmem>>, vector<8x128xf32>,
    %cst_204 = arith.constant 0.000000e+00 : f32
    %655 = vector.shape_cast %3 : vector<16x1xi1> to vector<16x1xi1>
    %656 = vector.broadcast %655 : vector<16x1xi1> to vector<16x128xi1>
    %657 = vector.broadcast %cst_204 : f32 to vector<16x128xf32>
    %658 = arith.select %656, %643, %657 : vector<16x128xi1>, vector<16x128xf32>
    %cst_205 = arith.constant 0.000000e+00 : f32
    %659 = vector.shape_cast %3 : vector<16x1xi1> to vector<16x1xi1>
    %660 = vector.broadcast %659 : vector<16x1xi1> to vector<16x128xi1>
    %661 = vector.broadcast %cst_205 : f32 to vector<16x128xf32>
    %662 = arith.select %660, %661, %643 : vector<16x128xi1>, vector<16x128xf32>
    %663 = tpu.concatenate %658, %662 in 1 : vector<16x128xf32>, vector<16x128xf32> -> vector<16x256xf32>
    %c40_206 = arith.constant 40 : index
    %c0_207 = arith.constant 0 : index
    %664 = vector.load %arg11[%c40_206, %c0_207] : memref<64x1024xf32, #tpu.memory_space<vmem>>, vector<8x512xf32>
    %c16_208 = arith.constant 16 : index
    %c512_209 = arith.constant 512 : index
    %665 = vector.load %arg11[%c16_208, %c512_209] : memref<64x1024xf32, #tpu.memory_space<vmem>>, vector<8x512xf32>
    %666 = tpu.concatenate %664, %665 in 0 : vector<8x512xf32>, vector<8x512xf32> -> vector<16x512xf32>
    %cst_210 = arith.constant dense<0.000000e+00> : vector<16x512xf32>
    %667 = tpu.matmul %663, %407, %cst_210 {dimension_numbers = #tpu.dot_dimension_numbers<[1], [0], [0], [1], [0, 0, 1, 1], [], []>} : vector<16x256xf32>, vector<256x512xf32>, vector<16x512xf32> -> vector<16x512xf32>
    %668 = arith.addf %666, %667 : vector<16x512xf32>
    %669 = vector.extract_strided_slice %668 {offsets = [0, 0], sizes = [16, 384], strides = [1, 1]} : vector<16x512xf32> to vector<16x384xf32>
    %670 = arith.negf %669 : vector<16x384xf32>
    %671 = math.exp %670 : vector<16x384xf32>
    %cst_211 = arith.constant 1.000000e+00 : f32
    %672 = vector.broadcast %cst_211 : f32 to vector<16x384xf32>
    %673 = arith.addf %672, %671 : vector<16x384xf32>
    %674 = arith.divf %672, %673 : vector<16x384xf32>
    %675 = vector.extract_strided_slice %668 {offsets = [0, 384], sizes = [16, 128], strides = [1, 1]} : vector<16x512xf32> to vector<16x128xf32>
    %676 = math.tanh %675 : vector<16x128xf32>
    %677 = vector.extract_strided_slice %674 {offsets = [0, 128], sizes = [16, 128], strides = [1, 1]} : vector<16x384xf32> to vector<16x128xf32>
    %678 = arith.mulf %677, %646 : vector<16x128xf32>
    %679 = vector.extract_strided_slice %674 {offsets = [0, 0], sizes = [16, 128], strides = [1, 1]} : vector<16x384xf32> to vector<16x128xf32>
    %680 = arith.mulf %679, %676 : vector<16x128xf32>
    %681 = arith.addf %678, %680 : vector<16x128xf32>
    %682 = vector.extract_strided_slice %674 {offsets = [0, 256], sizes = [16, 128], strides = [1, 1]} : vector<16x384xf32> to vector<16x128xf32>
    %683 = math.tanh %681 : vector<16x128xf32>
    %684 = arith.mulf %682, %683 : vector<16x128xf32>
    %c5_i32_212 = arith.constant 5 : i32
    %685 = vector.broadcast %c5_i32_212 : i32 to vector<8x1xi32>
    %686 = arith.cmpi sgt, %0, %685 : vector<8x1xi32>
    %c2_i32_213 = arith.constant 2 : i32
    %687 = vector.broadcast %c2_i32_213 : i32 to vector<8x1xi32>
    %688 = arith.cmpi sgt, %0, %687 : vector<8x1xi32>
    %689 = tpu.concatenate %686, %688 in 0 : vector<8x1xi1>, vector<8x1xi1> -> vector<16x1xi1>
    %690 = vector.shape_cast %689 : vector<16x1xi1> to vector<16x1xi1>
    %691 = vector.broadcast %690 : vector<16x1xi1> to vector<16x128xi1>
    %692 = arith.select %691, %684, %643 : vector<16x128xi1>, vector<16x128xf32>
    %693 = vector.shape_cast %689 : vector<16x1xi1> to vector<16x1xi1>
    %694 = vector.broadcast %693 : vector<16x1xi1> to vector<16x128xi1>
    %695 = arith.select %694, %681, %646 : vector<16x128xi1>, vector<16x128xf32>
    %cst_214 = arith.constant 0.000000e+00 : f32
    %696 = vector.shape_cast %689 : vector<16x1xi1> to vector<16x1xi1>
    %697 = vector.broadcast %696 : vector<16x1xi1> to vector<16x128xi1>
    %698 = vector.broadcast %cst_214 : f32 to vector<16x128xf32>
    %699 = arith.select %697, %684, %698 : vector<16x128xi1>, vector<16x128xf32>
    %700 = vector.extract_strided_slice %699 {offsets = [0, 0], sizes = [8, 128], strides = [1, 1]} : vector<16x128xf32> to vector<8x128xf32>
    %c40_215 = arith.constant 40 : index
    %c0_216 = arith.constant 0 : index
    %701 = vector.load %arg12[%c40_215, %c0_216] : memref<64x256xf32, #tpu.memory_space<vmem>>, vector<8x128xf32>
    tpu.vector_store %arg12[%c40_215, %c0_216], %700 {strides = array<i32>} : memref<64x256xf32, #tpu.memory_space<vmem>>, vector<8x128xf32>,
    %702 = vector.extract_strided_slice %699 {offsets = [8, 0], sizes = [8, 128], strides = [1, 1]} : vector<16x128xf32> to vector<8x128xf32>
    %c16_217 = arith.constant 16 : index
    %c128_218 = arith.constant 128 : index
    %703 = vector.load %arg12[%c16_217, %c128_218] : memref<64x256xf32, #tpu.memory_space<vmem>>, vector<8x128xf32>
    tpu.vector_store %arg12[%c16_217, %c128_218], %702 {strides = array<i32>} : memref<64x256xf32, #tpu.memory_space<vmem>>, vector<8x128xf32>,
    %cst_219 = arith.constant 0.000000e+00 : f32
    %704 = vector.shape_cast %3 : vector<16x1xi1> to vector<16x1xi1>
    %705 = vector.broadcast %704 : vector<16x1xi1> to vector<16x128xi1>
    %706 = vector.broadcast %cst_219 : f32 to vector<16x128xf32>
    %707 = arith.select %705, %692, %706 : vector<16x128xi1>, vector<16x128xf32>
    %cst_220 = arith.constant 0.000000e+00 : f32
    %708 = vector.shape_cast %3 : vector<16x1xi1> to vector<16x1xi1>
    %709 = vector.broadcast %708 : vector<16x1xi1> to vector<16x128xi1>
    %710 = vector.broadcast %cst_220 : f32 to vector<16x128xf32>
    %711 = arith.select %709, %710, %692 : vector<16x128xi1>, vector<16x128xf32>
    %712 = tpu.concatenate %707, %711 in 1 : vector<16x128xf32>, vector<16x128xf32> -> vector<16x256xf32>
    %c48_221 = arith.constant 48 : index
    %c0_222 = arith.constant 0 : index
    %713 = vector.load %arg11[%c48_221, %c0_222] : memref<64x1024xf32, #tpu.memory_space<vmem>>, vector<8x512xf32>
    %c8_223 = arith.constant 8 : index
    %c512_224 = arith.constant 512 : index
    %714 = vector.load %arg11[%c8_223, %c512_224] : memref<64x1024xf32, #tpu.memory_space<vmem>>, vector<8x512xf32>
    %715 = tpu.concatenate %713, %714 in 0 : vector<8x512xf32>, vector<8x512xf32> -> vector<16x512xf32>
    %cst_225 = arith.constant dense<0.000000e+00> : vector<16x512xf32>
    %716 = tpu.matmul %712, %407, %cst_225 {dimension_numbers = #tpu.dot_dimension_numbers<[1], [0], [0], [1], [0, 0, 1, 1], [], []>} : vector<16x256xf32>, vector<256x512xf32>, vector<16x512xf32> -> vector<16x512xf32>
    %717 = arith.addf %715, %716 : vector<16x512xf32>
    %718 = vector.extract_strided_slice %717 {offsets = [0, 0], sizes = [16, 384], strides = [1, 1]} : vector<16x512xf32> to vector<16x384xf32>
    %719 = arith.negf %718 : vector<16x384xf32>
    %720 = math.exp %719 : vector<16x384xf32>
    %cst_226 = arith.constant 1.000000e+00 : f32
    %721 = vector.broadcast %cst_226 : f32 to vector<16x384xf32>
    %722 = arith.addf %721, %720 : vector<16x384xf32>
    %723 = arith.divf %721, %722 : vector<16x384xf32>
    %724 = vector.extract_strided_slice %717 {offsets = [0, 384], sizes = [16, 128], strides = [1, 1]} : vector<16x512xf32> to vector<16x128xf32>
    %725 = math.tanh %724 : vector<16x128xf32>
    %726 = vector.extract_strided_slice %723 {offsets = [0, 128], sizes = [16, 128], strides = [1, 1]} : vector<16x384xf32> to vector<16x128xf32>
    %727 = arith.mulf %726, %695 : vector<16x128xf32>
    %728 = vector.extract_strided_slice %723 {offsets = [0, 0], sizes = [16, 128], strides = [1, 1]} : vector<16x384xf32> to vector<16x128xf32>
    %729 = arith.mulf %728, %725 : vector<16x128xf32>
    %730 = arith.addf %727, %729 : vector<16x128xf32>
    %731 = vector.extract_strided_slice %723 {offsets = [0, 256], sizes = [16, 128], strides = [1, 1]} : vector<16x384xf32> to vector<16x128xf32>
    %732 = math.tanh %730 : vector<16x128xf32>
    %733 = arith.mulf %731, %732 : vector<16x128xf32>
    %c6_i32_227 = arith.constant 6 : i32
    %734 = vector.broadcast %c6_i32_227 : i32 to vector<8x1xi32>
    %735 = arith.cmpi sgt, %0, %734 : vector<8x1xi32>
    %c1_i32_228 = arith.constant 1 : i32
    %736 = vector.broadcast %c1_i32_228 : i32 to vector<8x1xi32>
    %737 = arith.cmpi sgt, %0, %736 : vector<8x1xi32>
    %738 = tpu.concatenate %735, %737 in 0 : vector<8x1xi1>, vector<8x1xi1> -> vector<16x1xi1>
    %739 = vector.shape_cast %738 : vector<16x1xi1> to vector<16x1xi1>
    %740 = vector.broadcast %739 : vector<16x1xi1> to vector<16x128xi1>
    %741 = arith.select %740, %733, %692 : vector<16x128xi1>, vector<16x128xf32>
    %742 = vector.shape_cast %738 : vector<16x1xi1> to vector<16x1xi1>
    %743 = vector.broadcast %742 : vector<16x1xi1> to vector<16x128xi1>
    %744 = arith.select %743, %730, %695 : vector<16x128xi1>, vector<16x128xf32>
    %cst_229 = arith.constant 0.000000e+00 : f32
    %745 = vector.shape_cast %738 : vector<16x1xi1> to vector<16x1xi1>
    %746 = vector.broadcast %745 : vector<16x1xi1> to vector<16x128xi1>
    %747 = vector.broadcast %cst_229 : f32 to vector<16x128xf32>
    %748 = arith.select %746, %733, %747 : vector<16x128xi1>, vector<16x128xf32>
    %749 = vector.extract_strided_slice %748 {offsets = [0, 0], sizes = [8, 128], strides = [1, 1]} : vector<16x128xf32> to vector<8x128xf32>
    %c48_230 = arith.constant 48 : index
    %c0_231 = arith.constant 0 : index
    %750 = vector.load %arg12[%c48_230, %c0_231] : memref<64x256xf32, #tpu.memory_space<vmem>>, vector<8x128xf32>
    tpu.vector_store %arg12[%c48_230, %c0_231], %749 {strides = array<i32>} : memref<64x256xf32, #tpu.memory_space<vmem>>, vector<8x128xf32>,
    %751 = vector.extract_strided_slice %748 {offsets = [8, 0], sizes = [8, 128], strides = [1, 1]} : vector<16x128xf32> to vector<8x128xf32>
    %c8_232 = arith.constant 8 : index
    %c128_233 = arith.constant 128 : index
    %752 = vector.load %arg12[%c8_232, %c128_233] : memref<64x256xf32, #tpu.memory_space<vmem>>, vector<8x128xf32>
    tpu.vector_store %arg12[%c8_232, %c128_233], %751 {strides = array<i32>} : memref<64x256xf32, #tpu.memory_space<vmem>>, vector<8x128xf32>,
    %cst_234 = arith.constant 0.000000e+00 : f32
    %753 = vector.shape_cast %3 : vector<16x1xi1> to vector<16x1xi1>
    %754 = vector.broadcast %753 : vector<16x1xi1> to vector<16x128xi1>
    %755 = vector.broadcast %cst_234 : f32 to vector<16x128xf32>
    %756 = arith.select %754, %741, %755 : vector<16x128xi1>, vector<16x128xf32>
    %cst_235 = arith.constant 0.000000e+00 : f32
    %757 = vector.shape_cast %3 : vector<16x1xi1> to vector<16x1xi1>
    %758 = vector.broadcast %757 : vector<16x1xi1> to vector<16x128xi1>
    %759 = vector.broadcast %cst_235 : f32 to vector<16x128xf32>
    %760 = arith.select %758, %759, %741 : vector<16x128xi1>, vector<16x128xf32>
    %761 = tpu.concatenate %756, %760 in 1 : vector<16x128xf32>, vector<16x128xf32> -> vector<16x256xf32>
    %c56_236 = arith.constant 56 : index
    %c0_237 = arith.constant 0 : index
    %762 = vector.load %arg11[%c56_236, %c0_237] : memref<64x1024xf32, #tpu.memory_space<vmem>>, vector<8x512xf32>
    %c0_238 = arith.constant 0 : index
    %c512_239 = arith.constant 512 : index
    %763 = vector.load %arg11[%c0_238, %c512_239] : memref<64x1024xf32, #tpu.memory_space<vmem>>, vector<8x512xf32>
    %764 = tpu.concatenate %762, %763 in 0 : vector<8x512xf32>, vector<8x512xf32> -> vector<16x512xf32>
    %cst_240 = arith.constant dense<0.000000e+00> : vector<16x512xf32>
    %765 = tpu.matmul %761, %407, %cst_240 {dimension_numbers = #tpu.dot_dimension_numbers<[1], [0], [0], [1], [0, 0, 1, 1], [], []>} : vector<16x256xf32>, vector<256x512xf32>, vector<16x512xf32> -> vector<16x512xf32>
    %766 = arith.addf %764, %765 : vector<16x512xf32>
    %767 = vector.extract_strided_slice %766 {offsets = [0, 0], sizes = [16, 384], strides = [1, 1]} : vector<16x512xf32> to vector<16x384xf32>
    %768 = arith.negf %767 : vector<16x384xf32>
    %769 = math.exp %768 : vector<16x384xf32>
    %cst_241 = arith.constant 1.000000e+00 : f32
    %770 = vector.broadcast %cst_241 : f32 to vector<16x384xf32>
    %771 = arith.addf %770, %769 : vector<16x384xf32>
    %772 = arith.divf %770, %771 : vector<16x384xf32>
    %773 = vector.extract_strided_slice %766 {offsets = [0, 384], sizes = [16, 128], strides = [1, 1]} : vector<16x512xf32> to vector<16x128xf32>
    %774 = math.tanh %773 : vector<16x128xf32>
    %775 = vector.extract_strided_slice %772 {offsets = [0, 128], sizes = [16, 128], strides = [1, 1]} : vector<16x384xf32> to vector<16x128xf32>
    %776 = arith.mulf %775, %744 : vector<16x128xf32>
    %777 = vector.extract_strided_slice %772 {offsets = [0, 0], sizes = [16, 128], strides = [1, 1]} : vector<16x384xf32> to vector<16x128xf32>
    %778 = arith.mulf %777, %774 : vector<16x128xf32>
    %779 = arith.addf %776, %778 : vector<16x128xf32>
    %780 = vector.extract_strided_slice %772 {offsets = [0, 256], sizes = [16, 128], strides = [1, 1]} : vector<16x384xf32> to vector<16x128xf32>
    %781 = math.tanh %779 : vector<16x128xf32>
    %782 = arith.mulf %780, %781 : vector<16x128xf32>
    %c7_i32_242 = arith.constant 7 : i32
    %783 = vector.broadcast %c7_i32_242 : i32 to vector<8x1xi32>
    %784 = arith.cmpi sgt, %0, %783 : vector<8x1xi32>
    %c0_i32_243 = arith.constant 0 : i32
    %785 = vector.broadcast %c0_i32_243 : i32 to vector<8x1xi32>
    %786 = arith.cmpi sgt, %0, %785 : vector<8x1xi32>
    %787 = tpu.concatenate %784, %786 in 0 : vector<8x1xi1>, vector<8x1xi1> -> vector<16x1xi1>
    %cst_244 = arith.constant 0.000000e+00 : f32
    %788 = vector.shape_cast %787 : vector<16x1xi1> to vector<16x1xi1>
    %789 = vector.broadcast %788 : vector<16x1xi1> to vector<16x128xi1>
    %790 = vector.broadcast %cst_244 : f32 to vector<16x128xf32>
    %791 = arith.select %789, %782, %790 : vector<16x128xi1>, vector<16x128xf32>
    %792 = vector.extract_strided_slice %791 {offsets = [0, 0], sizes = [8, 128], strides = [1, 1]} : vector<16x128xf32> to vector<8x128xf32>
    %c56_245 = arith.constant 56 : index
    %c0_246 = arith.constant 0 : index
    %793 = vector.load %arg12[%c56_245, %c0_246] : memref<64x256xf32, #tpu.memory_space<vmem>>, vector<8x128xf32>
    tpu.vector_store %arg12[%c56_245, %c0_246], %792 {strides = array<i32>} : memref<64x256xf32, #tpu.memory_space<vmem>>, vector<8x128xf32>,
    %794 = vector.extract_strided_slice %791 {offsets = [8, 0], sizes = [8, 128], strides = [1, 1]} : vector<16x128xf32> to vector<8x128xf32>
    %c0_247 = arith.constant 0 : index
    %c128_248 = arith.constant 128 : index
    %795 = vector.load %arg12[%c0_247, %c128_248] : memref<64x256xf32, #tpu.memory_space<vmem>>, vector<8x128xf32>
    tpu.vector_store %arg12[%c0_247, %c128_248], %794 {strides = array<i32>} : memref<64x256xf32, #tpu.memory_space<vmem>>, vector<8x128xf32>,
    %c0_249 = arith.constant 0 : index
    %c0_250 = arith.constant 0 : index
    %796 = vector.load %arg12[%c0_249, %c0_250] : memref<64x256xf32, #tpu.memory_space<vmem>>, vector<64x256xf32>
    %c0_251 = arith.constant 0 : index
    %c0_252 = arith.constant 0 : index
    %797 = vector.load %arg8[%c0_251, %c0_252] : memref<256x128xf32, #tpu.memory_space<vmem>>, vector<256x128xf32>
    %cst_253 = arith.constant dense<0.000000e+00> : vector<64x128xf32>
    %798 = tpu.matmul %796, %797, %cst_253 {dimension_numbers = #tpu.dot_dimension_numbers<[1], [0], [0], [1], [0, 0, 1, 1], [], []>} : vector<64x256xf32>, vector<256x128xf32>, vector<64x128xf32> -> vector<64x128xf32>
    %c0_254 = arith.constant 0 : index
    %c0_255 = arith.constant 0 : index
    %799 = vector.load %arg9[%c0_254, %c0_255] : memref<1x128xf32, #tpu.memory_space<vmem>>, vector<1x128xf32>
    %800 = vector.broadcast %799 : vector<1x128xf32> to vector<64x128xf32>
    %801 = arith.addf %798, %800 : vector<64x128xf32>
    %c0_256 = arith.constant 0 : index
    %c0_257 = arith.constant 0 : index
    %802 = vector.load %arg10[%c0_256, %c0_257] : memref<64x128xf32, #tpu.memory_space<vmem>>, vector<64x128xf32>
    tpu.vector_store %arg10[%c0_256, %c0_257], %801 {strides = array<i32>} : memref<64x128xf32, #tpu.memory_space<vmem>>, vector<64x128xf32>,
    return
  }
}

</mosaic_0001>

<llo_original>
// kernel: _fused_forward.1
$region0: #{_fused_forward.1}
  #allocation0 [shape = 'u32[]', space=smem, size = 0x4, offset = 0x4, fixed_abs, tag = 'smem constant byte address 0x4 - core index']
  #allocation1 [shape = 'u32[144,128]{1,0:T(1,128)}', space=vmem, size = 0x12000, scoped, tag = 'internal scratch']
  #allocation2 [shape = 'f32[64,1024]{1,0:T(8,128)}', space=vmem, size = 0x40000, scoped, tag = 'scratch operand']
  #allocation3 [shape = 'f32[64,256]{1,0:T(8,128)}', space=vmem, size = 0x10000, scoped, tag = 'scratch operand']
  %s0 = inlined_call_operand.vmem [shape: f32[64,8], index: 0, kind: input, shape index: {}]
  %s1 = inlined_call_operand.vmem [shape: s32[8,1], index: 1, kind: input, shape index: {}]
  %s2 = inlined_call_operand.vmem [shape: f32[8,1024], index: 2, kind: input, shape index: {}]
  %s3 = inlined_call_operand.hbm [shape: f32[256,512], index: 3, kind: input, shape index: {}]
  %s4 = inlined_call_operand.vmem [shape: f32[1,1024], index: 4, kind: input, shape index: {}]
  %s5 = inlined_call_operand.hbm [shape: f32[256,1024], index: 5, kind: input, shape index: {}]
  %s6 = inlined_call_operand.hbm [shape: f32[256,512], index: 6, kind: input, shape index: {}]
  %s7 = inlined_call_operand.vmem [shape: f32[1,1024], index: 7, kind: input, shape index: {}]
  %s8 = inlined_call_operand.hbm [shape: f32[256,128], index: 8, kind: input, shape index: {}]
  %s9 = inlined_call_operand.vmem [shape: f32[1,128], index: 9, kind: input, shape index: {}]
  %s10 = inlined_call_operand.vmem [shape: f32[64,128], index: 10, kind: output, shape index: {}]
  %s11 = sld [smem:[#allocation0]]
  $region66: #{_fused_forward.1} parent=0
    _
  %s13 = ssub.s32 1, %s11
  %s14 = scalar_select 0, %s13, %s11
  $region1: #{_fused_forward.1} parent=0
    #allocation4 [shape = 'u8[524288]{0}', space=vmem, size = 0x80000, scoped, tag = 'input window, operand 3, single buffered']
    #allocation5 [shape = 's32[1]{0}', space=sflag, size = 0x4, scoped, tag = 'scoped memory for _fused_forward.1']
    #allocation6 [shape = 'u8[1048576]{0}', space=vmem, size = 0x100000, scoped, tag = 'input window, operand 5, single buffered']
    #allocation7 [shape = 's32[1]{0}', space=sflag, size = 0x4, scoped, tag = 'scoped memory for _fused_forward.1']
    #allocation8 [shape = 'u8[524288]{0}', space=vmem, size = 0x80000, scoped, tag = 'input window, operand 6, single buffered']
    #allocation9 [shape = 'u8[131072]{0}', space=vmem, size = 0x20000, scoped, tag = 'input window, operand 8, single buffered']
    #allocation10 [shape = 's32[1]{0}', space=sflag, size = 0x4, scoped, tag = 'scoped memory for _fused_forward.1']
    %15 = vsyncpa [#allocation5], 0
    %16 = vsyncpa [#allocation7], 0
    %17 = vsyncpa [#allocation10], 0
    // Predicated region
    $region2: #{_fused_forward.1} parent=1 // pred_check
      _
    $region3: #{_fused_forward.1} parent=1 // pred_check_branch
      %19 = sbr.rel (0) target = $region5
    $region4: #{_fused_forward.1} parent=1 // pred_region
      _
    $region5: #{_fused_forward.1} parent=1 // pred_fallthru
      _
    // Predicated region
    $region6: #{_fused_forward.1} parent=1 // pred_check
      _
    $region7: #{_fused_forward.1} parent=1 // pred_check_branch
      %21 = sbr.rel (0) target = $region9
    $region8: #{_fused_forward.1} parent=1 // pred_region
      _
    $region9: #{_fused_forward.1} parent=1 // pred_fallthru
      _
    // Predicated region
    $region10: #{_fused_forward.1} parent=1 // pred_check
      _
    $region11: #{_fused_forward.1} parent=1 // pred_check_branch
      %23 = sbr.rel (0) target = $region13
    $region12: #{_fused_forward.1} parent=1 // pred_region
      _
    $region13: #{_fused_forward.1} parent=1 // pred_fallthru
      _
    // Predicated region
    $region14: #{_fused_forward.1} parent=1 // pred_check
      _
    $region15: #{_fused_forward.1} parent=1 // pred_check_branch
      %25 = sbr.rel (0) target = $region17
    $region16: #{_fused_forward.1} parent=1 // pred_region
      %s27 = ssub.s32 16384, 16384
      %28 = vsyncadd [#allocation5], %s27
      %s29 = sshll.u32 [#allocation4], 4
      %s30 = int_to_ptr.vmem [resolvable:$true] %s29
      %35 = dma.hbm_to_vmem [thread:$0]  %s3, 16384, %s30, [#allocation5], 512, 512, 32
    $region17: #{_fused_forward.1} parent=1 // pred_fallthru
      _
    // Predicated region
    $region18: #{_fused_forward.1} parent=1 // pred_check
      _
    $region19: #{_fused_forward.1} parent=1 // pred_check_branch
      %37 = sbr.rel (0) target = $region21
    $region20: #{_fused_forward.1} parent=1 // pred_region
      _
    $region21: #{_fused_forward.1} parent=1 // pred_fallthru
      _
    // Predicated region
    $region22: #{_fused_forward.1} parent=1 // pred_check
      _
    $region23: #{_fused_forward.1} parent=1 // pred_check_branch
      %39 = sbr.rel (0) target = $region25
    $region24: #{_fused_forward.1} parent=1 // pred_region
      %s41 = ssub.s32 32768, 32768
      %42 = vsyncadd [#allocation7], %s41
      %s43 = sshll.u32 [#allocation6], 4
      %s44 = int_to_ptr.vmem [resolvable:$true] %s43
      %49 = dma.hbm_to_vmem [thread:$0]  %s5, 32768, %s44, [#allocation7], 1024, 1024, 64
    $region25: #{_fused_forward.1} parent=1 // pred_fallthru
      _
    // Predicated region
    $region26: #{_fused_forward.1} parent=1 // pred_check
      _
    $region27: #{_fused_forward.1} parent=1 // pred_check_branch
      %51 = sbr.rel (0) target = $region29
    $region28: #{_fused_forward.1} parent=1 // pred_region
      %s53 = ssub.s32 16384, 16384
      %54 = vsyncadd [#allocation7], %s53
      %s55 = sshll.u32 [#allocation8], 4
      %s56 = int_to_ptr.vmem [resolvable:$true] %s55
      %61 = dma.hbm_to_vmem [thread:$0]  %s6, 16384, %s56, [#allocation7], 512, 512, 32
    $region29: #{_fused_forward.1} parent=1 // pred_fallthru
      _
    // Predicated region
    $region30: #{_fused_forward.1} parent=1 // pred_check
      _
    $region31: #{_fused_forward.1} parent=1 // pred_check_branch
      %63 = sbr.rel (0) target = $region33
    $region32: #{_fused_forward.1} parent=1 // pred_region
      _
    $region33: #{_fused_forward.1} parent=1 // pred_fallthru
      _
    // Predicated region
    $region34: #{_fused_forward.1} parent=1 // pred_check
      _
    $region35: #{_fused_forward.1} parent=1 // pred_check_branch
      %65 = sbr.rel (0) target = $region37
    $region36: #{_fused_forward.1} parent=1 // pred_region
      %s67 = ssub.s32 4096, 4096
      %68 = vsyncadd [#allocation10], %s67
      %s69 = sshll.u32 [#allocation9], 4
      %s70 = int_to_ptr.vmem [resolvable:$true] %s69
      %75 = dma.hbm_to_vmem [thread:$0]  %s8, 4096, %s70, [#allocation10], 128, 128, 8
    $region37: #{_fused_forward.1} parent=1 // pred_fallthru
      _
    // Predicated region
    $region38: #{_fused_forward.1} parent=1 // pred_check
      _
    $region39: #{_fused_forward.1} parent=1 // pred_check_branch
      %77 = sbr.rel (0) target = $region41
    $region40: #{_fused_forward.1} parent=1 // pred_region
      _
    $region41: #{_fused_forward.1} parent=1 // pred_fallthru
      _
    // Predicated region
    $region42: #{_fused_forward.1} parent=1 // pred_check
      _
    $region43: #{_fused_forward.1} parent=1 // pred_check_branch
      %79 = sbr.rel (0) target = $region45
    $region44: #{_fused_forward.1} parent=1 // pred_region
      %80 = dma.done [#allocation5], 16384
    $region45: #{_fused_forward.1} parent=1 // pred_fallthru
      _
    // Predicated region
    $region46: #{_fused_forward.1} parent=1 // pred_check
      _
    $region47: #{_fused_forward.1} parent=1 // pred_check_branch
      %82 = sbr.rel (0) target = $region49
    $region48: #{_fused_forward.1} parent=1 // pred_region
      %83 = dma.done [#allocation7], 32768
    $region49: #{_fused_forward.1} parent=1 // pred_fallthru
      _
    // Predicated region
    $region50: #{_fused_forward.1} parent=1 // pred_check
      _
    $region51: #{_fused_forward.1} parent=1 // pred_check_branch
      %85 = sbr.rel (0) target = $region53
    $region52: #{_fused_forward.1} parent=1 // pred_region
      %86 = dma.done [#allocation7], 16384
    $region53: #{_fused_forward.1} parent=1 // pred_fallthru
      _
    // Predicated region
    $region54: #{_fused_forward.1} parent=1 // pred_check
      _
    $region55: #{_fused_forward.1} parent=1 // pred_check_branch
      %88 = sbr.rel (0) target = $region57
    $region56: #{_fused_forward.1} parent=1 // pred_region
      %89 = dma.done [#allocation10], 4096
    $region57: #{_fused_forward.1} parent=1 // pred_fallthru
      _
    %v90 = vld [vmem:[%s1] sm:$0xff]
    %v91 = vlaneseq
    %v92 = vshrl.u32 %v91, 7
    %v93 = vadd.s32 %v92, 8
    %vm94 = vcmp.lt.s32.totalorder %v92, 8
    %vm95 = vcmp.lt.s32.totalorder %v93, 8
    %v96 = vld [vmem:[%s0] sm:$0xff]
    %v97 = vld [vmem:[%s0 + $0x8] sm:$0xff]
    %v98 = vld [vmem:[%s0 + $0x10] sm:$0xff]
    %v99 = vld [vmem:[%s0 + $0x18] sm:$0xff]
    %v100 = vld [vmem:[%s0 + $0x20] sm:$0xff]
    %v101 = vld [vmem:[%s0 + $0x28] sm:$0xff]
    %v102 = vld [vmem:[%s0 + $0x30] sm:$0xff]
    %v103 = vld [vmem:[%s0 + $0x38] sm:$0xff]
    %v104 = vld [vmem:[%s2] sm:$0xff]
    %v105 = vld [vmem:[%s2 + $0x8] sm:$0xff]
    %v106 = vld [vmem:[%s2 + $0x10] sm:$0xff]
    %v107 = vld [vmem:[%s2 + $0x18] sm:$0xff]
    %v108 = vld [vmem:[%s2 + $0x20] sm:$0xff]
    %v109 = vld [vmem:[%s2 + $0x28] sm:$0xff]
    %v110 = vld [vmem:[%s2 + $0x30] sm:$0xff]
    %v111 = vld [vmem:[%s2 + $0x38] sm:$0xff]
    %v112 = vld [vmem:[%s4] sm:$0xff]
    %v114 = vlaneseq
    %v115 = vshrl.u32 %v114, 7
    %v116 = vsub.s32 0, %v115
    %v117 = vrot.slane %v112, %v116
    %v118 = vlaneseq
    %v119 = vshrl.u32 %v118, 7
    %v120 = vsub.s32 1, %v119
    %v121 = vrot.slane %v112, %v120
    %v122 = vlaneseq
    %v123 = vshrl.u32 %v122, 7
    %v124 = vsub.s32 2, %v123
    %v125 = vrot.slane %v112, %v124
    %v126 = vlaneseq
    %v127 = vshrl.u32 %v126, 7
    %v128 = vsub.s32 3, %v127
    %v129 = vrot.slane %v112, %v128
    %v130 = vlaneseq
    %v131 = vshrl.u32 %v130, 7
    %v132 = vsub.s32 4, %v131
    %v133 = vrot.slane %v112, %v132
    %v134 = vlaneseq
    %v135 = vshrl.u32 %v134, 7
    %v136 = vsub.s32 5, %v135
    %v137 = vrot.slane %v112, %v136
    %v138 = vlaneseq
    %v139 = vshrl.u32 %v138, 7
    %v140 = vsub.s32 6, %v139
    %v141 = vrot.slane %v112, %v140
    %v142 = vlaneseq
    %v143 = vshrl.u32 %v142, 7
    %v144 = vsub.s32 7, %v143
    %v145 = vrot.slane %v112, %v144
    %vm154 = vcmask 64512
    %v156 = vsel %vm154, %v96, 0
    %v159 = vsel %vm154, %v97, 0
    %v162 = vsel %vm154, %v98, 0
    %v165 = vsel %vm154, %v99, 0
    %v168 = vsel %vm154, %v100, 0
    %v171 = vsel %vm154, %v101, 0
    %v174 = vsel %vm154, %v102, 0
    %v177 = vsel %vm154, %v103, 0
    %179 = vmatprep.subr.mxu0 %v105
    %180 = vmatpush1.msra.mxu0 %v104
    %181 = vmatprep.subr.mxu0 0.0
    %182 = vmatpush1.msra.mxu0 0.0
    %183 = vmatprep.subr.mxu0 0.0
    %184 = vmatpush1.msra.mxu0 0.0
    %185 = vmatprep.subr.mxu0 0.0
    %186 = vmatpush1.msra.mxu0 0.0
    %187 = vmatprep.subr.mxu0 0.0
    %188 = vmatpush1.msra.mxu0 0.0
    %189 = vmatprep.subr.mxu0 0.0
    %190 = vmatpush1.msra.mxu0 0.0
    %191 = vmatprep.subr.mxu0 0.0
    %192 = vmatpush1.msra.mxu0 0.0
    %193 = vmatprep.subr.mxu0 0.0
    %194 = vmatpush1.msra.mxu0 0.0
    %195 = vmatprep.subr.mxu0 0.0
    %196 = vmatpush1.msra.mxu0 0.0
    %197 = vmatprep.subr.mxu0 0.0
    %198 = vmatpush1.msra.mxu0 0.0
    %199 = vmatprep.subr.mxu0 0.0
    %200 = vmatpush1.msra.mxu0 0.0
    %201 = vmatprep.subr.mxu0 0.0
    %202 = vmatpush1.msra.mxu0 0.0
    %203 = vmatprep.subr.mxu0 0.0
    %204 = vmatpush1.msra.mxu0 0.0
    %205 = vmatprep.subr.mxu0 0.0
    %206 = vmatpush1.msra.mxu0 0.0
    %207 = vmatprep.subr.mxu0 0.0
    %208 = vmatpush1.msra.mxu0 0.0
    %209 = vmatprep.subr.mxu0 0.0
    %210 = vmatpush1.msra.mxu0 0.0
    %211 = vmatprep.subr.mxu0 0.0
    %212 = vmatpush1.msra.mxu0 0.0
    %213 = vmatprep.subr.mxu0 0.0
    %214 = vmatpush1.msra.mxu0 0.0
    %215 = vmatprep.subr.mxu0 0.0
    %216 = vmatpush1.msra.mxu0 0.0
    %217 = vmatprep.subr.mxu0 0.0
    %218 = vmatpush1.msra.mxu0 0.0
    %219 = vmatprep.subr.mxu0 0.0
    %220 = vmatpush1.msra.mxu0 0.0
    %221 = vmatprep.subr.mxu0 0.0
    %222 = vmatpush1.msra.mxu0 0.0
    %223 = vmatprep.subr.mxu0 0.0
    %224 = vmatpush1.msra.mxu0 0.0
    %225 = vmatprep.subr.mxu0 0.0
    %226 = vmatpush1.msra.mxu0 0.0
    %227 = vmatprep.subr.mxu0 0.0
    %228 = vmatpush1.msra.mxu0 0.0
    %229 = vmatprep.subr.mxu0 0.0
    %230 = vmatpush1.msra.mxu0 0.0
    %231 = vmatprep.subr.mxu0 0.0
    %232 = vmatpush1.msra.mxu0 0.0
    %233 = vmatprep.subr.mxu0 0.0
    %234 = vmatpush1.msra.mxu0 0.0
    %235 = vmatprep.subr.mxu0 0.0
    %236 = vmatpush1.msra.mxu0 0.0
    %237 = vmatprep.subr.mxu0 0.0
    %238 = vmatpush1.msra.mxu0 0.0
    %239 = vmatprep.subr.mxu0 0.0
    %240 = vmatpush1.msra.mxu0 0.0
    %241 = vmatprep.subr.mxu0 0.0
    %242 = vmatpush1.msra.mxu0 0.0
    %243 = vmatprep.mubr.f32.mxu0 0.0
    %244 = vmatmul.mubr.f32.gmra.mrb[0].mxu0 %v156
    %v245 = vpop.f32.mrb[0].mxu0
    %v246 = vadd.f32 %v117, %v245
    %v247 = vpop.f32.mrb[0].mxu0
    %v248 = vadd.f32 %v121, %v247
    %249 = vmatprep.mubr.f32.mxu0 0.0
    %250 = vmatmul.mubr.f32.gmra.mrb[0].mxu0 %v159
    %v251 = vpop.f32.mrb[0].mxu0
    %v252 = vadd.f32 %v117, %v251
    %v253 = vpop.f32.mrb[0].mxu0
    %v254 = vadd.f32 %v121, %v253
    %255 = vmatprep.mubr.f32.mxu0 0.0
    %256 = vmatmul.mubr.f32.gmra.mrb[0].mxu0 %v162
    %v257 = vpop.f32.mrb[0].mxu0
    %v258 = vadd.f32 %v117, %v257
    %v259 = vpop.f32.mrb[0].mxu0
    %v260 = vadd.f32 %v121, %v259
    %261 = vmatprep.mubr.f32.mxu0 0.0
    %262 = vmatmul.mubr.f32.gmra.mrb[0].mxu0 %v165
    %v263 = vpop.f32.mrb[0].mxu0
    %v264 = vadd.f32 %v117, %v263
    %v265 = vpop.f32.mrb[0].mxu0
    %v266 = vadd.f32 %v121, %v265
    %267 = vmatprep.mubr.f32.mxu0 0.0
    %268 = vmatmul.mubr.f32.gmra.mrb[0].mxu0 %v168
    %v269 = vpop.f32.mrb[0].mxu0
    %v270 = vadd.f32 %v117, %v269
    %v271 = vpop.f32.mrb[0].mxu0
    %v272 = vadd.f32 %v121, %v271
    %273 = vmatprep.mubr.f32.mxu0 0.0
    %274 = vmatmul.mubr.f32.gmra.mrb[0].mxu0 %v171
    %v275 = vpop.f32.mrb[0].mxu0
    %v276 = vadd.f32 %v117, %v275
    %v277 = vpop.f32.mrb[0].mxu0
    %v278 = vadd.f32 %v121, %v277
    %279 = vmatprep.mubr.f32.mxu0 0.0
    %280 = vmatmul.mubr.f32.gmra.mrb[0].mxu0 %v174
    %v281 = vpop.f32.mrb[0].mxu0
    %v282 = vadd.f32 %v117, %v281
    %v283 = vpop.f32.mrb[0].mxu0
    %v284 = vadd.f32 %v121, %v283
    %285 = vmatprep.mubr.f32.mxu0 0.0
    %286 = vmatmul.mubr.f32.gmra.mrb[0].mxu0 %v177
    %v287 = vpop.f32.mrb[0].mxu0
    %v288 = vadd.f32 %v117, %v287
    %v289 = vpop.f32.mrb[0].mxu0
    %v290 = vadd.f32 %v121, %v289
    %291 = vdwg.mxu0
    %292 = vmatprep.subr.mxu0 %v107
    %293 = vmatpush1.msra.mxu0 %v106
    %294 = vmatprep.subr.mxu0 0.0
    %295 = vmatpush1.msra.mxu0 0.0
    %296 = vmatprep.subr.mxu0 0.0
    %297 = vmatpush1.msra.mxu0 0.0
    %298 = vmatprep.subr.mxu0 0.0
    %299 = vmatpush1.msra.mxu0 0.0
    %300 = vmatprep.subr.mxu0 0.0
    %301 = vmatpush1.msra.mxu0 0.0
    %302 = vmatprep.subr.mxu0 0.0
    %303 = vmatpush1.msra.mxu0 0.0
    %304 = vmatprep.subr.mxu0 0.0
    %305 = vmatpush1.msra.mxu0 0.0
    %306 = vmatprep.subr.mxu0 0.0
    %307 = vmatpush1.msra.mxu0 0.0
    %308 = vmatprep.subr.mxu0 0.0
    %309 = vmatpush1.msra.mxu0 0.0
    %310 = vmatprep.subr.mxu0 0.0
    %311 = vmatpush1.msra.mxu0 0.0
    %312 = vmatprep.subr.mxu0 0.0
    %313 = vmatpush1.msra.mxu0 0.0
    %314 = vmatprep.subr.mxu0 0.0
    %315 = vmatpush1.msra.mxu0 0.0
    %316 = vmatprep.subr.mxu0 0.0
    %317 = vmatpush1.msra.mxu0 0.0
    %318 = vmatprep.subr.mxu0 0.0
    %319 = vmatpush1.msra.mxu0 0.0
    %320 = vmatprep.subr.mxu0 0.0
    %321 = vmatpush1.msra.mxu0 0.0
    %322 = vmatprep.subr.mxu0 0.0
    %323 = vmatpush1.msra.mxu0 0.0
    %324 = vmatprep.subr.mxu0 0.0
    %325 = vmatpush1.msra.mxu0 0.0
    %326 = vmatprep.subr.mxu0 0.0
    %327 = vmatpush1.msra.mxu0 0.0
    %328 = vmatprep.subr.mxu0 0.0
    %329 = vmatpush1.msra.mxu0 0.0
    %330 = vmatprep.subr.mxu0 0.0
    %331 = vmatpush1.msra.mxu0 0.0
    %332 = vmatprep.subr.mxu0 0.0
    %333 = vmatpush1.msra.mxu0 0.0
    %334 = vmatprep.subr.mxu0 0.0
    %335 = vmatpush1.msra.mxu0 0.0
    %336 = vmatprep.subr.mxu0 0.0
    %337 = vmatpush1.msra.mxu0 0.0
    %338 = vmatprep.subr.mxu0 0.0
    %339 = vmatpush1.msra.mxu0 0.0
    %340 = vmatprep.subr.mxu0 0.0
    %341 = vmatpush1.msra.mxu0 0.0
    %342 = vmatprep.subr.mxu0 0.0
    %343 = vmatpush1.msra.mxu0 0.0
    %344 = vmatprep.subr.mxu0 0.0
    %345 = vmatpush1.msra.mxu0 0.0
    %346 = vmatprep.subr.mxu0 0.0
    %347 = vmatpush1.msra.mxu0 0.0
    %348 = vmatprep.subr.mxu0 0.0
    %349 = vmatpush1.msra.mxu0 0.0
    %350 = vmatprep.subr.mxu0 0.0
    %351 = vmatpush1.msra.mxu0 0.0
    %352 = vmatprep.subr.mxu0 0.0
    %353 = vmatpush1.msra.mxu0 0.0
    %354 = vmatprep.subr.mxu0 0.0
    %355 = vmatpush1.msra.mxu0 0.0
    %356 = vmatprep.mubr.f32.mxu0 0.0
    %357 = vmatmul.mubr.f32.gmra.mrb[0].mxu0 %v156
    %v358 = vpop.f32.mrb[0].mxu0
    %v359 = vadd.f32 %v125, %v358
    %v360 = vpop.f32.mrb[0].mxu0
    %v361 = vadd.f32 %v129, %v360
    %362 = vmatprep.mubr.f32.mxu0 0.0
    %363 = vmatmul.mubr.f32.gmra.mrb[0].mxu0 %v159
    %v364 = vpop.f32.mrb[0].mxu0
    %v365 = vadd.f32 %v125, %v364
    %v366 = vpop.f32.mrb[0].mxu0
    %v367 = vadd.f32 %v129, %v366
    %368 = vmatprep.mubr.f32.mxu0 0.0
    %369 = vmatmul.mubr.f32.gmra.mrb[0].mxu0 %v162
    %v370 = vpop.f32.mrb[0].mxu0
    %v371 = vadd.f32 %v125, %v370
    %v372 = vpop.f32.mrb[0].mxu0
    %v373 = vadd.f32 %v129, %v372
    %374 = vmatprep.mubr.f32.mxu0 0.0
    %375 = vmatmul.mubr.f32.gmra.mrb[0].mxu0 %v165
    %v376 = vpop.f32.mrb[0].mxu0
    %v377 = vadd.f32 %v125, %v376
    %v378 = vpop.f32.mrb[0].mxu0
    %v379 = vadd.f32 %v129, %v378
    %380 = vmatprep.mubr.f32.mxu0 0.0
    %381 = vmatmul.mubr.f32.gmra.mrb[0].mxu0 %v168
    %v382 = vpop.f32.mrb[0].mxu0
    %v383 = vadd.f32 %v125, %v382
    %v384 = vpop.f32.mrb[0].mxu0
    %v385 = vadd.f32 %v129, %v384
    %386 = vmatprep.mubr.f32.mxu0 0.0
    %387 = vmatmul.mubr.f32.gmra.mrb[0].mxu0 %v171
    %v388 = vpop.f32.mrb[0].mxu0
    %v389 = vadd.f32 %v125, %v388
    %v390 = vpop.f32.mrb[0].mxu0
    %v391 = vadd.f32 %v129, %v390
    %392 = vmatprep.mubr.f32.mxu0 0.0
    %393 = vmatmul.mubr.f32.gmra.mrb[0].mxu0 %v174
    %v394 = vpop.f32.mrb[0].mxu0
    %v395 = vadd.f32 %v125, %v394
    %v396 = vpop.f32.mrb[0].mxu0
    %v397 = vadd.f32 %v129, %v396
    %398 = vmatprep.mubr.f32.mxu0 0.0
    %399 = vmatmul.mubr.f32.gmra.mrb[0].mxu0 %v177
    %v400 = vpop.f32.mrb[0].mxu0
    %v401 = vadd.f32 %v125, %v400
    %v402 = vpop.f32.mrb[0].mxu0
    %v403 = vadd.f32 %v129, %v402
    %404 = vdwg.mxu0
    %405 = vmatprep.subr.mxu0 %v109
    %406 = vmatpush1.msra.mxu0 %v108
    %407 = vmatprep.subr.mxu0 0.0
    %408 = vmatpush1.msra.mxu0 0.0
    %409 = vmatprep.subr.mxu0 0.0
    %410 = vmatpush1.msra.mxu0 0.0
    %411 = vmatprep.subr.mxu0 0.0
    %412 = vmatpush1.msra.mxu0 0.0
    %413 = vmatprep.subr.mxu0 0.0
    %414 = vmatpush1.msra.mxu0 0.0
    %415 = vmatprep.subr.mxu0 0.0
    %416 = vmatpush1.msra.mxu0 0.0
    %417 = vmatprep.subr.mxu0 0.0
    %418 = vmatpush1.msra.mxu0 0.0
    %419 = vmatprep.subr.mxu0 0.0
    %420 = vmatpush1.msra.mxu0 0.0
    %421 = vmatprep.subr.mxu0 0.0
    %422 = vmatpush1.msra.mxu0 0.0
    %423 = vmatprep.subr.mxu0 0.0
    %424 = vmatpush1.msra.mxu0 0.0
    %425 = vmatprep.subr.mxu0 0.0
    %426 = vmatpush1.msra.mxu0 0.0
    %427 = vmatprep.subr.mxu0 0.0
    %428 = vmatpush1.msra.mxu0 0.0
    %429 = vmatprep.subr.mxu0 0.0
    %430 = vmatpush1.msra.mxu0 0.0
    %431 = vmatprep.subr.mxu0 0.0
    %432 = vmatpush1.msra.mxu0 0.0
    %433 = vmatprep.subr.mxu0 0.0
    %434 = vmatpush1.msra.mxu0 0.0
    %435 = vmatprep.subr.mxu0 0.0
    %436 = vmatpush1.msra.mxu0 0.0
    %437 = vmatprep.subr.mxu0 0.0
    %438 = vmatpush1.msra.mxu0 0.0
    %439 = vmatprep.subr.mxu0 0.0
    %440 = vmatpush1.msra.mxu0 0.0
    %441 = vmatprep.subr.mxu0 0.0
    %442 = vmatpush1.msra.mxu0 0.0
    %443 = vmatprep.subr.mxu0 0.0
    %444 = vmatpush1.msra.mxu0 0.0
    %445 = vmatprep.subr.mxu0 0.0
    %446 = vmatpush1.msra.mxu0 0.0
    %447 = vmatprep.subr.mxu0 0.0
    %448 = vmatpush1.msra.mxu0 0.0
    %449 = vmatprep.subr.mxu0 0.0
    %450 = vmatpush1.msra.mxu0 0.0
    %451 = vmatprep.subr.mxu0 0.0
    %452 = vmatpush1.msra.mxu0 0.0
    %453 = vmatprep.subr.mxu0 0.0
    %454 = vmatpush1.msra.mxu0 0.0
    %455 = vmatprep.subr.mxu0 0.0
    %456 = vmatpush1.msra.mxu0 0.0
    %457 = vmatprep.subr.mxu0 0.0
    %458 = vmatpush1.msra.mxu0 0.0
    %459 = vmatprep.subr.mxu0 0.0
    %460 = vmatpush1.msra.mxu0 0.0
    %461 = vmatprep.subr.mxu0 0.0
    %462 = vmatpush1.msra.mxu0 0.0
    %463 = vmatprep.subr.mxu0 0.0
    %464 = vmatpush1.msra.mxu0 0.0
    %465 = vmatprep.subr.mxu0 0.0
    %466 = vmatpush1.msra.mxu0 0.0
    %467 = vmatprep.subr.mxu0 0.0
    %468 = vmatpush1.msra.mxu0 0.0
    %469 = vmatprep.mubr.f32.mxu0 0.0
    %470 = vmatmul.mubr.f32.gmra.mrb[0].mxu0 %v156
    %v471 = vpop.f32.mrb[0].mxu0
    %v472 = vadd.f32 %v133, %v471
    %v473 = vpop.f32.mrb[0].mxu0
    %v474 = vadd.f32 %v137, %v473
    %475 = vmatprep.mubr.f32.mxu0 0.0
    %476 = vmatmul.mubr.f32.gmra.mrb[0].mxu0 %v159
    %v477 = vpop.f32.mrb[0].mxu0
    %v478 = vadd.f32 %v133, %v477
    %v479 = vpop.f32.mrb[0].mxu0
    %v480 = vadd.f32 %v137, %v479
    %481 = vmatprep.mubr.f32.mxu0 0.0
    %482 = vmatmul.mubr.f32.gmra.mrb[0].mxu0 %v162
    %v483 = vpop.f32.mrb[0].mxu0
    %v484 = vadd.f32 %v133, %v483
    %v485 = vpop.f32.mrb[0].mxu0
    %v486 = vadd.f32 %v137, %v485
    %487 = vmatprep.mubr.f32.mxu0 0.0
    %488 = vmatmul.mubr.f32.gmra.mrb[0].mxu0 %v165
    %v489 = vpop.f32.mrb[0].mxu0
    %v490 = vadd.f32 %v133, %v489
    %v491 = vpop.f32.mrb[0].mxu0
    %v492 = vadd.f32 %v137, %v491
    %493 = vmatprep.mubr.f32.mxu0 0.0
    %494 = vmatmul.mubr.f32.gmra.mrb[0].mxu0 %v168
    %v495 = vpop.f32.mrb[0].mxu0
    %v496 = vadd.f32 %v133, %v495
    %v497 = vpop.f32.mrb[0].mxu0
    %v498 = vadd.f32 %v137, %v497
    %499 = vmatprep.mubr.f32.mxu0 0.0
    %500 = vmatmul.mubr.f32.gmra.mrb[0].mxu0 %v171
    %v501 = vpop.f32.mrb[0].mxu0
    %v502 = vadd.f32 %v133, %v501
    %v503 = vpop.f32.mrb[0].mxu0
    %v504 = vadd.f32 %v137, %v503
    %505 = vmatprep.mubr.f32.mxu0 0.0
    %506 = vmatmul.mubr.f32.gmra.mrb[0].mxu0 %v174
    %v507 = vpop.f32.mrb[0].mxu0
    %v508 = vadd.f32 %v133, %v507
    %v509 = vpop.f32.mrb[0].mxu0
    %v510 = vadd.f32 %v137, %v509
    %511 = vmatprep.mubr.f32.mxu0 0.0
    %512 = vmatmul.mubr.f32.gmra.mrb[0].mxu0 %v177
    %v513 = vpop.f32.mrb[0].mxu0
    %v514 = vadd.f32 %v133, %v513
    %v515 = vpop.f32.mrb[0].mxu0
    %v516 = vadd.f32 %v137, %v515
    %517 = vdwg.mxu0
    %518 = vmatprep.subr.mxu0 %v111
    %519 = vmatpush1.msra.mxu0 %v110
    %520 = vmatprep.subr.mxu0 0.0
    %521 = vmatpush1.msra.mxu0 0.0
    %522 = vmatprep.subr.mxu0 0.0
    %523 = vmatpush1.msra.mxu0 0.0
    %524 = vmatprep.subr.mxu0 0.0
    %525 = vmatpush1.msra.mxu0 0.0
    %526 = vmatprep.subr.mxu0 0.0
    %527 = vmatpush1.msra.mxu0 0.0
    %528 = vmatprep.subr.mxu0 0.0
    %529 = vmatpush1.msra.mxu0 0.0
    %530 = vmatprep.subr.mxu0 0.0
    %531 = vmatpush1.msra.mxu0 0.0
    %532 = vmatprep.subr.mxu0 0.0
    %533 = vmatpush1.msra.mxu0 0.0
    %534 = vmatprep.subr.mxu0 0.0
    %535 = vmatpush1.msra.mxu0 0.0
    %536 = vmatprep.subr.mxu0 0.0
    %537 = vmatpush1.msra.mxu0 0.0
    %538 = vmatprep.subr.mxu0 0.0
    %539 = vmatpush1.msra.mxu0 0.0
    %540 = vmatprep.subr.mxu0 0.0
    %541 = vmatpush1.msra.mxu0 0.0
    %542 = vmatprep.subr.mxu0 0.0
    %543 = vmatpush1.msra.mxu0 0.0
    %544 = vmatprep.subr.mxu0 0.0
    %545 = vmatpush1.msra.mxu0 0.0
    %546 = vmatprep.subr.mxu0 0.0
    %547 = vmatpush1.msra.mxu0 0.0
    %548 = vmatprep.subr.mxu0 0.0
    %549 = vmatpush1.msra.mxu0 0.0
    %550 = vmatprep.subr.mxu0 0.0
    %551 = vmatpush1.msra.mxu0 0.0
    %552 = vmatprep.subr.mxu0 0.0
    %553 = vmatpush1.msra.mxu0 0.0
    %554 = vmatprep.subr.mxu0 0.0
    %555 = vmatpush1.msra.mxu0 0.0
    %556 = vmatprep.subr.mxu0 0.0
    %557 = vmatpush1.msra.mxu0 0.0
    %558 = vmatprep.subr.mxu0 0.0
    %559 = vmatpush1.msra.mxu0 0.0
    %560 = vmatprep.subr.mxu0 0.0
    %561 = vmatpush1.msra.mxu0 0.0
    %562 = vmatprep.subr.mxu0 0.0
    %563 = vmatpush1.msra.mxu0 0.0
    %564 = vmatprep.subr.mxu0 0.0
    %565 = vmatpush1.msra.mxu0 0.0
    %566 = vmatprep.subr.mxu0 0.0
    %567 = vmatpush1.msra.mxu0 0.0
    %568 = vmatprep.subr.mxu0 0.0
    %569 = vmatpush1.msra.mxu0 0.0
    %570 = vmatprep.subr.mxu0 0.0
    %571 = vmatpush1.msra.mxu0 0.0
    %572 = vmatprep.subr.mxu0 0.0
    %573 = vmatpush1.msra.mxu0 0.0
    %574 = vmatprep.subr.mxu0 0.0
    %575 = vmatpush1.msra.mxu0 0.0
    %576 = vmatprep.subr.mxu0 0.0
    %577 = vmatpush1.msra.mxu0 0.0
    %578 = vmatprep.subr.mxu0 0.0
    %579 = vmatpush1.msra.mxu0 0.0
    %580 = vmatprep.subr.mxu0 0.0
    %581 = vmatpush1.msra.mxu0 0.0
    %582 = vmatprep.mubr.f32.mxu0 0.0
    %583 = vmatmul.mubr.f32.gmra.mrb[0].mxu0 %v156
    %v584 = vpop.f32.mrb[0].mxu0
    %v585 = vadd.f32 %v141, %v584
    %v586 = vpop.f32.mrb[0].mxu0
    %v587 = vadd.f32 %v145, %v586
    %588 = vmatprep.mubr.f32.mxu0 0.0
    %589 = vmatmul.mubr.f32.gmra.mrb[0].mxu0 %v159
    %v590 = vpop.f32.mrb[0].mxu0
    %v591 = vadd.f32 %v141, %v590
    %v592 = vpop.f32.mrb[0].mxu0
    %v593 = vadd.f32 %v145, %v592
    %594 = vmatprep.mubr.f32.mxu0 0.0
    %595 = vmatmul.mubr.f32.gmra.mrb[0].mxu0 %v162
    %v596 = vpop.f32.mrb[0].mxu0
    %v597 = vadd.f32 %v141, %v596
    %v598 = vpop.f32.mrb[0].mxu0
    %v599 = vadd.f32 %v145, %v598
    %600 = vmatprep.mubr.f32.mxu0 0.0
    %601 = vmatmul.mubr.f32.gmra.mrb[0].mxu0 %v165
    %v602 = vpop.f32.mrb[0].mxu0
    %v603 = vadd.f32 %v141, %v602
    %v604 = vpop.f32.mrb[0].mxu0
    %v605 = vadd.f32 %v145, %v604
    %606 = vmatprep.mubr.f32.mxu0 0.0
    %607 = vmatmul.mubr.f32.gmra.mrb[0].mxu0 %v168
    %v608 = vpop.f32.mrb[0].mxu0
    %v609 = vadd.f32 %v141, %v608
    %v610 = vpop.f32.mrb[0].mxu0
    %v611 = vadd.f32 %v145, %v610
    %612 = vmatprep.mubr.f32.mxu0 0.0
    %613 = vmatmul.mubr.f32.gmra.mrb[0].mxu0 %v171
    %v614 = vpop.f32.mrb[0].mxu0
    %v615 = vadd.f32 %v141, %v614
    %v616 = vpop.f32.mrb[0].mxu0
    %v617 = vadd.f32 %v145, %v616
    %618 = vmatprep.mubr.f32.mxu0 0.0
    %619 = vmatmul.mubr.f32.gmra.mrb[0].mxu0 %v174
    %v620 = vpop.f32.mrb[0].mxu0
    %v621 = vadd.f32 %v141, %v620
    %v622 = vpop.f32.mrb[0].mxu0
    %v623 = vadd.f32 %v145, %v622
    %624 = vmatprep.mubr.f32.mxu0 0.0
    %625 = vmatmul.mubr.f32.gmra.mrb[0].mxu0 %v177
    %v626 = vpop.f32.mrb[0].mxu0
    %v627 = vadd.f32 %v141, %v626
    %v628 = vpop.f32.mrb[0].mxu0
    %v629 = vadd.f32 %v145, %v628
    %630 = vdwg.mxu0
    %631 = vst [vmem:[#allocation2] sm:$0xff] %v246
    %632 = vst [vmem:[#allocation2 + $0x8] sm:$0xff] %v248
    %633 = vst [vmem:[#allocation2 + $0x10] sm:$0xff] %v359
    %634 = vst [vmem:[#allocation2 + $0x18] sm:$0xff] %v361
    %635 = vst [vmem:[#allocation2 + $0x20] sm:$0xff] %v472
    %636 = vst [vmem:[#allocation2 + $0x28] sm:$0xff] %v474
    %637 = vst [vmem:[#allocation2 + $0x30] sm:$0xff] %v585
    %638 = vst [vmem:[#allocation2 + $0x38] sm:$0xff] %v587
    %639 = vst [vmem:[#allocation2 + $0x40] sm:$0xff] %v252
    %640 = vst [vmem:[#allocation2 + $0x48] sm:$0xff] %v254
    %641 = vst [vmem:[#allocation2 + $0x50] sm:$0xff] %v365
    %642 = vst [vmem:[#allocation2 + $0x58] sm:$0xff] %v367
    %643 = vst [vmem:[#allocation2 + $0x60] sm:$0xff] %v478
    %644 = vst [vmem:[#allocation2 + $0x68] sm:$0xff] %v480
    %645 = vst [vmem:[#allocation2 + $0x70] sm:$0xff] %v591
    %646 = vst [vmem:[#allocation2 + $0x78] sm:$0xff] %v593
    %647 = vst [vmem:[#allocation2 + $0x80] sm:$0xff] %v258
    %648 = vst [vmem:[#allocation2 + $0x88] sm:$0xff] %v260
    %649 = vst [vmem:[#allocation2 + $0x90] sm:$0xff] %v371
    %650 = vst [vmem:[#allocation2 + $0x98] sm:$0xff] %v373
    %651 = vst [vmem:[#allocation2 + $0xa0] sm:$0xff] %v484
    %652 = vst [vmem:[#allocation2 + $0xa8] sm:$0xff] %v486
    %653 = vst [vmem:[#allocation2 + $0xb0] sm:$0xff] %v597
    %654 = vst [vmem:[#allocation2 + $0xb8] sm:$0xff] %v599
    %655 = vst [vmem:[#allocation2 + $0xc0] sm:$0xff] %v264
    %656 = vst [vmem:[#allocation2 + $0xc8] sm:$0xff] %v266
    %657 = vst [vmem:[#allocation2 + $0xd0] sm:$0xff] %v377
    %658 = vst [vmem:[#allocation2 + $0xd8] sm:$0xff] %v379
    %659 = vst [vmem:[#allocation2 + $0xe0] sm:$0xff] %v490
    %660 = vst [vmem:[#allocation2 + $0xe8] sm:$0xff] %v492
    %661 = vst [vmem:[#allocation2 + $0xf0] sm:$0xff] %v603
    %662 = vst [vmem:[#allocation2 + $0xf8] sm:$0xff] %v605
    %663 = vst [vmem:[#allocation2 + $0x100] sm:$0xff] %v270
    %664 = vst [vmem:[#allocation2 + $0x108] sm:$0xff] %v272
    %665 = vst [vmem:[#allocation2 + $0x110] sm:$0xff] %v383
    %666 = vst [vmem:[#allocation2 + $0x118] sm:$0xff] %v385
    %667 = vst [vmem:[#allocation2 + $0x120] sm:$0xff] %v496
    %668 = vst [vmem:[#allocation2 + $0x128] sm:$0xff] %v498
    %669 = vst [vmem:[#allocation2 + $0x130] sm:$0xff] %v609
    %670 = vst [vmem:[#allocation2 + $0x138] sm:$0xff] %v611
    %671 = vst [vmem:[#allocation2 + $0x140] sm:$0xff] %v276
    %672 = vst [vmem:[#allocation2 + $0x148] sm:$0xff] %v278
    %673 = vst [vmem:[#allocation2 + $0x150] sm:$0xff] %v389
    %674 = vst [vmem:[#allocation2 + $0x158] sm:$0xff] %v391
    %675 = vst [vmem:[#allocation2 + $0x160] sm:$0xff] %v502
    %676 = vst [vmem:[#allocation2 + $0x168] sm:$0xff] %v504
    %677 = vst [vmem:[#allocation2 + $0x170] sm:$0xff] %v615
    %678 = vst [vmem:[#allocation2 + $0x178] sm:$0xff] %v617
    %679 = vst [vmem:[#allocation2 + $0x180] sm:$0xff] %v282
    %680 = vst [vmem:[#allocation2 + $0x188] sm:$0xff] %v284
    %681 = vst [vmem:[#allocation2 + $0x190] sm:$0xff] %v395
    %682 = vst [vmem:[#allocation2 + $0x198] sm:$0xff] %v397
    %683 = vst [vmem:[#allocation2 + $0x1a0] sm:$0xff] %v508
    %684 = vst [vmem:[#allocation2 + $0x1a8] sm:$0xff] %v510
    %685 = vst [vmem:[#allocation2 + $0x1b0] sm:$0xff] %v621
    %686 = vst [vmem:[#allocation2 + $0x1b8] sm:$0xff] %v623
    %687 = vst [vmem:[#allocation2 + $0x1c0] sm:$0xff] %v288
    %688 = vst [vmem:[#allocation2 + $0x1c8] sm:$0xff] %v290
    %689 = vst [vmem:[#allocation2 + $0x1d0] sm:$0xff] %v401
    %690 = vst [vmem:[#allocation2 + $0x1d8] sm:$0xff] %v403
    %691 = vst [vmem:[#allocation2 + $0x1e0] sm:$0xff] %v514
    %692 = vst [vmem:[#allocation2 + $0x1e8] sm:$0xff] %v516
    %693 = vst [vmem:[#allocation2 + $0x1f0] sm:$0xff] %v627
    %694 = vst [vmem:[#allocation2 + $0x1f8] sm:$0xff] %v629
    %v695 = vld [vmem:[#allocation4] sm:$0xff]
    %v696 = vld [vmem:[#allocation4 + $0x8] sm:$0xff]
    %v697 = vld [vmem:[#allocation4 + $0x10] sm:$0xff]
    %v698 = vld [vmem:[#allocation4 + $0x18] sm:$0xff]
    %v699 = vld [vmem:[#allocation4 + $0x20] sm:$0xff]
    %v700 = vld [vmem:[#allocation4 + $0x28] sm:$0xff]
    %v701 = vld [vmem:[#allocation4 + $0x30] sm:$0xff]
    %v702 = vld [vmem:[#allocation4 + $0x38] sm:$0xff]
    %v703 = vld [vmem:[#allocation4 + $0x40] sm:$0xff]
    %v704 = vld [vmem:[#allocation4 + $0x48] sm:$0xff]
    %v705 = vld [vmem:[#allocation4 + $0x50] sm:$0xff]
    %v706 = vld [vmem:[#allocation4 + $0x58] sm:$0xff]
    %v707 = vld [vmem:[#allocation4 + $0x60] sm:$0xff]
    %v708 = vld [vmem:[#allocation4 + $0x68] sm:$0xff]
    %v709 = vld [vmem:[#allocation4 + $0x70] sm:$0xff]
    %v710 = vld [vmem:[#allocation4 + $0x78] sm:$0xff]
    %v711 = vld [vmem:[#allocation4 + $0x80] sm:$0xff]
    %v712 = vld [vmem:[#allocation4 + $0x88] sm:$0xff]
    %v713 = vld [vmem:[#allocation4 + $0x90] sm:$0xff]
    %v714 = vld [vmem:[#allocation4 + $0x98] sm:$0xff]
    %v715 = vld [vmem:[#allocation4 + $0xa0] sm:$0xff]
    %v716 = vld [vmem:[#allocation4 + $0xa8] sm:$0xff]
    %v717 = vld [vmem:[#allocation4 + $0xb0] sm:$0xff]
    %v718 = vld [vmem:[#allocation4 + $0xb8] sm:$0xff]
    %v719 = vld [vmem:[#allocation4 + $0xc0] sm:$0xff]
    %v720 = vld [vmem:[#allocation4 + $0xc8] sm:$0xff]
    %v721 = vld [vmem:[#allocation4 + $0xd0] sm:$0xff]
    %v722 = vld [vmem:[#allocation4 + $0xd8] sm:$0xff]
    %v723 = vld [vmem:[#allocation4 + $0xe0] sm:$0xff]
    %v724 = vld [vmem:[#allocation4 + $0xe8] sm:$0xff]
    %v725 = vld [vmem:[#allocation4 + $0xf0] sm:$0xff]
    %v726 = vld [vmem:[#allocation4 + $0xf8] sm:$0xff]
    %v727 = vld [vmem:[#allocation4 + $0x100] sm:$0xff]
    %v728 = vld [vmem:[#allocation4 + $0x108] sm:$0xff]
    %v729 = vld [vmem:[#allocation4 + $0x110] sm:$0xff]
    %v730 = vld [vmem:[#allocation4 + $0x118] sm:$0xff]
    %v731 = vld [vmem:[#allocation4 + $0x120] sm:$0xff]
    %v732 = vld [vmem:[#allocation4 + $0x128] sm:$0xff]
    %v733 = vld [vmem:[#allocation4 + $0x130] sm:$0xff]
    %v734 = vld [vmem:[#allocation4 + $0x138] sm:$0xff]
    %v735 = vld [vmem:[#allocation4 + $0x140] sm:$0xff]
    %v736 = vld [vmem:[#allocation4 + $0x148] sm:$0xff]
    %v737 = vld [vmem:[#allocation4 + $0x150] sm:$0xff]
    %v738 = vld [vmem:[#allocation4 + $0x158] sm:$0xff]
    %v739 = vld [vmem:[#allocation4 + $0x160] sm:$0xff]
    %v740 = vld [vmem:[#allocation4 + $0x168] sm:$0xff]
    %v741 = vld [vmem:[#allocation4 + $0x170] sm:$0xff]
    %v742 = vld [vmem:[#allocation4 + $0x178] sm:$0xff]
    %v743 = vld [vmem:[#allocation4 + $0x180] sm:$0xff]
    %v744 = vld [vmem:[#allocation4 + $0x188] sm:$0xff]
    %v745 = vld [vmem:[#allocation4 + $0x190] sm:$0xff]
    %v746 = vld [vmem:[#allocation4 + $0x198] sm:$0xff]
    %v747 = vld [vmem:[#allocation4 + $0x1a0] sm:$0xff]
    %v748 = vld [vmem:[#allocation4 + $0x1a8] sm:$0xff]
    %v749 = vld [vmem:[#allocation4 + $0x1b0] sm:$0xff]
    %v750 = vld [vmem:[#allocation4 + $0x1b8] sm:$0xff]
    %v751 = vld [vmem:[#allocation4 + $0x1c0] sm:$0xff]
    %v752 = vld [vmem:[#allocation4 + $0x1c8] sm:$0xff]
    %v753 = vld [vmem:[#allocation4 + $0x1d0] sm:$0xff]
    %v754 = vld [vmem:[#allocation4 + $0x1d8] sm:$0xff]
    %v755 = vld [vmem:[#allocation4 + $0x1e0] sm:$0xff]
    %v756 = vld [vmem:[#allocation4 + $0x1e8] sm:$0xff]
    %v757 = vld [vmem:[#allocation4 + $0x1f0] sm:$0xff]
    %v758 = vld [vmem:[#allocation4 + $0x1f8] sm:$0xff]
    %v759 = vld [vmem:[#allocation4 + $0x200] sm:$0xff]
    %v760 = vld [vmem:[#allocation4 + $0x208] sm:$0xff]
    %v761 = vld [vmem:[#allocation4 + $0x210] sm:$0xff]
    %v762 = vld [vmem:[#allocation4 + $0x218] sm:$0xff]
    %v763 = vld [vmem:[#allocation4 + $0x220] sm:$0xff]
    %v764 = vld [vmem:[#allocation4 + $0x228] sm:$0xff]
    %v765 = vld [vmem:[#allocation4 + $0x230] sm:$0xff]
    %v766 = vld [vmem:[#allocation4 + $0x238] sm:$0xff]
    %v767 = vld [vmem:[#allocation4 + $0x240] sm:$0xff]
    %v768 = vld [vmem:[#allocation4 + $0x248] sm:$0xff]
    %v769 = vld [vmem:[#allocation4 + $0x250] sm:$0xff]
    %v770 = vld [vmem:[#allocation4 + $0x258] sm:$0xff]
    %v771 = vld [vmem:[#allocation4 + $0x260] sm:$0xff]
    %v772 = vld [vmem:[#allocation4 + $0x268] sm:$0xff]
    %v773 = vld [vmem:[#allocation4 + $0x270] sm:$0xff]
    %v774 = vld [vmem:[#allocation4 + $0x278] sm:$0xff]
    %v775 = vld [vmem:[#allocation4 + $0x280] sm:$0xff]
    %v776 = vld [vmem:[#allocation4 + $0x288] sm:$0xff]
    %v777 = vld [vmem:[#allocation4 + $0x290] sm:$0xff]
    %v778 = vld [vmem:[#allocation4 + $0x298] sm:$0xff]
    %v779 = vld [vmem:[#allocation4 + $0x2a0] sm:$0xff]
    %v780 = vld [vmem:[#allocation4 + $0x2a8] sm:$0xff]
    %v781 = vld [vmem:[#allocation4 + $0x2b0] sm:$0xff]
    %v782 = vld [vmem:[#allocation4 + $0x2b8] sm:$0xff]
    %v783 = vld [vmem:[#allocation4 + $0x2c0] sm:$0xff]
    %v784 = vld [vmem:[#allocation4 + $0x2c8] sm:$0xff]
    %v785 = vld [vmem:[#allocation4 + $0x2d0] sm:$0xff]
    %v786 = vld [vmem:[#allocation4 + $0x2d8] sm:$0xff]
    %v787 = vld [vmem:[#allocation4 + $0x2e0] sm:$0xff]
    %v788 = vld [vmem:[#allocation4 + $0x2e8] sm:$0xff]
    %v789 = vld [vmem:[#allocation4 + $0x2f0] sm:$0xff]
    %v790 = vld [vmem:[#allocation4 + $0x2f8] sm:$0xff]
    %v791 = vld [vmem:[#allocation4 + $0x300] sm:$0xff]
    %v792 = vld [vmem:[#allocation4 + $0x308] sm:$0xff]
    %v793 = vld [vmem:[#allocation4 + $0x310] sm:$0xff]
    %v794 = vld [vmem:[#allocation4 + $0x318] sm:$0xff]
    %v795 = vld [vmem:[#allocation4 + $0x320] sm:$0xff]
    %v796 = vld [vmem:[#allocation4 + $0x328] sm:$0xff]
    %v797 = vld [vmem:[#allocation4 + $0x330] sm:$0xff]
    %v798 = vld [vmem:[#allocation4 + $0x338] sm:$0xff]
    %v799 = vld [vmem:[#allocation4 + $0x340] sm:$0xff]
    %v800 = vld [vmem:[#allocation4 + $0x348] sm:$0xff]
    %v801 = vld [vmem:[#allocation4 + $0x350] sm:$0xff]
    %v802 = vld [vmem:[#allocation4 + $0x358] sm:$0xff]
    %v803 = vld [vmem:[#allocation4 + $0x360] sm:$0xff]
    %v804 = vld [vmem:[#allocation4 + $0x368] sm:$0xff]
    %v805 = vld [vmem:[#allocation4 + $0x370] sm:$0xff]
    %v806 = vld [vmem:[#allocation4 + $0x378] sm:$0xff]
    %v807 = vld [vmem:[#allocation4 + $0x380] sm:$0xff]
    %v808 = vld [vmem:[#allocation4 + $0x388] sm:$0xff]
    %v809 = vld [vmem:[#allocation4 + $0x390] sm:$0xff]
    %v810 = vld [vmem:[#allocation4 + $0x398] sm:$0xff]
    %v811 = vld [vmem:[#allocation4 + $0x3a0] sm:$0xff]
    %v812 = vld [vmem:[#allocation4 + $0x3a8] sm:$0xff]
    %v813 = vld [vmem:[#allocation4 + $0x3b0] sm:$0xff]
    %v814 = vld [vmem:[#allocation4 + $0x3b8] sm:$0xff]
    %v815 = vld [vmem:[#allocation4 + $0x3c0] sm:$0xff]
    %v816 = vld [vmem:[#allocation4 + $0x3c8] sm:$0xff]
    %v817 = vld [vmem:[#allocation4 + $0x3d0] sm:$0xff]
    %v818 = vld [vmem:[#allocation4 + $0x3d8] sm:$0xff]
    %v819 = vld [vmem:[#allocation4 + $0x3e0] sm:$0xff]
    %v820 = vld [vmem:[#allocation4 + $0x3e8] sm:$0xff]
    %v821 = vld [vmem:[#allocation4 + $0x3f0] sm:$0xff]
    %v822 = vld [vmem:[#allocation4 + $0x3f8] sm:$0xff]
    %v823 = vld [vmem:[#allocation2] sm:$0xff]
    %v824 = vld [vmem:[#allocation2 + $0x8] sm:$0xff]
    %v825 = vld [vmem:[#allocation2 + $0x10] sm:$0xff]
    %v826 = vld [vmem:[#allocation2 + $0x18] sm:$0xff]
    %v827 = vld [vmem:[#allocation2 + $0x1e0] sm:$0xff]
    %v828 = vld [vmem:[#allocation2 + $0x1e8] sm:$0xff]
    %v829 = vld [vmem:[#allocation2 + $0x1f0] sm:$0xff]
    %v830 = vld [vmem:[#allocation2 + $0x1f8] sm:$0xff]
    %831 = vmatprep.subr.mxu0 %v696
    %832 = vmatpush1.msra.mxu0 %v695
    %833 = vmatprep.subr.mxu0 %v700
    %834 = vmatpush1.msra.mxu0 %v699
    %835 = vmatprep.subr.mxu0 %v704
    %836 = vmatpush1.msra.mxu0 %v703
    %837 = vmatprep.subr.mxu0 %v708
    %838 = vmatpush1.msra.mxu0 %v707
    %839 = vmatprep.subr.mxu0 %v712
    %840 = vmatpush1.msra.mxu0 %v711
    %841 = vmatprep.subr.mxu0 %v716
    %842 = vmatpush1.msra.mxu0 %v715
    %843 = vmatprep.subr.mxu0 %v720
    %844 = vmatpush1.msra.mxu0 %v719
    %845 = vmatprep.subr.mxu0 %v724
    %846 = vmatpush1.msra.mxu0 %v723
    %847 = vmatprep.subr.mxu0 %v728
    %848 = vmatpush1.msra.mxu0 %v727
    %849 = vmatprep.subr.mxu0 %v732
    %850 = vmatpush1.msra.mxu0 %v731
    %851 = vmatprep.subr.mxu0 %v736
    %852 = vmatpush1.msra.mxu0 %v735
    %853 = vmatprep.subr.mxu0 %v740
    %854 = vmatpush1.msra.mxu0 %v739
    %855 = vmatprep.subr.mxu0 %v744
    %856 = vmatpush1.msra.mxu0 %v743
    %857 = vmatprep.subr.mxu0 %v748
    %858 = vmatpush1.msra.mxu0 %v747
    %859 = vmatprep.subr.mxu0 %v752
    %860 = vmatpush1.msra.mxu0 %v751
    %861 = vmatprep.subr.mxu0 %v756
    %862 = vmatpush1.msra.mxu0 %v755
    %863 = vmatprep.subr.mxu0 %v760
    %864 = vmatpush1.msra.mxu0 %v759
    %865 = vmatprep.subr.mxu0 %v764
    %866 = vmatpush1.msra.mxu0 %v763
    %867 = vmatprep.subr.mxu0 %v768
    %868 = vmatpush1.msra.mxu0 %v767
    %869 = vmatprep.subr.mxu0 %v772
    %870 = vmatpush1.msra.mxu0 %v771
    %871 = vmatprep.subr.mxu0 %v776
    %872 = vmatpush1.msra.mxu0 %v775
    %873 = vmatprep.subr.mxu0 %v780
    %874 = vmatpush1.msra.mxu0 %v779
    %875 = vmatprep.subr.mxu0 %v784
    %876 = vmatpush1.msra.mxu0 %v783
    %877 = vmatprep.subr.mxu0 %v788
    %878 = vmatpush1.msra.mxu0 %v787
    %879 = vmatprep.subr.mxu0 %v792
    %880 = vmatpush1.msra.mxu0 %v791
    %881 = vmatprep.subr.mxu0 %v796
    %882 = vmatpush1.msra.mxu0 %v795
    %883 = vmatprep.subr.mxu0 %v800
    %884 = vmatpush1.msra.mxu0 %v799
    %885 = vmatprep.subr.mxu0 %v804
    %886 = vmatpush1.msra.mxu0 %v803
    %887 = vmatprep.subr.mxu0 %v808
    %888 = vmatpush1.msra.mxu0 %v807
    %889 = vmatprep.subr.mxu0 %v812
    %890 = vmatpush1.msra.mxu0 %v811
    %891 = vmatprep.subr.mxu0 %v816
    %892 = vmatpush1.msra.mxu0 %v815
    %893 = vmatprep.subr.mxu0 %v820
    %894 = vmatpush1.msra.mxu0 %v819
    %895 = vmatprep.mubr.f32.mxu0 0.0
    %896 = vmatmul.mubr.f32.gmra.mrb[0].mxu0 0.0
    %v897 = vpop.f32.mrb[0].mxu0
    %v898 = vadd.f32 0.0, %v897
    %v899 = vpop.f32.mrb[0].mxu0
    %v900 = vadd.f32 0.0, %v899
    %901 = vmatprep.mubr.f32.mxu0 0.0
    %902 = vmatmul.mubr.f32.gmra.mrb[0].mxu0 0.0
    %v903 = vpop.f32.mrb[0].mxu0
    %v904 = vadd.f32 0.0, %v903
    %v905 = vpop.f32.mrb[0].mxu0
    %v906 = vadd.f32 0.0, %v905
    %907 = vdwg.mxu0
    %908 = vmatprep.subr.mxu0 %v698
    %909 = vmatpush1.msra.mxu0 %v697
    %910 = vmatprep.subr.mxu0 %v702
    %911 = vmatpush1.msra.mxu0 %v701
    %912 = vmatprep.subr.mxu0 %v706
    %913 = vmatpush1.msra.mxu0 %v705
    %914 = vmatprep.subr.mxu0 %v710
    %915 = vmatpush1.msra.mxu0 %v709
    %916 = vmatprep.subr.mxu0 %v714
    %917 = vmatpush1.msra.mxu0 %v713
    %918 = vmatprep.subr.mxu0 %v718
    %919 = vmatpush1.msra.mxu0 %v717
    %920 = vmatprep.subr.mxu0 %v722
    %921 = vmatpush1.msra.mxu0 %v721
    %922 = vmatprep.subr.mxu0 %v726
    %923 = vmatpush1.msra.mxu0 %v725
    %924 = vmatprep.subr.mxu0 %v730
    %925 = vmatpush1.msra.mxu0 %v729
    %926 = vmatprep.subr.mxu0 %v734
    %927 = vmatpush1.msra.mxu0 %v733
    %928 = vmatprep.subr.mxu0 %v738
    %929 = vmatpush1.msra.mxu0 %v737
    %930 = vmatprep.subr.mxu0 %v742
    %931 = vmatpush1.msra.mxu0 %v741
    %932 = vmatprep.subr.mxu0 %v746
    %933 = vmatpush1.msra.mxu0 %v745
    %934 = vmatprep.subr.mxu0 %v750
    %935 = vmatpush1.msra.mxu0 %v749
    %936 = vmatprep.subr.mxu0 %v754
    %937 = vmatpush1.msra.mxu0 %v753
    %938 = vmatprep.subr.mxu0 %v758
    %939 = vmatpush1.msra.mxu0 %v757
    %940 = vmatprep.subr.mxu0 %v762
    %941 = vmatpush1.msra.mxu0 %v761
    %942 = vmatprep.subr.mxu0 %v766
    %943 = vmatpush1.msra.mxu0 %v765
    %944 = vmatprep.subr.mxu0 %v770
    %945 = vmatpush1.msra.mxu0 %v769
    %946 = vmatprep.subr.mxu0 %v774
    %947 = vmatpush1.msra.mxu0 %v773
    %948 = vmatprep.subr.mxu0 %v778
    %949 = vmatpush1.msra.mxu0 %v777
    %950 = vmatprep.subr.mxu0 %v782
    %951 = vmatpush1.msra.mxu0 %v781
    %952 = vmatprep.subr.mxu0 %v786
    %953 = vmatpush1.msra.mxu0 %v785
    %954 = vmatprep.subr.mxu0 %v790
    %955 = vmatpush1.msra.mxu0 %v789
    %956 = vmatprep.subr.mxu0 %v794
    %957 = vmatpush1.msra.mxu0 %v793
    %958 = vmatprep.subr.mxu0 %v798
    %959 = vmatpush1.msra.mxu0 %v797
    %960 = vmatprep.subr.mxu0 %v802
    %961 = vmatpush1.msra.mxu0 %v801
    %962 = vmatprep.subr.mxu0 %v806
    %963 = vmatpush1.msra.mxu0 %v805
    %964 = vmatprep.subr.mxu0 %v810
    %965 = vmatpush1.msra.mxu0 %v809
    %966 = vmatprep.subr.mxu0 %v814
    %967 = vmatpush1.msra.mxu0 %v813
    %968 = vmatprep.subr.mxu0 %v818
    %969 = vmatpush1.msra.mxu0 %v817
    %970 = vmatprep.subr.mxu0 %v822
    %971 = vmatpush1.msra.mxu0 %v821
    %972 = vmatprep.mubr.f32.mxu0 0.0
    %973 = vmatmul.mubr.f32.gmra.mrb[0].mxu0 0.0
    %v974 = vpop.f32.mrb[0].mxu0
    %v975 = vadd.f32 0.0, %v974
    %v976 = vpop.f32.mrb[0].mxu0
    %v977 = vadd.f32 0.0, %v976
    %978 = vmatprep.mubr.f32.mxu0 0.0
    %979 = vmatmul.mubr.f32.gmra.mrb[0].mxu0 0.0
    %v980 = vpop.f32.mrb[0].mxu0
    %v981 = vadd.f32 0.0, %v980
    %v982 = vpop.f32.mrb[0].mxu0
    %v983 = vadd.f32 0.0, %v982
    %984 = vdwg.mxu0
    %v985 = vadd.f32 %v823, %v898
    %v986 = vadd.f32 %v824, %v900
    %v987 = vadd.f32 %v825, %v975
    %v988 = vadd.f32 %v826, %v977
    %v989 = vadd.f32 %v827, %v904
    %v990 = vadd.f32 %v828, %v906
    %v991 = vadd.f32 %v829, %v981
    %v992 = vadd.f32 %v830, %v983
    %v993 = vxor.u32 %v985, 2147483648
    %v994 = vxor.u32 %v986, 2147483648
    %v995 = vxor.u32 %v987, 2147483648
    %v996 = vxor.u32 %v989, 2147483648
    %v997 = vxor.u32 %v990, 2147483648
    %v998 = vxor.u32 %v991, 2147483648
    %v999 = vmul.f32 %v993, 1.442695
    %v1000 = vpow.pop %v999
    %v1001 = vmul.f32 %v994, 1.442695
    %v1002 = vpow.pop %v1001
    %v1003 = vmul.f32 %v995, 1.442695
    %v1004 = vpow.pop %v1003
    %v1005 = vmul.f32 %v996, 1.442695
    %v1006 = vpow.pop %v1005
    %v1007 = vmul.f32 %v997, 1.442695
    %v1008 = vpow.pop %v1007
    %v1009 = vmul.f32 %v998, 1.442695
    %v1010 = vpow.pop %v1009
    %v1011 = vadd.f32 %v1000, 1.0
    %v1012 = vadd.f32 %v1002, 1.0
    %v1013 = vadd.f32 %v1004, 1.0
    %v1014 = vadd.f32 %v1006, 1.0
    %v1015 = vadd.f32 %v1008, 1.0
    %v1016 = vadd.f32 %v1010, 1.0
    %v1017 = vrcp.pop %v1011
    %v1018 = vmul.f32 1.0, %v1017
    %v1019 = vrcp.pop %v1012
    %v1020 = vmul.f32 1.0, %v1019
    %v1021 = vrcp.pop %v1013
    %v1022 = vmul.f32 1.0, %v1021
    %v1023 = vrcp.pop %v1014
    %v1024 = vmul.f32 1.0, %v1023
    %v1025 = vrcp.pop %v1015
    %v1026 = vmul.f32 1.0, %v1025
    %v1027 = vrcp.pop %v1016
    %v1028 = vmul.f32 1.0, %v1027
    %v1029 = vtanh.pop %v988
    %v1030 = vtanh.pop %v992
    %v1031 = vmul.f32 %v1020, 0.0
    %v1032 = vmul.f32 %v1026, 0.0
    %v1033 = vmul.f32 %v1018, %v1029
    %v1034 = vmul.f32 %v1024, %v1030
    %v1035 = vadd.f32 %v1031, %v1033
    %v1036 = vadd.f32 %v1032, %v1034
    %v1037 = vtanh.pop %v1035
    %v1038 = vtanh.pop %v1036
    %v1039 = vmul.f32 %v1022, %v1037
    %v1040 = vmul.f32 %v1028, %v1038
    %vm1041 = vcmp.gt.s32.totalorder %v90, 0
    %vm1042 = vcmp.gt.s32.totalorder %v90, 7
    %v1043 = vsel %vm1041, 1, 0
    %v1044 = vsel %vm1042, 1, 0
    %1045 = vset.pattern.permute.xlu0 0
    %1046 = vperm.xlu0 %1045, %v1043
    %v1047 = vpop.permute.xlu0 %1046
    %1048 = vset.pattern.permute.xlu0 0
    %1049 = vperm.xlu0 %1048, %v1044
    %v1050 = vpop.permute.xlu0 %1049
    %vm1051 = vcmp.eq.s32.totalorder %v1047, 1
    %vm1052 = vcmp.eq.s32.totalorder %v1050, 1
    %v1053 = vsel %vm1051, %v1039, 0.0
    %v1054 = vsel %vm1052, %v1040, 0.0
    %v1055 = vsel %vm1051, %v1035, 0.0
    %v1056 = vsel %vm1052, %v1036, 0.0
    %1057 = vst [vmem:[#allocation3] sm:$0xff] %v1053
    %1058 = vst [vmem:[#allocation3 + $0x78] sm:$0xff] %v1054
    %v1059 = vsel %vm94, 1, 0
    %v1060 = vsel %vm95, 1, 0
    %vm1061 = vcmp.eq.s32.totalorder %v1059, 1
    %vm1062 = vcmp.eq.s32.totalorder %v1060, 1
    %v1063 = vsel %vm1061, %v1053, 0.0
    %v1064 = vsel %vm1062, %v1054, 0.0
    %v1065 = vsel %vm1061, 0.0, %v1053
    %v1066 = vsel %vm1062, 0.0, %v1054
    %v1067 = vld [vmem:[#allocation2 + $0x40] sm:$0xff]
    %v1068 = vld [vmem:[#allocation2 + $0x48] sm:$0xff]
    %v1069 = vld [vmem:[#allocation2 + $0x50] sm:$0xff]
    %v1070 = vld [vmem:[#allocation2 + $0x58] sm:$0xff]
    %v1071 = vld [vmem:[#allocation2 + $0x1a0] sm:$0xff]
    %v1072 = vld [vmem:[#allocation2 + $0x1a8] sm:$0xff]
    %v1073 = vld [vmem:[#allocation2 + $0x1b0] sm:$0xff]
    %v1074 = vld [vmem:[#allocation2 + $0x1b8] sm:$0xff]
    %1075 = vmatprep.subr.mxu0 %v696
    %1076 = vmatpush1.msra.mxu0 %v695
    %1077 = vmatprep.subr.mxu0 %v700
    %1078 = vmatpush1.msra.mxu0 %v699
    %1079 = vmatprep.subr.mxu0 %v704
    %1080 = vmatpush1.msra.mxu0 %v703
    %1081 = vmatprep.subr.mxu0 %v708
    %1082 = vmatpush1.msra.mxu0 %v707
    %1083 = vmatprep.subr.mxu0 %v712
    %1084 = vmatpush1.msra.mxu0 %v711
    %1085 = vmatprep.subr.mxu0 %v716
    %1086 = vmatpush1.msra.mxu0 %v715
    %1087 = vmatprep.subr.mxu0 %v720
    %1088 = vmatpush1.msra.mxu0 %v719
    %1089 = vmatprep.subr.mxu0 %v724
    %1090 = vmatpush1.msra.mxu0 %v723
    %1091 = vmatprep.subr.mxu0 %v728
    %1092 = vmatpush1.msra.mxu0 %v727
    %1093 = vmatprep.subr.mxu0 %v732
    %1094 = vmatpush1.msra.mxu0 %v731
    %1095 = vmatprep.subr.mxu0 %v736
    %1096 = vmatpush1.msra.mxu0 %v735
    %1097 = vmatprep.subr.mxu0 %v740
    %1098 = vmatpush1.msra.mxu0 %v739
    %1099 = vmatprep.subr.mxu0 %v744
    %1100 = vmatpush1.msra.mxu0 %v743
    %1101 = vmatprep.subr.mxu0 %v748
    %1102 = vmatpush1.msra.mxu0 %v747
    %1103 = vmatprep.subr.mxu0 %v752
    %1104 = vmatpush1.msra.mxu0 %v751
    %1105 = vmatprep.subr.mxu0 %v756
    %1106 = vmatpush1.msra.mxu0 %v755
    %1107 = vmatprep.subr.mxu0 %v760
    %1108 = vmatpush1.msra.mxu0 %v759
    %1109 = vmatprep.subr.mxu0 %v764
    %1110 = vmatpush1.msra.mxu0 %v763
    %1111 = vmatprep.subr.mxu0 %v768
    %1112 = vmatpush1.msra.mxu0 %v767
    %1113 = vmatprep.subr.mxu0 %v772
    %1114 = vmatpush1.msra.mxu0 %v771
    %1115 = vmatprep.subr.mxu0 %v776
    %1116 = vmatpush1.msra.mxu0 %v775
    %1117 = vmatprep.subr.mxu0 %v780
    %1118 = vmatpush1.msra.mxu0 %v779
    %1119 = vmatprep.subr.mxu0 %v784
    %1120 = vmatpush1.msra.mxu0 %v783
    %1121 = vmatprep.subr.mxu0 %v788
    %1122 = vmatpush1.msra.mxu0 %v787
    %1123 = vmatprep.subr.mxu0 %v792
    %1124 = vmatpush1.msra.mxu0 %v791
    %1125 = vmatprep.subr.mxu0 %v796
    %1126 = vmatpush1.msra.mxu0 %v795
    %1127 = vmatprep.subr.mxu0 %v800
    %1128 = vmatpush1.msra.mxu0 %v799
    %1129 = vmatprep.subr.mxu0 %v804
    %1130 = vmatpush1.msra.mxu0 %v803
    %1131 = vmatprep.subr.mxu0 %v808
    %1132 = vmatpush1.msra.mxu0 %v807
    %1133 = vmatprep.subr.mxu0 %v812
    %1134 = vmatpush1.msra.mxu0 %v811
    %1135 = vmatprep.subr.mxu0 %v816
    %1136 = vmatpush1.msra.mxu0 %v815
    %1137 = vmatprep.subr.mxu0 %v820
    %1138 = vmatpush1.msra.mxu0 %v819
    %1139 = vmatprep.mubr.f32.mxu0 %v1065
    %1140 = vmatmul.mubr.f32.gmra.mrb[0].mxu0 %v1063
    %v1141 = vpop.f32.mrb[0].mxu0
    %v1142 = vadd.f32 0.0, %v1141
    %v1143 = vpop.f32.mrb[0].mxu0
    %v1144 = vadd.f32 0.0, %v1143
    %1145 = vmatprep.mubr.f32.mxu0 %v1066
    %1146 = vmatmul.mubr.f32.gmra.mrb[0].mxu0 %v1064
    %v1147 = vpop.f32.mrb[0].mxu0
    %v1148 = vadd.f32 0.0, %v1147
    %v1149 = vpop.f32.mrb[0].mxu0
    %v1150 = vadd.f32 0.0, %v1149
    %1151 = vdwg.mxu0
    %1152 = vmatprep.subr.mxu0 %v698
    %1153 = vmatpush1.msra.mxu0 %v697
    %1154 = vmatprep.subr.mxu0 %v702
    %1155 = vmatpush1.msra.mxu0 %v701
    %1156 = vmatprep.subr.mxu0 %v706
    %1157 = vmatpush1.msra.mxu0 %v705
    %1158 = vmatprep.subr.mxu0 %v710
    %1159 = vmatpush1.msra.mxu0 %v709
    %1160 = vmatprep.subr.mxu0 %v714
    %1161 = vmatpush1.msra.mxu0 %v713
    %1162 = vmatprep.subr.mxu0 %v718
    %1163 = vmatpush1.msra.mxu0 %v717
    %1164 = vmatprep.subr.mxu0 %v722
    %1165 = vmatpush1.msra.mxu0 %v721
    %1166 = vmatprep.subr.mxu0 %v726
    %1167 = vmatpush1.msra.mxu0 %v725
    %1168 = vmatprep.subr.mxu0 %v730
    %1169 = vmatpush1.msra.mxu0 %v729
    %1170 = vmatprep.subr.mxu0 %v734
    %1171 = vmatpush1.msra.mxu0 %v733
    %1172 = vmatprep.subr.mxu0 %v738
    %1173 = vmatpush1.msra.mxu0 %v737
    %1174 = vmatprep.subr.mxu0 %v742
    %1175 = vmatpush1.msra.mxu0 %v741
    %1176 = vmatprep.subr.mxu0 %v746
    %1177 = vmatpush1.msra.mxu0 %v745
    %1178 = vmatprep.subr.mxu0 %v750
    %1179 = vmatpush1.msra.mxu0 %v749
    %1180 = vmatprep.subr.mxu0 %v754
    %1181 = vmatpush1.msra.mxu0 %v753
    %1182 = vmatprep.subr.mxu0 %v758
    %1183 = vmatpush1.msra.mxu0 %v757
    %1184 = vmatprep.subr.mxu0 %v762
    %1185 = vmatpush1.msra.mxu0 %v761
    %1186 = vmatprep.subr.mxu0 %v766
    %1187 = vmatpush1.msra.mxu0 %v765
    %1188 = vmatprep.subr.mxu0 %v770
    %1189 = vmatpush1.msra.mxu0 %v769
    %1190 = vmatprep.subr.mxu0 %v774
    %1191 = vmatpush1.msra.mxu0 %v773
    %1192 = vmatprep.subr.mxu0 %v778
    %1193 = vmatpush1.msra.mxu0 %v777
    %1194 = vmatprep.subr.mxu0 %v782
    %1195 = vmatpush1.msra.mxu0 %v781
    %1196 = vmatprep.subr.mxu0 %v786
    %1197 = vmatpush1.msra.mxu0 %v785
    %1198 = vmatprep.subr.mxu0 %v790
    %1199 = vmatpush1.msra.mxu0 %v789
    %1200 = vmatprep.subr.mxu0 %v794
    %1201 = vmatpush1.msra.mxu0 %v793
    %1202 = vmatprep.subr.mxu0 %v798
    %1203 = vmatpush1.msra.mxu0 %v797
    %1204 = vmatprep.subr.mxu0 %v802
    %1205 = vmatpush1.msra.mxu0 %v801
    %1206 = vmatprep.subr.mxu0 %v806
    %1207 = vmatpush1.msra.mxu0 %v805
    %1208 = vmatprep.subr.mxu0 %v810
    %1209 = vmatpush1.msra.mxu0 %v809
    %1210 = vmatprep.subr.mxu0 %v814
    %1211 = vmatpush1.msra.mxu0 %v813
    %1212 = vmatprep.subr.mxu0 %v818
    %1213 = vmatpush1.msra.mxu0 %v817
    %1214 = vmatprep.subr.mxu0 %v822
    %1215 = vmatpush1.msra.mxu0 %v821
    %1216 = vmatprep.mubr.f32.mxu0 %v1065
    %1217 = vmatmul.mubr.f32.gmra.mrb[0].mxu0 %v1063
    %v1218 = vpop.f32.mrb[0].mxu0
    %v1219 = vadd.f32 0.0, %v1218
    %v1220 = vpop.f32.mrb[0].mxu0
    %v1221 = vadd.f32 0.0, %v1220
    %1222 = vmatprep.mubr.f32.mxu0 %v1066
    %1223 = vmatmul.mubr.f32.gmra.mrb[0].mxu0 %v1064
    %v1224 = vpop.f32.mrb[0].mxu0
    %v1225 = vadd.f32 0.0, %v1224
    %v1226 = vpop.f32.mrb[0].mxu0
    %v1227 = vadd.f32 0.0, %v1226
    %1228 = vdwg.mxu0
    %v1229 = vadd.f32 %v1067, %v1142
    %v1230 = vadd.f32 %v1068, %v1144
    %v1231 = vadd.f32 %v1069, %v1219
    %v1232 = vadd.f32 %v1070, %v1221
    %v1233 = vadd.f32 %v1071, %v1148
    %v1234 = vadd.f32 %v1072, %v1150
    %v1235 = vadd.f32 %v1073, %v1225
    %v1236 = vadd.f32 %v1074, %v1227
    %v1237 = vxor.u32 %v1229, 2147483648
    %v1238 = vxor.u32 %v1230, 2147483648
    %v1239 = vxor.u32 %v1231, 2147483648
    %v1240 = vxor.u32 %v1233, 2147483648
    %v1241 = vxor.u32 %v1234, 2147483648
    %v1242 = vxor.u32 %v1235, 2147483648
    %v1243 = vmul.f32 %v1237, 1.442695
    %v1244 = vpow.pop %v1243
    %v1245 = vmul.f32 %v1238, 1.442695
    %v1246 = vpow.pop %v1245
    %v1247 = vmul.f32 %v1239, 1.442695
    %v1248 = vpow.pop %v1247
    %v1249 = vmul.f32 %v1240, 1.442695
    %v1250 = vpow.pop %v1249
    %v1251 = vmul.f32 %v1241, 1.442695
    %v1252 = vpow.pop %v1251
    %v1253 = vmul.f32 %v1242, 1.442695
    %v1254 = vpow.pop %v1253
    %v1255 = vadd.f32 %v1244, 1.0
    %v1256 = vadd.f32 %v1246, 1.0
    %v1257 = vadd.f32 %v1248, 1.0
    %v1258 = vadd.f32 %v1250, 1.0
    %v1259 = vadd.f32 %v1252, 1.0
    %v1260 = vadd.f32 %v1254, 1.0
    %v1261 = vrcp.pop %v1255
    %v1262 = vmul.f32 1.0, %v1261
    %v1263 = vrcp.pop %v1256
    %v1264 = vmul.f32 1.0, %v1263
    %v1265 = vrcp.pop %v1257
    %v1266 = vmul.f32 1.0, %v1265
    %v1267 = vrcp.pop %v1258
    %v1268 = vmul.f32 1.0, %v1267
    %v1269 = vrcp.pop %v1259
    %v1270 = vmul.f32 1.0, %v1269
    %v1271 = vrcp.pop %v1260
    %v1272 = vmul.f32 1.0, %v1271
    %v1273 = vtanh.pop %v1232
    %v1274 = vtanh.pop %v1236
    %v1275 = vmul.f32 %v1264, %v1055
    %v1276 = vmul.f32 %v1270, %v1056
    %v1277 = vmul.f32 %v1262, %v1273
    %v1278 = vmul.f32 %v1268, %v1274
    %v1279 = vadd.f32 %v1275, %v1277
    %v1280 = vadd.f32 %v1276, %v1278
    %v1281 = vtanh.pop %v1279
    %v1282 = vtanh.pop %v1280
    %v1283 = vmul.f32 %v1266, %v1281
    %v1284 = vmul.f32 %v1272, %v1282
    %vm1285 = vcmp.gt.s32.totalorder %v90, 1
    %vm1286 = vcmp.gt.s32.totalorder %v90, 6
    %v1287 = vsel %vm1285, 1, 0
    %v1288 = vsel %vm1286, 1, 0
    %1289 = vset.pattern.permute.xlu0 0
    %1290 = vperm.xlu0 %1289, %v1287
    %v1291 = vpop.permute.xlu0 %1290
    %1292 = vset.pattern.permute.xlu0 0
    %1293 = vperm.xlu0 %1292, %v1288
    %v1294 = vpop.permute.xlu0 %1293
    %vm1295 = vcmp.eq.s32.totalorder %v1291, 1
    %vm1296 = vcmp.eq.s32.totalorder %v1294, 1
    %v1297 = vsel %vm1295, %v1283, %v1053
    %v1298 = vsel %vm1296, %v1284, %v1054
    %v1299 = vsel %vm1295, %v1279, %v1055
    %v1300 = vsel %vm1296, %v1280, %v1056
    %v1301 = vsel %vm1295, %v1283, 0.0
    %v1302 = vsel %vm1296, %v1284, 0.0
    %1303 = vst [vmem:[#allocation3 + $0x10] sm:$0xff] %v1301
    %1304 = vst [vmem:[#allocation3 + $0x68] sm:$0xff] %v1302
    %v1305 = vsel %vm1061, %v1297, 0.0
    %v1306 = vsel %vm1062, %v1298, 0.0
    %v1307 = vsel %vm1061, 0.0, %v1297
    %v1308 = vsel %vm1062, 0.0, %v1298
    %v1309 = vld [vmem:[#allocation2 + $0x80] sm:$0xff]
    %v1310 = vld [vmem:[#allocation2 + $0x88] sm:$0xff]
    %v1311 = vld [vmem:[#allocation2 + $0x90] sm:$0xff]
    %v1312 = vld [vmem:[#allocation2 + $0x98] sm:$0xff]
    %v1313 = vld [vmem:[#allocation2 + $0x160] sm:$0xff]
    %v1314 = vld [vmem:[#allocation2 + $0x168] sm:$0xff]
    %v1315 = vld [vmem:[#allocation2 + $0x170] sm:$0xff]
    %v1316 = vld [vmem:[#allocation2 + $0x178] sm:$0xff]
    %1317 = vmatprep.subr.mxu0 %v696
    %1318 = vmatpush1.msra.mxu0 %v695
    %1319 = vmatprep.subr.mxu0 %v700
    %1320 = vmatpush1.msra.mxu0 %v699
    %1321 = vmatprep.subr.mxu0 %v704
    %1322 = vmatpush1.msra.mxu0 %v703
    %1323 = vmatprep.subr.mxu0 %v708
    %1324 = vmatpush1.msra.mxu0 %v707
    %1325 = vmatprep.subr.mxu0 %v712
    %1326 = vmatpush1.msra.mxu0 %v711
    %1327 = vmatprep.subr.mxu0 %v716
    %1328 = vmatpush1.msra.mxu0 %v715
    %1329 = vmatprep.subr.mxu0 %v720
    %1330 = vmatpush1.msra.mxu0 %v719
    %1331 = vmatprep.subr.mxu0 %v724
    %1332 = vmatpush1.msra.mxu0 %v723
    %1333 = vmatprep.subr.mxu0 %v728
    %1334 = vmatpush1.msra.mxu0 %v727
    %1335 = vmatprep.subr.mxu0 %v732
    %1336 = vmatpush1.msra.mxu0 %v731
    %1337 = vmatprep.subr.mxu0 %v736
    %1338 = vmatpush1.msra.mxu0 %v735
    %1339 = vmatprep.subr.mxu0 %v740
    %1340 = vmatpush1.msra.mxu0 %v739
    %1341 = vmatprep.subr.mxu0 %v744
    %1342 = vmatpush1.msra.mxu0 %v743
    %1343 = vmatprep.subr.mxu0 %v748
    %1344 = vmatpush1.msra.mxu0 %v747
    %1345 = vmatprep.subr.mxu0 %v752
    %1346 = vmatpush1.msra.mxu0 %v751
    %1347 = vmatprep.subr.mxu0 %v756
    %1348 = vmatpush1.msra.mxu0 %v755
    %1349 = vmatprep.subr.mxu0 %v760
    %1350 = vmatpush1.msra.mxu0 %v759
    %1351 = vmatprep.subr.mxu0 %v764
    %1352 = vmatpush1.msra.mxu0 %v763
    %1353 = vmatprep.subr.mxu0 %v768
    %1354 = vmatpush1.msra.mxu0 %v767
    %1355 = vmatprep.subr.mxu0 %v772
    %1356 = vmatpush1.msra.mxu0 %v771
    %1357 = vmatprep.subr.mxu0 %v776
    %1358 = vmatpush1.msra.mxu0 %v775
    %1359 = vmatprep.subr.mxu0 %v780
    %1360 = vmatpush1.msra.mxu0 %v779
    %1361 = vmatprep.subr.mxu0 %v784
    %1362 = vmatpush1.msra.mxu0 %v783
    %1363 = vmatprep.subr.mxu0 %v788
    %1364 = vmatpush1.msra.mxu0 %v787
    %1365 = vmatprep.subr.mxu0 %v792
    %1366 = vmatpush1.msra.mxu0 %v791
    %1367 = vmatprep.subr.mxu0 %v796
    %1368 = vmatpush1.msra.mxu0 %v795
    %1369 = vmatprep.subr.mxu0 %v800
    %1370 = vmatpush1.msra.mxu0 %v799
    %1371 = vmatprep.subr.mxu0 %v804
    %1372 = vmatpush1.msra.mxu0 %v803
    %1373 = vmatprep.subr.mxu0 %v808
    %1374 = vmatpush1.msra.mxu0 %v807
    %1375 = vmatprep.subr.mxu0 %v812
    %1376 = vmatpush1.msra.mxu0 %v811
    %1377 = vmatprep.subr.mxu0 %v816
    %1378 = vmatpush1.msra.mxu0 %v815
    %1379 = vmatprep.subr.mxu0 %v820
    %1380 = vmatpush1.msra.mxu0 %v819
    %1381 = vmatprep.mubr.f32.mxu0 %v1307
    %1382 = vmatmul.mubr.f32.gmra.mrb[0].mxu0 %v1305
    %v1383 = vpop.f32.mrb[0].mxu0
    %v1384 = vadd.f32 0.0, %v1383
    %v1385 = vpop.f32.mrb[0].mxu0
    %v1386 = vadd.f32 0.0, %v1385
    %1387 = vmatprep.mubr.f32.mxu0 %v1308
    %1388 = vmatmul.mubr.f32.gmra.mrb[0].mxu0 %v1306
    %v1389 = vpop.f32.mrb[0].mxu0
    %v1390 = vadd.f32 0.0, %v1389
    %v1391 = vpop.f32.mrb[0].mxu0
    %v1392 = vadd.f32 0.0, %v1391
    %1393 = vdwg.mxu0
    %1394 = vmatprep.subr.mxu0 %v698
    %1395 = vmatpush1.msra.mxu0 %v697
    %1396 = vmatprep.subr.mxu0 %v702
    %1397 = vmatpush1.msra.mxu0 %v701
    %1398 = vmatprep.subr.mxu0 %v706
    %1399 = vmatpush1.msra.mxu0 %v705
    %1400 = vmatprep.subr.mxu0 %v710
    %1401 = vmatpush1.msra.mxu0 %v709
    %1402 = vmatprep.subr.mxu0 %v714
    %1403 = vmatpush1.msra.mxu0 %v713
    %1404 = vmatprep.subr.mxu0 %v718
    %1405 = vmatpush1.msra.mxu0 %v717
    %1406 = vmatprep.subr.mxu0 %v722
    %1407 = vmatpush1.msra.mxu0 %v721
    %1408 = vmatprep.subr.mxu0 %v726
    %1409 = vmatpush1.msra.mxu0 %v725
    %1410 = vmatprep.subr.mxu0 %v730
    %1411 = vmatpush1.msra.mxu0 %v729
    %1412 = vmatprep.subr.mxu0 %v734
    %1413 = vmatpush1.msra.mxu0 %v733
    %1414 = vmatprep.subr.mxu0 %v738
    %1415 = vmatpush1.msra.mxu0 %v737
    %1416 = vmatprep.subr.mxu0 %v742
    %1417 = vmatpush1.msra.mxu0 %v741
    %1418 = vmatprep.subr.mxu0 %v746
    %1419 = vmatpush1.msra.mxu0 %v745
    %1420 = vmatprep.subr.mxu0 %v750
    %1421 = vmatpush1.msra.mxu0 %v749
    %1422 = vmatprep.subr.mxu0 %v754
    %1423 = vmatpush1.msra.mxu0 %v753
    %1424 = vmatprep.subr.mxu0 %v758
    %1425 = vmatpush1.msra.mxu0 %v757
    %1426 = vmatprep.subr.mxu0 %v762
    %1427 = vmatpush1.msra.mxu0 %v761
    %1428 = vmatprep.subr.mxu0 %v766
    %1429 = vmatpush1.msra.mxu0 %v765
    %1430 = vmatprep.subr.mxu0 %v770
    %1431 = vmatpush1.msra.mxu0 %v769
    %1432 = vmatprep.subr.mxu0 %v774
    %1433 = vmatpush1.msra.mxu0 %v773
    %1434 = vmatprep.subr.mxu0 %v778
    %1435 = vmatpush1.msra.mxu0 %v777
    %1436 = vmatprep.subr.mxu0 %v782
    %1437 = vmatpush1.msra.mxu0 %v781
    %1438 = vmatprep.subr.mxu0 %v786
    %1439 = vmatpush1.msra.mxu0 %v785
    %1440 = vmatprep.subr.mxu0 %v790
    %1441 = vmatpush1.msra.mxu0 %v789
    %1442 = vmatprep.subr.mxu0 %v794
    %1443 = vmatpush1.msra.mxu0 %v793
    %1444 = vmatprep.subr.mxu0 %v798
    %1445 = vmatpush1.msra.mxu0 %v797
    %1446 = vmatprep.subr.mxu0 %v802
    %1447 = vmatpush1.msra.mxu0 %v801
    %1448 = vmatprep.subr.mxu0 %v806
    %1449 = vmatpush1.msra.mxu0 %v805
    %1450 = vmatprep.subr.mxu0 %v810
    %1451 = vmatpush1.msra.mxu0 %v809
    %1452 = vmatprep.subr.mxu0 %v814
    %1453 = vmatpush1.msra.mxu0 %v813
    %1454 = vmatprep.subr.mxu0 %v818
    %1455 = vmatpush1.msra.mxu0 %v817
    %1456 = vmatprep.subr.mxu0 %v822
    %1457 = vmatpush1.msra.mxu0 %v821
    %1458 = vmatprep.mubr.f32.mxu0 %v1307
    %1459 = vmatmul.mubr.f32.gmra.mrb[0].mxu0 %v1305
    %v1460 = vpop.f32.mrb[0].mxu0
    %v1461 = vadd.f32 0.0, %v1460
    %v1462 = vpop.f32.mrb[0].mxu0
    %v1463 = vadd.f32 0.0, %v1462
    %1464 = vmatprep.mubr.f32.mxu0 %v1308
    %1465 = vmatmul.mubr.f32.gmra.mrb[0].mxu0 %v1306
    %v1466 = vpop.f32.mrb[0].mxu0
    %v1467 = vadd.f32 0.0, %v1466
    %v1468 = vpop.f32.mrb[0].mxu0
    %v1469 = vadd.f32 0.0, %v1468
    %1470 = vdwg.mxu0
    %v1471 = vadd.f32 %v1309, %v1384
    %v1472 = vadd.f32 %v1310, %v1386
    %v1473 = vadd.f32 %v1311, %v1461
    %v1474 = vadd.f32 %v1312, %v1463
    %v1475 = vadd.f32 %v1313, %v1390
    %v1476 = vadd.f32 %v1314, %v1392
    %v1477 = vadd.f32 %v1315, %v1467
    %v1478 = vadd.f32 %v1316, %v1469
    %v1479 = vxor.u32 %v1471, 2147483648
    %v1480 = vxor.u32 %v1472, 2147483648
    %v1481 = vxor.u32 %v1473, 2147483648
    %v1482 = vxor.u32 %v1475, 2147483648
    %v1483 = vxor.u32 %v1476, 2147483648
    %v1484 = vxor.u32 %v1477, 2147483648
    %v1485 = vmul.f32 %v1479, 1.442695
    %v1486 = vpow.pop %v1485
    %v1487 = vmul.f32 %v1480, 1.442695
    %v1488 = vpow.pop %v1487
    %v1489 = vmul.f32 %v1481, 1.442695
    %v1490 = vpow.pop %v1489
    %v1491 = vmul.f32 %v1482, 1.442695
    %v1492 = vpow.pop %v1491
    %v1493 = vmul.f32 %v1483, 1.442695
    %v1494 = vpow.pop %v1493
    %v1495 = vmul.f32 %v1484, 1.442695
    %v1496 = vpow.pop %v1495
    %v1497 = vadd.f32 %v1486, 1.0
    %v1498 = vadd.f32 %v1488, 1.0
    %v1499 = vadd.f32 %v1490, 1.0
    %v1500 = vadd.f32 %v1492, 1.0
    %v1501 = vadd.f32 %v1494, 1.0
    %v1502 = vadd.f32 %v1496, 1.0
    %v1503 = vrcp.pop %v1497
    %v1504 = vmul.f32 1.0, %v1503
    %v1505 = vrcp.pop %v1498
    %v1506 = vmul.f32 1.0, %v1505
    %v1507 = vrcp.pop %v1499
    %v1508 = vmul.f32 1.0, %v1507
    %v1509 = vrcp.pop %v1500
    %v1510 = vmul.f32 1.0, %v1509
    %v1511 = vrcp.pop %v1501
    %v1512 = vmul.f32 1.0, %v1511
    %v1513 = vrcp.pop %v1502
    %v1514 = vmul.f32 1.0, %v1513
    %v1515 = vtanh.pop %v1474
    %v1516 = vtanh.pop %v1478
    %v1517 = vmul.f32 %v1506, %v1299
    %v1518 = vmul.f32 %v1512, %v1300
    %v1519 = vmul.f32 %v1504, %v1515
    %v1520 = vmul.f32 %v1510, %v1516
    %v1521 = vadd.f32 %v1517, %v1519
    %v1522 = vadd.f32 %v1518, %v1520
    %v1523 = vtanh.pop %v1521
    %v1524 = vtanh.pop %v1522
    %v1525 = vmul.f32 %v1508, %v1523
    %v1526 = vmul.f32 %v1514, %v1524
    %vm1527 = vcmp.gt.s32.totalorder %v90, 2
    %vm1528 = vcmp.gt.s32.totalorder %v90, 5
    %v1529 = vsel %vm1527, 1, 0
    %v1530 = vsel %vm1528, 1, 0
    %1531 = vset.pattern.permute.xlu0 0
    %1532 = vperm.xlu0 %1531, %v1529
    %v1533 = vpop.permute.xlu0 %1532
    %1534 = vset.pattern.permute.xlu0 0
    %1535 = vperm.xlu0 %1534, %v1530
    %v1536 = vpop.permute.xlu0 %1535
    %vm1537 = vcmp.eq.s32.totalorder %v1533, 1
    %vm1538 = vcmp.eq.s32.totalorder %v1536, 1
    %v1539 = vsel %vm1537, %v1525, %v1297
    %v1540 = vsel %vm1538, %v1526, %v1298
    %v1541 = vsel %vm1537, %v1521, %v1299
    %v1542 = vsel %vm1538, %v1522, %v1300
    %v1543 = vsel %vm1537, %v1525, 0.0
    %v1544 = vsel %vm1538, %v1526, 0.0
    %1545 = vst [vmem:[#allocation3 + $0x20] sm:$0xff] %v1543
    %1546 = vst [vmem:[#allocation3 + $0x58] sm:$0xff] %v1544
    %v1547 = vsel %vm1061, %v1539, 0.0
    %v1548 = vsel %vm1062, %v1540, 0.0
    %v1549 = vsel %vm1061, 0.0, %v1539
    %v1550 = vsel %vm1062, 0.0, %v1540
    %v1551 = vld [vmem:[#allocation2 + $0xc0] sm:$0xff]
    %v1552 = vld [vmem:[#allocation2 + $0xc8] sm:$0xff]
    %v1553 = vld [vmem:[#allocation2 + $0xd0] sm:$0xff]
    %v1554 = vld [vmem:[#allocation2 + $0xd8] sm:$0xff]
    %v1555 = vld [vmem:[#allocation2 + $0x120] sm:$0xff]
    %v1556 = vld [vmem:[#allocation2 + $0x128] sm:$0xff]
    %v1557 = vld [vmem:[#allocation2 + $0x130] sm:$0xff]
    %v1558 = vld [vmem:[#allocation2 + $0x138] sm:$0xff]
    %1559 = vmatprep.subr.mxu0 %v696
    %1560 = vmatpush1.msra.mxu0 %v695
    %1561 = vmatprep.subr.mxu0 %v700
    %1562 = vmatpush1.msra.mxu0 %v699
    %1563 = vmatprep.subr.mxu0 %v704
    %1564 = vmatpush1.msra.mxu0 %v703
    %1565 = vmatprep.subr.mxu0 %v708
    %1566 = vmatpush1.msra.mxu0 %v707
    %1567 = vmatprep.subr.mxu0 %v712
    %1568 = vmatpush1.msra.mxu0 %v711
    %1569 = vmatprep.subr.mxu0 %v716
    %1570 = vmatpush1.msra.mxu0 %v715
    %1571 = vmatprep.subr.mxu0 %v720
    %1572 = vmatpush1.msra.mxu0 %v719
    %1573 = vmatprep.subr.mxu0 %v724
    %1574 = vmatpush1.msra.mxu0 %v723
    %1575 = vmatprep.subr.mxu0 %v728
    %1576 = vmatpush1.msra.mxu0 %v727
    %1577 = vmatprep.subr.mxu0 %v732
    %1578 = vmatpush1.msra.mxu0 %v731
    %1579 = vmatprep.subr.mxu0 %v736
    %1580 = vmatpush1.msra.mxu0 %v735
    %1581 = vmatprep.subr.mxu0 %v740
    %1582 = vmatpush1.msra.mxu0 %v739
    %1583 = vmatprep.subr.mxu0 %v744
    %1584 = vmatpush1.msra.mxu0 %v743
    %1585 = vmatprep.subr.mxu0 %v748
    %1586 = vmatpush1.msra.mxu0 %v747
    %1587 = vmatprep.subr.mxu0 %v752
    %1588 = vmatpush1.msra.mxu0 %v751
    %1589 = vmatprep.subr.mxu0 %v756
    %1590 = vmatpush1.msra.mxu0 %v755
    %1591 = vmatprep.subr.mxu0 %v760
    %1592 = vmatpush1.msra.mxu0 %v759
    %1593 = vmatprep.subr.mxu0 %v764
    %1594 = vmatpush1.msra.mxu0 %v763
    %1595 = vmatprep.subr.mxu0 %v768
    %1596 = vmatpush1.msra.mxu0 %v767
    %1597 = vmatprep.subr.mxu0 %v772
    %1598 = vmatpush1.msra.mxu0 %v771
    %1599 = vmatprep.subr.mxu0 %v776
    %1600 = vmatpush1.msra.mxu0 %v775
    %1601 = vmatprep.subr.mxu0 %v780
    %1602 = vmatpush1.msra.mxu0 %v779
    %1603 = vmatprep.subr.mxu0 %v784
    %1604 = vmatpush1.msra.mxu0 %v783
    %1605 = vmatprep.subr.mxu0 %v788
    %1606 = vmatpush1.msra.mxu0 %v787
    %1607 = vmatprep.subr.mxu0 %v792
    %1608 = vmatpush1.msra.mxu0 %v791
    %1609 = vmatprep.subr.mxu0 %v796
    %1610 = vmatpush1.msra.mxu0 %v795
    %1611 = vmatprep.subr.mxu0 %v800
    %1612 = vmatpush1.msra.mxu0 %v799
    %1613 = vmatprep.subr.mxu0 %v804
    %1614 = vmatpush1.msra.mxu0 %v803
    %1615 = vmatprep.subr.mxu0 %v808
    %1616 = vmatpush1.msra.mxu0 %v807
    %1617 = vmatprep.subr.mxu0 %v812
    %1618 = vmatpush1.msra.mxu0 %v811
    %1619 = vmatprep.subr.mxu0 %v816
    %1620 = vmatpush1.msra.mxu0 %v815
    %1621 = vmatprep.subr.mxu0 %v820
    %1622 = vmatpush1.msra.mxu0 %v819
    %1623 = vmatprep.mubr.f32.mxu0 %v1549
    %1624 = vmatmul.mubr.f32.gmra.mrb[0].mxu0 %v1547
    %v1625 = vpop.f32.mrb[0].mxu0
    %v1626 = vadd.f32 0.0, %v1625
    %v1627 = vpop.f32.mrb[0].mxu0
    %v1628 = vadd.f32 0.0, %v1627
    %1629 = vmatprep.mubr.f32.mxu0 %v1550
    %1630 = vmatmul.mubr.f32.gmra.mrb[0].mxu0 %v1548
    %v1631 = vpop.f32.mrb[0].mxu0
    %v1632 = vadd.f32 0.0, %v1631
    %v1633 = vpop.f32.mrb[0].mxu0
    %v1634 = vadd.f32 0.0, %v1633
    %1635 = vdwg.mxu0
    %1636 = vmatprep.subr.mxu0 %v698
    %1637 = vmatpush1.msra.mxu0 %v697
    %1638 = vmatprep.subr.mxu0 %v702
    %1639 = vmatpush1.msra.mxu0 %v701
    %1640 = vmatprep.subr.mxu0 %v706
    %1641 = vmatpush1.msra.mxu0 %v705
    %1642 = vmatprep.subr.mxu0 %v710
    %1643 = vmatpush1.msra.mxu0 %v709
    %1644 = vmatprep.subr.mxu0 %v714
    %1645 = vmatpush1.msra.mxu0 %v713
    %1646 = vmatprep.subr.mxu0 %v718
    %1647 = vmatpush1.msra.mxu0 %v717
    %1648 = vmatprep.subr.mxu0 %v722
    %1649 = vmatpush1.msra.mxu0 %v721
    %1650 = vmatprep.subr.mxu0 %v726
    %1651 = vmatpush1.msra.mxu0 %v725
    %1652 = vmatprep.subr.mxu0 %v730
    %1653 = vmatpush1.msra.mxu0 %v729
    %1654 = vmatprep.subr.mxu0 %v734
    %1655 = vmatpush1.msra.mxu0 %v733
    %1656 = vmatprep.subr.mxu0 %v738
    %1657 = vmatpush1.msra.mxu0 %v737
    %1658 = vmatprep.subr.mxu0 %v742
    %1659 = vmatpush1.msra.mxu0 %v741
    %1660 = vmatprep.subr.mxu0 %v746
    %1661 = vmatpush1.msra.mxu0 %v745
    %1662 = vmatprep.subr.mxu0 %v750
    %1663 = vmatpush1.msra.mxu0 %v749
    %1664 = vmatprep.subr.mxu0 %v754
    %1665 = vmatpush1.msra.mxu0 %v753
    %1666 = vmatprep.subr.mxu0 %v758
    %1667 = vmatpush1.msra.mxu0 %v757
    %1668 = vmatprep.subr.mxu0 %v762
    %1669 = vmatpush1.msra.mxu0 %v761
    %1670 = vmatprep.subr.mxu0 %v766
    %1671 = vmatpush1.msra.mxu0 %v765
    %1672 = vmatprep.subr.mxu0 %v770
    %1673 = vmatpush1.msra.mxu0 %v769
    %1674 = vmatprep.subr.mxu0 %v774
    %1675 = vmatpush1.msra.mxu0 %v773
    %1676 = vmatprep.subr.mxu0 %v778
    %1677 = vmatpush1.msra.mxu0 %v777
    %1678 = vmatprep.subr.mxu0 %v782
    %1679 = vmatpush1.msra.mxu0 %v781
    %1680 = vmatprep.subr.mxu0 %v786
    %1681 = vmatpush1.msra.mxu0 %v785
    %1682 = vmatprep.subr.mxu0 %v790
    %1683 = vmatpush1.msra.mxu0 %v789
    %1684 = vmatprep.subr.mxu0 %v794
    %1685 = vmatpush1.msra.mxu0 %v793
    %1686 = vmatprep.subr.mxu0 %v798
    %1687 = vmatpush1.msra.mxu0 %v797
    %1688 = vmatprep.subr.mxu0 %v802
    %1689 = vmatpush1.msra.mxu0 %v801
    %1690 = vmatprep.subr.mxu0 %v806
    %1691 = vmatpush1.msra.mxu0 %v805
    %1692 = vmatprep.subr.mxu0 %v810
    %1693 = vmatpush1.msra.mxu0 %v809
    %1694 = vmatprep.subr.mxu0 %v814
    %1695 = vmatpush1.msra.mxu0 %v813
    %1696 = vmatprep.subr.mxu0 %v818
    %1697 = vmatpush1.msra.mxu0 %v817
    %1698 = vmatprep.subr.mxu0 %v822
    %1699 = vmatpush1.msra.mxu0 %v821
    %1700 = vmatprep.mubr.f32.mxu0 %v1549
    %1701 = vmatmul.mubr.f32.gmra.mrb[0].mxu0 %v1547
    %v1702 = vpop.f32.mrb[0].mxu0
    %v1703 = vadd.f32 0.0, %v1702
    %v1704 = vpop.f32.mrb[0].mxu0
    %v1705 = vadd.f32 0.0, %v1704
    %1706 = vmatprep.mubr.f32.mxu0 %v1550
    %1707 = vmatmul.mubr.f32.gmra.mrb[0].mxu0 %v1548
    %v1708 = vpop.f32.mrb[0].mxu0
    %v1709 = vadd.f32 0.0, %v1708
    %v1710 = vpop.f32.mrb[0].mxu0
    %v1711 = vadd.f32 0.0, %v1710
    %1712 = vdwg.mxu0
    %v1713 = vadd.f32 %v1551, %v1626
    %v1714 = vadd.f32 %v1552, %v1628
    %v1715 = vadd.f32 %v1553, %v1703
    %v1716 = vadd.f32 %v1554, %v1705
    %v1717 = vadd.f32 %v1555, %v1632
    %v1718 = vadd.f32 %v1556, %v1634
    %v1719 = vadd.f32 %v1557, %v1709
    %v1720 = vadd.f32 %v1558, %v1711
    %v1721 = vxor.u32 %v1713, 2147483648
    %v1722 = vxor.u32 %v1714, 2147483648
    %v1723 = vxor.u32 %v1715, 2147483648
    %v1724 = vxor.u32 %v1717, 2147483648
    %v1725 = vxor.u32 %v1718, 2147483648
    %v1726 = vxor.u32 %v1719, 2147483648
    %v1727 = vmul.f32 %v1721, 1.442695
    %v1728 = vpow.pop %v1727
    %v1729 = vmul.f32 %v1722, 1.442695
    %v1730 = vpow.pop %v1729
    %v1731 = vmul.f32 %v1723, 1.442695
    %v1732 = vpow.pop %v1731
    %v1733 = vmul.f32 %v1724, 1.442695
    %v1734 = vpow.pop %v1733
    %v1735 = vmul.f32 %v1725, 1.442695
    %v1736 = vpow.pop %v1735
    %v1737 = vmul.f32 %v1726, 1.442695
    %v1738 = vpow.pop %v1737
    %v1739 = vadd.f32 %v1728, 1.0
    %v1740 = vadd.f32 %v1730, 1.0
    %v1741 = vadd.f32 %v1732, 1.0
    %v1742 = vadd.f32 %v1734, 1.0
    %v1743 = vadd.f32 %v1736, 1.0
    %v1744 = vadd.f32 %v1738, 1.0
    %v1745 = vrcp.pop %v1739
    %v1746 = vmul.f32 1.0, %v1745
    %v1747 = vrcp.pop %v1740
    %v1748 = vmul.f32 1.0, %v1747
    %v1749 = vrcp.pop %v1741
    %v1750 = vmul.f32 1.0, %v1749
    %v1751 = vrcp.pop %v1742
    %v1752 = vmul.f32 1.0, %v1751
    %v1753 = vrcp.pop %v1743
    %v1754 = vmul.f32 1.0, %v1753
    %v1755 = vrcp.pop %v1744
    %v1756 = vmul.f32 1.0, %v1755
    %v1757 = vtanh.pop %v1716
    %v1758 = vtanh.pop %v1720
    %v1759 = vmul.f32 %v1748, %v1541
    %v1760 = vmul.f32 %v1754, %v1542
    %v1761 = vmul.f32 %v1746, %v1757
    %v1762 = vmul.f32 %v1752, %v1758
    %v1763 = vadd.f32 %v1759, %v1761
    %v1764 = vadd.f32 %v1760, %v1762
    %v1765 = vtanh.pop %v1763
    %v1766 = vtanh.pop %v1764
    %v1767 = vmul.f32 %v1750, %v1765
    %v1768 = vmul.f32 %v1756, %v1766
    %vm1769 = vcmp.gt.s32.totalorder %v90, 3
    %vm1770 = vcmp.gt.s32.totalorder %v90, 4
    %v1771 = vsel %vm1769, 1, 0
    %v1772 = vsel %vm1770, 1, 0
    %1773 = vset.pattern.permute.xlu0 0
    %1774 = vperm.xlu0 %1773, %v1771
    %v1775 = vpop.permute.xlu0 %1774
    %1776 = vset.pattern.permute.xlu0 0
    %1777 = vperm.xlu0 %1776, %v1772
    %v1778 = vpop.permute.xlu0 %1777
    %vm1779 = vcmp.eq.s32.totalorder %v1775, 1
    %vm1780 = vcmp.eq.s32.totalorder %v1778, 1
    %v1781 = vsel %vm1779, %v1767, %v1539
    %v1782 = vsel %vm1780, %v1768, %v1540
    %v1783 = vsel %vm1779, %v1763, %v1541
    %v1784 = vsel %vm1780, %v1764, %v1542
    %v1785 = vsel %vm1779, %v1767, 0.0
    %v1786 = vsel %vm1780, %v1768, 0.0
    %1787 = vst [vmem:[#allocation3 + $0x30] sm:$0xff] %v1785
    %1788 = vst [vmem:[#allocation3 + $0x48] sm:$0xff] %v1786
    %v1789 = vsel %vm1061, %v1781, 0.0
    %v1790 = vsel %vm1062, %v1782, 0.0
    %v1791 = vsel %vm1061, 0.0, %v1781
    %v1792 = vsel %vm1062, 0.0, %v1782
    %v1793 = vld [vmem:[#allocation2 + $0x100] sm:$0xff]
    %v1794 = vld [vmem:[#allocation2 + $0x108] sm:$0xff]
    %v1795 = vld [vmem:[#allocation2 + $0x110] sm:$0xff]
    %v1796 = vld [vmem:[#allocation2 + $0x118] sm:$0xff]
    %v1797 = vld [vmem:[#allocation2 + $0xe0] sm:$0xff]
    %v1798 = vld [vmem:[#allocation2 + $0xe8] sm:$0xff]
    %v1799 = vld [vmem:[#allocation2 + $0xf0] sm:$0xff]
    %v1800 = vld [vmem:[#allocation2 + $0xf8] sm:$0xff]
    %1801 = vmatprep.subr.mxu0 %v696
    %1802 = vmatpush1.msra.mxu0 %v695
    %1803 = vmatprep.subr.mxu0 %v700
    %1804 = vmatpush1.msra.mxu0 %v699
    %1805 = vmatprep.subr.mxu0 %v704
    %1806 = vmatpush1.msra.mxu0 %v703
    %1807 = vmatprep.subr.mxu0 %v708
    %1808 = vmatpush1.msra.mxu0 %v707
    %1809 = vmatprep.subr.mxu0 %v712
    %1810 = vmatpush1.msra.mxu0 %v711
    %1811 = vmatprep.subr.mxu0 %v716
    %1812 = vmatpush1.msra.mxu0 %v715
    %1813 = vmatprep.subr.mxu0 %v720
    %1814 = vmatpush1.msra.mxu0 %v719
    %1815 = vmatprep.subr.mxu0 %v724
    %1816 = vmatpush1.msra.mxu0 %v723
    %1817 = vmatprep.subr.mxu0 %v728
    %1818 = vmatpush1.msra.mxu0 %v727
    %1819 = vmatprep.subr.mxu0 %v732
    %1820 = vmatpush1.msra.mxu0 %v731
    %1821 = vmatprep.subr.mxu0 %v736
    %1822 = vmatpush1.msra.mxu0 %v735
    %1823 = vmatprep.subr.mxu0 %v740
    %1824 = vmatpush1.msra.mxu0 %v739
    %1825 = vmatprep.subr.mxu0 %v744
    %1826 = vmatpush1.msra.mxu0 %v743
    %1827 = vmatprep.subr.mxu0 %v748
    %1828 = vmatpush1.msra.mxu0 %v747
    %1829 = vmatprep.subr.mxu0 %v752
    %1830 = vmatpush1.msra.mxu0 %v751
    %1831 = vmatprep.subr.mxu0 %v756
    %1832 = vmatpush1.msra.mxu0 %v755
    %1833 = vmatprep.subr.mxu0 %v760
    %1834 = vmatpush1.msra.mxu0 %v759
    %1835 = vmatprep.subr.mxu0 %v764
    %1836 = vmatpush1.msra.mxu0 %v763
    %1837 = vmatprep.subr.mxu0 %v768
    %1838 = vmatpush1.msra.mxu0 %v767
    %1839 = vmatprep.subr.mxu0 %v772
    %1840 = vmatpush1.msra.mxu0 %v771
    %1841 = vmatprep.subr.mxu0 %v776
    %1842 = vmatpush1.msra.mxu0 %v775
    %1843 = vmatprep.subr.mxu0 %v780
    %1844 = vmatpush1.msra.mxu0 %v779
    %1845 = vmatprep.subr.mxu0 %v784
    %1846 = vmatpush1.msra.mxu0 %v783
    %1847 = vmatprep.subr.mxu0 %v788
    %1848 = vmatpush1.msra.mxu0 %v787
    %1849 = vmatprep.subr.mxu0 %v792
    %1850 = vmatpush1.msra.mxu0 %v791
    %1851 = vmatprep.subr.mxu0 %v796
    %1852 = vmatpush1.msra.mxu0 %v795
    %1853 = vmatprep.subr.mxu0 %v800
    %1854 = vmatpush1.msra.mxu0 %v799
    %1855 = vmatprep.subr.mxu0 %v804
    %1856 = vmatpush1.msra.mxu0 %v803
    %1857 = vmatprep.subr.mxu0 %v808
    %1858 = vmatpush1.msra.mxu0 %v807
    %1859 = vmatprep.subr.mxu0 %v812
    %1860 = vmatpush1.msra.mxu0 %v811
    %1861 = vmatprep.subr.mxu0 %v816
    %1862 = vmatpush1.msra.mxu0 %v815
    %1863 = vmatprep.subr.mxu0 %v820
    %1864 = vmatpush1.msra.mxu0 %v819
    %1865 = vmatprep.mubr.f32.mxu0 %v1791
    %1866 = vmatmul.mubr.f32.gmra.mrb[0].mxu0 %v1789
    %v1867 = vpop.f32.mrb[0].mxu0
    %v1868 = vadd.f32 0.0, %v1867
    %v1869 = vpop.f32.mrb[0].mxu0
    %v1870 = vadd.f32 0.0, %v1869
    %1871 = vmatprep.mubr.f32.mxu0 %v1792
    %1872 = vmatmul.mubr.f32.gmra.mrb[0].mxu0 %v1790
    %v1873 = vpop.f32.mrb[0].mxu0
    %v1874 = vadd.f32 0.0, %v1873
    %v1875 = vpop.f32.mrb[0].mxu0
    %v1876 = vadd.f32 0.0, %v1875
    %1877 = vdwg.mxu0
    %1878 = vmatprep.subr.mxu0 %v698
    %1879 = vmatpush1.msra.mxu0 %v697
    %1880 = vmatprep.subr.mxu0 %v702
    %1881 = vmatpush1.msra.mxu0 %v701
    %1882 = vmatprep.subr.mxu0 %v706
    %1883 = vmatpush1.msra.mxu0 %v705
    %1884 = vmatprep.subr.mxu0 %v710
    %1885 = vmatpush1.msra.mxu0 %v709
    %1886 = vmatprep.subr.mxu0 %v714
    %1887 = vmatpush1.msra.mxu0 %v713
    %1888 = vmatprep.subr.mxu0 %v718
    %1889 = vmatpush1.msra.mxu0 %v717
    %1890 = vmatprep.subr.mxu0 %v722
    %1891 = vmatpush1.msra.mxu0 %v721
    %1892 = vmatprep.subr.mxu0 %v726
    %1893 = vmatpush1.msra.mxu0 %v725
    %1894 = vmatprep.subr.mxu0 %v730
    %1895 = vmatpush1.msra.mxu0 %v729
    %1896 = vmatprep.subr.mxu0 %v734
    %1897 = vmatpush1.msra.mxu0 %v733
    %1898 = vmatprep.subr.mxu0 %v738
    %1899 = vmatpush1.msra.mxu0 %v737
    %1900 = vmatprep.subr.mxu0 %v742
    %1901 = vmatpush1.msra.mxu0 %v741
    %1902 = vmatprep.subr.mxu0 %v746
    %1903 = vmatpush1.msra.mxu0 %v745
    %1904 = vmatprep.subr.mxu0 %v750
    %1905 = vmatpush1.msra.mxu0 %v749
    %1906 = vmatprep.subr.mxu0 %v754
    %1907 = vmatpush1.msra.mxu0 %v753
    %1908 = vmatprep.subr.mxu0 %v758
    %1909 = vmatpush1.msra.mxu0 %v757
    %1910 = vmatprep.subr.mxu0 %v762
    %1911 = vmatpush1.msra.mxu0 %v761
    %1912 = vmatprep.subr.mxu0 %v766
    %1913 = vmatpush1.msra.mxu0 %v765
    %1914 = vmatprep.subr.mxu0 %v770
    %1915 = vmatpush1.msra.mxu0 %v769
    %1916 = vmatprep.subr.mxu0 %v774
    %1917 = vmatpush1.msra.mxu0 %v773
    %1918 = vmatprep.subr.mxu0 %v778
    %1919 = vmatpush1.msra.mxu0 %v777
    %1920 = vmatprep.subr.mxu0 %v782
    %1921 = vmatpush1.msra.mxu0 %v781
    %1922 = vmatprep.subr.mxu0 %v786
    %1923 = vmatpush1.msra.mxu0 %v785
    %1924 = vmatprep.subr.mxu0 %v790
    %1925 = vmatpush1.msra.mxu0 %v789
    %1926 = vmatprep.subr.mxu0 %v794
    %1927 = vmatpush1.msra.mxu0 %v793
    %1928 = vmatprep.subr.mxu0 %v798
    %1929 = vmatpush1.msra.mxu0 %v797
    %1930 = vmatprep.subr.mxu0 %v802
    %1931 = vmatpush1.msra.mxu0 %v801
    %1932 = vmatprep.subr.mxu0 %v806
    %1933 = vmatpush1.msra.mxu0 %v805
    %1934 = vmatprep.subr.mxu0 %v810
    %1935 = vmatpush1.msra.mxu0 %v809
    %1936 = vmatprep.subr.mxu0 %v814
    %1937 = vmatpush1.msra.mxu0 %v813
    %1938 = vmatprep.subr.mxu0 %v818
    %1939 = vmatpush1.msra.mxu0 %v817
    %1940 = vmatprep.subr.mxu0 %v822
    %1941 = vmatpush1.msra.mxu0 %v821
    %1942 = vmatprep.mubr.f32.mxu0 %v1791
    %1943 = vmatmul.mubr.f32.gmra.mrb[0].mxu0 %v1789
    %v1944 = vpop.f32.mrb[0].mxu0
    %v1945 = vadd.f32 0.0, %v1944
    %v1946 = vpop.f32.mrb[0].mxu0
    %v1947 = vadd.f32 0.0, %v1946
    %1948 = vmatprep.mubr.f32.mxu0 %v1792
    %1949 = vmatmul.mubr.f32.gmra.mrb[0].mxu0 %v1790
    %v1950 = vpop.f32.mrb[0].mxu0
    %v1951 = vadd.f32 0.0, %v1950
    %v1952 = vpop.f32.mrb[0].mxu0
    %v1953 = vadd.f32 0.0, %v1952
    %1954 = vdwg.mxu0
    %v1955 = vadd.f32 %v1793, %v1868
    %v1956 = vadd.f32 %v1794, %v1870
    %v1957 = vadd.f32 %v1795, %v1945
    %v1958 = vadd.f32 %v1796, %v1947
    %v1959 = vadd.f32 %v1797, %v1874
    %v1960 = vadd.f32 %v1798, %v1876
    %v1961 = vadd.f32 %v1799, %v1951
    %v1962 = vadd.f32 %v1800, %v1953
    %v1963 = vxor.u32 %v1955, 2147483648
    %v1964 = vxor.u32 %v1956, 2147483648
    %v1965 = vxor.u32 %v1957, 2147483648
    %v1966 = vxor.u32 %v1959, 2147483648
    %v1967 = vxor.u32 %v1960, 2147483648
    %v1968 = vxor.u32 %v1961, 2147483648
    %v1969 = vmul.f32 %v1963, 1.442695
    %v1970 = vpow.pop %v1969
    %v1971 = vmul.f32 %v1964, 1.442695
    %v1972 = vpow.pop %v1971
    %v1973 = vmul.f32 %v1965, 1.442695
    %v1974 = vpow.pop %v1973
    %v1975 = vmul.f32 %v1966, 1.442695
    %v1976 = vpow.pop %v1975
    %v1977 = vmul.f32 %v1967, 1.442695
    %v1978 = vpow.pop %v1977
    %v1979 = vmul.f32 %v1968, 1.442695
    %v1980 = vpow.pop %v1979
    %v1981 = vadd.f32 %v1970, 1.0
    %v1982 = vadd.f32 %v1972, 1.0
    %v1983 = vadd.f32 %v1974, 1.0
    %v1984 = vadd.f32 %v1976, 1.0
    %v1985 = vadd.f32 %v1978, 1.0
    %v1986 = vadd.f32 %v1980, 1.0
    %v1987 = vrcp.pop %v1981
    %v1988 = vmul.f32 1.0, %v1987
    %v1989 = vrcp.pop %v1982
    %v1990 = vmul.f32 1.0, %v1989
    %v1991 = vrcp.pop %v1983
    %v1992 = vmul.f32 1.0, %v1991
    %v1993 = vrcp.pop %v1984
    %v1994 = vmul.f32 1.0, %v1993
    %v1995 = vrcp.pop %v1985
    %v1996 = vmul.f32 1.0, %v1995
    %v1997 = vrcp.pop %v1986
    %v1998 = vmul.f32 1.0, %v1997
    %v1999 = vtanh.pop %v1958
    %v2000 = vtanh.pop %v1962
    %v2001 = vmul.f32 %v1990, %v1783
    %v2002 = vmul.f32 %v1996, %v1784
    %v2003 = vmul.f32 %v1988, %v1999
    %v2004 = vmul.f32 %v1994, %v2000
    %v2005 = vadd.f32 %v2001, %v2003
    %v2006 = vadd.f32 %v2002, %v2004
    %v2007 = vtanh.pop %v2005
    %v2008 = vtanh.pop %v2006
    %v2009 = vmul.f32 %v1992, %v2007
    %v2010 = vmul.f32 %v1998, %v2008
    %v2011 = vsel %vm1780, %v2009, %v1781
    %v2012 = vsel %vm1779, %v2010, %v1782
    %v2013 = vsel %vm1780, %v2005, %v1783
    %v2014 = vsel %vm1779, %v2006, %v1784
    %v2015 = vsel %vm1780, %v2009, 0.0
    %v2016 = vsel %vm1779, %v2010, 0.0
    %2017 = vst [vmem:[#allocation3 + $0x40] sm:$0xff] %v2015
    %2018 = vst [vmem:[#allocation3 + $0x38] sm:$0xff] %v2016
    %v2019 = vsel %vm1061, %v2011, 0.0
    %v2020 = vsel %vm1062, %v2012, 0.0
    %v2021 = vsel %vm1061, 0.0, %v2011
    %v2022 = vsel %vm1062, 0.0, %v2012
    %v2023 = vld [vmem:[#allocation2 + $0x140] sm:$0xff]
    %v2024 = vld [vmem:[#allocation2 + $0x148] sm:$0xff]
    %v2025 = vld [vmem:[#allocation2 + $0x150] sm:$0xff]
    %v2026 = vld [vmem:[#allocation2 + $0x158] sm:$0xff]
    %v2027 = vld [vmem:[#allocation2 + $0xa0] sm:$0xff]
    %v2028 = vld [vmem:[#allocation2 + $0xa8] sm:$0xff]
    %v2029 = vld [vmem:[#allocation2 + $0xb0] sm:$0xff]
    %v2030 = vld [vmem:[#allocation2 + $0xb8] sm:$0xff]
    %2031 = vmatprep.subr.mxu0 %v696
    %2032 = vmatpush1.msra.mxu0 %v695
    %2033 = vmatprep.subr.mxu0 %v700
    %2034 = vmatpush1.msra.mxu0 %v699
    %2035 = vmatprep.subr.mxu0 %v704
    %2036 = vmatpush1.msra.mxu0 %v703
    %2037 = vmatprep.subr.mxu0 %v708
    %2038 = vmatpush1.msra.mxu0 %v707
    %2039 = vmatprep.subr.mxu0 %v712
    %2040 = vmatpush1.msra.mxu0 %v711
    %2041 = vmatprep.subr.mxu0 %v716
    %2042 = vmatpush1.msra.mxu0 %v715
    %2043 = vmatprep.subr.mxu0 %v720
    %2044 = vmatpush1.msra.mxu0 %v719
    %2045 = vmatprep.subr.mxu0 %v724
    %2046 = vmatpush1.msra.mxu0 %v723
    %2047 = vmatprep.subr.mxu0 %v728
    %2048 = vmatpush1.msra.mxu0 %v727
    %2049 = vmatprep.subr.mxu0 %v732
    %2050 = vmatpush1.msra.mxu0 %v731
    %2051 = vmatprep.subr.mxu0 %v736
    %2052 = vmatpush1.msra.mxu0 %v735
    %2053 = vmatprep.subr.mxu0 %v740
    %2054 = vmatpush1.msra.mxu0 %v739
    %2055 = vmatprep.subr.mxu0 %v744
    %2056 = vmatpush1.msra.mxu0 %v743
    %2057 = vmatprep.subr.mxu0 %v748
    %2058 = vmatpush1.msra.mxu0 %v747
    %2059 = vmatprep.subr.mxu0 %v752
    %2060 = vmatpush1.msra.mxu0 %v751
    %2061 = vmatprep.subr.mxu0 %v756
    %2062 = vmatpush1.msra.mxu0 %v755
    %2063 = vmatprep.subr.mxu0 %v760
    %2064 = vmatpush1.msra.mxu0 %v759
    %2065 = vmatprep.subr.mxu0 %v764
    %2066 = vmatpush1.msra.mxu0 %v763
    %2067 = vmatprep.subr.mxu0 %v768
    %2068 = vmatpush1.msra.mxu0 %v767
    %2069 = vmatprep.subr.mxu0 %v772
    %2070 = vmatpush1.msra.mxu0 %v771
    %2071 = vmatprep.subr.mxu0 %v776
    %2072 = vmatpush1.msra.mxu0 %v775
    %2073 = vmatprep.subr.mxu0 %v780
    %2074 = vmatpush1.msra.mxu0 %v779
    %2075 = vmatprep.subr.mxu0 %v784
    %2076 = vmatpush1.msra.mxu0 %v783
    %2077 = vmatprep.subr.mxu0 %v788
    %2078 = vmatpush1.msra.mxu0 %v787
    %2079 = vmatprep.subr.mxu0 %v792
    %2080 = vmatpush1.msra.mxu0 %v791
    %2081 = vmatprep.subr.mxu0 %v796
    %2082 = vmatpush1.msra.mxu0 %v795
    %2083 = vmatprep.subr.mxu0 %v800
    %2084 = vmatpush1.msra.mxu0 %v799
    %2085 = vmatprep.subr.mxu0 %v804
    %2086 = vmatpush1.msra.mxu0 %v803
    %2087 = vmatprep.subr.mxu0 %v808
    %2088 = vmatpush1.msra.mxu0 %v807
    %2089 = vmatprep.subr.mxu0 %v812
    %2090 = vmatpush1.msra.mxu0 %v811
    %2091 = vmatprep.subr.mxu0 %v816
    %2092 = vmatpush1.msra.mxu0 %v815
    %2093 = vmatprep.subr.mxu0 %v820
    %2094 = vmatpush1.msra.mxu0 %v819
    %2095 = vmatprep.mubr.f32.mxu0 %v2021
    %2096 = vmatmul.mubr.f32.gmra.mrb[0].mxu0 %v2019
    %v2097 = vpop.f32.mrb[0].mxu0
    %v2098 = vadd.f32 0.0, %v2097
    %v2099 = vpop.f32.mrb[0].mxu0
    %v2100 = vadd.f32 0.0, %v2099
    %2101 = vmatprep.mubr.f32.mxu0 %v2022
    %2102 = vmatmul.mubr.f32.gmra.mrb[0].mxu0 %v2020
    %v2103 = vpop.f32.mrb[0].mxu0
    %v2104 = vadd.f32 0.0, %v2103
    %v2105 = vpop.f32.mrb[0].mxu0
    %v2106 = vadd.f32 0.0, %v2105
    %2107 = vdwg.mxu0
    %2108 = vmatprep.subr.mxu0 %v698
    %2109 = vmatpush1.msra.mxu0 %v697
    %2110 = vmatprep.subr.mxu0 %v702
    %2111 = vmatpush1.msra.mxu0 %v701
    %2112 = vmatprep.subr.mxu0 %v706
    %2113 = vmatpush1.msra.mxu0 %v705
    %2114 = vmatprep.subr.mxu0 %v710
    %2115 = vmatpush1.msra.mxu0 %v709
    %2116 = vmatprep.subr.mxu0 %v714
    %2117 = vmatpush1.msra.mxu0 %v713
    %2118 = vmatprep.subr.mxu0 %v718
    %2119 = vmatpush1.msra.mxu0 %v717
    %2120 = vmatprep.subr.mxu0 %v722
    %2121 = vmatpush1.msra.mxu0 %v721
    %2122 = vmatprep.subr.mxu0 %v726
    %2123 = vmatpush1.msra.mxu0 %v725
    %2124 = vmatprep.subr.mxu0 %v730
    %2125 = vmatpush1.msra.mxu0 %v729
    %2126 = vmatprep.subr.mxu0 %v734
    %2127 = vmatpush1.msra.mxu0 %v733
    %2128 = vmatprep.subr.mxu0 %v738
    %2129 = vmatpush1.msra.mxu0 %v737
    %2130 = vmatprep.subr.mxu0 %v742
    %2131 = vmatpush1.msra.mxu0 %v741
    %2132 = vmatprep.subr.mxu0 %v746
    %2133 = vmatpush1.msra.mxu0 %v745
    %2134 = vmatprep.subr.mxu0 %v750
    %2135 = vmatpush1.msra.mxu0 %v749
    %2136 = vmatprep.subr.mxu0 %v754
    %2137 = vmatpush1.msra.mxu0 %v753
    %2138 = vmatprep.subr.mxu0 %v758
    %2139 = vmatpush1.msra.mxu0 %v757
    %2140 = vmatprep.subr.mxu0 %v762
    %2141 = vmatpush1.msra.mxu0 %v761
    %2142 = vmatprep.subr.mxu0 %v766
    %2143 = vmatpush1.msra.mxu0 %v765
    %2144 = vmatprep.subr.mxu0 %v770
    %2145 = vmatpush1.msra.mxu0 %v769
    %2146 = vmatprep.subr.mxu0 %v774
    %2147 = vmatpush1.msra.mxu0 %v773
    %2148 = vmatprep.subr.mxu0 %v778
    %2149 = vmatpush1.msra.mxu0 %v777
    %2150 = vmatprep.subr.mxu0 %v782
    %2151 = vmatpush1.msra.mxu0 %v781
    %2152 = vmatprep.subr.mxu0 %v786
    %2153 = vmatpush1.msra.mxu0 %v785
    %2154 = vmatprep.subr.mxu0 %v790
    %2155 = vmatpush1.msra.mxu0 %v789
    %2156 = vmatprep.subr.mxu0 %v794
    %2157 = vmatpush1.msra.mxu0 %v793
    %2158 = vmatprep.subr.mxu0 %v798
    %2159 = vmatpush1.msra.mxu0 %v797
    %2160 = vmatprep.subr.mxu0 %v802
    %2161 = vmatpush1.msra.mxu0 %v801
    %2162 = vmatprep.subr.mxu0 %v806
    %2163 = vmatpush1.msra.mxu0 %v805
    %2164 = vmatprep.subr.mxu0 %v810
    %2165 = vmatpush1.msra.mxu0 %v809
    %2166 = vmatprep.subr.mxu0 %v814
    %2167 = vmatpush1.msra.mxu0 %v813
    %2168 = vmatprep.subr.mxu0 %v818
    %2169 = vmatpush1.msra.mxu0 %v817
    %2170 = vmatprep.subr.mxu0 %v822
    %2171 = vmatpush1.msra.mxu0 %v821
    %2172 = vmatprep.mubr.f32.mxu0 %v2021
    %2173 = vmatmul.mubr.f32.gmra.mrb[0].mxu0 %v2019
    %v2174 = vpop.f32.mrb[0].mxu0
    %v2175 = vadd.f32 0.0, %v2174
    %v2176 = vpop.f32.mrb[0].mxu0
    %v2177 = vadd.f32 0.0, %v2176
    %2178 = vmatprep.mubr.f32.mxu0 %v2022
    %2179 = vmatmul.mubr.f32.gmra.mrb[0].mxu0 %v2020
    %v2180 = vpop.f32.mrb[0].mxu0
    %v2181 = vadd.f32 0.0, %v2180
    %v2182 = vpop.f32.mrb[0].mxu0
    %v2183 = vadd.f32 0.0, %v2182
    %2184 = vdwg.mxu0
    %v2185 = vadd.f32 %v2023, %v2098
    %v2186 = vadd.f32 %v2024, %v2100
    %v2187 = vadd.f32 %v2025, %v2175
    %v2188 = vadd.f32 %v2026, %v2177
    %v2189 = vadd.f32 %v2027, %v2104
    %v2190 = vadd.f32 %v2028, %v2106
    %v2191 = vadd.f32 %v2029, %v2181
    %v2192 = vadd.f32 %v2030, %v2183
    %v2193 = vxor.u32 %v2185, 2147483648
    %v2194 = vxor.u32 %v2186, 2147483648
    %v2195 = vxor.u32 %v2187, 2147483648
    %v2196 = vxor.u32 %v2189, 2147483648
    %v2197 = vxor.u32 %v2190, 2147483648
    %v2198 = vxor.u32 %v2191, 2147483648
    %v2199 = vmul.f32 %v2193, 1.442695
    %v2200 = vpow.pop %v2199
    %v2201 = vmul.f32 %v2194, 1.442695
    %v2202 = vpow.pop %v2201
    %v2203 = vmul.f32 %v2195, 1.442695
    %v2204 = vpow.pop %v2203
    %v2205 = vmul.f32 %v2196, 1.442695
    %v2206 = vpow.pop %v2205
    %v2207 = vmul.f32 %v2197, 1.442695
    %v2208 = vpow.pop %v2207
    %v2209 = vmul.f32 %v2198, 1.442695
    %v2210 = vpow.pop %v2209
    %v2211 = vadd.f32 %v2200, 1.0
    %v2212 = vadd.f32 %v2202, 1.0
    %v2213 = vadd.f32 %v2204, 1.0
    %v2214 = vadd.f32 %v2206, 1.0
    %v2215 = vadd.f32 %v2208, 1.0
    %v2216 = vadd.f32 %v2210, 1.0
    %v2217 = vrcp.pop %v2211
    %v2218 = vmul.f32 1.0, %v2217
    %v2219 = vrcp.pop %v2212
    %v2220 = vmul.f32 1.0, %v2219
    %v2221 = vrcp.pop %v2213
    %v2222 = vmul.f32 1.0, %v2221
    %v2223 = vrcp.pop %v2214
    %v2224 = vmul.f32 1.0, %v2223
    %v2225 = vrcp.pop %v2215
    %v2226 = vmul.f32 1.0, %v2225
    %v2227 = vrcp.pop %v2216
    %v2228 = vmul.f32 1.0, %v2227
    %v2229 = vtanh.pop %v2188
    %v2230 = vtanh.pop %v2192
    %v2231 = vmul.f32 %v2220, %v2013
    %v2232 = vmul.f32 %v2226, %v2014
    %v2233 = vmul.f32 %v2218, %v2229
    %v2234 = vmul.f32 %v2224, %v2230
    %v2235 = vadd.f32 %v2231, %v2233
    %v2236 = vadd.f32 %v2232, %v2234
    %v2237 = vtanh.pop %v2235
    %v2238 = vtanh.pop %v2236
    %v2239 = vmul.f32 %v2222, %v2237
    %v2240 = vmul.f32 %v2228, %v2238
    %v2241 = vsel %vm1538, %v2239, %v2011
    %v2242 = vsel %vm1537, %v2240, %v2012
    %v2243 = vsel %vm1538, %v2235, %v2013
    %v2244 = vsel %vm1537, %v2236, %v2014
    %v2245 = vsel %vm1538, %v2239, 0.0
    %v2246 = vsel %vm1537, %v2240, 0.0
    %2247 = vst [vmem:[#allocation3 + $0x50] sm:$0xff] %v2245
    %2248 = vst [vmem:[#allocation3 + $0x28] sm:$0xff] %v2246
    %v2249 = vsel %vm1061, %v2241, 0.0
    %v2250 = vsel %vm1062, %v2242, 0.0
    %v2251 = vsel %vm1061, 0.0, %v2241
    %v2252 = vsel %vm1062, 0.0, %v2242
    %v2253 = vld [vmem:[#allocation2 + $0x180] sm:$0xff]
    %v2254 = vld [vmem:[#allocation2 + $0x188] sm:$0xff]
    %v2255 = vld [vmem:[#allocation2 + $0x190] sm:$0xff]
    %v2256 = vld [vmem:[#allocation2 + $0x198] sm:$0xff]
    %v2257 = vld [vmem:[#allocation2 + $0x60] sm:$0xff]
    %v2258 = vld [vmem:[#allocation2 + $0x68] sm:$0xff]
    %v2259 = vld [vmem:[#allocation2 + $0x70] sm:$0xff]
    %v2260 = vld [vmem:[#allocation2 + $0x78] sm:$0xff]
    %2261 = vmatprep.subr.mxu0 %v696
    %2262 = vmatpush1.msra.mxu0 %v695
    %2263 = vmatprep.subr.mxu0 %v700
    %2264 = vmatpush1.msra.mxu0 %v699
    %2265 = vmatprep.subr.mxu0 %v704
    %2266 = vmatpush1.msra.mxu0 %v703
    %2267 = vmatprep.subr.mxu0 %v708
    %2268 = vmatpush1.msra.mxu0 %v707
    %2269 = vmatprep.subr.mxu0 %v712
    %2270 = vmatpush1.msra.mxu0 %v711
    %2271 = vmatprep.subr.mxu0 %v716
    %2272 = vmatpush1.msra.mxu0 %v715
    %2273 = vmatprep.subr.mxu0 %v720
    %2274 = vmatpush1.msra.mxu0 %v719
    %2275 = vmatprep.subr.mxu0 %v724
    %2276 = vmatpush1.msra.mxu0 %v723
    %2277 = vmatprep.subr.mxu0 %v728
    %2278 = vmatpush1.msra.mxu0 %v727
    %2279 = vmatprep.subr.mxu0 %v732
    %2280 = vmatpush1.msra.mxu0 %v731
    %2281 = vmatprep.subr.mxu0 %v736
    %2282 = vmatpush1.msra.mxu0 %v735
    %2283 = vmatprep.subr.mxu0 %v740
    %2284 = vmatpush1.msra.mxu0 %v739
    %2285 = vmatprep.subr.mxu0 %v744
    %2286 = vmatpush1.msra.mxu0 %v743
    %2287 = vmatprep.subr.mxu0 %v748
    %2288 = vmatpush1.msra.mxu0 %v747
    %2289 = vmatprep.subr.mxu0 %v752
    %2290 = vmatpush1.msra.mxu0 %v751
    %2291 = vmatprep.subr.mxu0 %v756
    %2292 = vmatpush1.msra.mxu0 %v755
    %2293 = vmatprep.subr.mxu0 %v760
    %2294 = vmatpush1.msra.mxu0 %v759
    %2295 = vmatprep.subr.mxu0 %v764
    %2296 = vmatpush1.msra.mxu0 %v763
    %2297 = vmatprep.subr.mxu0 %v768
    %2298 = vmatpush1.msra.mxu0 %v767
    %2299 = vmatprep.subr.mxu0 %v772
    %2300 = vmatpush1.msra.mxu0 %v771
    %2301 = vmatprep.subr.mxu0 %v776
    %2302 = vmatpush1.msra.mxu0 %v775
    %2303 = vmatprep.subr.mxu0 %v780
    %2304 = vmatpush1.msra.mxu0 %v779
    %2305 = vmatprep.subr.mxu0 %v784
    %2306 = vmatpush1.msra.mxu0 %v783
    %2307 = vmatprep.subr.mxu0 %v788
    %2308 = vmatpush1.msra.mxu0 %v787
    %2309 = vmatprep.subr.mxu0 %v792
    %2310 = vmatpush1.msra.mxu0 %v791
    %2311 = vmatprep.subr.mxu0 %v796
    %2312 = vmatpush1.msra.mxu0 %v795
    %2313 = vmatprep.subr.mxu0 %v800
    %2314 = vmatpush1.msra.mxu0 %v799
    %2315 = vmatprep.subr.mxu0 %v804
    %2316 = vmatpush1.msra.mxu0 %v803
    %2317 = vmatprep.subr.mxu0 %v808
    %2318 = vmatpush1.msra.mxu0 %v807
    %2319 = vmatprep.subr.mxu0 %v812
    %2320 = vmatpush1.msra.mxu0 %v811
    %2321 = vmatprep.subr.mxu0 %v816
    %2322 = vmatpush1.msra.mxu0 %v815
    %2323 = vmatprep.subr.mxu0 %v820
    %2324 = vmatpush1.msra.mxu0 %v819
    %2325 = vmatprep.mubr.f32.mxu0 %v2251
    %2326 = vmatmul.mubr.f32.gmra.mrb[0].mxu0 %v2249
    %v2327 = vpop.f32.mrb[0].mxu0
    %v2328 = vadd.f32 0.0, %v2327
    %v2329 = vpop.f32.mrb[0].mxu0
    %v2330 = vadd.f32 0.0, %v2329
    %2331 = vmatprep.mubr.f32.mxu0 %v2252
    %2332 = vmatmul.mubr.f32.gmra.mrb[0].mxu0 %v2250
    %v2333 = vpop.f32.mrb[0].mxu0
    %v2334 = vadd.f32 0.0, %v2333
    %v2335 = vpop.f32.mrb[0].mxu0
    %v2336 = vadd.f32 0.0, %v2335
    %2337 = vdwg.mxu0
    %2338 = vmatprep.subr.mxu0 %v698
    %2339 = vmatpush1.msra.mxu0 %v697
    %2340 = vmatprep.subr.mxu0 %v702
    %2341 = vmatpush1.msra.mxu0 %v701
    %2342 = vmatprep.subr.mxu0 %v706
    %2343 = vmatpush1.msra.mxu0 %v705
    %2344 = vmatprep.subr.mxu0 %v710
    %2345 = vmatpush1.msra.mxu0 %v709
    %2346 = vmatprep.subr.mxu0 %v714
    %2347 = vmatpush1.msra.mxu0 %v713
    %2348 = vmatprep.subr.mxu0 %v718
    %2349 = vmatpush1.msra.mxu0 %v717
    %2350 = vmatprep.subr.mxu0 %v722
    %2351 = vmatpush1.msra.mxu0 %v721
    %2352 = vmatprep.subr.mxu0 %v726
    %2353 = vmatpush1.msra.mxu0 %v725
    %2354 = vmatprep.subr.mxu0 %v730
    %2355 = vmatpush1.msra.mxu0 %v729
    %2356 = vmatprep.subr.mxu0 %v734
    %2357 = vmatpush1.msra.mxu0 %v733
    %2358 = vmatprep.subr.mxu0 %v738
    %2359 = vmatpush1.msra.mxu0 %v737
    %2360 = vmatprep.subr.mxu0 %v742
    %2361 = vmatpush1.msra.mxu0 %v741
    %2362 = vmatprep.subr.mxu0 %v746
    %2363 = vmatpush1.msra.mxu0 %v745
    %2364 = vmatprep.subr.mxu0 %v750
    %2365 = vmatpush1.msra.mxu0 %v749
    %2366 = vmatprep.subr.mxu0 %v754
    %2367 = vmatpush1.msra.mxu0 %v753
    %2368 = vmatprep.subr.mxu0 %v758
    %2369 = vmatpush1.msra.mxu0 %v757
    %2370 = vmatprep.subr.mxu0 %v762
    %2371 = vmatpush1.msra.mxu0 %v761
    %2372 = vmatprep.subr.mxu0 %v766
    %2373 = vmatpush1.msra.mxu0 %v765
    %2374 = vmatprep.subr.mxu0 %v770
    %2375 = vmatpush1.msra.mxu0 %v769
    %2376 = vmatprep.subr.mxu0 %v774
    %2377 = vmatpush1.msra.mxu0 %v773
    %2378 = vmatprep.subr.mxu0 %v778
    %2379 = vmatpush1.msra.mxu0 %v777
    %2380 = vmatprep.subr.mxu0 %v782
    %2381 = vmatpush1.msra.mxu0 %v781
    %2382 = vmatprep.subr.mxu0 %v786
    %2383 = vmatpush1.msra.mxu0 %v785
    %2384 = vmatprep.subr.mxu0 %v790
    %2385 = vmatpush1.msra.mxu0 %v789
    %2386 = vmatprep.subr.mxu0 %v794
    %2387 = vmatpush1.msra.mxu0 %v793
    %2388 = vmatprep.subr.mxu0 %v798
    %2389 = vmatpush1.msra.mxu0 %v797
    %2390 = vmatprep.subr.mxu0 %v802
    %2391 = vmatpush1.msra.mxu0 %v801
    %2392 = vmatprep.subr.mxu0 %v806
    %2393 = vmatpush1.msra.mxu0 %v805
    %2394 = vmatprep.subr.mxu0 %v810
    %2395 = vmatpush1.msra.mxu0 %v809
    %2396 = vmatprep.subr.mxu0 %v814
    %2397 = vmatpush1.msra.mxu0 %v813
    %2398 = vmatprep.subr.mxu0 %v818
    %2399 = vmatpush1.msra.mxu0 %v817
    %2400 = vmatprep.subr.mxu0 %v822
    %2401 = vmatpush1.msra.mxu0 %v821
    %2402 = vmatprep.mubr.f32.mxu0 %v2251
    %2403 = vmatmul.mubr.f32.gmra.mrb[0].mxu0 %v2249
    %v2404 = vpop.f32.mrb[0].mxu0
    %v2405 = vadd.f32 0.0, %v2404
    %v2406 = vpop.f32.mrb[0].mxu0
    %v2407 = vadd.f32 0.0, %v2406
    %2408 = vmatprep.mubr.f32.mxu0 %v2252
    %2409 = vmatmul.mubr.f32.gmra.mrb[0].mxu0 %v2250
    %v2410 = vpop.f32.mrb[0].mxu0
    %v2411 = vadd.f32 0.0, %v2410
    %v2412 = vpop.f32.mrb[0].mxu0
    %v2413 = vadd.f32 0.0, %v2412
    %2414 = vdwg.mxu0
    %v2415 = vadd.f32 %v2253, %v2328
    %v2416 = vadd.f32 %v2254, %v2330
    %v2417 = vadd.f32 %v2255, %v2405
    %v2418 = vadd.f32 %v2256, %v2407
    %v2419 = vadd.f32 %v2257, %v2334
    %v2420 = vadd.f32 %v2258, %v2336
    %v2421 = vadd.f32 %v2259, %v2411
    %v2422 = vadd.f32 %v2260, %v2413
    %v2423 = vxor.u32 %v2415, 2147483648
    %v2424 = vxor.u32 %v2416, 2147483648
    %v2425 = vxor.u32 %v2417, 2147483648
    %v2426 = vxor.u32 %v2419, 2147483648
    %v2427 = vxor.u32 %v2420, 2147483648
    %v2428 = vxor.u32 %v2421, 2147483648
    %v2429 = vmul.f32 %v2423, 1.442695
    %v2430 = vpow.pop %v2429
    %v2431 = vmul.f32 %v2424, 1.442695
    %v2432 = vpow.pop %v2431
    %v2433 = vmul.f32 %v2425, 1.442695
    %v2434 = vpow.pop %v2433
    %v2435 = vmul.f32 %v2426, 1.442695
    %v2436 = vpow.pop %v2435
    %v2437 = vmul.f32 %v2427, 1.442695
    %v2438 = vpow.pop %v2437
    %v2439 = vmul.f32 %v2428, 1.442695
    %v2440 = vpow.pop %v2439
    %v2441 = vadd.f32 %v2430, 1.0
    %v2442 = vadd.f32 %v2432, 1.0
    %v2443 = vadd.f32 %v2434, 1.0
    %v2444 = vadd.f32 %v2436, 1.0
    %v2445 = vadd.f32 %v2438, 1.0
    %v2446 = vadd.f32 %v2440, 1.0
    %v2447 = vrcp.pop %v2441
    %v2448 = vmul.f32 1.0, %v2447
    %v2449 = vrcp.pop %v2442
    %v2450 = vmul.f32 1.0, %v2449
    %v2451 = vrcp.pop %v2443
    %v2452 = vmul.f32 1.0, %v2451
    %v2453 = vrcp.pop %v2444
    %v2454 = vmul.f32 1.0, %v2453
    %v2455 = vrcp.pop %v2445
    %v2456 = vmul.f32 1.0, %v2455
    %v2457 = vrcp.pop %v2446
    %v2458 = vmul.f32 1.0, %v2457
    %v2459 = vtanh.pop %v2418
    %v2460 = vtanh.pop %v2422
    %v2461 = vmul.f32 %v2450, %v2243
    %v2462 = vmul.f32 %v2456, %v2244
    %v2463 = vmul.f32 %v2448, %v2459
    %v2464 = vmul.f32 %v2454, %v2460
    %v2465 = vadd.f32 %v2461, %v2463
    %v2466 = vadd.f32 %v2462, %v2464
    %v2467 = vtanh.pop %v2465
    %v2468 = vtanh.pop %v2466
    %v2469 = vmul.f32 %v2452, %v2467
    %v2470 = vmul.f32 %v2458, %v2468
    %v2471 = vsel %vm1296, %v2469, %v2241
    %v2472 = vsel %vm1295, %v2470, %v2242
    %v2473 = vsel %vm1296, %v2465, %v2243
    %v2474 = vsel %vm1295, %v2466, %v2244
    %v2475 = vsel %vm1296, %v2469, 0.0
    %v2476 = vsel %vm1295, %v2470, 0.0
    %2477 = vst [vmem:[#allocation3 + $0x60] sm:$0xff] %v2475
    %2478 = vst [vmem:[#allocation3 + $0x18] sm:$0xff] %v2476
    %v2479 = vsel %vm1061, %v2471, 0.0
    %v2480 = vsel %vm1062, %v2472, 0.0
    %v2481 = vsel %vm1061, 0.0, %v2471
    %v2482 = vsel %vm1062, 0.0, %v2472
    %v2483 = vld [vmem:[#allocation2 + $0x1c0] sm:$0xff]
    %v2484 = vld [vmem:[#allocation2 + $0x1c8] sm:$0xff]
    %v2485 = vld [vmem:[#allocation2 + $0x1d0] sm:$0xff]
    %v2486 = vld [vmem:[#allocation2 + $0x1d8] sm:$0xff]
    %v2487 = vld [vmem:[#allocation2 + $0x20] sm:$0xff]
    %v2488 = vld [vmem:[#allocation2 + $0x28] sm:$0xff]
    %v2489 = vld [vmem:[#allocation2 + $0x30] sm:$0xff]
    %v2490 = vld [vmem:[#allocation2 + $0x38] sm:$0xff]
    %2491 = vmatprep.subr.mxu0 %v696
    %2492 = vmatpush1.msra.mxu0 %v695
    %2493 = vmatprep.subr.mxu0 %v700
    %2494 = vmatpush1.msra.mxu0 %v699
    %2495 = vmatprep.subr.mxu0 %v704
    %2496 = vmatpush1.msra.mxu0 %v703
    %2497 = vmatprep.subr.mxu0 %v708
    %2498 = vmatpush1.msra.mxu0 %v707
    %2499 = vmatprep.subr.mxu0 %v712
    %2500 = vmatpush1.msra.mxu0 %v711
    %2501 = vmatprep.subr.mxu0 %v716
    %2502 = vmatpush1.msra.mxu0 %v715
    %2503 = vmatprep.subr.mxu0 %v720
    %2504 = vmatpush1.msra.mxu0 %v719
    %2505 = vmatprep.subr.mxu0 %v724
    %2506 = vmatpush1.msra.mxu0 %v723
    %2507 = vmatprep.subr.mxu0 %v728
    %2508 = vmatpush1.msra.mxu0 %v727
    %2509 = vmatprep.subr.mxu0 %v732
    %2510 = vmatpush1.msra.mxu0 %v731
    %2511 = vmatprep.subr.mxu0 %v736
    %2512 = vmatpush1.msra.mxu0 %v735
    %2513 = vmatprep.subr.mxu0 %v740
    %2514 = vmatpush1.msra.mxu0 %v739
    %2515 = vmatprep.subr.mxu0 %v744
    %2516 = vmatpush1.msra.mxu0 %v743
    %2517 = vmatprep.subr.mxu0 %v748
    %2518 = vmatpush1.msra.mxu0 %v747
    %2519 = vmatprep.subr.mxu0 %v752
    %2520 = vmatpush1.msra.mxu0 %v751
    %2521 = vmatprep.subr.mxu0 %v756
    %2522 = vmatpush1.msra.mxu0 %v755
    %2523 = vmatprep.subr.mxu0 %v760
    %2524 = vmatpush1.msra.mxu0 %v759
    %2525 = vmatprep.subr.mxu0 %v764
    %2526 = vmatpush1.msra.mxu0 %v763
    %2527 = vmatprep.subr.mxu0 %v768
    %2528 = vmatpush1.msra.mxu0 %v767
    %2529 = vmatprep.subr.mxu0 %v772
    %2530 = vmatpush1.msra.mxu0 %v771
    %2531 = vmatprep.subr.mxu0 %v776
    %2532 = vmatpush1.msra.mxu0 %v775
    %2533 = vmatprep.subr.mxu0 %v780
    %2534 = vmatpush1.msra.mxu0 %v779
    %2535 = vmatprep.subr.mxu0 %v784
    %2536 = vmatpush1.msra.mxu0 %v783
    %2537 = vmatprep.subr.mxu0 %v788
    %2538 = vmatpush1.msra.mxu0 %v787
    %2539 = vmatprep.subr.mxu0 %v792
    %2540 = vmatpush1.msra.mxu0 %v791
    %2541 = vmatprep.subr.mxu0 %v796
    %2542 = vmatpush1.msra.mxu0 %v795
    %2543 = vmatprep.subr.mxu0 %v800
    %2544 = vmatpush1.msra.mxu0 %v799
    %2545 = vmatprep.subr.mxu0 %v804
    %2546 = vmatpush1.msra.mxu0 %v803
    %2547 = vmatprep.subr.mxu0 %v808
    %2548 = vmatpush1.msra.mxu0 %v807
    %2549 = vmatprep.subr.mxu0 %v812
    %2550 = vmatpush1.msra.mxu0 %v811
    %2551 = vmatprep.subr.mxu0 %v816
    %2552 = vmatpush1.msra.mxu0 %v815
    %2553 = vmatprep.subr.mxu0 %v820
    %2554 = vmatpush1.msra.mxu0 %v819
    %2555 = vmatprep.mubr.f32.mxu0 %v2481
    %2556 = vmatmul.mubr.f32.gmra.mrb[0].mxu0 %v2479
    %v2557 = vpop.f32.mrb[0].mxu0
    %v2558 = vadd.f32 0.0, %v2557
    %v2559 = vpop.f32.mrb[0].mxu0
    %v2560 = vadd.f32 0.0, %v2559
    %2561 = vmatprep.mubr.f32.mxu0 %v2482
    %2562 = vmatmul.mubr.f32.gmra.mrb[0].mxu0 %v2480
    %v2563 = vpop.f32.mrb[0].mxu0
    %v2564 = vadd.f32 0.0, %v2563
    %v2565 = vpop.f32.mrb[0].mxu0
    %v2566 = vadd.f32 0.0, %v2565
    %2567 = vdwg.mxu0
    %2568 = vmatprep.subr.mxu0 %v698
    %2569 = vmatpush1.msra.mxu0 %v697
    %2570 = vmatprep.subr.mxu0 %v702
    %2571 = vmatpush1.msra.mxu0 %v701
    %2572 = vmatprep.subr.mxu0 %v706
    %2573 = vmatpush1.msra.mxu0 %v705
    %2574 = vmatprep.subr.mxu0 %v710
    %2575 = vmatpush1.msra.mxu0 %v709
    %2576 = vmatprep.subr.mxu0 %v714
    %2577 = vmatpush1.msra.mxu0 %v713
    %2578 = vmatprep.subr.mxu0 %v718
    %2579 = vmatpush1.msra.mxu0 %v717
    %2580 = vmatprep.subr.mxu0 %v722
    %2581 = vmatpush1.msra.mxu0 %v721
    %2582 = vmatprep.subr.mxu0 %v726
    %2583 = vmatpush1.msra.mxu0 %v725
    %2584 = vmatprep.subr.mxu0 %v730
    %2585 = vmatpush1.msra.mxu0 %v729
    %2586 = vmatprep.subr.mxu0 %v734
    %2587 = vmatpush1.msra.mxu0 %v733
    %2588 = vmatprep.subr.mxu0 %v738
    %2589 = vmatpush1.msra.mxu0 %v737
    %2590 = vmatprep.subr.mxu0 %v742
    %2591 = vmatpush1.msra.mxu0 %v741
    %2592 = vmatprep.subr.mxu0 %v746
    %2593 = vmatpush1.msra.mxu0 %v745
    %2594 = vmatprep.subr.mxu0 %v750
    %2595 = vmatpush1.msra.mxu0 %v749
    %2596 = vmatprep.subr.mxu0 %v754
    %2597 = vmatpush1.msra.mxu0 %v753
    %2598 = vmatprep.subr.mxu0 %v758
    %2599 = vmatpush1.msra.mxu0 %v757
    %2600 = vmatprep.subr.mxu0 %v762
    %2601 = vmatpush1.msra.mxu0 %v761
    %2602 = vmatprep.subr.mxu0 %v766
    %2603 = vmatpush1.msra.mxu0 %v765
    %2604 = vmatprep.subr.mxu0 %v770
    %2605 = vmatpush1.msra.mxu0 %v769
    %2606 = vmatprep.subr.mxu0 %v774
    %2607 = vmatpush1.msra.mxu0 %v773
    %2608 = vmatprep.subr.mxu0 %v778
    %2609 = vmatpush1.msra.mxu0 %v777
    %2610 = vmatprep.subr.mxu0 %v782
    %2611 = vmatpush1.msra.mxu0 %v781
    %2612 = vmatprep.subr.mxu0 %v786
    %2613 = vmatpush1.msra.mxu0 %v785
    %2614 = vmatprep.subr.mxu0 %v790
    %2615 = vmatpush1.msra.mxu0 %v789
    %2616 = vmatprep.subr.mxu0 %v794
    %2617 = vmatpush1.msra.mxu0 %v793
    %2618 = vmatprep.subr.mxu0 %v798
    %2619 = vmatpush1.msra.mxu0 %v797
    %2620 = vmatprep.subr.mxu0 %v802
    %2621 = vmatpush1.msra.mxu0 %v801
    %2622 = vmatprep.subr.mxu0 %v806
    %2623 = vmatpush1.msra.mxu0 %v805
    %2624 = vmatprep.subr.mxu0 %v810
    %2625 = vmatpush1.msra.mxu0 %v809
    %2626 = vmatprep.subr.mxu0 %v814
    %2627 = vmatpush1.msra.mxu0 %v813
    %2628 = vmatprep.subr.mxu0 %v818
    %2629 = vmatpush1.msra.mxu0 %v817
    %2630 = vmatprep.subr.mxu0 %v822
    %2631 = vmatpush1.msra.mxu0 %v821
    %2632 = vmatprep.mubr.f32.mxu0 %v2481
    %2633 = vmatmul.mubr.f32.gmra.mrb[0].mxu0 %v2479
    %v2634 = vpop.f32.mrb[0].mxu0
    %v2635 = vadd.f32 0.0, %v2634
    %v2636 = vpop.f32.mrb[0].mxu0
    %v2637 = vadd.f32 0.0, %v2636
    %2638 = vmatprep.mubr.f32.mxu0 %v2482
    %2639 = vmatmul.mubr.f32.gmra.mrb[0].mxu0 %v2480
    %v2640 = vpop.f32.mrb[0].mxu0
    %v2641 = vadd.f32 0.0, %v2640
    %v2642 = vpop.f32.mrb[0].mxu0
    %v2643 = vadd.f32 0.0, %v2642
    %2644 = vdwg.mxu0
    %v2645 = vadd.f32 %v2483, %v2558
    %v2646 = vadd.f32 %v2484, %v2560
    %v2647 = vadd.f32 %v2485, %v2635
    %v2648 = vadd.f32 %v2486, %v2637
    %v2649 = vadd.f32 %v2487, %v2564
    %v2650 = vadd.f32 %v2488, %v2566
    %v2651 = vadd.f32 %v2489, %v2641
    %v2652 = vadd.f32 %v2490, %v2643
    %v2653 = vxor.u32 %v2645, 2147483648
    %v2654 = vxor.u32 %v2646, 2147483648
    %v2655 = vxor.u32 %v2647, 2147483648
    %v2656 = vxor.u32 %v2649, 2147483648
    %v2657 = vxor.u32 %v2650, 2147483648
    %v2658 = vxor.u32 %v2651, 2147483648
    %v2659 = vmul.f32 %v2653, 1.442695
    %v2660 = vpow.pop %v2659
    %v2661 = vmul.f32 %v2654, 1.442695
    %v2662 = vpow.pop %v2661
    %v2663 = vmul.f32 %v2655, 1.442695
    %v2664 = vpow.pop %v2663
    %v2665 = vmul.f32 %v2656, 1.442695
    %v2666 = vpow.pop %v2665
    %v2667 = vmul.f32 %v2657, 1.442695
    %v2668 = vpow.pop %v2667
    %v2669 = vmul.f32 %v2658, 1.442695
    %v2670 = vpow.pop %v2669
    %v2671 = vadd.f32 %v2660, 1.0
    %v2672 = vadd.f32 %v2662, 1.0
    %v2673 = vadd.f32 %v2664, 1.0
    %v2674 = vadd.f32 %v2666, 1.0
    %v2675 = vadd.f32 %v2668, 1.0
    %v2676 = vadd.f32 %v2670, 1.0
    %v2677 = vrcp.pop %v2671
    %v2678 = vmul.f32 1.0, %v2677
    %v2679 = vrcp.pop %v2672
    %v2680 = vmul.f32 1.0, %v2679
    %v2681 = vrcp.pop %v2673
    %v2682 = vmul.f32 1.0, %v2681
    %v2683 = vrcp.pop %v2674
    %v2684 = vmul.f32 1.0, %v2683
    %v2685 = vrcp.pop %v2675
    %v2686 = vmul.f32 1.0, %v2685
    %v2687 = vrcp.pop %v2676
    %v2688 = vmul.f32 1.0, %v2687
    %v2689 = vtanh.pop %v2648
    %v2690 = vtanh.pop %v2652
    %v2691 = vmul.f32 %v2680, %v2473
    %v2692 = vmul.f32 %v2686, %v2474
    %v2693 = vmul.f32 %v2678, %v2689
    %v2694 = vmul.f32 %v2684, %v2690
    %v2695 = vadd.f32 %v2691, %v2693
    %v2696 = vadd.f32 %v2692, %v2694
    %v2697 = vtanh.pop %v2695
    %v2698 = vtanh.pop %v2696
    %v2699 = vmul.f32 %v2682, %v2697
    %v2700 = vmul.f32 %v2688, %v2698
    %v2701 = vsel %vm1052, %v2699, 0.0
    %v2702 = vsel %vm1051, %v2700, 0.0
    %2703 = vst [vmem:[#allocation3 + $0x70] sm:$0xff] %v2701
    %2704 = vst [vmem:[#allocation3 + $0x8] sm:$0xff] %v2702
    %v2705 = vld [vmem:[#allocation3] sm:$0xff]
    %v2706 = vld [vmem:[#allocation3 + $0x8] sm:$0xff]
    %v2707 = vld [vmem:[#allocation3 + $0x10] sm:$0xff]
    %v2708 = vld [vmem:[#allocation3 + $0x18] sm:$0xff]
    %v2709 = vld [vmem:[#allocation3 + $0x20] sm:$0xff]
    %v2710 = vld [vmem:[#allocation3 + $0x28] sm:$0xff]
    %v2711 = vld [vmem:[#allocation3 + $0x30] sm:$0xff]
    %v2712 = vld [vmem:[#allocation3 + $0x38] sm:$0xff]
    %v2713 = vld [vmem:[#allocation3 + $0x40] sm:$0xff]
    %v2714 = vld [vmem:[#allocation3 + $0x48] sm:$0xff]
    %v2715 = vld [vmem:[#allocation3 + $0x50] sm:$0xff]
    %v2716 = vld [vmem:[#allocation3 + $0x58] sm:$0xff]
    %v2717 = vld [vmem:[#allocation3 + $0x60] sm:$0xff]
    %v2718 = vld [vmem:[#allocation3 + $0x68] sm:$0xff]
    %v2719 = vld [vmem:[#allocation3 + $0x70] sm:$0xff]
    %v2720 = vld [vmem:[#allocation3 + $0x78] sm:$0xff]
    %v2721 = vld [vmem:[#allocation6] sm:$0xff]
    %v2722 = vld [vmem:[#allocation6 + $0x8] sm:$0xff]
    %v2723 = vld [vmem:[#allocation6 + $0x10] sm:$0xff]
    %v2724 = vld [vmem:[#allocation6 + $0x18] sm:$0xff]
    %v2725 = vld [vmem:[#allocation6 + $0x20] sm:$0xff]
    %v2726 = vld [vmem:[#allocation6 + $0x28] sm:$0xff]
    %v2727 = vld [vmem:[#allocation6 + $0x30] sm:$0xff]
    %v2728 = vld [vmem:[#allocation6 + $0x38] sm:$0xff]
    %v2729 = vld [vmem:[#allocation6 + $0x40] sm:$0xff]
    %v2730 = vld [vmem:[#allocation6 + $0x48] sm:$0xff]
    %v2731 = vld [vmem:[#allocation6 + $0x50] sm:$0xff]
    %v2732 = vld [vmem:[#allocation6 + $0x58] sm:$0xff]
    %v2733 = vld [vmem:[#allocation6 + $0x60] sm:$0xff]
    %v2734 = vld [vmem:[#allocation6 + $0x68] sm:$0xff]
    %v2735 = vld [vmem:[#allocation6 + $0x70] sm:$0xff]
    %v2736 = vld [vmem:[#allocation6 + $0x78] sm:$0xff]
    %v2737 = vld [vmem:[#allocation6 + $0x80] sm:$0xff]
    %v2738 = vld [vmem:[#allocation6 + $0x88] sm:$0xff]
    %v2739 = vld [vmem:[#allocation6 + $0x90] sm:$0xff]
    %v2740 = vld [vmem:[#allocation6 + $0x98] sm:$0xff]
    %v2741 = vld [vmem:[#allocation6 + $0xa0] sm:$0xff]
    %v2742 = vld [vmem:[#allocation6 + $0xa8] sm:$0xff]
    %v2743 = vld [vmem:[#allocation6 + $0xb0] sm:$0xff]
    %v2744 = vld [vmem:[#allocation6 + $0xb8] sm:$0xff]
    %v2745 = vld [vmem:[#allocation6 + $0xc0] sm:$0xff]
    %v2746 = vld [vmem:[#allocation6 + $0xc8] sm:$0xff]
    %v2747 = vld [vmem:[#allocation6 + $0xd0] sm:$0xff]
    %v2748 = vld [vmem:[#allocation6 + $0xd8] sm:$0xff]
    %v2749 = vld [vmem:[#allocation6 + $0xe0] sm:$0xff]
    %v2750 = vld [vmem:[#allocation6 + $0xe8] sm:$0xff]
    %v2751 = vld [vmem:[#allocation6 + $0xf0] sm:$0xff]
    %v2752 = vld [vmem:[#allocation6 + $0xf8] sm:$0xff]
    %v2753 = vld [vmem:[#allocation6 + $0x100] sm:$0xff]
    %v2754 = vld [vmem:[#allocation6 + $0x108] sm:$0xff]
    %v2755 = vld [vmem:[#allocation6 + $0x110] sm:$0xff]
    %v2756 = vld [vmem:[#allocation6 + $0x118] sm:$0xff]
    %v2757 = vld [vmem:[#allocation6 + $0x120] sm:$0xff]
    %v2758 = vld [vmem:[#allocation6 + $0x128] sm:$0xff]
    %v2759 = vld [vmem:[#allocation6 + $0x130] sm:$0xff]
    %v2760 = vld [vmem:[#allocation6 + $0x138] sm:$0xff]
    %v2761 = vld [vmem:[#allocation6 + $0x140] sm:$0xff]
    %v2762 = vld [vmem:[#allocation6 + $0x148] sm:$0xff]
    %v2763 = vld [vmem:[#allocation6 + $0x150] sm:$0xff]
    %v2764 = vld [vmem:[#allocation6 + $0x158] sm:$0xff]
    %v2765 = vld [vmem:[#allocation6 + $0x160] sm:$0xff]
    %v2766 = vld [vmem:[#allocation6 + $0x168] sm:$0xff]
    %v2767 = vld [vmem:[#allocation6 + $0x170] sm:$0xff]
    %v2768 = vld [vmem:[#allocation6 + $0x178] sm:$0xff]
    %v2769 = vld [vmem:[#allocation6 + $0x180] sm:$0xff]
    %v2770 = vld [vmem:[#allocation6 + $0x188] sm:$0xff]
    %v2771 = vld [vmem:[#allocation6 + $0x190] sm:$0xff]
    %v2772 = vld [vmem:[#allocation6 + $0x198] sm:$0xff]
    %v2773 = vld [vmem:[#allocation6 + $0x1a0] sm:$0xff]
    %v2774 = vld [vmem:[#allocation6 + $0x1a8] sm:$0xff]
    %v2775 = vld [vmem:[#allocation6 + $0x1b0] sm:$0xff]
    %v2776 = vld [vmem:[#allocation6 + $0x1b8] sm:$0xff]
    %v2777 = vld [vmem:[#allocation6 + $0x1c0] sm:$0xff]
    %v2778 = vld [vmem:[#allocation6 + $0x1c8] sm:$0xff]
    %v2779 = vld [vmem:[#allocation6 + $0x1d0] sm:$0xff]
    %v2780 = vld [vmem:[#allocation6 + $0x1d8] sm:$0xff]
    %v2781 = vld [vmem:[#allocation6 + $0x1e0] sm:$0xff]
    %v2782 = vld [vmem:[#allocation6 + $0x1e8] sm:$0xff]
    %v2783 = vld [vmem:[#allocation6 + $0x1f0] sm:$0xff]
    %v2784 = vld [vmem:[#allocation6 + $0x1f8] sm:$0xff]
    %v2785 = vld [vmem:[#allocation6 + $0x200] sm:$0xff]
    %v2786 = vld [vmem:[#allocation6 + $0x208] sm:$0xff]
    %v2787 = vld [vmem:[#allocation6 + $0x210] sm:$0xff]
    %v2788 = vld [vmem:[#allocation6 + $0x218] sm:$0xff]
    %v2789 = vld [vmem:[#allocation6 + $0x220] sm:$0xff]
    %v2790 = vld [vmem:[#allocation6 + $0x228] sm:$0xff]
    %v2791 = vld [vmem:[#allocation6 + $0x230] sm:$0xff]
    %v2792 = vld [vmem:[#allocation6 + $0x238] sm:$0xff]
    %v2793 = vld [vmem:[#allocation6 + $0x240] sm:$0xff]
    %v2794 = vld [vmem:[#allocation6 + $0x248] sm:$0xff]
    %v2795 = vld [vmem:[#allocation6 + $0x250] sm:$0xff]
    %v2796 = vld [vmem:[#allocation6 + $0x258] sm:$0xff]
    %v2797 = vld [vmem:[#allocation6 + $0x260] sm:$0xff]
    %v2798 = vld [vmem:[#allocation6 + $0x268] sm:$0xff]
    %v2799 = vld [vmem:[#allocation6 + $0x270] sm:$0xff]
    %v2800 = vld [vmem:[#allocation6 + $0x278] sm:$0xff]
    %v2801 = vld [vmem:[#allocation6 + $0x280] sm:$0xff]
    %v2802 = vld [vmem:[#allocation6 + $0x288] sm:$0xff]
    %v2803 = vld [vmem:[#allocation6 + $0x290] sm:$0xff]
    %v2804 = vld [vmem:[#allocation6 + $0x298] sm:$0xff]
    %v2805 = vld [vmem:[#allocation6 + $0x2a0] sm:$0xff]
    %v2806 = vld [vmem:[#allocation6 + $0x2a8] sm:$0xff]
    %v2807 = vld [vmem:[#allocation6 + $0x2b0] sm:$0xff]
    %v2808 = vld [vmem:[#allocation6 + $0x2b8] sm:$0xff]
    %v2809 = vld [vmem:[#allocation6 + $0x2c0] sm:$0xff]
    %v2810 = vld [vmem:[#allocation6 + $0x2c8] sm:$0xff]
    %v2811 = vld [vmem:[#allocation6 + $0x2d0] sm:$0xff]
    %v2812 = vld [vmem:[#allocation6 + $0x2d8] sm:$0xff]
    %v2813 = vld [vmem:[#allocation6 + $0x2e0] sm:$0xff]
    %v2814 = vld [vmem:[#allocation6 + $0x2e8] sm:$0xff]
    %v2815 = vld [vmem:[#allocation6 + $0x2f0] sm:$0xff]
    %v2816 = vld [vmem:[#allocation6 + $0x2f8] sm:$0xff]
    %v2817 = vld [vmem:[#allocation6 + $0x300] sm:$0xff]
    %v2818 = vld [vmem:[#allocation6 + $0x308] sm:$0xff]
    %v2819 = vld [vmem:[#allocation6 + $0x310] sm:$0xff]
    %v2820 = vld [vmem:[#allocation6 + $0x318] sm:$0xff]
    %v2821 = vld [vmem:[#allocation6 + $0x320] sm:$0xff]
    %v2822 = vld [vmem:[#allocation6 + $0x328] sm:$0xff]
    %v2823 = vld [vmem:[#allocation6 + $0x330] sm:$0xff]
    %v2824 = vld [vmem:[#allocation6 + $0x338] sm:$0xff]
    %v2825 = vld [vmem:[#allocation6 + $0x340] sm:$0xff]
    %v2826 = vld [vmem:[#allocation6 + $0x348] sm:$0xff]
    %v2827 = vld [vmem:[#allocation6 + $0x350] sm:$0xff]
    %v2828 = vld [vmem:[#allocation6 + $0x358] sm:$0xff]
    %v2829 = vld [vmem:[#allocation6 + $0x360] sm:$0xff]
    %v2830 = vld [vmem:[#allocation6 + $0x368] sm:$0xff]
    %v2831 = vld [vmem:[#allocation6 + $0x370] sm:$0xff]
    %v2832 = vld [vmem:[#allocation6 + $0x378] sm:$0xff]
    %v2833 = vld [vmem:[#allocation6 + $0x380] sm:$0xff]
    %v2834 = vld [vmem:[#allocation6 + $0x388] sm:$0xff]
    %v2835 = vld [vmem:[#allocation6 + $0x390] sm:$0xff]
    %v2836 = vld [vmem:[#allocation6 + $0x398] sm:$0xff]
    %v2837 = vld [vmem:[#allocation6 + $0x3a0] sm:$0xff]
    %v2838 = vld [vmem:[#allocation6 + $0x3a8] sm:$0xff]
    %v2839 = vld [vmem:[#allocation6 + $0x3b0] sm:$0xff]
    %v2840 = vld [vmem:[#allocation6 + $0x3b8] sm:$0xff]
    %v2841 = vld [vmem:[#allocation6 + $0x3c0] sm:$0xff]
    %v2842 = vld [vmem:[#allocation6 + $0x3c8] sm:$0xff]
    %v2843 = vld [vmem:[#allocation6 + $0x3d0] sm:$0xff]
    %v2844 = vld [vmem:[#allocation6 + $0x3d8] sm:$0xff]
    %v2845 = vld [vmem:[#allocation6 + $0x3e0] sm:$0xff]
    %v2846 = vld [vmem:[#allocation6 + $0x3e8] sm:$0xff]
    %v2847 = vld [vmem:[#allocation6 + $0x3f0] sm:$0xff]
    %v2848 = vld [vmem:[#allocation6 + $0x3f8] sm:$0xff]
    %v2849 = vld [vmem:[#allocation6 + $0x400] sm:$0xff]
    %v2850 = vld [vmem:[#allocation6 + $0x408] sm:$0xff]
    %v2851 = vld [vmem:[#allocation6 + $0x410] sm:$0xff]
    %v2852 = vld [vmem:[#allocation6 + $0x418] sm:$0xff]
    %v2853 = vld [vmem:[#allocation6 + $0x420] sm:$0xff]
    %v2854 = vld [vmem:[#allocation6 + $0x428] sm:$0xff]
    %v2855 = vld [vmem:[#allocation6 + $0x430] sm:$0xff]
    %v2856 = vld [vmem:[#allocation6 + $0x438] sm:$0xff]
    %v2857 = vld [vmem:[#allocation6 + $0x440] sm:$0xff]
    %v2858 = vld [vmem:[#allocation6 + $0x448] sm:$0xff]
    %v2859 = vld [vmem:[#allocation6 + $0x450] sm:$0xff]
    %v2860 = vld [vmem:[#allocation6 + $0x458] sm:$0xff]
    %v2861 = vld [vmem:[#allocation6 + $0x460] sm:$0xff]
    %v2862 = vld [vmem:[#allocation6 + $0x468] sm:$0xff]
    %v2863 = vld [vmem:[#allocation6 + $0x470] sm:$0xff]
    %v2864 = vld [vmem:[#allocation6 + $0x478] sm:$0xff]
    %v2865 = vld [vmem:[#allocation6 + $0x480] sm:$0xff]
    %v2866 = vld [vmem:[#allocation6 + $0x488] sm:$0xff]
    %v2867 = vld [vmem:[#allocation6 + $0x490] sm:$0xff]
    %v2868 = vld [vmem:[#allocation6 + $0x498] sm:$0xff]
    %v2869 = vld [vmem:[#allocation6 + $0x4a0] sm:$0xff]
    %v2870 = vld [vmem:[#allocation6 + $0x4a8] sm:$0xff]
    %v2871 = vld [vmem:[#allocation6 + $0x4b0] sm:$0xff]
    %v2872 = vld [vmem:[#allocation6 + $0x4b8] sm:$0xff]
    %v2873 = vld [vmem:[#allocation6 + $0x4c0] sm:$0xff]
    %v2874 = vld [vmem:[#allocation6 + $0x4c8] sm:$0xff]
    %v2875 = vld [vmem:[#allocation6 + $0x4d0] sm:$0xff]
    %v2876 = vld [vmem:[#allocation6 + $0x4d8] sm:$0xff]
    %v2877 = vld [vmem:[#allocation6 + $0x4e0] sm:$0xff]
    %v2878 = vld [vmem:[#allocation6 + $0x4e8] sm:$0xff]
    %v2879 = vld [vmem:[#allocation6 + $0x4f0] sm:$0xff]
    %v2880 = vld [vmem:[#allocation6 + $0x4f8] sm:$0xff]
    %v2881 = vld [vmem:[#allocation6 + $0x500] sm:$0xff]
    %v2882 = vld [vmem:[#allocation6 + $0x508] sm:$0xff]
    %v2883 = vld [vmem:[#allocation6 + $0x510] sm:$0xff]
    %v2884 = vld [vmem:[#allocation6 + $0x518] sm:$0xff]
    %v2885 = vld [vmem:[#allocation6 + $0x520] sm:$0xff]
    %v2886 = vld [vmem:[#allocation6 + $0x528] sm:$0xff]
    %v2887 = vld [vmem:[#allocation6 + $0x530] sm:$0xff]
    %v2888 = vld [vmem:[#allocation6 + $0x538] sm:$0xff]
    %v2889 = vld [vmem:[#allocation6 + $0x540] sm:$0xff]
    %v2890 = vld [vmem:[#allocation6 + $0x548] sm:$0xff]
    %v2891 = vld [vmem:[#allocation6 + $0x550] sm:$0xff]
    %v2892 = vld [vmem:[#allocation6 + $0x558] sm:$0xff]
    %v2893 = vld [vmem:[#allocation6 + $0x560] sm:$0xff]
    %v2894 = vld [vmem:[#allocation6 + $0x568] sm:$0xff]
    %v2895 = vld [vmem:[#allocation6 + $0x570] sm:$0xff]
    %v2896 = vld [vmem:[#allocation6 + $0x578] sm:$0xff]
    %v2897 = vld [vmem:[#allocation6 + $0x580] sm:$0xff]
    %v2898 = vld [vmem:[#allocation6 + $0x588] sm:$0xff]
    %v2899 = vld [vmem:[#allocation6 + $0x590] sm:$0xff]
    %v2900 = vld [vmem:[#allocation6 + $0x598] sm:$0xff]
    %v2901 = vld [vmem:[#allocation6 + $0x5a0] sm:$0xff]
    %v2902 = vld [vmem:[#allocation6 + $0x5a8] sm:$0xff]
    %v2903 = vld [vmem:[#allocation6 + $0x5b0] sm:$0xff]
    %v2904 = vld [vmem:[#allocation6 + $0x5b8] sm:$0xff]
    %v2905 = vld [vmem:[#allocation6 + $0x5c0] sm:$0xff]
    %v2906 = vld [vmem:[#allocation6 + $0x5c8] sm:$0xff]
    %v2907 = vld [vmem:[#allocation6 + $0x5d0] sm:$0xff]
    %v2908 = vld [vmem:[#allocation6 + $0x5d8] sm:$0xff]
    %v2909 = vld [vmem:[#allocation6 + $0x5e0] sm:$0xff]
    %v2910 = vld [vmem:[#allocation6 + $0x5e8] sm:$0xff]
    %v2911 = vld [vmem:[#allocation6 + $0x5f0] sm:$0xff]
    %v2912 = vld [vmem:[#allocation6 + $0x5f8] sm:$0xff]
    %v2913 = vld [vmem:[#allocation6 + $0x600] sm:$0xff]
    %v2914 = vld [vmem:[#allocation6 + $0x608] sm:$0xff]
    %v2915 = vld [vmem:[#allocation6 + $0x610] sm:$0xff]
    %v2916 = vld [vmem:[#allocation6 + $0x618] sm:$0xff]
    %v2917 = vld [vmem:[#allocation6 + $0x620] sm:$0xff]
    %v2918 = vld [vmem:[#allocation6 + $0x628] sm:$0xff]
    %v2919 = vld [vmem:[#allocation6 + $0x630] sm:$0xff]
    %v2920 = vld [vmem:[#allocation6 + $0x638] sm:$0xff]
    %v2921 = vld [vmem:[#allocation6 + $0x640] sm:$0xff]
    %v2922 = vld [vmem:[#allocation6 + $0x648] sm:$0xff]
    %v2923 = vld [vmem:[#allocation6 + $0x650] sm:$0xff]
    %v2924 = vld [vmem:[#allocation6 + $0x658] sm:$0xff]
    %v2925 = vld [vmem:[#allocation6 + $0x660] sm:$0xff]
    %v2926 = vld [vmem:[#allocation6 + $0x668] sm:$0xff]
    %v2927 = vld [vmem:[#allocation6 + $0x670] sm:$0xff]
    %v2928 = vld [vmem:[#allocation6 + $0x678] sm:$0xff]
    %v2929 = vld [vmem:[#allocation6 + $0x680] sm:$0xff]
    %v2930 = vld [vmem:[#allocation6 + $0x688] sm:$0xff]
    %v2931 = vld [vmem:[#allocation6 + $0x690] sm:$0xff]
    %v2932 = vld [vmem:[#allocation6 + $0x698] sm:$0xff]
    %v2933 = vld [vmem:[#allocation6 + $0x6a0] sm:$0xff]
    %v2934 = vld [vmem:[#allocation6 + $0x6a8] sm:$0xff]
    %v2935 = vld [vmem:[#allocation6 + $0x6b0] sm:$0xff]
    %v2936 = vld [vmem:[#allocation6 + $0x6b8] sm:$0xff]
    %v2937 = vld [vmem:[#allocation6 + $0x6c0] sm:$0xff]
    %v2938 = vld [vmem:[#allocation6 + $0x6c8] sm:$0xff]
    %v2939 = vld [vmem:[#allocation6 + $0x6d0] sm:$0xff]
    %v2940 = vld [vmem:[#allocation6 + $0x6d8] sm:$0xff]
    %v2941 = vld [vmem:[#allocation6 + $0x6e0] sm:$0xff]
    %v2942 = vld [vmem:[#allocation6 + $0x6e8] sm:$0xff]
    %v2943 = vld [vmem:[#allocation6 + $0x6f0] sm:$0xff]
    %v2944 = vld [vmem:[#allocation6 + $0x6f8] sm:$0xff]
    %v2945 = vld [vmem:[#allocation6 + $0x700] sm:$0xff]
    %v2946 = vld [vmem:[#allocation6 + $0x708] sm:$0xff]
    %v2947 = vld [vmem:[#allocation6 + $0x710] sm:$0xff]
    %v2948 = vld [vmem:[#allocation6 + $0x718] sm:$0xff]
    %v2949 = vld [vmem:[#allocation6 + $0x720] sm:$0xff]
    %v2950 = vld [vmem:[#allocation6 + $0x728] sm:$0xff]
    %v2951 = vld [vmem:[#allocation6 + $0x730] sm:$0xff]
    %v2952 = vld [vmem:[#allocation6 + $0x738] sm:$0xff]
    %v2953 = vld [vmem:[#allocation6 + $0x740] sm:$0xff]
    %v2954 = vld [vmem:[#allocation6 + $0x748] sm:$0xff]
    %v2955 = vld [vmem:[#allocation6 + $0x750] sm:$0xff]
    %v2956 = vld [vmem:[#allocation6 + $0x758] sm:$0xff]
    %v2957 = vld [vmem:[#allocation6 + $0x760] sm:$0xff]
    %v2958 = vld [vmem:[#allocation6 + $0x768] sm:$0xff]
    %v2959 = vld [vmem:[#allocation6 + $0x770] sm:$0xff]
    %v2960 = vld [vmem:[#allocation6 + $0x778] sm:$0xff]
    %v2961 = vld [vmem:[#allocation6 + $0x780] sm:$0xff]
    %v2962 = vld [vmem:[#allocation6 + $0x788] sm:$0xff]
    %v2963 = vld [vmem:[#allocation6 + $0x790] sm:$0xff]
    %v2964 = vld [vmem:[#allocation6 + $0x798] sm:$0xff]
    %v2965 = vld [vmem:[#allocation6 + $0x7a0] sm:$0xff]
    %v2966 = vld [vmem:[#allocation6 + $0x7a8] sm:$0xff]
    %v2967 = vld [vmem:[#allocation6 + $0x7b0] sm:$0xff]
    %v2968 = vld [vmem:[#allocation6 + $0x7b8] sm:$0xff]
    %v2969 = vld [vmem:[#allocation6 + $0x7c0] sm:$0xff]
    %v2970 = vld [vmem:[#allocation6 + $0x7c8] sm:$0xff]
    %v2971 = vld [vmem:[#allocation6 + $0x7d0] sm:$0xff]
    %v2972 = vld [vmem:[#allocation6 + $0x7d8] sm:$0xff]
    %v2973 = vld [vmem:[#allocation6 + $0x7e0] sm:$0xff]
    %v2974 = vld [vmem:[#allocation6 + $0x7e8] sm:$0xff]
    %v2975 = vld [vmem:[#allocation6 + $0x7f0] sm:$0xff]
    %v2976 = vld [vmem:[#allocation6 + $0x7f8] sm:$0xff]
    %v2977 = vld [vmem:[%s7] sm:$0xff]
    %v2979 = vlaneseq
    %v2980 = vshrl.u32 %v2979, 7
    %v2981 = vsub.s32 0, %v2980
    %v2982 = vrot.slane %v2977, %v2981
    %v2983 = vlaneseq
    %v2984 = vshrl.u32 %v2983, 7
    %v2985 = vsub.s32 1, %v2984
    %v2986 = vrot.slane %v2977, %v2985
    %v2987 = vlaneseq
    %v2988 = vshrl.u32 %v2987, 7
    %v2989 = vsub.s32 2, %v2988
    %v2990 = vrot.slane %v2977, %v2989
    %v2991 = vlaneseq
    %v2992 = vshrl.u32 %v2991, 7
    %v2993 = vsub.s32 3, %v2992
    %v2994 = vrot.slane %v2977, %v2993
    %v2995 = vlaneseq
    %v2996 = vshrl.u32 %v2995, 7
    %v2997 = vsub.s32 4, %v2996
    %v2998 = vrot.slane %v2977, %v2997
    %v2999 = vlaneseq
    %v3000 = vshrl.u32 %v2999, 7
    %v3001 = vsub.s32 5, %v3000
    %v3002 = vrot.slane %v2977, %v3001
    %v3003 = vlaneseq
    %v3004 = vshrl.u32 %v3003, 7
    %v3005 = vsub.s32 6, %v3004
    %v3006 = vrot.slane %v2977, %v3005
    %v3007 = vlaneseq
    %v3008 = vshrl.u32 %v3007, 7
    %v3009 = vsub.s32 7, %v3008
    %v3010 = vrot.slane %v2977, %v3009
    %3019 = vmatprep.subr.mxu0 %v2722
    %3020 = vmatpush1.msra.mxu0 %v2721
    %3021 = vmatprep.subr.mxu0 %v2730
    %3022 = vmatpush1.msra.mxu0 %v2729
    %3023 = vmatprep.subr.mxu0 %v2738
    %3024 = vmatpush1.msra.mxu0 %v2737
    %3025 = vmatprep.subr.mxu0 %v2746
    %3026 = vmatpush1.msra.mxu0 %v2745
    %3027 = vmatprep.subr.mxu0 %v2754
    %3028 = vmatpush1.msra.mxu0 %v2753
    %3029 = vmatprep.subr.mxu0 %v2762
    %3030 = vmatpush1.msra.mxu0 %v2761
    %3031 = vmatprep.subr.mxu0 %v2770
    %3032 = vmatpush1.msra.mxu0 %v2769
    %3033 = vmatprep.subr.mxu0 %v2778
    %3034 = vmatpush1.msra.mxu0 %v2777
    %3035 = vmatprep.subr.mxu0 %v2786
    %3036 = vmatpush1.msra.mxu0 %v2785
    %3037 = vmatprep.subr.mxu0 %v2794
    %3038 = vmatpush1.msra.mxu0 %v2793
    %3039 = vmatprep.subr.mxu0 %v2802
    %3040 = vmatpush1.msra.mxu0 %v2801
    %3041 = vmatprep.subr.mxu0 %v2810
    %3042 = vmatpush1.msra.mxu0 %v2809
    %3043 = vmatprep.subr.mxu0 %v2818
    %3044 = vmatpush1.msra.mxu0 %v2817
    %3045 = vmatprep.subr.mxu0 %v2826
    %3046 = vmatpush1.msra.mxu0 %v2825
    %3047 = vmatprep.subr.mxu0 %v2834
    %3048 = vmatpush1.msra.mxu0 %v2833
    %3049 = vmatprep.subr.mxu0 %v2842
    %3050 = vmatpush1.msra.mxu0 %v2841
    %3051 = vmatprep.subr.mxu0 %v2850
    %3052 = vmatpush1.msra.mxu0 %v2849
    %3053 = vmatprep.subr.mxu0 %v2858
    %3054 = vmatpush1.msra.mxu0 %v2857
    %3055 = vmatprep.subr.mxu0 %v2866
    %3056 = vmatpush1.msra.mxu0 %v2865
    %3057 = vmatprep.subr.mxu0 %v2874
    %3058 = vmatpush1.msra.mxu0 %v2873
    %3059 = vmatprep.subr.mxu0 %v2882
    %3060 = vmatpush1.msra.mxu0 %v2881
    %3061 = vmatprep.subr.mxu0 %v2890
    %3062 = vmatpush1.msra.mxu0 %v2889
    %3063 = vmatprep.subr.mxu0 %v2898
    %3064 = vmatpush1.msra.mxu0 %v2897
    %3065 = vmatprep.subr.mxu0 %v2906
    %3066 = vmatpush1.msra.mxu0 %v2905
    %3067 = vmatprep.subr.mxu0 %v2914
    %3068 = vmatpush1.msra.mxu0 %v2913
    %3069 = vmatprep.subr.mxu0 %v2922
    %3070 = vmatpush1.msra.mxu0 %v2921
    %3071 = vmatprep.subr.mxu0 %v2930
    %3072 = vmatpush1.msra.mxu0 %v2929
    %3073 = vmatprep.subr.mxu0 %v2938
    %3074 = vmatpush1.msra.mxu0 %v2937
    %3075 = vmatprep.subr.mxu0 %v2946
    %3076 = vmatpush1.msra.mxu0 %v2945
    %3077 = vmatprep.subr.mxu0 %v2954
    %3078 = vmatpush1.msra.mxu0 %v2953
    %3079 = vmatprep.subr.mxu0 %v2962
    %3080 = vmatpush1.msra.mxu0 %v2961
    %3081 = vmatprep.subr.mxu0 %v2970
    %3082 = vmatpush1.msra.mxu0 %v2969
    %3083 = vmatprep.mubr.f32.mxu0 %v2706
    %3084 = vmatmul.mubr.f32.gmra.mrb[0].mxu0 %v2705
    %v3085 = vpop.f32.mrb[0].mxu0
    %v3086 = vadd.f32 %v2982, %v3085
    %v3087 = vpop.f32.mrb[0].mxu0
    %v3088 = vadd.f32 %v2986, %v3087
    %3089 = vmatprep.mubr.f32.mxu0 %v2708
    %3090 = vmatmul.mubr.f32.gmra.mrb[0].mxu0 %v2707
    %v3091 = vpop.f32.mrb[0].mxu0
    %v3092 = vadd.f32 %v2982, %v3091
    %v3093 = vpop.f32.mrb[0].mxu0
    %v3094 = vadd.f32 %v2986, %v3093
    %3095 = vmatprep.mubr.f32.mxu0 %v2710
    %3096 = vmatmul.mubr.f32.gmra.mrb[0].mxu0 %v2709
    %v3097 = vpop.f32.mrb[0].mxu0
    %v3098 = vadd.f32 %v2982, %v3097
    %v3099 = vpop.f32.mrb[0].mxu0
    %v3100 = vadd.f32 %v2986, %v3099
    %3101 = vmatprep.mubr.f32.mxu0 %v2712
    %3102 = vmatmul.mubr.f32.gmra.mrb[0].mxu0 %v2711
    %v3103 = vpop.f32.mrb[0].mxu0
    %v3104 = vadd.f32 %v2982, %v3103
    %v3105 = vpop.f32.mrb[0].mxu0
    %v3106 = vadd.f32 %v2986, %v3105
    %3107 = vmatprep.mubr.f32.mxu0 %v2714
    %3108 = vmatmul.mubr.f32.gmra.mrb[0].mxu0 %v2713
    %v3109 = vpop.f32.mrb[0].mxu0
    %v3110 = vadd.f32 %v2982, %v3109
    %v3111 = vpop.f32.mrb[0].mxu0
    %v3112 = vadd.f32 %v2986, %v3111
    %3113 = vmatprep.mubr.f32.mxu0 %v2716
    %3114 = vmatmul.mubr.f32.gmra.mrb[0].mxu0 %v2715
    %v3115 = vpop.f32.mrb[0].mxu0
    %v3116 = vadd.f32 %v2982, %v3115
    %v3117 = vpop.f32.mrb[0].mxu0
    %v3118 = vadd.f32 %v2986, %v3117
    %3119 = vmatprep.mubr.f32.mxu0 %v2718
    %3120 = vmatmul.mubr.f32.gmra.mrb[0].mxu0 %v2717
    %v3121 = vpop.f32.mrb[0].mxu0
    %v3122 = vadd.f32 %v2982, %v3121
    %v3123 = vpop.f32.mrb[0].mxu0
    %v3124 = vadd.f32 %v2986, %v3123
    %3125 = vmatprep.mubr.f32.mxu0 %v2720
    %3126 = vmatmul.mubr.f32.gmra.mrb[0].mxu0 %v2719
    %v3127 = vpop.f32.mrb[0].mxu0
    %v3128 = vadd.f32 %v2982, %v3127
    %v3129 = vpop.f32.mrb[0].mxu0
    %v3130 = vadd.f32 %v2986, %v3129
    %3131 = vdwg.mxu0
    %3132 = vmatprep.subr.mxu0 %v2724
    %3133 = vmatpush1.msra.mxu0 %v2723
    %3134 = vmatprep.subr.mxu0 %v2732
    %3135 = vmatpush1.msra.mxu0 %v2731
    %3136 = vmatprep.subr.mxu0 %v2740
    %3137 = vmatpush1.msra.mxu0 %v2739
    %3138 = vmatprep.subr.mxu0 %v2748
    %3139 = vmatpush1.msra.mxu0 %v2747
    %3140 = vmatprep.subr.mxu0 %v2756
    %3141 = vmatpush1.msra.mxu0 %v2755
    %3142 = vmatprep.subr.mxu0 %v2764
    %3143 = vmatpush1.msra.mxu0 %v2763
    %3144 = vmatprep.subr.mxu0 %v2772
    %3145 = vmatpush1.msra.mxu0 %v2771
    %3146 = vmatprep.subr.mxu0 %v2780
    %3147 = vmatpush1.msra.mxu0 %v2779
    %3148 = vmatprep.subr.mxu0 %v2788
    %3149 = vmatpush1.msra.mxu0 %v2787
    %3150 = vmatprep.subr.mxu0 %v2796
    %3151 = vmatpush1.msra.mxu0 %v2795
    %3152 = vmatprep.subr.mxu0 %v2804
    %3153 = vmatpush1.msra.mxu0 %v2803
    %3154 = vmatprep.subr.mxu0 %v2812
    %3155 = vmatpush1.msra.mxu0 %v2811
    %3156 = vmatprep.subr.mxu0 %v2820
    %3157 = vmatpush1.msra.mxu0 %v2819
    %3158 = vmatprep.subr.mxu0 %v2828
    %3159 = vmatpush1.msra.mxu0 %v2827
    %3160 = vmatprep.subr.mxu0 %v2836
    %3161 = vmatpush1.msra.mxu0 %v2835
    %3162 = vmatprep.subr.mxu0 %v2844
    %3163 = vmatpush1.msra.mxu0 %v2843
    %3164 = vmatprep.subr.mxu0 %v2852
    %3165 = vmatpush1.msra.mxu0 %v2851
    %3166 = vmatprep.subr.mxu0 %v2860
    %3167 = vmatpush1.msra.mxu0 %v2859
    %3168 = vmatprep.subr.mxu0 %v2868
    %3169 = vmatpush1.msra.mxu0 %v2867
    %3170 = vmatprep.subr.mxu0 %v2876
    %3171 = vmatpush1.msra.mxu0 %v2875
    %3172 = vmatprep.subr.mxu0 %v2884
    %3173 = vmatpush1.msra.mxu0 %v2883
    %3174 = vmatprep.subr.mxu0 %v2892
    %3175 = vmatpush1.msra.mxu0 %v2891
    %3176 = vmatprep.subr.mxu0 %v2900
    %3177 = vmatpush1.msra.mxu0 %v2899
    %3178 = vmatprep.subr.mxu0 %v2908
    %3179 = vmatpush1.msra.mxu0 %v2907
    %3180 = vmatprep.subr.mxu0 %v2916
    %3181 = vmatpush1.msra.mxu0 %v2915
    %3182 = vmatprep.subr.mxu0 %v2924
    %3183 = vmatpush1.msra.mxu0 %v2923
    %3184 = vmatprep.subr.mxu0 %v2932
    %3185 = vmatpush1.msra.mxu0 %v2931
    %3186 = vmatprep.subr.mxu0 %v2940
    %3187 = vmatpush1.msra.mxu0 %v2939
    %3188 = vmatprep.subr.mxu0 %v2948
    %3189 = vmatpush1.msra.mxu0 %v2947
    %3190 = vmatprep.subr.mxu0 %v2956
    %3191 = vmatpush1.msra.mxu0 %v2955
    %3192 = vmatprep.subr.mxu0 %v2964
    %3193 = vmatpush1.msra.mxu0 %v2963
    %3194 = vmatprep.subr.mxu0 %v2972
    %3195 = vmatpush1.msra.mxu0 %v2971
    %3196 = vmatprep.mubr.f32.mxu0 %v2706
    %3197 = vmatmul.mubr.f32.gmra.mrb[0].mxu0 %v2705
    %v3198 = vpop.f32.mrb[0].mxu0
    %v3199 = vadd.f32 %v2990, %v3198
    %v3200 = vpop.f32.mrb[0].mxu0
    %v3201 = vadd.f32 %v2994, %v3200
    %3202 = vmatprep.mubr.f32.mxu0 %v2708
    %3203 = vmatmul.mubr.f32.gmra.mrb[0].mxu0 %v2707
    %v3204 = vpop.f32.mrb[0].mxu0
    %v3205 = vadd.f32 %v2990, %v3204
    %v3206 = vpop.f32.mrb[0].mxu0
    %v3207 = vadd.f32 %v2994, %v3206
    %3208 = vmatprep.mubr.f32.mxu0 %v2710
    %3209 = vmatmul.mubr.f32.gmra.mrb[0].mxu0 %v2709
    %v3210 = vpop.f32.mrb[0].mxu0
    %v3211 = vadd.f32 %v2990, %v3210
    %v3212 = vpop.f32.mrb[0].mxu0
    %v3213 = vadd.f32 %v2994, %v3212
    %3214 = vmatprep.mubr.f32.mxu0 %v2712
    %3215 = vmatmul.mubr.f32.gmra.mrb[0].mxu0 %v2711
    %v3216 = vpop.f32.mrb[0].mxu0
    %v3217 = vadd.f32 %v2990, %v3216
    %v3218 = vpop.f32.mrb[0].mxu0
    %v3219 = vadd.f32 %v2994, %v3218
    %3220 = vmatprep.mubr.f32.mxu0 %v2714
    %3221 = vmatmul.mubr.f32.gmra.mrb[0].mxu0 %v2713
    %v3222 = vpop.f32.mrb[0].mxu0
    %v3223 = vadd.f32 %v2990, %v3222
    %v3224 = vpop.f32.mrb[0].mxu0
    %v3225 = vadd.f32 %v2994, %v3224
    %3226 = vmatprep.mubr.f32.mxu0 %v2716
    %3227 = vmatmul.mubr.f32.gmra.mrb[0].mxu0 %v2715
    %v3228 = vpop.f32.mrb[0].mxu0
    %v3229 = vadd.f32 %v2990, %v3228
    %v3230 = vpop.f32.mrb[0].mxu0
    %v3231 = vadd.f32 %v2994, %v3230
    %3232 = vmatprep.mubr.f32.mxu0 %v2718
    %3233 = vmatmul.mubr.f32.gmra.mrb[0].mxu0 %v2717
    %v3234 = vpop.f32.mrb[0].mxu0
    %v3235 = vadd.f32 %v2990, %v3234
    %v3236 = vpop.f32.mrb[0].mxu0
    %v3237 = vadd.f32 %v2994, %v3236
    %3238 = vmatprep.mubr.f32.mxu0 %v2720
    %3239 = vmatmul.mubr.f32.gmra.mrb[0].mxu0 %v2719
    %v3240 = vpop.f32.mrb[0].mxu0
    %v3241 = vadd.f32 %v2990, %v3240
    %v3242 = vpop.f32.mrb[0].mxu0
    %v3243 = vadd.f32 %v2994, %v3242
    %3244 = vdwg.mxu0
    %3245 = vmatprep.subr.mxu0 %v2726
    %3246 = vmatpush1.msra.mxu0 %v2725
    %3247 = vmatprep.subr.mxu0 %v2734
    %3248 = vmatpush1.msra.mxu0 %v2733
    %3249 = vmatprep.subr.mxu0 %v2742
    %3250 = vmatpush1.msra.mxu0 %v2741
    %3251 = vmatprep.subr.mxu0 %v2750
    %3252 = vmatpush1.msra.mxu0 %v2749
    %3253 = vmatprep.subr.mxu0 %v2758
    %3254 = vmatpush1.msra.mxu0 %v2757
    %3255 = vmatprep.subr.mxu0 %v2766
    %3256 = vmatpush1.msra.mxu0 %v2765
    %3257 = vmatprep.subr.mxu0 %v2774
    %3258 = vmatpush1.msra.mxu0 %v2773
    %3259 = vmatprep.subr.mxu0 %v2782
    %3260 = vmatpush1.msra.mxu0 %v2781
    %3261 = vmatprep.subr.mxu0 %v2790
    %3262 = vmatpush1.msra.mxu0 %v2789
    %3263 = vmatprep.subr.mxu0 %v2798
    %3264 = vmatpush1.msra.mxu0 %v2797
    %3265 = vmatprep.subr.mxu0 %v2806
    %3266 = vmatpush1.msra.mxu0 %v2805
    %3267 = vmatprep.subr.mxu0 %v2814
    %3268 = vmatpush1.msra.mxu0 %v2813
    %3269 = vmatprep.subr.mxu0 %v2822
    %3270 = vmatpush1.msra.mxu0 %v2821
    %3271 = vmatprep.subr.mxu0 %v2830
    %3272 = vmatpush1.msra.mxu0 %v2829
    %3273 = vmatprep.subr.mxu0 %v2838
    %3274 = vmatpush1.msra.mxu0 %v2837
    %3275 = vmatprep.subr.mxu0 %v2846
    %3276 = vmatpush1.msra.mxu0 %v2845
    %3277 = vmatprep.subr.mxu0 %v2854
    %3278 = vmatpush1.msra.mxu0 %v2853
    %3279 = vmatprep.subr.mxu0 %v2862
    %3280 = vmatpush1.msra.mxu0 %v2861
    %3281 = vmatprep.subr.mxu0 %v2870
    %3282 = vmatpush1.msra.mxu0 %v2869
    %3283 = vmatprep.subr.mxu0 %v2878
    %3284 = vmatpush1.msra.mxu0 %v2877
    %3285 = vmatprep.subr.mxu0 %v2886
    %3286 = vmatpush1.msra.mxu0 %v2885
    %3287 = vmatprep.subr.mxu0 %v2894
    %3288 = vmatpush1.msra.mxu0 %v2893
    %3289 = vmatprep.subr.mxu0 %v2902
    %3290 = vmatpush1.msra.mxu0 %v2901
    %3291 = vmatprep.subr.mxu0 %v2910
    %3292 = vmatpush1.msra.mxu0 %v2909
    %3293 = vmatprep.subr.mxu0 %v2918
    %3294 = vmatpush1.msra.mxu0 %v2917
    %3295 = vmatprep.subr.mxu0 %v2926
    %3296 = vmatpush1.msra.mxu0 %v2925
    %3297 = vmatprep.subr.mxu0 %v2934
    %3298 = vmatpush1.msra.mxu0 %v2933
    %3299 = vmatprep.subr.mxu0 %v2942
    %3300 = vmatpush1.msra.mxu0 %v2941
    %3301 = vmatprep.subr.mxu0 %v2950
    %3302 = vmatpush1.msra.mxu0 %v2949
    %3303 = vmatprep.subr.mxu0 %v2958
    %3304 = vmatpush1.msra.mxu0 %v2957
    %3305 = vmatprep.subr.mxu0 %v2966
    %3306 = vmatpush1.msra.mxu0 %v2965
    %3307 = vmatprep.subr.mxu0 %v2974
    %3308 = vmatpush1.msra.mxu0 %v2973
    %3309 = vmatprep.mubr.f32.mxu0 %v2706
    %3310 = vmatmul.mubr.f32.gmra.mrb[0].mxu0 %v2705
    %v3311 = vpop.f32.mrb[0].mxu0
    %v3312 = vadd.f32 %v2998, %v3311
    %v3313 = vpop.f32.mrb[0].mxu0
    %v3314 = vadd.f32 %v3002, %v3313
    %3315 = vmatprep.mubr.f32.mxu0 %v2708
    %3316 = vmatmul.mubr.f32.gmra.mrb[0].mxu0 %v2707
    %v3317 = vpop.f32.mrb[0].mxu0
    %v3318 = vadd.f32 %v2998, %v3317
    %v3319 = vpop.f32.mrb[0].mxu0
    %v3320 = vadd.f32 %v3002, %v3319
    %3321 = vmatprep.mubr.f32.mxu0 %v2710
    %3322 = vmatmul.mubr.f32.gmra.mrb[0].mxu0 %v2709
    %v3323 = vpop.f32.mrb[0].mxu0
    %v3324 = vadd.f32 %v2998, %v3323
    %v3325 = vpop.f32.mrb[0].mxu0
    %v3326 = vadd.f32 %v3002, %v3325
    %3327 = vmatprep.mubr.f32.mxu0 %v2712
    %3328 = vmatmul.mubr.f32.gmra.mrb[0].mxu0 %v2711
    %v3329 = vpop.f32.mrb[0].mxu0
    %v3330 = vadd.f32 %v2998, %v3329
    %v3331 = vpop.f32.mrb[0].mxu0
    %v3332 = vadd.f32 %v3002, %v3331
    %3333 = vmatprep.mubr.f32.mxu0 %v2714
    %3334 = vmatmul.mubr.f32.gmra.mrb[0].mxu0 %v2713
    %v3335 = vpop.f32.mrb[0].mxu0
    %v3336 = vadd.f32 %v2998, %v3335
    %v3337 = vpop.f32.mrb[0].mxu0
    %v3338 = vadd.f32 %v3002, %v3337
    %3339 = vmatprep.mubr.f32.mxu0 %v2716
    %3340 = vmatmul.mubr.f32.gmra.mrb[0].mxu0 %v2715
    %v3341 = vpop.f32.mrb[0].mxu0
    %v3342 = vadd.f32 %v2998, %v3341
    %v3343 = vpop.f32.mrb[0].mxu0
    %v3344 = vadd.f32 %v3002, %v3343
    %3345 = vmatprep.mubr.f32.mxu0 %v2718
    %3346 = vmatmul.mubr.f32.gmra.mrb[0].mxu0 %v2717
    %v3347 = vpop.f32.mrb[0].mxu0
    %v3348 = vadd.f32 %v2998, %v3347
    %v3349 = vpop.f32.mrb[0].mxu0
    %v3350 = vadd.f32 %v3002, %v3349
    %3351 = vmatprep.mubr.f32.mxu0 %v2720
    %3352 = vmatmul.mubr.f32.gmra.mrb[0].mxu0 %v2719
    %v3353 = vpop.f32.mrb[0].mxu0
    %v3354 = vadd.f32 %v2998, %v3353
    %v3355 = vpop.f32.mrb[0].mxu0
    %v3356 = vadd.f32 %v3002, %v3355
    %3357 = vdwg.mxu0
    %3358 = vmatprep.subr.mxu0 %v2728
    %3359 = vmatpush1.msra.mxu0 %v2727
    %3360 = vmatprep.subr.mxu0 %v2736
    %3361 = vmatpush1.msra.mxu0 %v2735
    %3362 = vmatprep.subr.mxu0 %v2744
    %3363 = vmatpush1.msra.mxu0 %v2743
    %3364 = vmatprep.subr.mxu0 %v2752
    %3365 = vmatpush1.msra.mxu0 %v2751
    %3366 = vmatprep.subr.mxu0 %v2760
    %3367 = vmatpush1.msra.mxu0 %v2759
    %3368 = vmatprep.subr.mxu0 %v2768
    %3369 = vmatpush1.msra.mxu0 %v2767
    %3370 = vmatprep.subr.mxu0 %v2776
    %3371 = vmatpush1.msra.mxu0 %v2775
    %3372 = vmatprep.subr.mxu0 %v2784
    %3373 = vmatpush1.msra.mxu0 %v2783
    %3374 = vmatprep.subr.mxu0 %v2792
    %3375 = vmatpush1.msra.mxu0 %v2791
    %3376 = vmatprep.subr.mxu0 %v2800
    %3377 = vmatpush1.msra.mxu0 %v2799
    %3378 = vmatprep.subr.mxu0 %v2808
    %3379 = vmatpush1.msra.mxu0 %v2807
    %3380 = vmatprep.subr.mxu0 %v2816
    %3381 = vmatpush1.msra.mxu0 %v2815
    %3382 = vmatprep.subr.mxu0 %v2824
    %3383 = vmatpush1.msra.mxu0 %v2823
    %3384 = vmatprep.subr.mxu0 %v2832
    %3385 = vmatpush1.msra.mxu0 %v2831
    %3386 = vmatprep.subr.mxu0 %v2840
    %3387 = vmatpush1.msra.mxu0 %v2839
    %3388 = vmatprep.subr.mxu0 %v2848
    %3389 = vmatpush1.msra.mxu0 %v2847
    %3390 = vmatprep.subr.mxu0 %v2856
    %3391 = vmatpush1.msra.mxu0 %v2855
    %3392 = vmatprep.subr.mxu0 %v2864
    %3393 = vmatpush1.msra.mxu0 %v2863
    %3394 = vmatprep.subr.mxu0 %v2872
    %3395 = vmatpush1.msra.mxu0 %v2871
    %3396 = vmatprep.subr.mxu0 %v2880
    %3397 = vmatpush1.msra.mxu0 %v2879
    %3398 = vmatprep.subr.mxu0 %v2888
    %3399 = vmatpush1.msra.mxu0 %v2887
    %3400 = vmatprep.subr.mxu0 %v2896
    %3401 = vmatpush1.msra.mxu0 %v2895
    %3402 = vmatprep.subr.mxu0 %v2904
    %3403 = vmatpush1.msra.mxu0 %v2903
    %3404 = vmatprep.subr.mxu0 %v2912
    %3405 = vmatpush1.msra.mxu0 %v2911
    %3406 = vmatprep.subr.mxu0 %v2920
    %3407 = vmatpush1.msra.mxu0 %v2919
    %3408 = vmatprep.subr.mxu0 %v2928
    %3409 = vmatpush1.msra.mxu0 %v2927
    %3410 = vmatprep.subr.mxu0 %v2936
    %3411 = vmatpush1.msra.mxu0 %v2935
    %3412 = vmatprep.subr.mxu0 %v2944
    %3413 = vmatpush1.msra.mxu0 %v2943
    %3414 = vmatprep.subr.mxu0 %v2952
    %3415 = vmatpush1.msra.mxu0 %v2951
    %3416 = vmatprep.subr.mxu0 %v2960
    %3417 = vmatpush1.msra.mxu0 %v2959
    %3418 = vmatprep.subr.mxu0 %v2968
    %3419 = vmatpush1.msra.mxu0 %v2967
    %3420 = vmatprep.subr.mxu0 %v2976
    %3421 = vmatpush1.msra.mxu0 %v2975
    %3422 = vmatprep.mubr.f32.mxu0 %v2706
    %3423 = vmatmul.mubr.f32.gmra.mrb[0].mxu0 %v2705
    %v3424 = vpop.f32.mrb[0].mxu0
    %v3425 = vadd.f32 %v3006, %v3424
    %v3426 = vpop.f32.mrb[0].mxu0
    %v3427 = vadd.f32 %v3010, %v3426
    %3428 = vmatprep.mubr.f32.mxu0 %v2708
    %3429 = vmatmul.mubr.f32.gmra.mrb[0].mxu0 %v2707
    %v3430 = vpop.f32.mrb[0].mxu0
    %v3431 = vadd.f32 %v3006, %v3430
    %v3432 = vpop.f32.mrb[0].mxu0
    %v3433 = vadd.f32 %v3010, %v3432
    %3434 = vmatprep.mubr.f32.mxu0 %v2710
    %3435 = vmatmul.mubr.f32.gmra.mrb[0].mxu0 %v2709
    %v3436 = vpop.f32.mrb[0].mxu0
    %v3437 = vadd.f32 %v3006, %v3436
    %v3438 = vpop.f32.mrb[0].mxu0
    %v3439 = vadd.f32 %v3010, %v3438
    %3440 = vmatprep.mubr.f32.mxu0 %v2712
    %3441 = vmatmul.mubr.f32.gmra.mrb[0].mxu0 %v2711
    %v3442 = vpop.f32.mrb[0].mxu0
    %v3443 = vadd.f32 %v3006, %v3442
    %v3444 = vpop.f32.mrb[0].mxu0
    %v3445 = vadd.f32 %v3010, %v3444
    %3446 = vmatprep.mubr.f32.mxu0 %v2714
    %3447 = vmatmul.mubr.f32.gmra.mrb[0].mxu0 %v2713
    %v3448 = vpop.f32.mrb[0].mxu0
    %v3449 = vadd.f32 %v3006, %v3448
    %v3450 = vpop.f32.mrb[0].mxu0
    %v3451 = vadd.f32 %v3010, %v3450
    %3452 = vmatprep.mubr.f32.mxu0 %v2716
    %3453 = vmatmul.mubr.f32.gmra.mrb[0].mxu0 %v2715
    %v3454 = vpop.f32.mrb[0].mxu0
    %v3455 = vadd.f32 %v3006, %v3454
    %v3456 = vpop.f32.mrb[0].mxu0
    %v3457 = vadd.f32 %v3010, %v3456
    %3458 = vmatprep.mubr.f32.mxu0 %v2718
    %3459 = vmatmul.mubr.f32.gmra.mrb[0].mxu0 %v2717
    %v3460 = vpop.f32.mrb[0].mxu0
    %v3461 = vadd.f32 %v3006, %v3460
    %v3462 = vpop.f32.mrb[0].mxu0
    %v3463 = vadd.f32 %v3010, %v3462
    %3464 = vmatprep.mubr.f32.mxu0 %v2720
    %3465 = vmatmul.mubr.f32.gmra.mrb[0].mxu0 %v2719
    %v3466 = vpop.f32.mrb[0].mxu0
    %v3467 = vadd.f32 %v3006, %v3466
    %v3468 = vpop.f32.mrb[0].mxu0
    %v3469 = vadd.f32 %v3010, %v3468
    %3470 = vdwg.mxu0
    %3471 = vst [vmem:[#allocation2] sm:$0xff] %v3086
    %3472 = vst [vmem:[#allocation2 + $0x8] sm:$0xff] %v3088
    %3473 = vst [vmem:[#allocation2 + $0x10] sm:$0xff] %v3199
    %3474 = vst [vmem:[#allocation2 + $0x18] sm:$0xff] %v3201
    %3475 = vst [vmem:[#allocation2 + $0x20] sm:$0xff] %v3312
    %3476 = vst [vmem:[#allocation2 + $0x28] sm:$0xff] %v3314
    %3477 = vst [vmem:[#allocation2 + $0x30] sm:$0xff] %v3425
    %3478 = vst [vmem:[#allocation2 + $0x38] sm:$0xff] %v3427
    %3479 = vst [vmem:[#allocation2 + $0x40] sm:$0xff] %v3092
    %3480 = vst [vmem:[#allocation2 + $0x48] sm:$0xff] %v3094
    %3481 = vst [vmem:[#allocation2 + $0x50] sm:$0xff] %v3205
    %3482 = vst [vmem:[#allocation2 + $0x58] sm:$0xff] %v3207
    %3483 = vst [vmem:[#allocation2 + $0x60] sm:$0xff] %v3318
    %3484 = vst [vmem:[#allocation2 + $0x68] sm:$0xff] %v3320
    %3485 = vst [vmem:[#allocation2 + $0x70] sm:$0xff] %v3431
    %3486 = vst [vmem:[#allocation2 + $0x78] sm:$0xff] %v3433
    %3487 = vst [vmem:[#allocation2 + $0x80] sm:$0xff] %v3098
    %3488 = vst [vmem:[#allocation2 + $0x88] sm:$0xff] %v3100
    %3489 = vst [vmem:[#allocation2 + $0x90] sm:$0xff] %v3211
    %3490 = vst [vmem:[#allocation2 + $0x98] sm:$0xff] %v3213
    %3491 = vst [vmem:[#allocation2 + $0xa0] sm:$0xff] %v3324
    %3492 = vst [vmem:[#allocation2 + $0xa8] sm:$0xff] %v3326
    %3493 = vst [vmem:[#allocation2 + $0xb0] sm:$0xff] %v3437
    %3494 = vst [vmem:[#allocation2 + $0xb8] sm:$0xff] %v3439
    %3495 = vst [vmem:[#allocation2 + $0xc0] sm:$0xff] %v3104
    %3496 = vst [vmem:[#allocation2 + $0xc8] sm:$0xff] %v3106
    %3497 = vst [vmem:[#allocation2 + $0xd0] sm:$0xff] %v3217
    %3498 = vst [vmem:[#allocation2 + $0xd8] sm:$0xff] %v3219
    %3499 = vst [vmem:[#allocation2 + $0xe0] sm:$0xff] %v3330
    %3500 = vst [vmem:[#allocation2 + $0xe8] sm:$0xff] %v3332
    %3501 = vst [vmem:[#allocation2 + $0xf0] sm:$0xff] %v3443
    %3502 = vst [vmem:[#allocation2 + $0xf8] sm:$0xff] %v3445
    %3503 = vst [vmem:[#allocation2 + $0x100] sm:$0xff] %v3110
    %3504 = vst [vmem:[#allocation2 + $0x108] sm:$0xff] %v3112
    %3505 = vst [vmem:[#allocation2 + $0x110] sm:$0xff] %v3223
    %3506 = vst [vmem:[#allocation2 + $0x118] sm:$0xff] %v3225
    %3507 = vst [vmem:[#allocation2 + $0x120] sm:$0xff] %v3336
    %3508 = vst [vmem:[#allocation2 + $0x128] sm:$0xff] %v3338
    %3509 = vst [vmem:[#allocation2 + $0x130] sm:$0xff] %v3449
    %3510 = vst [vmem:[#allocation2 + $0x138] sm:$0xff] %v3451
    %3511 = vst [vmem:[#allocation2 + $0x140] sm:$0xff] %v3116
    %3512 = vst [vmem:[#allocation2 + $0x148] sm:$0xff] %v3118
    %3513 = vst [vmem:[#allocation2 + $0x150] sm:$0xff] %v3229
    %3514 = vst [vmem:[#allocation2 + $0x158] sm:$0xff] %v3231
    %3515 = vst [vmem:[#allocation2 + $0x160] sm:$0xff] %v3342
    %3516 = vst [vmem:[#allocation2 + $0x168] sm:$0xff] %v3344
    %3517 = vst [vmem:[#allocation2 + $0x170] sm:$0xff] %v3455
    %3518 = vst [vmem:[#allocation2 + $0x178] sm:$0xff] %v3457
    %3519 = vst [vmem:[#allocation2 + $0x180] sm:$0xff] %v3122
    %3520 = vst [vmem:[#allocation2 + $0x188] sm:$0xff] %v3124
    %3521 = vst [vmem:[#allocation2 + $0x190] sm:$0xff] %v3235
    %3522 = vst [vmem:[#allocation2 + $0x198] sm:$0xff] %v3237
    %3523 = vst [vmem:[#allocation2 + $0x1a0] sm:$0xff] %v3348
    %3524 = vst [vmem:[#allocation2 + $0x1a8] sm:$0xff] %v3350
    %3525 = vst [vmem:[#allocation2 + $0x1b0] sm:$0xff] %v3461
    %3526 = vst [vmem:[#allocation2 + $0x1b8] sm:$0xff] %v3463
    %3527 = vst [vmem:[#allocation2 + $0x1c0] sm:$0xff] %v3128
    %3528 = vst [vmem:[#allocation2 + $0x1c8] sm:$0xff] %v3130
    %3529 = vst [vmem:[#allocation2 + $0x1d0] sm:$0xff] %v3241
    %3530 = vst [vmem:[#allocation2 + $0x1d8] sm:$0xff] %v3243
    %3531 = vst [vmem:[#allocation2 + $0x1e0] sm:$0xff] %v3354
    %3532 = vst [vmem:[#allocation2 + $0x1e8] sm:$0xff] %v3356
    %3533 = vst [vmem:[#allocation2 + $0x1f0] sm:$0xff] %v3467
    %3534 = vst [vmem:[#allocation2 + $0x1f8] sm:$0xff] %v3469
    %v3535 = vld [vmem:[#allocation8] sm:$0xff]
    %v3536 = vld [vmem:[#allocation8 + $0x8] sm:$0xff]
    %v3537 = vld [vmem:[#allocation8 + $0x10] sm:$0xff]
    %v3538 = vld [vmem:[#allocation8 + $0x18] sm:$0xff]
    %v3539 = vld [vmem:[#allocation8 + $0x20] sm:$0xff]
    %v3540 = vld [vmem:[#allocation8 + $0x28] sm:$0xff]
    %v3541 = vld [vmem:[#allocation8 + $0x30] sm:$0xff]
    %v3542 = vld [vmem:[#allocation8 + $0x38] sm:$0xff]
    %v3543 = vld [vmem:[#allocation8 + $0x40] sm:$0xff]
    %v3544 = vld [vmem:[#allocation8 + $0x48] sm:$0xff]
    %v3545 = vld [vmem:[#allocation8 + $0x50] sm:$0xff]
    %v3546 = vld [vmem:[#allocation8 + $0x58] sm:$0xff]
    %v3547 = vld [vmem:[#allocation8 + $0x60] sm:$0xff]
    %v3548 = vld [vmem:[#allocation8 + $0x68] sm:$0xff]
    %v3549 = vld [vmem:[#allocation8 + $0x70] sm:$0xff]
    %v3550 = vld [vmem:[#allocation8 + $0x78] sm:$0xff]
    %v3551 = vld [vmem:[#allocation8 + $0x80] sm:$0xff]
    %v3552 = vld [vmem:[#allocation8 + $0x88] sm:$0xff]
    %v3553 = vld [vmem:[#allocation8 + $0x90] sm:$0xff]
    %v3554 = vld [vmem:[#allocation8 + $0x98] sm:$0xff]
    %v3555 = vld [vmem:[#allocation8 + $0xa0] sm:$0xff]
    %v3556 = vld [vmem:[#allocation8 + $0xa8] sm:$0xff]
    %v3557 = vld [vmem:[#allocation8 + $0xb0] sm:$0xff]
    %v3558 = vld [vmem:[#allocation8 + $0xb8] sm:$0xff]
    %v3559 = vld [vmem:[#allocation8 + $0xc0] sm:$0xff]
    %v3560 = vld [vmem:[#allocation8 + $0xc8] sm:$0xff]
    %v3561 = vld [vmem:[#allocation8 + $0xd0] sm:$0xff]
    %v3562 = vld [vmem:[#allocation8 + $0xd8] sm:$0xff]
    %v3563 = vld [vmem:[#allocation8 + $0xe0] sm:$0xff]
    %v3564 = vld [vmem:[#allocation8 + $0xe8] sm:$0xff]
    %v3565 = vld [vmem:[#allocation8 + $0xf0] sm:$0xff]
    %v3566 = vld [vmem:[#allocation8 + $0xf8] sm:$0xff]
    %v3567 = vld [vmem:[#allocation8 + $0x100] sm:$0xff]
    %v3568 = vld [vmem:[#allocation8 + $0x108] sm:$0xff]
    %v3569 = vld [vmem:[#allocation8 + $0x110] sm:$0xff]
    %v3570 = vld [vmem:[#allocation8 + $0x118] sm:$0xff]
    %v3571 = vld [vmem:[#allocation8 + $0x120] sm:$0xff]
    %v3572 = vld [vmem:[#allocation8 + $0x128] sm:$0xff]
    %v3573 = vld [vmem:[#allocation8 + $0x130] sm:$0xff]
    %v3574 = vld [vmem:[#allocation8 + $0x138] sm:$0xff]
    %v3575 = vld [vmem:[#allocation8 + $0x140] sm:$0xff]
    %v3576 = vld [vmem:[#allocation8 + $0x148] sm:$0xff]
    %v3577 = vld [vmem:[#allocation8 + $0x150] sm:$0xff]
    %v3578 = vld [vmem:[#allocation8 + $0x158] sm:$0xff]
    %v3579 = vld [vmem:[#allocation8 + $0x160] sm:$0xff]
    %v3580 = vld [vmem:[#allocation8 + $0x168] sm:$0xff]
    %v3581 = vld [vmem:[#allocation8 + $0x170] sm:$0xff]
    %v3582 = vld [vmem:[#allocation8 + $0x178] sm:$0xff]
    %v3583 = vld [vmem:[#allocation8 + $0x180] sm:$0xff]
    %v3584 = vld [vmem:[#allocation8 + $0x188] sm:$0xff]
    %v3585 = vld [vmem:[#allocation8 + $0x190] sm:$0xff]
    %v3586 = vld [vmem:[#allocation8 + $0x198] sm:$0xff]
    %v3587 = vld [vmem:[#allocation8 + $0x1a0] sm:$0xff]
    %v3588 = vld [vmem:[#allocation8 + $0x1a8] sm:$0xff]
    %v3589 = vld [vmem:[#allocation8 + $0x1b0] sm:$0xff]
    %v3590 = vld [vmem:[#allocation8 + $0x1b8] sm:$0xff]
    %v3591 = vld [vmem:[#allocation8 + $0x1c0] sm:$0xff]
    %v3592 = vld [vmem:[#allocation8 + $0x1c8] sm:$0xff]
    %v3593 = vld [vmem:[#allocation8 + $0x1d0] sm:$0xff]
    %v3594 = vld [vmem:[#allocation8 + $0x1d8] sm:$0xff]
    %v3595 = vld [vmem:[#allocation8 + $0x1e0] sm:$0xff]
    %v3596 = vld [vmem:[#allocation8 + $0x1e8] sm:$0xff]
    %v3597 = vld [vmem:[#allocation8 + $0x1f0] sm:$0xff]
    %v3598 = vld [vmem:[#allocation8 + $0x1f8] sm:$0xff]
    %v3599 = vld [vmem:[#allocation8 + $0x200] sm:$0xff]
    %v3600 = vld [vmem:[#allocation8 + $0x208] sm:$0xff]
    %v3601 = vld [vmem:[#allocation8 + $0x210] sm:$0xff]
    %v3602 = vld [vmem:[#allocation8 + $0x218] sm:$0xff]
    %v3603 = vld [vmem:[#allocation8 + $0x220] sm:$0xff]
    %v3604 = vld [vmem:[#allocation8 + $0x228] sm:$0xff]
    %v3605 = vld [vmem:[#allocation8 + $0x230] sm:$0xff]
    %v3606 = vld [vmem:[#allocation8 + $0x238] sm:$0xff]
    %v3607 = vld [vmem:[#allocation8 + $0x240] sm:$0xff]
    %v3608 = vld [vmem:[#allocation8 + $0x248] sm:$0xff]
    %v3609 = vld [vmem:[#allocation8 + $0x250] sm:$0xff]
    %v3610 = vld [vmem:[#allocation8 + $0x258] sm:$0xff]
    %v3611 = vld [vmem:[#allocation8 + $0x260] sm:$0xff]
    %v3612 = vld [vmem:[#allocation8 + $0x268] sm:$0xff]
    %v3613 = vld [vmem:[#allocation8 + $0x270] sm:$0xff]
    %v3614 = vld [vmem:[#allocation8 + $0x278] sm:$0xff]
    %v3615 = vld [vmem:[#allocation8 + $0x280] sm:$0xff]
    %v3616 = vld [vmem:[#allocation8 + $0x288] sm:$0xff]
    %v3617 = vld [vmem:[#allocation8 + $0x290] sm:$0xff]
    %v3618 = vld [vmem:[#allocation8 + $0x298] sm:$0xff]
    %v3619 = vld [vmem:[#allocation8 + $0x2a0] sm:$0xff]
    %v3620 = vld [vmem:[#allocation8 + $0x2a8] sm:$0xff]
    %v3621 = vld [vmem:[#allocation8 + $0x2b0] sm:$0xff]
    %v3622 = vld [vmem:[#allocation8 + $0x2b8] sm:$0xff]
    %v3623 = vld [vmem:[#allocation8 + $0x2c0] sm:$0xff]
    %v3624 = vld [vmem:[#allocation8 + $0x2c8] sm:$0xff]
    %v3625 = vld [vmem:[#allocation8 + $0x2d0] sm:$0xff]
    %v3626 = vld [vmem:[#allocation8 + $0x2d8] sm:$0xff]
    %v3627 = vld [vmem:[#allocation8 + $0x2e0] sm:$0xff]
    %v3628 = vld [vmem:[#allocation8 + $0x2e8] sm:$0xff]
    %v3629 = vld [vmem:[#allocation8 + $0x2f0] sm:$0xff]
    %v3630 = vld [vmem:[#allocation8 + $0x2f8] sm:$0xff]
    %v3631 = vld [vmem:[#allocation8 + $0x300] sm:$0xff]
    %v3632 = vld [vmem:[#allocation8 + $0x308] sm:$0xff]
    %v3633 = vld [vmem:[#allocation8 + $0x310] sm:$0xff]
    %v3634 = vld [vmem:[#allocation8 + $0x318] sm:$0xff]
    %v3635 = vld [vmem:[#allocation8 + $0x320] sm:$0xff]
    %v3636 = vld [vmem:[#allocation8 + $0x328] sm:$0xff]
    %v3637 = vld [vmem:[#allocation8 + $0x330] sm:$0xff]
    %v3638 = vld [vmem:[#allocation8 + $0x338] sm:$0xff]
    %v3639 = vld [vmem:[#allocation8 + $0x340] sm:$0xff]
    %v3640 = vld [vmem:[#allocation8 + $0x348] sm:$0xff]
    %v3641 = vld [vmem:[#allocation8 + $0x350] sm:$0xff]
    %v3642 = vld [vmem:[#allocation8 + $0x358] sm:$0xff]
    %v3643 = vld [vmem:[#allocation8 + $0x360] sm:$0xff]
    %v3644 = vld [vmem:[#allocation8 + $0x368] sm:$0xff]
    %v3645 = vld [vmem:[#allocation8 + $0x370] sm:$0xff]
    %v3646 = vld [vmem:[#allocation8 + $0x378] sm:$0xff]
    %v3647 = vld [vmem:[#allocation8 + $0x380] sm:$0xff]
    %v3648 = vld [vmem:[#allocation8 + $0x388] sm:$0xff]
    %v3649 = vld [vmem:[#allocation8 + $0x390] sm:$0xff]
    %v3650 = vld [vmem:[#allocation8 + $0x398] sm:$0xff]
    %v3651 = vld [vmem:[#allocation8 + $0x3a0] sm:$0xff]
    %v3652 = vld [vmem:[#allocation8 + $0x3a8] sm:$0xff]
    %v3653 = vld [vmem:[#allocation8 + $0x3b0] sm:$0xff]
    %v3654 = vld [vmem:[#allocation8 + $0x3b8] sm:$0xff]
    %v3655 = vld [vmem:[#allocation8 + $0x3c0] sm:$0xff]
    %v3656 = vld [vmem:[#allocation8 + $0x3c8] sm:$0xff]
    %v3657 = vld [vmem:[#allocation8 + $0x3d0] sm:$0xff]
    %v3658 = vld [vmem:[#allocation8 + $0x3d8] sm:$0xff]
    %v3659 = vld [vmem:[#allocation8 + $0x3e0] sm:$0xff]
    %v3660 = vld [vmem:[#allocation8 + $0x3e8] sm:$0xff]
    %v3661 = vld [vmem:[#allocation8 + $0x3f0] sm:$0xff]
    %v3662 = vld [vmem:[#allocation8 + $0x3f8] sm:$0xff]
    %v3663 = vld [vmem:[#allocation2] sm:$0xff]
    %v3664 = vld [vmem:[#allocation2 + $0x8] sm:$0xff]
    %v3665 = vld [vmem:[#allocation2 + $0x10] sm:$0xff]
    %v3666 = vld [vmem:[#allocation2 + $0x18] sm:$0xff]
    %v3667 = vld [vmem:[#allocation2 + $0x1e0] sm:$0xff]
    %v3668 = vld [vmem:[#allocation2 + $0x1e8] sm:$0xff]
    %v3669 = vld [vmem:[#allocation2 + $0x1f0] sm:$0xff]
    %v3670 = vld [vmem:[#allocation2 + $0x1f8] sm:$0xff]
    %3671 = vmatprep.subr.mxu0 %v3536
    %3672 = vmatpush1.msra.mxu0 %v3535
    %3673 = vmatprep.subr.mxu0 %v3540
    %3674 = vmatpush1.msra.mxu0 %v3539
    %3675 = vmatprep.subr.mxu0 %v3544
    %3676 = vmatpush1.msra.mxu0 %v3543
    %3677 = vmatprep.subr.mxu0 %v3548
    %3678 = vmatpush1.msra.mxu0 %v3547
    %3679 = vmatprep.subr.mxu0 %v3552
    %3680 = vmatpush1.msra.mxu0 %v3551
    %3681 = vmatprep.subr.mxu0 %v3556
    %3682 = vmatpush1.msra.mxu0 %v3555
    %3683 = vmatprep.subr.mxu0 %v3560
    %3684 = vmatpush1.msra.mxu0 %v3559
    %3685 = vmatprep.subr.mxu0 %v3564
    %3686 = vmatpush1.msra.mxu0 %v3563
    %3687 = vmatprep.subr.mxu0 %v3568
    %3688 = vmatpush1.msra.mxu0 %v3567
    %3689 = vmatprep.subr.mxu0 %v3572
    %3690 = vmatpush1.msra.mxu0 %v3571
    %3691 = vmatprep.subr.mxu0 %v3576
    %3692 = vmatpush1.msra.mxu0 %v3575
    %3693 = vmatprep.subr.mxu0 %v3580
    %3694 = vmatpush1.msra.mxu0 %v3579
    %3695 = vmatprep.subr.mxu0 %v3584
    %3696 = vmatpush1.msra.mxu0 %v3583
    %3697 = vmatprep.subr.mxu0 %v3588
    %3698 = vmatpush1.msra.mxu0 %v3587
    %3699 = vmatprep.subr.mxu0 %v3592
    %3700 = vmatpush1.msra.mxu0 %v3591
    %3701 = vmatprep.subr.mxu0 %v3596
    %3702 = vmatpush1.msra.mxu0 %v3595
    %3703 = vmatprep.subr.mxu0 %v3600
    %3704 = vmatpush1.msra.mxu0 %v3599
    %3705 = vmatprep.subr.mxu0 %v3604
    %3706 = vmatpush1.msra.mxu0 %v3603
    %3707 = vmatprep.subr.mxu0 %v3608
    %3708 = vmatpush1.msra.mxu0 %v3607
    %3709 = vmatprep.subr.mxu0 %v3612
    %3710 = vmatpush1.msra.mxu0 %v3611
    %3711 = vmatprep.subr.mxu0 %v3616
    %3712 = vmatpush1.msra.mxu0 %v3615
    %3713 = vmatprep.subr.mxu0 %v3620
    %3714 = vmatpush1.msra.mxu0 %v3619
    %3715 = vmatprep.subr.mxu0 %v3624
    %3716 = vmatpush1.msra.mxu0 %v3623
    %3717 = vmatprep.subr.mxu0 %v3628
    %3718 = vmatpush1.msra.mxu0 %v3627
    %3719 = vmatprep.subr.mxu0 %v3632
    %3720 = vmatpush1.msra.mxu0 %v3631
    %3721 = vmatprep.subr.mxu0 %v3636
    %3722 = vmatpush1.msra.mxu0 %v3635
    %3723 = vmatprep.subr.mxu0 %v3640
    %3724 = vmatpush1.msra.mxu0 %v3639
    %3725 = vmatprep.subr.mxu0 %v3644
    %3726 = vmatpush1.msra.mxu0 %v3643
    %3727 = vmatprep.subr.mxu0 %v3648
    %3728 = vmatpush1.msra.mxu0 %v3647
    %3729 = vmatprep.subr.mxu0 %v3652
    %3730 = vmatpush1.msra.mxu0 %v3651
    %3731 = vmatprep.subr.mxu0 %v3656
    %3732 = vmatpush1.msra.mxu0 %v3655
    %3733 = vmatprep.subr.mxu0 %v3660
    %3734 = vmatpush1.msra.mxu0 %v3659
    %3735 = vmatprep.mubr.f32.mxu0 0.0
    %3736 = vmatmul.mubr.f32.gmra.mrb[0].mxu0 0.0
    %v3737 = vpop.f32.mrb[0].mxu0
    %v3738 = vadd.f32 0.0, %v3737
    %v3739 = vpop.f32.mrb[0].mxu0
    %v3740 = vadd.f32 0.0, %v3739
    %3741 = vmatprep.mubr.f32.mxu0 0.0
    %3742 = vmatmul.mubr.f32.gmra.mrb[0].mxu0 0.0
    %v3743 = vpop.f32.mrb[0].mxu0
    %v3744 = vadd.f32 0.0, %v3743
    %v3745 = vpop.f32.mrb[0].mxu0
    %v3746 = vadd.f32 0.0, %v3745
    %3747 = vdwg.mxu0
    %3748 = vmatprep.subr.mxu0 %v3538
    %3749 = vmatpush1.msra.mxu0 %v3537
    %3750 = vmatprep.subr.mxu0 %v3542
    %3751 = vmatpush1.msra.mxu0 %v3541
    %3752 = vmatprep.subr.mxu0 %v3546
    %3753 = vmatpush1.msra.mxu0 %v3545
    %3754 = vmatprep.subr.mxu0 %v3550
    %3755 = vmatpush1.msra.mxu0 %v3549
    %3756 = vmatprep.subr.mxu0 %v3554
    %3757 = vmatpush1.msra.mxu0 %v3553
    %3758 = vmatprep.subr.mxu0 %v3558
    %3759 = vmatpush1.msra.mxu0 %v3557
    %3760 = vmatprep.subr.mxu0 %v3562
    %3761 = vmatpush1.msra.mxu0 %v3561
    %3762 = vmatprep.subr.mxu0 %v3566
    %3763 = vmatpush1.msra.mxu0 %v3565
    %3764 = vmatprep.subr.mxu0 %v3570
    %3765 = vmatpush1.msra.mxu0 %v3569
    %3766 = vmatprep.subr.mxu0 %v3574
    %3767 = vmatpush1.msra.mxu0 %v3573
    %3768 = vmatprep.subr.mxu0 %v3578
    %3769 = vmatpush1.msra.mxu0 %v3577
    %3770 = vmatprep.subr.mxu0 %v3582
    %3771 = vmatpush1.msra.mxu0 %v3581
    %3772 = vmatprep.subr.mxu0 %v3586
    %3773 = vmatpush1.msra.mxu0 %v3585
    %3774 = vmatprep.subr.mxu0 %v3590
    %3775 = vmatpush1.msra.mxu0 %v3589
    %3776 = vmatprep.subr.mxu0 %v3594
    %3777 = vmatpush1.msra.mxu0 %v3593
    %3778 = vmatprep.subr.mxu0 %v3598
    %3779 = vmatpush1.msra.mxu0 %v3597
    %3780 = vmatprep.subr.mxu0 %v3602
    %3781 = vmatpush1.msra.mxu0 %v3601
    %3782 = vmatprep.subr.mxu0 %v3606
    %3783 = vmatpush1.msra.mxu0 %v3605
    %3784 = vmatprep.subr.mxu0 %v3610
    %3785 = vmatpush1.msra.mxu0 %v3609
    %3786 = vmatprep.subr.mxu0 %v3614
    %3787 = vmatpush1.msra.mxu0 %v3613
    %3788 = vmatprep.subr.mxu0 %v3618
    %3789 = vmatpush1.msra.mxu0 %v3617
    %3790 = vmatprep.subr.mxu0 %v3622
    %3791 = vmatpush1.msra.mxu0 %v3621
    %3792 = vmatprep.subr.mxu0 %v3626
    %3793 = vmatpush1.msra.mxu0 %v3625
    %3794 = vmatprep.subr.mxu0 %v3630
    %3795 = vmatpush1.msra.mxu0 %v3629
    %3796 = vmatprep.subr.mxu0 %v3634
    %3797 = vmatpush1.msra.mxu0 %v3633
    %3798 = vmatprep.subr.mxu0 %v3638
    %3799 = vmatpush1.msra.mxu0 %v3637
    %3800 = vmatprep.subr.mxu0 %v3642
    %3801 = vmatpush1.msra.mxu0 %v3641
    %3802 = vmatprep.subr.mxu0 %v3646
    %3803 = vmatpush1.msra.mxu0 %v3645
    %3804 = vmatprep.subr.mxu0 %v3650
    %3805 = vmatpush1.msra.mxu0 %v3649
    %3806 = vmatprep.subr.mxu0 %v3654
    %3807 = vmatpush1.msra.mxu0 %v3653
    %3808 = vmatprep.subr.mxu0 %v3658
    %3809 = vmatpush1.msra.mxu0 %v3657
    %3810 = vmatprep.subr.mxu0 %v3662
    %3811 = vmatpush1.msra.mxu0 %v3661
    %3812 = vmatprep.mubr.f32.mxu0 0.0
    %3813 = vmatmul.mubr.f32.gmra.mrb[0].mxu0 0.0
    %v3814 = vpop.f32.mrb[0].mxu0
    %v3815 = vadd.f32 0.0, %v3814
    %v3816 = vpop.f32.mrb[0].mxu0
    %v3817 = vadd.f32 0.0, %v3816
    %3818 = vmatprep.mubr.f32.mxu0 0.0
    %3819 = vmatmul.mubr.f32.gmra.mrb[0].mxu0 0.0
    %v3820 = vpop.f32.mrb[0].mxu0
    %v3821 = vadd.f32 0.0, %v3820
    %v3822 = vpop.f32.mrb[0].mxu0
    %v3823 = vadd.f32 0.0, %v3822
    %3824 = vdwg.mxu0
    %v3825 = vadd.f32 %v3663, %v3738
    %v3826 = vadd.f32 %v3664, %v3740
    %v3827 = vadd.f32 %v3665, %v3815
    %v3828 = vadd.f32 %v3666, %v3817
    %v3829 = vadd.f32 %v3667, %v3744
    %v3830 = vadd.f32 %v3668, %v3746
    %v3831 = vadd.f32 %v3669, %v3821
    %v3832 = vadd.f32 %v3670, %v3823
    %v3833 = vxor.u32 %v3825, 2147483648
    %v3834 = vxor.u32 %v3826, 2147483648
    %v3835 = vxor.u32 %v3827, 2147483648
    %v3836 = vxor.u32 %v3829, 2147483648
    %v3837 = vxor.u32 %v3830, 2147483648
    %v3838 = vxor.u32 %v3831, 2147483648
    %v3839 = vmul.f32 %v3833, 1.442695
    %v3840 = vpow.pop %v3839
    %v3841 = vmul.f32 %v3834, 1.442695
    %v3842 = vpow.pop %v3841
    %v3843 = vmul.f32 %v3835, 1.442695
    %v3844 = vpow.pop %v3843
    %v3845 = vmul.f32 %v3836, 1.442695
    %v3846 = vpow.pop %v3845
    %v3847 = vmul.f32 %v3837, 1.442695
    %v3848 = vpow.pop %v3847
    %v3849 = vmul.f32 %v3838, 1.442695
    %v3850 = vpow.pop %v3849
    %v3851 = vadd.f32 %v3840, 1.0
    %v3852 = vadd.f32 %v3842, 1.0
    %v3853 = vadd.f32 %v3844, 1.0
    %v3854 = vadd.f32 %v3846, 1.0
    %v3855 = vadd.f32 %v3848, 1.0
    %v3856 = vadd.f32 %v3850, 1.0
    %v3857 = vrcp.pop %v3851
    %v3858 = vmul.f32 1.0, %v3857
    %v3859 = vrcp.pop %v3852
    %v3860 = vmul.f32 1.0, %v3859
    %v3861 = vrcp.pop %v3853
    %v3862 = vmul.f32 1.0, %v3861
    %v3863 = vrcp.pop %v3854
    %v3864 = vmul.f32 1.0, %v3863
    %v3865 = vrcp.pop %v3855
    %v3866 = vmul.f32 1.0, %v3865
    %v3867 = vrcp.pop %v3856
    %v3868 = vmul.f32 1.0, %v3867
    %v3869 = vtanh.pop %v3828
    %v3870 = vtanh.pop %v3832
    %v3871 = vmul.f32 %v3860, 0.0
    %v3872 = vmul.f32 %v3866, 0.0
    %v3873 = vmul.f32 %v3858, %v3869
    %v3874 = vmul.f32 %v3864, %v3870
    %v3875 = vadd.f32 %v3871, %v3873
    %v3876 = vadd.f32 %v3872, %v3874
    %v3877 = vtanh.pop %v3875
    %v3878 = vtanh.pop %v3876
    %v3879 = vmul.f32 %v3862, %v3877
    %v3880 = vmul.f32 %v3868, %v3878
    %v3881 = vsel %vm1051, %v3879, 0.0
    %v3882 = vsel %vm1052, %v3880, 0.0
    %v3883 = vsel %vm1051, %v3875, 0.0
    %v3884 = vsel %vm1052, %v3876, 0.0
    %3885 = vst [vmem:[#allocation3] sm:$0xff] %v3881
    %3886 = vst [vmem:[#allocation3 + $0x78] sm:$0xff] %v3882
    %v3887 = vsel %vm1061, %v3881, 0.0
    %v3888 = vsel %vm1062, %v3882, 0.0
    %v3889 = vsel %vm1061, 0.0, %v3881
    %v3890 = vsel %vm1062, 0.0, %v3882
    %v3891 = vld [vmem:[#allocation2 + $0x40] sm:$0xff]
    %v3892 = vld [vmem:[#allocation2 + $0x48] sm:$0xff]
    %v3893 = vld [vmem:[#allocation2 + $0x50] sm:$0xff]
    %v3894 = vld [vmem:[#allocation2 + $0x58] sm:$0xff]
    %v3895 = vld [vmem:[#allocation2 + $0x1a0] sm:$0xff]
    %v3896 = vld [vmem:[#allocation2 + $0x1a8] sm:$0xff]
    %v3897 = vld [vmem:[#allocation2 + $0x1b0] sm:$0xff]
    %v3898 = vld [vmem:[#allocation2 + $0x1b8] sm:$0xff]
    %3899 = vmatprep.subr.mxu0 %v3536
    %3900 = vmatpush1.msra.mxu0 %v3535
    %3901 = vmatprep.subr.mxu0 %v3540
    %3902 = vmatpush1.msra.mxu0 %v3539
    %3903 = vmatprep.subr.mxu0 %v3544
    %3904 = vmatpush1.msra.mxu0 %v3543
    %3905 = vmatprep.subr.mxu0 %v3548
    %3906 = vmatpush1.msra.mxu0 %v3547
    %3907 = vmatprep.subr.mxu0 %v3552
    %3908 = vmatpush1.msra.mxu0 %v3551
    %3909 = vmatprep.subr.mxu0 %v3556
    %3910 = vmatpush1.msra.mxu0 %v3555
    %3911 = vmatprep.subr.mxu0 %v3560
    %3912 = vmatpush1.msra.mxu0 %v3559
    %3913 = vmatprep.subr.mxu0 %v3564
    %3914 = vmatpush1.msra.mxu0 %v3563
    %3915 = vmatprep.subr.mxu0 %v3568
    %3916 = vmatpush1.msra.mxu0 %v3567
    %3917 = vmatprep.subr.mxu0 %v3572
    %3918 = vmatpush1.msra.mxu0 %v3571
    %3919 = vmatprep.subr.mxu0 %v3576
    %3920 = vmatpush1.msra.mxu0 %v3575
    %3921 = vmatprep.subr.mxu0 %v3580
    %3922 = vmatpush1.msra.mxu0 %v3579
    %3923 = vmatprep.subr.mxu0 %v3584
    %3924 = vmatpush1.msra.mxu0 %v3583
    %3925 = vmatprep.subr.mxu0 %v3588
    %3926 = vmatpush1.msra.mxu0 %v3587
    %3927 = vmatprep.subr.mxu0 %v3592
    %3928 = vmatpush1.msra.mxu0 %v3591
    %3929 = vmatprep.subr.mxu0 %v3596
    %3930 = vmatpush1.msra.mxu0 %v3595
    %3931 = vmatprep.subr.mxu0 %v3600
    %3932 = vmatpush1.msra.mxu0 %v3599
    %3933 = vmatprep.subr.mxu0 %v3604
    %3934 = vmatpush1.msra.mxu0 %v3603
    %3935 = vmatprep.subr.mxu0 %v3608
    %3936 = vmatpush1.msra.mxu0 %v3607
    %3937 = vmatprep.subr.mxu0 %v3612
    %3938 = vmatpush1.msra.mxu0 %v3611
    %3939 = vmatprep.subr.mxu0 %v3616
    %3940 = vmatpush1.msra.mxu0 %v3615
    %3941 = vmatprep.subr.mxu0 %v3620
    %3942 = vmatpush1.msra.mxu0 %v3619
    %3943 = vmatprep.subr.mxu0 %v3624
    %3944 = vmatpush1.msra.mxu0 %v3623
    %3945 = vmatprep.subr.mxu0 %v3628
    %3946 = vmatpush1.msra.mxu0 %v3627
    %3947 = vmatprep.subr.mxu0 %v3632
    %3948 = vmatpush1.msra.mxu0 %v3631
    %3949 = vmatprep.subr.mxu0 %v3636
    %3950 = vmatpush1.msra.mxu0 %v3635
    %3951 = vmatprep.subr.mxu0 %v3640
    %3952 = vmatpush1.msra.mxu0 %v3639
    %3953 = vmatprep.subr.mxu0 %v3644
    %3954 = vmatpush1.msra.mxu0 %v3643
    %3955 = vmatprep.subr.mxu0 %v3648
    %3956 = vmatpush1.msra.mxu0 %v3647
    %3957 = vmatprep.subr.mxu0 %v3652
    %3958 = vmatpush1.msra.mxu0 %v3651
    %3959 = vmatprep.subr.mxu0 %v3656
    %3960 = vmatpush1.msra.mxu0 %v3655
    %3961 = vmatprep.subr.mxu0 %v3660
    %3962 = vmatpush1.msra.mxu0 %v3659
    %3963 = vmatprep.mubr.f32.mxu0 %v3889
    %3964 = vmatmul.mubr.f32.gmra.mrb[0].mxu0 %v3887
    %v3965 = vpop.f32.mrb[0].mxu0
    %v3966 = vadd.f32 0.0, %v3965
    %v3967 = vpop.f32.mrb[0].mxu0
    %v3968 = vadd.f32 0.0, %v3967
    %3969 = vmatprep.mubr.f32.mxu0 %v3890
    %3970 = vmatmul.mubr.f32.gmra.mrb[0].mxu0 %v3888
    %v3971 = vpop.f32.mrb[0].mxu0
    %v3972 = vadd.f32 0.0, %v3971
    %v3973 = vpop.f32.mrb[0].mxu0
    %v3974 = vadd.f32 0.0, %v3973
    %3975 = vdwg.mxu0
    %3976 = vmatprep.subr.mxu0 %v3538
    %3977 = vmatpush1.msra.mxu0 %v3537
    %3978 = vmatprep.subr.mxu0 %v3542
    %3979 = vmatpush1.msra.mxu0 %v3541
    %3980 = vmatprep.subr.mxu0 %v3546
    %3981 = vmatpush1.msra.mxu0 %v3545
    %3982 = vmatprep.subr.mxu0 %v3550
    %3983 = vmatpush1.msra.mxu0 %v3549
    %3984 = vmatprep.subr.mxu0 %v3554
    %3985 = vmatpush1.msra.mxu0 %v3553
    %3986 = vmatprep.subr.mxu0 %v3558
    %3987 = vmatpush1.msra.mxu0 %v3557
    %3988 = vmatprep.subr.mxu0 %v3562
    %3989 = vmatpush1.msra.mxu0 %v3561
    %3990 = vmatprep.subr.mxu0 %v3566
    %3991 = vmatpush1.msra.mxu0 %v3565
    %3992 = vmatprep.subr.mxu0 %v3570
    %3993 = vmatpush1.msra.mxu0 %v3569
    %3994 = vmatprep.subr.mxu0 %v3574
    %3995 = vmatpush1.msra.mxu0 %v3573
    %3996 = vmatprep.subr.mxu0 %v3578
    %3997 = vmatpush1.msra.mxu0 %v3577
    %3998 = vmatprep.subr.mxu0 %v3582
    %3999 = vmatpush1.msra.mxu0 %v3581
    %4000 = vmatprep.subr.mxu0 %v3586
    %4001 = vmatpush1.msra.mxu0 %v3585
    %4002 = vmatprep.subr.mxu0 %v3590
    %4003 = vmatpush1.msra.mxu0 %v3589
    %4004 = vmatprep.subr.mxu0 %v3594
    %4005 = vmatpush1.msra.mxu0 %v3593
    %4006 = vmatprep.subr.mxu0 %v3598
    %4007 = vmatpush1.msra.mxu0 %v3597
    %4008 = vmatprep.subr.mxu0 %v3602
    %4009 = vmatpush1.msra.mxu0 %v3601
    %4010 = vmatprep.subr.mxu0 %v3606
    %4011 = vmatpush1.msra.mxu0 %v3605
    %4012 = vmatprep.subr.mxu0 %v3610
    %4013 = vmatpush1.msra.mxu0 %v3609
    %4014 = vmatprep.subr.mxu0 %v3614
    %4015 = vmatpush1.msra.mxu0 %v3613
    %4016 = vmatprep.subr.mxu0 %v3618
    %4017 = vmatpush1.msra.mxu0 %v3617
    %4018 = vmatprep.subr.mxu0 %v3622
    %4019 = vmatpush1.msra.mxu0 %v3621
    %4020 = vmatprep.subr.mxu0 %v3626
    %4021 = vmatpush1.msra.mxu0 %v3625
    %4022 = vmatprep.subr.mxu0 %v3630
    %4023 = vmatpush1.msra.mxu0 %v3629
    %4024 = vmatprep.subr.mxu0 %v3634
    %4025 = vmatpush1.msra.mxu0 %v3633
    %4026 = vmatprep.subr.mxu0 %v3638
    %4027 = vmatpush1.msra.mxu0 %v3637
    %4028 = vmatprep.subr.mxu0 %v3642
    %4029 = vmatpush1.msra.mxu0 %v3641
    %4030 = vmatprep.subr.mxu0 %v3646
    %4031 = vmatpush1.msra.mxu0 %v3645
    %4032 = vmatprep.subr.mxu0 %v3650
    %4033 = vmatpush1.msra.mxu0 %v3649
    %4034 = vmatprep.subr.mxu0 %v3654
    %4035 = vmatpush1.msra.mxu0 %v3653
    %4036 = vmatprep.subr.mxu0 %v3658
    %4037 = vmatpush1.msra.mxu0 %v3657
    %4038 = vmatprep.subr.mxu0 %v3662
    %4039 = vmatpush1.msra.mxu0 %v3661
    %4040 = vmatprep.mubr.f32.mxu0 %v3889
    %4041 = vmatmul.mubr.f32.gmra.mrb[0].mxu0 %v3887
    %v4042 = vpop.f32.mrb[0].mxu0
    %v4043 = vadd.f32 0.0, %v4042
    %v4044 = vpop.f32.mrb[0].mxu0
    %v4045 = vadd.f32 0.0, %v4044
    %4046 = vmatprep.mubr.f32.mxu0 %v3890
    %4047 = vmatmul.mubr.f32.gmra.mrb[0].mxu0 %v3888
    %v4048 = vpop.f32.mrb[0].mxu0
    %v4049 = vadd.f32 0.0, %v4048
    %v4050 = vpop.f32.mrb[0].mxu0
    %v4051 = vadd.f32 0.0, %v4050
    %4052 = vdwg.mxu0
    %v4053 = vadd.f32 %v3891, %v3966
    %v4054 = vadd.f32 %v3892, %v3968
    %v4055 = vadd.f32 %v3893, %v4043
    %v4056 = vadd.f32 %v3894, %v4045
    %v4057 = vadd.f32 %v3895, %v3972
    %v4058 = vadd.f32 %v3896, %v3974
    %v4059 = vadd.f32 %v3897, %v4049
    %v4060 = vadd.f32 %v3898, %v4051
    %v4061 = vxor.u32 %v4053, 2147483648
    %v4062 = vxor.u32 %v4054, 2147483648
    %v4063 = vxor.u32 %v4055, 2147483648
    %v4064 = vxor.u32 %v4057, 2147483648
    %v4065 = vxor.u32 %v4058, 2147483648
    %v4066 = vxor.u32 %v4059, 2147483648
    %v4067 = vmul.f32 %v4061, 1.442695
    %v4068 = vpow.pop %v4067
    %v4069 = vmul.f32 %v4062, 1.442695
    %v4070 = vpow.pop %v4069
    %v4071 = vmul.f32 %v4063, 1.442695
    %v4072 = vpow.pop %v4071
    %v4073 = vmul.f32 %v4064, 1.442695
    %v4074 = vpow.pop %v4073
    %v4075 = vmul.f32 %v4065, 1.442695
    %v4076 = vpow.pop %v4075
    %v4077 = vmul.f32 %v4066, 1.442695
    %v4078 = vpow.pop %v4077
    %v4079 = vadd.f32 %v4068, 1.0
    %v4080 = vadd.f32 %v4070, 1.0
    %v4081 = vadd.f32 %v4072, 1.0
    %v4082 = vadd.f32 %v4074, 1.0
    %v4083 = vadd.f32 %v4076, 1.0
    %v4084 = vadd.f32 %v4078, 1.0
    %v4085 = vrcp.pop %v4079
    %v4086 = vmul.f32 1.0, %v4085
    %v4087 = vrcp.pop %v4080
    %v4088 = vmul.f32 1.0, %v4087
    %v4089 = vrcp.pop %v4081
    %v4090 = vmul.f32 1.0, %v4089
    %v4091 = vrcp.pop %v4082
    %v4092 = vmul.f32 1.0, %v4091
    %v4093 = vrcp.pop %v4083
    %v4094 = vmul.f32 1.0, %v4093
    %v4095 = vrcp.pop %v4084
    %v4096 = vmul.f32 1.0, %v4095
    %v4097 = vtanh.pop %v4056
    %v4098 = vtanh.pop %v4060
    %v4099 = vmul.f32 %v4088, %v3883
    %v4100 = vmul.f32 %v4094, %v3884
    %v4101 = vmul.f32 %v4086, %v4097
    %v4102 = vmul.f32 %v4092, %v4098
    %v4103 = vadd.f32 %v4099, %v4101
    %v4104 = vadd.f32 %v4100, %v4102
    %v4105 = vtanh.pop %v4103
    %v4106 = vtanh.pop %v4104
    %v4107 = vmul.f32 %v4090, %v4105
    %v4108 = vmul.f32 %v4096, %v4106
    %v4109 = vsel %vm1295, %v4107, %v3881
    %v4110 = vsel %vm1296, %v4108, %v3882
    %v4111 = vsel %vm1295, %v4103, %v3883
    %v4112 = vsel %vm1296, %v4104, %v3884
    %v4113 = vsel %vm1295, %v4107, 0.0
    %v4114 = vsel %vm1296, %v4108, 0.0
    %4115 = vst [vmem:[#allocation3 + $0x10] sm:$0xff] %v4113
    %4116 = vst [vmem:[#allocation3 + $0x68] sm:$0xff] %v4114
    %v4117 = vsel %vm1061, %v4109, 0.0
    %v4118 = vsel %vm1062, %v4110, 0.0
    %v4119 = vsel %vm1061, 0.0, %v4109
    %v4120 = vsel %vm1062, 0.0, %v4110
    %v4121 = vld [vmem:[#allocation2 + $0x80] sm:$0xff]
    %v4122 = vld [vmem:[#allocation2 + $0x88] sm:$0xff]
    %v4123 = vld [vmem:[#allocation2 + $0x90] sm:$0xff]
    %v4124 = vld [vmem:[#allocation2 + $0x98] sm:$0xff]
    %v4125 = vld [vmem:[#allocation2 + $0x160] sm:$0xff]
    %v4126 = vld [vmem:[#allocation2 + $0x168] sm:$0xff]
    %v4127 = vld [vmem:[#allocation2 + $0x170] sm:$0xff]
    %v4128 = vld [vmem:[#allocation2 + $0x178] sm:$0xff]
    %4129 = vmatprep.subr.mxu0 %v3536
    %4130 = vmatpush1.msra.mxu0 %v3535
    %4131 = vmatprep.subr.mxu0 %v3540
    %4132 = vmatpush1.msra.mxu0 %v3539
    %4133 = vmatprep.subr.mxu0 %v3544
    %4134 = vmatpush1.msra.mxu0 %v3543
    %4135 = vmatprep.subr.mxu0 %v3548
    %4136 = vmatpush1.msra.mxu0 %v3547
    %4137 = vmatprep.subr.mxu0 %v3552
    %4138 = vmatpush1.msra.mxu0 %v3551
    %4139 = vmatprep.subr.mxu0 %v3556
    %4140 = vmatpush1.msra.mxu0 %v3555
    %4141 = vmatprep.subr.mxu0 %v3560
    %4142 = vmatpush1.msra.mxu0 %v3559
    %4143 = vmatprep.subr.mxu0 %v3564
    %4144 = vmatpush1.msra.mxu0 %v3563
    %4145 = vmatprep.subr.mxu0 %v3568
    %4146 = vmatpush1.msra.mxu0 %v3567
    %4147 = vmatprep.subr.mxu0 %v3572
    %4148 = vmatpush1.msra.mxu0 %v3571
    %4149 = vmatprep.subr.mxu0 %v3576
    %4150 = vmatpush1.msra.mxu0 %v3575
    %4151 = vmatprep.subr.mxu0 %v3580
    %4152 = vmatpush1.msra.mxu0 %v3579
    %4153 = vmatprep.subr.mxu0 %v3584
    %4154 = vmatpush1.msra.mxu0 %v3583
    %4155 = vmatprep.subr.mxu0 %v3588
    %4156 = vmatpush1.msra.mxu0 %v3587
    %4157 = vmatprep.subr.mxu0 %v3592
    %4158 = vmatpush1.msra.mxu0 %v3591
    %4159 = vmatprep.subr.mxu0 %v3596
    %4160 = vmatpush1.msra.mxu0 %v3595
    %4161 = vmatprep.subr.mxu0 %v3600
    %4162 = vmatpush1.msra.mxu0 %v3599
    %4163 = vmatprep.subr.mxu0 %v3604
    %4164 = vmatpush1.msra.mxu0 %v3603
    %4165 = vmatprep.subr.mxu0 %v3608
    %4166 = vmatpush1.msra.mxu0 %v3607
    %4167 = vmatprep.subr.mxu0 %v3612
    %4168 = vmatpush1.msra.mxu0 %v3611
    %4169 = vmatprep.subr.mxu0 %v3616
    %4170 = vmatpush1.msra.mxu0 %v3615
    %4171 = vmatprep.subr.mxu0 %v3620
    %4172 = vmatpush1.msra.mxu0 %v3619
    %4173 = vmatprep.subr.mxu0 %v3624
    %4174 = vmatpush1.msra.mxu0 %v3623
    %4175 = vmatprep.subr.mxu0 %v3628
    %4176 = vmatpush1.msra.mxu0 %v3627
    %4177 = vmatprep.subr.mxu0 %v3632
    %4178 = vmatpush1.msra.mxu0 %v3631
    %4179 = vmatprep.subr.mxu0 %v3636
    %4180 = vmatpush1.msra.mxu0 %v3635
    %4181 = vmatprep.subr.mxu0 %v3640
    %4182 = vmatpush1.msra.mxu0 %v3639
    %4183 = vmatprep.subr.mxu0 %v3644
    %4184 = vmatpush1.msra.mxu0 %v3643
    %4185 = vmatprep.subr.mxu0 %v3648
    %4186 = vmatpush1.msra.mxu0 %v3647
    %4187 = vmatprep.subr.mxu0 %v3652
    %4188 = vmatpush1.msra.mxu0 %v3651
    %4189 = vmatprep.subr.mxu0 %v3656
    %4190 = vmatpush1.msra.mxu0 %v3655
    %4191 = vmatprep.subr.mxu0 %v3660
    %4192 = vmatpush1.msra.mxu0 %v3659
    %4193 = vmatprep.mubr.f32.mxu0 %v4119
    %4194 = vmatmul.mubr.f32.gmra.mrb[0].mxu0 %v4117
    %v4195 = vpop.f32.mrb[0].mxu0
    %v4196 = vadd.f32 0.0, %v4195
    %v4197 = vpop.f32.mrb[0].mxu0
    %v4198 = vadd.f32 0.0, %v4197
    %4199 = vmatprep.mubr.f32.mxu0 %v4120
    %4200 = vmatmul.mubr.f32.gmra.mrb[0].mxu0 %v4118
    %v4201 = vpop.f32.mrb[0].mxu0
    %v4202 = vadd.f32 0.0, %v4201
    %v4203 = vpop.f32.mrb[0].mxu0
    %v4204 = vadd.f32 0.0, %v4203
    %4205 = vdwg.mxu0
    %4206 = vmatprep.subr.mxu0 %v3538
    %4207 = vmatpush1.msra.mxu0 %v3537
    %4208 = vmatprep.subr.mxu0 %v3542
    %4209 = vmatpush1.msra.mxu0 %v3541
    %4210 = vmatprep.subr.mxu0 %v3546
    %4211 = vmatpush1.msra.mxu0 %v3545
    %4212 = vmatprep.subr.mxu0 %v3550
    %4213 = vmatpush1.msra.mxu0 %v3549
    %4214 = vmatprep.subr.mxu0 %v3554
    %4215 = vmatpush1.msra.mxu0 %v3553
    %4216 = vmatprep.subr.mxu0 %v3558
    %4217 = vmatpush1.msra.mxu0 %v3557
    %4218 = vmatprep.subr.mxu0 %v3562
    %4219 = vmatpush1.msra.mxu0 %v3561
    %4220 = vmatprep.subr.mxu0 %v3566
    %4221 = vmatpush1.msra.mxu0 %v3565
    %4222 = vmatprep.subr.mxu0 %v3570
    %4223 = vmatpush1.msra.mxu0 %v3569
    %4224 = vmatprep.subr.mxu0 %v3574
    %4225 = vmatpush1.msra.mxu0 %v3573
    %4226 = vmatprep.subr.mxu0 %v3578
    %4227 = vmatpush1.msra.mxu0 %v3577
    %4228 = vmatprep.subr.mxu0 %v3582
    %4229 = vmatpush1.msra.mxu0 %v3581
    %4230 = vmatprep.subr.mxu0 %v3586
    %4231 = vmatpush1.msra.mxu0 %v3585
    %4232 = vmatprep.subr.mxu0 %v3590
    %4233 = vmatpush1.msra.mxu0 %v3589
    %4234 = vmatprep.subr.mxu0 %v3594
    %4235 = vmatpush1.msra.mxu0 %v3593
    %4236 = vmatprep.subr.mxu0 %v3598
    %4237 = vmatpush1.msra.mxu0 %v3597
    %4238 = vmatprep.subr.mxu0 %v3602
    %4239 = vmatpush1.msra.mxu0 %v3601
    %4240 = vmatprep.subr.mxu0 %v3606
    %4241 = vmatpush1.msra.mxu0 %v3605
    %4242 = vmatprep.subr.mxu0 %v3610
    %4243 = vmatpush1.msra.mxu0 %v3609
    %4244 = vmatprep.subr.mxu0 %v3614
    %4245 = vmatpush1.msra.mxu0 %v3613
    %4246 = vmatprep.subr.mxu0 %v3618
    %4247 = vmatpush1.msra.mxu0 %v3617
    %4248 = vmatprep.subr.mxu0 %v3622
    %4249 = vmatpush1.msra.mxu0 %v3621
    %4250 = vmatprep.subr.mxu0 %v3626
    %4251 = vmatpush1.msra.mxu0 %v3625
    %4252 = vmatprep.subr.mxu0 %v3630
    %4253 = vmatpush1.msra.mxu0 %v3629
    %4254 = vmatprep.subr.mxu0 %v3634
    %4255 = vmatpush1.msra.mxu0 %v3633
    %4256 = vmatprep.subr.mxu0 %v3638
    %4257 = vmatpush1.msra.mxu0 %v3637
    %4258 = vmatprep.subr.mxu0 %v3642
    %4259 = vmatpush1.msra.mxu0 %v3641
    %4260 = vmatprep.subr.mxu0 %v3646
    %4261 = vmatpush1.msra.mxu0 %v3645
    %4262 = vmatprep.subr.mxu0 %v3650
    %4263 = vmatpush1.msra.mxu0 %v3649
    %4264 = vmatprep.subr.mxu0 %v3654
    %4265 = vmatpush1.msra.mxu0 %v3653
    %4266 = vmatprep.subr.mxu0 %v3658
    %4267 = vmatpush1.msra.mxu0 %v3657
    %4268 = vmatprep.subr.mxu0 %v3662
    %4269 = vmatpush1.msra.mxu0 %v3661
    %4270 = vmatprep.mubr.f32.mxu0 %v4119
    %4271 = vmatmul.mubr.f32.gmra.mrb[0].mxu0 %v4117
    %v4272 = vpop.f32.mrb[0].mxu0
    %v4273 = vadd.f32 0.0, %v4272
    %v4274 = vpop.f32.mrb[0].mxu0
    %v4275 = vadd.f32 0.0, %v4274
    %4276 = vmatprep.mubr.f32.mxu0 %v4120
    %4277 = vmatmul.mubr.f32.gmra.mrb[0].mxu0 %v4118
    %v4278 = vpop.f32.mrb[0].mxu0
    %v4279 = vadd.f32 0.0, %v4278
    %v4280 = vpop.f32.mrb[0].mxu0
    %v4281 = vadd.f32 0.0, %v4280
    %4282 = vdwg.mxu0
    %v4283 = vadd.f32 %v4121, %v4196
    %v4284 = vadd.f32 %v4122, %v4198
    %v4285 = vadd.f32 %v4123, %v4273
    %v4286 = vadd.f32 %v4124, %v4275
    %v4287 = vadd.f32 %v4125, %v4202
    %v4288 = vadd.f32 %v4126, %v4204
    %v4289 = vadd.f32 %v4127, %v4279
    %v4290 = vadd.f32 %v4128, %v4281
    %v4291 = vxor.u32 %v4283, 2147483648
    %v4292 = vxor.u32 %v4284, 2147483648
    %v4293 = vxor.u32 %v4285, 2147483648
    %v4294 = vxor.u32 %v4287, 2147483648
    %v4295 = vxor.u32 %v4288, 2147483648
    %v4296 = vxor.u32 %v4289, 2147483648
    %v4297 = vmul.f32 %v4291, 1.442695
    %v4298 = vpow.pop %v4297
    %v4299 = vmul.f32 %v4292, 1.442695
    %v4300 = vpow.pop %v4299
    %v4301 = vmul.f32 %v4293, 1.442695
    %v4302 = vpow.pop %v4301
    %v4303 = vmul.f32 %v4294, 1.442695
    %v4304 = vpow.pop %v4303
    %v4305 = vmul.f32 %v4295, 1.442695
    %v4306 = vpow.pop %v4305
    %v4307 = vmul.f32 %v4296, 1.442695
    %v4308 = vpow.pop %v4307
    %v4309 = vadd.f32 %v4298, 1.0
    %v4310 = vadd.f32 %v4300, 1.0
    %v4311 = vadd.f32 %v4302, 1.0
    %v4312 = vadd.f32 %v4304, 1.0
    %v4313 = vadd.f32 %v4306, 1.0
    %v4314 = vadd.f32 %v4308, 1.0
    %v4315 = vrcp.pop %v4309
    %v4316 = vmul.f32 1.0, %v4315
    %v4317 = vrcp.pop %v4310
    %v4318 = vmul.f32 1.0, %v4317
    %v4319 = vrcp.pop %v4311
    %v4320 = vmul.f32 1.0, %v4319
    %v4321 = vrcp.pop %v4312
    %v4322 = vmul.f32 1.0, %v4321
    %v4323 = vrcp.pop %v4313
    %v4324 = vmul.f32 1.0, %v4323
    %v4325 = vrcp.pop %v4314
    %v4326 = vmul.f32 1.0, %v4325
    %v4327 = vtanh.pop %v4286
    %v4328 = vtanh.pop %v4290
    %v4329 = vmul.f32 %v4318, %v4111
    %v4330 = vmul.f32 %v4324, %v4112
    %v4331 = vmul.f32 %v4316, %v4327
    %v4332 = vmul.f32 %v4322, %v4328
    %v4333 = vadd.f32 %v4329, %v4331
    %v4334 = vadd.f32 %v4330, %v4332
    %v4335 = vtanh.pop %v4333
    %v4336 = vtanh.pop %v4334
    %v4337 = vmul.f32 %v4320, %v4335
    %v4338 = vmul.f32 %v4326, %v4336
    %v4339 = vsel %vm1537, %v4337, %v4109
    %v4340 = vsel %vm1538, %v4338, %v4110
    %v4341 = vsel %vm1537, %v4333, %v4111
    %v4342 = vsel %vm1538, %v4334, %v4112
    %v4343 = vsel %vm1537, %v4337, 0.0
    %v4344 = vsel %vm1538, %v4338, 0.0
    %4345 = vst [vmem:[#allocation3 + $0x20] sm:$0xff] %v4343
    %4346 = vst [vmem:[#allocation3 + $0x58] sm:$0xff] %v4344
    %v4347 = vsel %vm1061, %v4339, 0.0
    %v4348 = vsel %vm1062, %v4340, 0.0
    %v4349 = vsel %vm1061, 0.0, %v4339
    %v4350 = vsel %vm1062, 0.0, %v4340
    %v4351 = vld [vmem:[#allocation2 + $0xc0] sm:$0xff]
    %v4352 = vld [vmem:[#allocation2 + $0xc8] sm:$0xff]
    %v4353 = vld [vmem:[#allocation2 + $0xd0] sm:$0xff]
    %v4354 = vld [vmem:[#allocation2 + $0xd8] sm:$0xff]
    %v4355 = vld [vmem:[#allocation2 + $0x120] sm:$0xff]
    %v4356 = vld [vmem:[#allocation2 + $0x128] sm:$0xff]
    %v4357 = vld [vmem:[#allocation2 + $0x130] sm:$0xff]
    %v4358 = vld [vmem:[#allocation2 + $0x138] sm:$0xff]
    %4359 = vmatprep.subr.mxu0 %v3536
    %4360 = vmatpush1.msra.mxu0 %v3535
    %4361 = vmatprep.subr.mxu0 %v3540
    %4362 = vmatpush1.msra.mxu0 %v3539
    %4363 = vmatprep.subr.mxu0 %v3544
    %4364 = vmatpush1.msra.mxu0 %v3543
    %4365 = vmatprep.subr.mxu0 %v3548
    %4366 = vmatpush1.msra.mxu0 %v3547
    %4367 = vmatprep.subr.mxu0 %v3552
    %4368 = vmatpush1.msra.mxu0 %v3551
    %4369 = vmatprep.subr.mxu0 %v3556
    %4370 = vmatpush1.msra.mxu0 %v3555
    %4371 = vmatprep.subr.mxu0 %v3560
    %4372 = vmatpush1.msra.mxu0 %v3559
    %4373 = vmatprep.subr.mxu0 %v3564
    %4374 = vmatpush1.msra.mxu0 %v3563
    %4375 = vmatprep.subr.mxu0 %v3568
    %4376 = vmatpush1.msra.mxu0 %v3567
    %4377 = vmatprep.subr.mxu0 %v3572
    %4378 = vmatpush1.msra.mxu0 %v3571
    %4379 = vmatprep.subr.mxu0 %v3576
    %4380 = vmatpush1.msra.mxu0 %v3575
    %4381 = vmatprep.subr.mxu0 %v3580
    %4382 = vmatpush1.msra.mxu0 %v3579
    %4383 = vmatprep.subr.mxu0 %v3584
    %4384 = vmatpush1.msra.mxu0 %v3583
    %4385 = vmatprep.subr.mxu0 %v3588
    %4386 = vmatpush1.msra.mxu0 %v3587
    %4387 = vmatprep.subr.mxu0 %v3592
    %4388 = vmatpush1.msra.mxu0 %v3591
    %4389 = vmatprep.subr.mxu0 %v3596
    %4390 = vmatpush1.msra.mxu0 %v3595
    %4391 = vmatprep.subr.mxu0 %v3600
    %4392 = vmatpush1.msra.mxu0 %v3599
    %4393 = vmatprep.subr.mxu0 %v3604
    %4394 = vmatpush1.msra.mxu0 %v3603
    %4395 = vmatprep.subr.mxu0 %v3608
    %4396 = vmatpush1.msra.mxu0 %v3607
    %4397 = vmatprep.subr.mxu0 %v3612
    %4398 = vmatpush1.msra.mxu0 %v3611
    %4399 = vmatprep.subr.mxu0 %v3616
    %4400 = vmatpush1.msra.mxu0 %v3615
    %4401 = vmatprep.subr.mxu0 %v3620
    %4402 = vmatpush1.msra.mxu0 %v3619
    %4403 = vmatprep.subr.mxu0 %v3624
    %4404 = vmatpush1.msra.mxu0 %v3623
    %4405 = vmatprep.subr.mxu0 %v3628
    %4406 = vmatpush1.msra.mxu0 %v3627
    %4407 = vmatprep.subr.mxu0 %v3632
    %4408 = vmatpush1.msra.mxu0 %v3631
    %4409 = vmatprep.subr.mxu0 %v3636
    %4410 = vmatpush1.msra.mxu0 %v3635
    %4411 = vmatprep.subr.mxu0 %v3640
    %4412 = vmatpush1.msra.mxu0 %v3639
    %4413 = vmatprep.subr.mxu0 %v3644
    %4414 = vmatpush1.msra.mxu0 %v3643
    %4415 = vmatprep.subr.mxu0 %v3648
    %4416 = vmatpush1.msra.mxu0 %v3647
    %4417 = vmatprep.subr.mxu0 %v3652
    %4418 = vmatpush1.msra.mxu0 %v3651
    %4419 = vmatprep.subr.mxu0 %v3656
    %4420 = vmatpush1.msra.mxu0 %v3655
    %4421 = vmatprep.subr.mxu0 %v3660
    %4422 = vmatpush1.msra.mxu0 %v3659
    %4423 = vmatprep.mubr.f32.mxu0 %v4349
    %4424 = vmatmul.mubr.f32.gmra.mrb[0].mxu0 %v4347
    %v4425 = vpop.f32.mrb[0].mxu0
    %v4426 = vadd.f32 0.0, %v4425
    %v4427 = vpop.f32.mrb[0].mxu0
    %v4428 = vadd.f32 0.0, %v4427
    %4429 = vmatprep.mubr.f32.mxu0 %v4350
    %4430 = vmatmul.mubr.f32.gmra.mrb[0].mxu0 %v4348
    %v4431 = vpop.f32.mrb[0].mxu0
    %v4432 = vadd.f32 0.0, %v4431
    %v4433 = vpop.f32.mrb[0].mxu0
    %v4434 = vadd.f32 0.0, %v4433
    %4435 = vdwg.mxu0
    %4436 = vmatprep.subr.mxu0 %v3538
    %4437 = vmatpush1.msra.mxu0 %v3537
    %4438 = vmatprep.subr.mxu0 %v3542
    %4439 = vmatpush1.msra.mxu0 %v3541
    %4440 = vmatprep.subr.mxu0 %v3546
    %4441 = vmatpush1.msra.mxu0 %v3545
    %4442 = vmatprep.subr.mxu0 %v3550
    %4443 = vmatpush1.msra.mxu0 %v3549
    %4444 = vmatprep.subr.mxu0 %v3554
    %4445 = vmatpush1.msra.mxu0 %v3553
    %4446 = vmatprep.subr.mxu0 %v3558
    %4447 = vmatpush1.msra.mxu0 %v3557
    %4448 = vmatprep.subr.mxu0 %v3562
    %4449 = vmatpush1.msra.mxu0 %v3561
    %4450 = vmatprep.subr.mxu0 %v3566
    %4451 = vmatpush1.msra.mxu0 %v3565
    %4452 = vmatprep.subr.mxu0 %v3570
    %4453 = vmatpush1.msra.mxu0 %v3569
    %4454 = vmatprep.subr.mxu0 %v3574
    %4455 = vmatpush1.msra.mxu0 %v3573
    %4456 = vmatprep.subr.mxu0 %v3578
    %4457 = vmatpush1.msra.mxu0 %v3577
    %4458 = vmatprep.subr.mxu0 %v3582
    %4459 = vmatpush1.msra.mxu0 %v3581
    %4460 = vmatprep.subr.mxu0 %v3586
    %4461 = vmatpush1.msra.mxu0 %v3585
    %4462 = vmatprep.subr.mxu0 %v3590
    %4463 = vmatpush1.msra.mxu0 %v3589
    %4464 = vmatprep.subr.mxu0 %v3594
    %4465 = vmatpush1.msra.mxu0 %v3593
    %4466 = vmatprep.subr.mxu0 %v3598
    %4467 = vmatpush1.msra.mxu0 %v3597
    %4468 = vmatprep.subr.mxu0 %v3602
    %4469 = vmatpush1.msra.mxu0 %v3601
    %4470 = vmatprep.subr.mxu0 %v3606
    %4471 = vmatpush1.msra.mxu0 %v3605
    %4472 = vmatprep.subr.mxu0 %v3610
    %4473 = vmatpush1.msra.mxu0 %v3609
    %4474 = vmatprep.subr.mxu0 %v3614
    %4475 = vmatpush1.msra.mxu0 %v3613
    %4476 = vmatprep.subr.mxu0 %v3618
    %4477 = vmatpush1.msra.mxu0 %v3617
    %4478 = vmatprep.subr.mxu0 %v3622
    %4479 = vmatpush1.msra.mxu0 %v3621
    %4480 = vmatprep.subr.mxu0 %v3626
    %4481 = vmatpush1.msra.mxu0 %v3625
    %4482 = vmatprep.subr.mxu0 %v3630
    %4483 = vmatpush1.msra.mxu0 %v3629
    %4484 = vmatprep.subr.mxu0 %v3634
    %4485 = vmatpush1.msra.mxu0 %v3633
    %4486 = vmatprep.subr.mxu0 %v3638
    %4487 = vmatpush1.msra.mxu0 %v3637
    %4488 = vmatprep.subr.mxu0 %v3642
    %4489 = vmatpush1.msra.mxu0 %v3641
    %4490 = vmatprep.subr.mxu0 %v3646
    %4491 = vmatpush1.msra.mxu0 %v3645
    %4492 = vmatprep.subr.mxu0 %v3650
    %4493 = vmatpush1.msra.mxu0 %v3649
    %4494 = vmatprep.subr.mxu0 %v3654
    %4495 = vmatpush1.msra.mxu0 %v3653
    %4496 = vmatprep.subr.mxu0 %v3658
    %4497 = vmatpush1.msra.mxu0 %v3657
    %4498 = vmatprep.subr.mxu0 %v3662
    %4499 = vmatpush1.msra.mxu0 %v3661
    %4500 = vmatprep.mubr.f32.mxu0 %v4349
    %4501 = vmatmul.mubr.f32.gmra.mrb[0].mxu0 %v4347
    %v4502 = vpop.f32.mrb[0].mxu0
    %v4503 = vadd.f32 0.0, %v4502
    %v4504 = vpop.f32.mrb[0].mxu0
    %v4505 = vadd.f32 0.0, %v4504
    %4506 = vmatprep.mubr.f32.mxu0 %v4350
    %4507 = vmatmul.mubr.f32.gmra.mrb[0].mxu0 %v4348
    %v4508 = vpop.f32.mrb[0].mxu0
    %v4509 = vadd.f32 0.0, %v4508
    %v4510 = vpop.f32.mrb[0].mxu0
    %v4511 = vadd.f32 0.0, %v4510
    %4512 = vdwg.mxu0
    %v4513 = vadd.f32 %v4351, %v4426
    %v4514 = vadd.f32 %v4352, %v4428
    %v4515 = vadd.f32 %v4353, %v4503
    %v4516 = vadd.f32 %v4354, %v4505
    %v4517 = vadd.f32 %v4355, %v4432
    %v4518 = vadd.f32 %v4356, %v4434
    %v4519 = vadd.f32 %v4357, %v4509
    %v4520 = vadd.f32 %v4358, %v4511
    %v4521 = vxor.u32 %v4513, 2147483648
    %v4522 = vxor.u32 %v4514, 2147483648
    %v4523 = vxor.u32 %v4515, 2147483648
    %v4524 = vxor.u32 %v4517, 2147483648
    %v4525 = vxor.u32 %v4518, 2147483648
    %v4526 = vxor.u32 %v4519, 2147483648
    %v4527 = vmul.f32 %v4521, 1.442695
    %v4528 = vpow.pop %v4527
    %v4529 = vmul.f32 %v4522, 1.442695
    %v4530 = vpow.pop %v4529
    %v4531 = vmul.f32 %v4523, 1.442695
    %v4532 = vpow.pop %v4531
    %v4533 = vmul.f32 %v4524, 1.442695
    %v4534 = vpow.pop %v4533
    %v4535 = vmul.f32 %v4525, 1.442695
    %v4536 = vpow.pop %v4535
    %v4537 = vmul.f32 %v4526, 1.442695
    %v4538 = vpow.pop %v4537
    %v4539 = vadd.f32 %v4528, 1.0
    %v4540 = vadd.f32 %v4530, 1.0
    %v4541 = vadd.f32 %v4532, 1.0
    %v4542 = vadd.f32 %v4534, 1.0
    %v4543 = vadd.f32 %v4536, 1.0
    %v4544 = vadd.f32 %v4538, 1.0
    %v4545 = vrcp.pop %v4539
    %v4546 = vmul.f32 1.0, %v4545
    %v4547 = vrcp.pop %v4540
    %v4548 = vmul.f32 1.0, %v4547
    %v4549 = vrcp.pop %v4541
    %v4550 = vmul.f32 1.0, %v4549
    %v4551 = vrcp.pop %v4542
    %v4552 = vmul.f32 1.0, %v4551
    %v4553 = vrcp.pop %v4543
    %v4554 = vmul.f32 1.0, %v4553
    %v4555 = vrcp.pop %v4544
    %v4556 = vmul.f32 1.0, %v4555
    %v4557 = vtanh.pop %v4516
    %v4558 = vtanh.pop %v4520
    %v4559 = vmul.f32 %v4548, %v4341
    %v4560 = vmul.f32 %v4554, %v4342
    %v4561 = vmul.f32 %v4546, %v4557
    %v4562 = vmul.f32 %v4552, %v4558
    %v4563 = vadd.f32 %v4559, %v4561
    %v4564 = vadd.f32 %v4560, %v4562
    %v4565 = vtanh.pop %v4563
    %v4566 = vtanh.pop %v4564
    %v4567 = vmul.f32 %v4550, %v4565
    %v4568 = vmul.f32 %v4556, %v4566
    %v4569 = vsel %vm1779, %v4567, %v4339
    %v4570 = vsel %vm1780, %v4568, %v4340
    %v4571 = vsel %vm1779, %v4563, %v4341
    %v4572 = vsel %vm1780, %v4564, %v4342
    %v4573 = vsel %vm1779, %v4567, 0.0
    %v4574 = vsel %vm1780, %v4568, 0.0
    %4575 = vst [vmem:[#allocation3 + $0x30] sm:$0xff] %v4573
    %4576 = vst [vmem:[#allocation3 + $0x48] sm:$0xff] %v4574
    %v4577 = vsel %vm1061, %v4569, 0.0
    %v4578 = vsel %vm1062, %v4570, 0.0
    %v4579 = vsel %vm1061, 0.0, %v4569
    %v4580 = vsel %vm1062, 0.0, %v4570
    %v4581 = vld [vmem:[#allocation2 + $0x100] sm:$0xff]
    %v4582 = vld [vmem:[#allocation2 + $0x108] sm:$0xff]
    %v4583 = vld [vmem:[#allocation2 + $0x110] sm:$0xff]
    %v4584 = vld [vmem:[#allocation2 + $0x118] sm:$0xff]
    %v4585 = vld [vmem:[#allocation2 + $0xe0] sm:$0xff]
    %v4586 = vld [vmem:[#allocation2 + $0xe8] sm:$0xff]
    %v4587 = vld [vmem:[#allocation2 + $0xf0] sm:$0xff]
    %v4588 = vld [vmem:[#allocation2 + $0xf8] sm:$0xff]
    %4589 = vmatprep.subr.mxu0 %v3536
    %4590 = vmatpush1.msra.mxu0 %v3535
    %4591 = vmatprep.subr.mxu0 %v3540
    %4592 = vmatpush1.msra.mxu0 %v3539
    %4593 = vmatprep.subr.mxu0 %v3544
    %4594 = vmatpush1.msra.mxu0 %v3543
    %4595 = vmatprep.subr.mxu0 %v3548
    %4596 = vmatpush1.msra.mxu0 %v3547
    %4597 = vmatprep.subr.mxu0 %v3552
    %4598 = vmatpush1.msra.mxu0 %v3551
    %4599 = vmatprep.subr.mxu0 %v3556
    %4600 = vmatpush1.msra.mxu0 %v3555
    %4601 = vmatprep.subr.mxu0 %v3560
    %4602 = vmatpush1.msra.mxu0 %v3559
    %4603 = vmatprep.subr.mxu0 %v3564
    %4604 = vmatpush1.msra.mxu0 %v3563
    %4605 = vmatprep.subr.mxu0 %v3568
    %4606 = vmatpush1.msra.mxu0 %v3567
    %4607 = vmatprep.subr.mxu0 %v3572
    %4608 = vmatpush1.msra.mxu0 %v3571
    %4609 = vmatprep.subr.mxu0 %v3576
    %4610 = vmatpush1.msra.mxu0 %v3575
    %4611 = vmatprep.subr.mxu0 %v3580
    %4612 = vmatpush1.msra.mxu0 %v3579
    %4613 = vmatprep.subr.mxu0 %v3584
    %4614 = vmatpush1.msra.mxu0 %v3583
    %4615 = vmatprep.subr.mxu0 %v3588
    %4616 = vmatpush1.msra.mxu0 %v3587
    %4617 = vmatprep.subr.mxu0 %v3592
    %4618 = vmatpush1.msra.mxu0 %v3591
    %4619 = vmatprep.subr.mxu0 %v3596
    %4620 = vmatpush1.msra.mxu0 %v3595
    %4621 = vmatprep.subr.mxu0 %v3600
    %4622 = vmatpush1.msra.mxu0 %v3599
    %4623 = vmatprep.subr.mxu0 %v3604
    %4624 = vmatpush1.msra.mxu0 %v3603
    %4625 = vmatprep.subr.mxu0 %v3608
    %4626 = vmatpush1.msra.mxu0 %v3607
    %4627 = vmatprep.subr.mxu0 %v3612
    %4628 = vmatpush1.msra.mxu0 %v3611
    %4629 = vmatprep.subr.mxu0 %v3616
    %4630 = vmatpush1.msra.mxu0 %v3615
    %4631 = vmatprep.subr.mxu0 %v3620
    %4632 = vmatpush1.msra.mxu0 %v3619
    %4633 = vmatprep.subr.mxu0 %v3624
    %4634 = vmatpush1.msra.mxu0 %v3623
    %4635 = vmatprep.subr.mxu0 %v3628
    %4636 = vmatpush1.msra.mxu0 %v3627
    %4637 = vmatprep.subr.mxu0 %v3632
    %4638 = vmatpush1.msra.mxu0 %v3631
    %4639 = vmatprep.subr.mxu0 %v3636
    %4640 = vmatpush1.msra.mxu0 %v3635
    %4641 = vmatprep.subr.mxu0 %v3640
    %4642 = vmatpush1.msra.mxu0 %v3639
    %4643 = vmatprep.subr.mxu0 %v3644
    %4644 = vmatpush1.msra.mxu0 %v3643
    %4645 = vmatprep.subr.mxu0 %v3648
    %4646 = vmatpush1.msra.mxu0 %v3647
    %4647 = vmatprep.subr.mxu0 %v3652
    %4648 = vmatpush1.msra.mxu0 %v3651
    %4649 = vmatprep.subr.mxu0 %v3656
    %4650 = vmatpush1.msra.mxu0 %v3655
    %4651 = vmatprep.subr.mxu0 %v3660
    %4652 = vmatpush1.msra.mxu0 %v3659
    %4653 = vmatprep.mubr.f32.mxu0 %v4579
    %4654 = vmatmul.mubr.f32.gmra.mrb[0].mxu0 %v4577
    %v4655 = vpop.f32.mrb[0].mxu0
    %v4656 = vadd.f32 0.0, %v4655
    %v4657 = vpop.f32.mrb[0].mxu0
    %v4658 = vadd.f32 0.0, %v4657
    %4659 = vmatprep.mubr.f32.mxu0 %v4580
    %4660 = vmatmul.mubr.f32.gmra.mrb[0].mxu0 %v4578
    %v4661 = vpop.f32.mrb[0].mxu0
    %v4662 = vadd.f32 0.0, %v4661
    %v4663 = vpop.f32.mrb[0].mxu0
    %v4664 = vadd.f32 0.0, %v4663
    %4665 = vdwg.mxu0
    %4666 = vmatprep.subr.mxu0 %v3538
    %4667 = vmatpush1.msra.mxu0 %v3537
    %4668 = vmatprep.subr.mxu0 %v3542
    %4669 = vmatpush1.msra.mxu0 %v3541
    %4670 = vmatprep.subr.mxu0 %v3546
    %4671 = vmatpush1.msra.mxu0 %v3545
    %4672 = vmatprep.subr.mxu0 %v3550
    %4673 = vmatpush1.msra.mxu0 %v3549
    %4674 = vmatprep.subr.mxu0 %v3554
    %4675 = vmatpush1.msra.mxu0 %v3553
    %4676 = vmatprep.subr.mxu0 %v3558
    %4677 = vmatpush1.msra.mxu0 %v3557
    %4678 = vmatprep.subr.mxu0 %v3562
    %4679 = vmatpush1.msra.mxu0 %v3561
    %4680 = vmatprep.subr.mxu0 %v3566
    %4681 = vmatpush1.msra.mxu0 %v3565
    %4682 = vmatprep.subr.mxu0 %v3570
    %4683 = vmatpush1.msra.mxu0 %v3569
    %4684 = vmatprep.subr.mxu0 %v3574
    %4685 = vmatpush1.msra.mxu0 %v3573
    %4686 = vmatprep.subr.mxu0 %v3578
    %4687 = vmatpush1.msra.mxu0 %v3577
    %4688 = vmatprep.subr.mxu0 %v3582
    %4689 = vmatpush1.msra.mxu0 %v3581
    %4690 = vmatprep.subr.mxu0 %v3586
    %4691 = vmatpush1.msra.mxu0 %v3585
    %4692 = vmatprep.subr.mxu0 %v3590
    %4693 = vmatpush1.msra.mxu0 %v3589
    %4694 = vmatprep.subr.mxu0 %v3594
    %4695 = vmatpush1.msra.mxu0 %v3593
    %4696 = vmatprep.subr.mxu0 %v3598
    %4697 = vmatpush1.msra.mxu0 %v3597
    %4698 = vmatprep.subr.mxu0 %v3602
    %4699 = vmatpush1.msra.mxu0 %v3601
    %4700 = vmatprep.subr.mxu0 %v3606
    %4701 = vmatpush1.msra.mxu0 %v3605
    %4702 = vmatprep.subr.mxu0 %v3610
    %4703 = vmatpush1.msra.mxu0 %v3609
    %4704 = vmatprep.subr.mxu0 %v3614
    %4705 = vmatpush1.msra.mxu0 %v3613
    %4706 = vmatprep.subr.mxu0 %v3618
    %4707 = vmatpush1.msra.mxu0 %v3617
    %4708 = vmatprep.subr.mxu0 %v3622
    %4709 = vmatpush1.msra.mxu0 %v3621
    %4710 = vmatprep.subr.mxu0 %v3626
    %4711 = vmatpush1.msra.mxu0 %v3625
    %4712 = vmatprep.subr.mxu0 %v3630
    %4713 = vmatpush1.msra.mxu0 %v3629
    %4714 = vmatprep.subr.mxu0 %v3634
    %4715 = vmatpush1.msra.mxu0 %v3633
    %4716 = vmatprep.subr.mxu0 %v3638
    %4717 = vmatpush1.msra.mxu0 %v3637
    %4718 = vmatprep.subr.mxu0 %v3642
    %4719 = vmatpush1.msra.mxu0 %v3641
    %4720 = vmatprep.subr.mxu0 %v3646
    %4721 = vmatpush1.msra.mxu0 %v3645
    %4722 = vmatprep.subr.mxu0 %v3650
    %4723 = vmatpush1.msra.mxu0 %v3649
    %4724 = vmatprep.subr.mxu0 %v3654
    %4725 = vmatpush1.msra.mxu0 %v3653
    %4726 = vmatprep.subr.mxu0 %v3658
    %4727 = vmatpush1.msra.mxu0 %v3657
    %4728 = vmatprep.subr.mxu0 %v3662
    %4729 = vmatpush1.msra.mxu0 %v3661
    %4730 = vmatprep.mubr.f32.mxu0 %v4579
    %4731 = vmatmul.mubr.f32.gmra.mrb[0].mxu0 %v4577
    %v4732 = vpop.f32.mrb[0].mxu0
    %v4733 = vadd.f32 0.0, %v4732
    %v4734 = vpop.f32.mrb[0].mxu0
    %v4735 = vadd.f32 0.0, %v4734
    %4736 = vmatprep.mubr.f32.mxu0 %v4580
    %4737 = vmatmul.mubr.f32.gmra.mrb[0].mxu0 %v4578
    %v4738 = vpop.f32.mrb[0].mxu0
    %v4739 = vadd.f32 0.0, %v4738
    %v4740 = vpop.f32.mrb[0].mxu0
    %v4741 = vadd.f32 0.0, %v4740
    %4742 = vdwg.mxu0
    %v4743 = vadd.f32 %v4581, %v4656
    %v4744 = vadd.f32 %v4582, %v4658
    %v4745 = vadd.f32 %v4583, %v4733
    %v4746 = vadd.f32 %v4584, %v4735
    %v4747 = vadd.f32 %v4585, %v4662
    %v4748 = vadd.f32 %v4586, %v4664
    %v4749 = vadd.f32 %v4587, %v4739
    %v4750 = vadd.f32 %v4588, %v4741
    %v4751 = vxor.u32 %v4743, 2147483648
    %v4752 = vxor.u32 %v4744, 2147483648
    %v4753 = vxor.u32 %v4745, 2147483648
    %v4754 = vxor.u32 %v4747, 2147483648
    %v4755 = vxor.u32 %v4748, 2147483648
    %v4756 = vxor.u32 %v4749, 2147483648
    %v4757 = vmul.f32 %v4751, 1.442695
    %v4758 = vpow.pop %v4757
    %v4759 = vmul.f32 %v4752, 1.442695
    %v4760 = vpow.pop %v4759
    %v4761 = vmul.f32 %v4753, 1.442695
    %v4762 = vpow.pop %v4761
    %v4763 = vmul.f32 %v4754, 1.442695
    %v4764 = vpow.pop %v4763
    %v4765 = vmul.f32 %v4755, 1.442695
    %v4766 = vpow.pop %v4765
    %v4767 = vmul.f32 %v4756, 1.442695
    %v4768 = vpow.pop %v4767
    %v4769 = vadd.f32 %v4758, 1.0
    %v4770 = vadd.f32 %v4760, 1.0
    %v4771 = vadd.f32 %v4762, 1.0
    %v4772 = vadd.f32 %v4764, 1.0
    %v4773 = vadd.f32 %v4766, 1.0
    %v4774 = vadd.f32 %v4768, 1.0
    %v4775 = vrcp.pop %v4769
    %v4776 = vmul.f32 1.0, %v4775
    %v4777 = vrcp.pop %v4770
    %v4778 = vmul.f32 1.0, %v4777
    %v4779 = vrcp.pop %v4771
    %v4780 = vmul.f32 1.0, %v4779
    %v4781 = vrcp.pop %v4772
    %v4782 = vmul.f32 1.0, %v4781
    %v4783 = vrcp.pop %v4773
    %v4784 = vmul.f32 1.0, %v4783
    %v4785 = vrcp.pop %v4774
    %v4786 = vmul.f32 1.0, %v4785
    %v4787 = vtanh.pop %v4746
    %v4788 = vtanh.pop %v4750
    %v4789 = vmul.f32 %v4778, %v4571
    %v4790 = vmul.f32 %v4784, %v4572
    %v4791 = vmul.f32 %v4776, %v4787
    %v4792 = vmul.f32 %v4782, %v4788
    %v4793 = vadd.f32 %v4789, %v4791
    %v4794 = vadd.f32 %v4790, %v4792
    %v4795 = vtanh.pop %v4793
    %v4796 = vtanh.pop %v4794
    %v4797 = vmul.f32 %v4780, %v4795
    %v4798 = vmul.f32 %v4786, %v4796
    %v4799 = vsel %vm1780, %v4797, %v4569
    %v4800 = vsel %vm1779, %v4798, %v4570
    %v4801 = vsel %vm1780, %v4793, %v4571
    %v4802 = vsel %vm1779, %v4794, %v4572
    %v4803 = vsel %vm1780, %v4797, 0.0
    %v4804 = vsel %vm1779, %v4798, 0.0
    %4805 = vst [vmem:[#allocation3 + $0x40] sm:$0xff] %v4803
    %4806 = vst [vmem:[#allocation3 + $0x38] sm:$0xff] %v4804
    %v4807 = vsel %vm1061, %v4799, 0.0
    %v4808 = vsel %vm1062, %v4800, 0.0
    %v4809 = vsel %vm1061, 0.0, %v4799
    %v4810 = vsel %vm1062, 0.0, %v4800
    %v4811 = vld [vmem:[#allocation2 + $0x140] sm:$0xff]
    %v4812 = vld [vmem:[#allocation2 + $0x148] sm:$0xff]
    %v4813 = vld [vmem:[#allocation2 + $0x150] sm:$0xff]
    %v4814 = vld [vmem:[#allocation2 + $0x158] sm:$0xff]
    %v4815 = vld [vmem:[#allocation2 + $0xa0] sm:$0xff]
    %v4816 = vld [vmem:[#allocation2 + $0xa8] sm:$0xff]
    %v4817 = vld [vmem:[#allocation2 + $0xb0] sm:$0xff]
    %v4818 = vld [vmem:[#allocation2 + $0xb8] sm:$0xff]
    %4819 = vmatprep.subr.mxu0 %v3536
    %4820 = vmatpush1.msra.mxu0 %v3535
    %4821 = vmatprep.subr.mxu0 %v3540
    %4822 = vmatpush1.msra.mxu0 %v3539
    %4823 = vmatprep.subr.mxu0 %v3544
    %4824 = vmatpush1.msra.mxu0 %v3543
    %4825 = vmatprep.subr.mxu0 %v3548
    %4826 = vmatpush1.msra.mxu0 %v3547
    %4827 = vmatprep.subr.mxu0 %v3552
    %4828 = vmatpush1.msra.mxu0 %v3551
    %4829 = vmatprep.subr.mxu0 %v3556
    %4830 = vmatpush1.msra.mxu0 %v3555
    %4831 = vmatprep.subr.mxu0 %v3560
    %4832 = vmatpush1.msra.mxu0 %v3559
    %4833 = vmatprep.subr.mxu0 %v3564
    %4834 = vmatpush1.msra.mxu0 %v3563
    %4835 = vmatprep.subr.mxu0 %v3568
    %4836 = vmatpush1.msra.mxu0 %v3567
    %4837 = vmatprep.subr.mxu0 %v3572
    %4838 = vmatpush1.msra.mxu0 %v3571
    %4839 = vmatprep.subr.mxu0 %v3576
    %4840 = vmatpush1.msra.mxu0 %v3575
    %4841 = vmatprep.subr.mxu0 %v3580
    %4842 = vmatpush1.msra.mxu0 %v3579
    %4843 = vmatprep.subr.mxu0 %v3584
    %4844 = vmatpush1.msra.mxu0 %v3583
    %4845 = vmatprep.subr.mxu0 %v3588
    %4846 = vmatpush1.msra.mxu0 %v3587
    %4847 = vmatprep.subr.mxu0 %v3592
    %4848 = vmatpush1.msra.mxu0 %v3591
    %4849 = vmatprep.subr.mxu0 %v3596
    %4850 = vmatpush1.msra.mxu0 %v3595
    %4851 = vmatprep.subr.mxu0 %v3600
    %4852 = vmatpush1.msra.mxu0 %v3599
    %4853 = vmatprep.subr.mxu0 %v3604
    %4854 = vmatpush1.msra.mxu0 %v3603
    %4855 = vmatprep.subr.mxu0 %v3608
    %4856 = vmatpush1.msra.mxu0 %v3607
    %4857 = vmatprep.subr.mxu0 %v3612
    %4858 = vmatpush1.msra.mxu0 %v3611
    %4859 = vmatprep.subr.mxu0 %v3616
    %4860 = vmatpush1.msra.mxu0 %v3615
    %4861 = vmatprep.subr.mxu0 %v3620
    %4862 = vmatpush1.msra.mxu0 %v3619
    %4863 = vmatprep.subr.mxu0 %v3624
    %4864 = vmatpush1.msra.mxu0 %v3623
    %4865 = vmatprep.subr.mxu0 %v3628
    %4866 = vmatpush1.msra.mxu0 %v3627
    %4867 = vmatprep.subr.mxu0 %v3632
    %4868 = vmatpush1.msra.mxu0 %v3631
    %4869 = vmatprep.subr.mxu0 %v3636
    %4870 = vmatpush1.msra.mxu0 %v3635
    %4871 = vmatprep.subr.mxu0 %v3640
    %4872 = vmatpush1.msra.mxu0 %v3639
    %4873 = vmatprep.subr.mxu0 %v3644
    %4874 = vmatpush1.msra.mxu0 %v3643
    %4875 = vmatprep.subr.mxu0 %v3648
    %4876 = vmatpush1.msra.mxu0 %v3647
    %4877 = vmatprep.subr.mxu0 %v3652
    %4878 = vmatpush1.msra.mxu0 %v3651
    %4879 = vmatprep.subr.mxu0 %v3656
    %4880 = vmatpush1.msra.mxu0 %v3655
    %4881 = vmatprep.subr.mxu0 %v3660
    %4882 = vmatpush1.msra.mxu0 %v3659
    %4883 = vmatprep.mubr.f32.mxu0 %v4809
    %4884 = vmatmul.mubr.f32.gmra.mrb[0].mxu0 %v4807
    %v4885 = vpop.f32.mrb[0].mxu0
    %v4886 = vadd.f32 0.0, %v4885
    %v4887 = vpop.f32.mrb[0].mxu0
    %v4888 = vadd.f32 0.0, %v4887
    %4889 = vmatprep.mubr.f32.mxu0 %v4810
    %4890 = vmatmul.mubr.f32.gmra.mrb[0].mxu0 %v4808
    %v4891 = vpop.f32.mrb[0].mxu0
    %v4892 = vadd.f32 0.0, %v4891
    %v4893 = vpop.f32.mrb[0].mxu0
    %v4894 = vadd.f32 0.0, %v4893
    %4895 = vdwg.mxu0
    %4896 = vmatprep.subr.mxu0 %v3538
    %4897 = vmatpush1.msra.mxu0 %v3537
    %4898 = vmatprep.subr.mxu0 %v3542
    %4899 = vmatpush1.msra.mxu0 %v3541
    %4900 = vmatprep.subr.mxu0 %v3546
    %4901 = vmatpush1.msra.mxu0 %v3545
    %4902 = vmatprep.subr.mxu0 %v3550
    %4903 = vmatpush1.msra.mxu0 %v3549
    %4904 = vmatprep.subr.mxu0 %v3554
    %4905 = vmatpush1.msra.mxu0 %v3553
    %4906 = vmatprep.subr.mxu0 %v3558
    %4907 = vmatpush1.msra.mxu0 %v3557
    %4908 = vmatprep.subr.mxu0 %v3562
    %4909 = vmatpush1.msra.mxu0 %v3561
    %4910 = vmatprep.subr.mxu0 %v3566
    %4911 = vmatpush1.msra.mxu0 %v3565
    %4912 = vmatprep.subr.mxu0 %v3570
    %4913 = vmatpush1.msra.mxu0 %v3569
    %4914 = vmatprep.subr.mxu0 %v3574
    %4915 = vmatpush1.msra.mxu0 %v3573
    %4916 = vmatprep.subr.mxu0 %v3578
    %4917 = vmatpush1.msra.mxu0 %v3577
    %4918 = vmatprep.subr.mxu0 %v3582
    %4919 = vmatpush1.msra.mxu0 %v3581
    %4920 = vmatprep.subr.mxu0 %v3586
    %4921 = vmatpush1.msra.mxu0 %v3585
    %4922 = vmatprep.subr.mxu0 %v3590
    %4923 = vmatpush1.msra.mxu0 %v3589
    %4924 = vmatprep.subr.mxu0 %v3594
    %4925 = vmatpush1.msra.mxu0 %v3593
    %4926 = vmatprep.subr.mxu0 %v3598
    %4927 = vmatpush1.msra.mxu0 %v3597
    %4928 = vmatprep.subr.mxu0 %v3602
    %4929 = vmatpush1.msra.mxu0 %v3601
    %4930 = vmatprep.subr.mxu0 %v3606
    %4931 = vmatpush1.msra.mxu0 %v3605
    %4932 = vmatprep.subr.mxu0 %v3610
    %4933 = vmatpush1.msra.mxu0 %v3609
    %4934 = vmatprep.subr.mxu0 %v3614
    %4935 = vmatpush1.msra.mxu0 %v3613
    %4936 = vmatprep.subr.mxu0 %v3618
    %4937 = vmatpush1.msra.mxu0 %v3617
    %4938 = vmatprep.subr.mxu0 %v3622
    %4939 = vmatpush1.msra.mxu0 %v3621
    %4940 = vmatprep.subr.mxu0 %v3626
    %4941 = vmatpush1.msra.mxu0 %v3625
    %4942 = vmatprep.subr.mxu0 %v3630
    %4943 = vmatpush1.msra.mxu0 %v3629
    %4944 = vmatprep.subr.mxu0 %v3634
    %4945 = vmatpush1.msra.mxu0 %v3633
    %4946 = vmatprep.subr.mxu0 %v3638
    %4947 = vmatpush1.msra.mxu0 %v3637
    %4948 = vmatprep.subr.mxu0 %v3642
    %4949 = vmatpush1.msra.mxu0 %v3641
    %4950 = vmatprep.subr.mxu0 %v3646
    %4951 = vmatpush1.msra.mxu0 %v3645
    %4952 = vmatprep.subr.mxu0 %v3650
    %4953 = vmatpush1.msra.mxu0 %v3649
    %4954 = vmatprep.subr.mxu0 %v3654
    %4955 = vmatpush1.msra.mxu0 %v3653
    %4956 = vmatprep.subr.mxu0 %v3658
    %4957 = vmatpush1.msra.mxu0 %v3657
    %4958 = vmatprep.subr.mxu0 %v3662
    %4959 = vmatpush1.msra.mxu0 %v3661
    %4960 = vmatprep.mubr.f32.mxu0 %v4809
    %4961 = vmatmul.mubr.f32.gmra.mrb[0].mxu0 %v4807
    %v4962 = vpop.f32.mrb[0].mxu0
    %v4963 = vadd.f32 0.0, %v4962
    %v4964 = vpop.f32.mrb[0].mxu0
    %v4965 = vadd.f32 0.0, %v4964
    %4966 = vmatprep.mubr.f32.mxu0 %v4810
    %4967 = vmatmul.mubr.f32.gmra.mrb[0].mxu0 %v4808
    %v4968 = vpop.f32.mrb[0].mxu0
    %v4969 = vadd.f32 0.0, %v4968
    %v4970 = vpop.f32.mrb[0].mxu0
    %v4971 = vadd.f32 0.0, %v4970
    %4972 = vdwg.mxu0
    %v4973 = vadd.f32 %v4811, %v4886
    %v4974 = vadd.f32 %v4812, %v4888
    %v4975 = vadd.f32 %v4813, %v4963
    %v4976 = vadd.f32 %v4814, %v4965
    %v4977 = vadd.f32 %v4815, %v4892
    %v4978 = vadd.f32 %v4816, %v4894
    %v4979 = vadd.f32 %v4817, %v4969
    %v4980 = vadd.f32 %v4818, %v4971
    %v4981 = vxor.u32 %v4973, 2147483648
    %v4982 = vxor.u32 %v4974, 2147483648
    %v4983 = vxor.u32 %v4975, 2147483648
    %v4984 = vxor.u32 %v4977, 2147483648
    %v4985 = vxor.u32 %v4978, 2147483648
    %v4986 = vxor.u32 %v4979, 2147483648
    %v4987 = vmul.f32 %v4981, 1.442695
    %v4988 = vpow.pop %v4987
    %v4989 = vmul.f32 %v4982, 1.442695
    %v4990 = vpow.pop %v4989
    %v4991 = vmul.f32 %v4983, 1.442695
    %v4992 = vpow.pop %v4991
    %v4993 = vmul.f32 %v4984, 1.442695
    %v4994 = vpow.pop %v4993
    %v4995 = vmul.f32 %v4985, 1.442695
    %v4996 = vpow.pop %v4995
    %v4997 = vmul.f32 %v4986, 1.442695
    %v4998 = vpow.pop %v4997
    %v4999 = vadd.f32 %v4988, 1.0
    %v5000 = vadd.f32 %v4990, 1.0
    %v5001 = vadd.f32 %v4992, 1.0
    %v5002 = vadd.f32 %v4994, 1.0
    %v5003 = vadd.f32 %v4996, 1.0
    %v5004 = vadd.f32 %v4998, 1.0
    %v5005 = vrcp.pop %v4999
    %v5006 = vmul.f32 1.0, %v5005
    %v5007 = vrcp.pop %v5000
    %v5008 = vmul.f32 1.0, %v5007
    %v5009 = vrcp.pop %v5001
    %v5010 = vmul.f32 1.0, %v5009
    %v5011 = vrcp.pop %v5002
    %v5012 = vmul.f32 1.0, %v5011
    %v5013 = vrcp.pop %v5003
    %v5014 = vmul.f32 1.0, %v5013
    %v5015 = vrcp.pop %v5004
    %v5016 = vmul.f32 1.0, %v5015
    %v5017 = vtanh.pop %v4976
    %v5018 = vtanh.pop %v4980
    %v5019 = vmul.f32 %v5008, %v4801
    %v5020 = vmul.f32 %v5014, %v4802
    %v5021 = vmul.f32 %v5006, %v5017
    %v5022 = vmul.f32 %v5012, %v5018
    %v5023 = vadd.f32 %v5019, %v5021
    %v5024 = vadd.f32 %v5020, %v5022
    %v5025 = vtanh.pop %v5023
    %v5026 = vtanh.pop %v5024
    %v5027 = vmul.f32 %v5010, %v5025
    %v5028 = vmul.f32 %v5016, %v5026
    %v5029 = vsel %vm1538, %v5027, %v4799
    %v5030 = vsel %vm1537, %v5028, %v4800
    %v5031 = vsel %vm1538, %v5023, %v4801
    %v5032 = vsel %vm1537, %v5024, %v4802
    %v5033 = vsel %vm1538, %v5027, 0.0
    %v5034 = vsel %vm1537, %v5028, 0.0
    %5035 = vst [vmem:[#allocation3 + $0x50] sm:$0xff] %v5033
    %5036 = vst [vmem:[#allocation3 + $0x28] sm:$0xff] %v5034
    %v5037 = vsel %vm1061, %v5029, 0.0
    %v5038 = vsel %vm1062, %v5030, 0.0
    %v5039 = vsel %vm1061, 0.0, %v5029
    %v5040 = vsel %vm1062, 0.0, %v5030
    %v5041 = vld [vmem:[#allocation2 + $0x180] sm:$0xff]
    %v5042 = vld [vmem:[#allocation2 + $0x188] sm:$0xff]
    %v5043 = vld [vmem:[#allocation2 + $0x190] sm:$0xff]
    %v5044 = vld [vmem:[#allocation2 + $0x198] sm:$0xff]
    %v5045 = vld [vmem:[#allocation2 + $0x60] sm:$0xff]
    %v5046 = vld [vmem:[#allocation2 + $0x68] sm:$0xff]
    %v5047 = vld [vmem:[#allocation2 + $0x70] sm:$0xff]
    %v5048 = vld [vmem:[#allocation2 + $0x78] sm:$0xff]
    %5049 = vmatprep.subr.mxu0 %v3536
    %5050 = vmatpush1.msra.mxu0 %v3535
    %5051 = vmatprep.subr.mxu0 %v3540
    %5052 = vmatpush1.msra.mxu0 %v3539
    %5053 = vmatprep.subr.mxu0 %v3544
    %5054 = vmatpush1.msra.mxu0 %v3543
    %5055 = vmatprep.subr.mxu0 %v3548
    %5056 = vmatpush1.msra.mxu0 %v3547
    %5057 = vmatprep.subr.mxu0 %v3552
    %5058 = vmatpush1.msra.mxu0 %v3551
    %5059 = vmatprep.subr.mxu0 %v3556
    %5060 = vmatpush1.msra.mxu0 %v3555
    %5061 = vmatprep.subr.mxu0 %v3560
    %5062 = vmatpush1.msra.mxu0 %v3559
    %5063 = vmatprep.subr.mxu0 %v3564
    %5064 = vmatpush1.msra.mxu0 %v3563
    %5065 = vmatprep.subr.mxu0 %v3568
    %5066 = vmatpush1.msra.mxu0 %v3567
    %5067 = vmatprep.subr.mxu0 %v3572
    %5068 = vmatpush1.msra.mxu0 %v3571
    %5069 = vmatprep.subr.mxu0 %v3576
    %5070 = vmatpush1.msra.mxu0 %v3575
    %5071 = vmatprep.subr.mxu0 %v3580
    %5072 = vmatpush1.msra.mxu0 %v3579
    %5073 = vmatprep.subr.mxu0 %v3584
    %5074 = vmatpush1.msra.mxu0 %v3583
    %5075 = vmatprep.subr.mxu0 %v3588
    %5076 = vmatpush1.msra.mxu0 %v3587
    %5077 = vmatprep.subr.mxu0 %v3592
    %5078 = vmatpush1.msra.mxu0 %v3591
    %5079 = vmatprep.subr.mxu0 %v3596
    %5080 = vmatpush1.msra.mxu0 %v3595
    %5081 = vmatprep.subr.mxu0 %v3600
    %5082 = vmatpush1.msra.mxu0 %v3599
    %5083 = vmatprep.subr.mxu0 %v3604
    %5084 = vmatpush1.msra.mxu0 %v3603
    %5085 = vmatprep.subr.mxu0 %v3608
    %5086 = vmatpush1.msra.mxu0 %v3607
    %5087 = vmatprep.subr.mxu0 %v3612
    %5088 = vmatpush1.msra.mxu0 %v3611
    %5089 = vmatprep.subr.mxu0 %v3616
    %5090 = vmatpush1.msra.mxu0 %v3615
    %5091 = vmatprep.subr.mxu0 %v3620
    %5092 = vmatpush1.msra.mxu0 %v3619
    %5093 = vmatprep.subr.mxu0 %v3624
    %5094 = vmatpush1.msra.mxu0 %v3623
    %5095 = vmatprep.subr.mxu0 %v3628
    %5096 = vmatpush1.msra.mxu0 %v3627
    %5097 = vmatprep.subr.mxu0 %v3632
    %5098 = vmatpush1.msra.mxu0 %v3631
    %5099 = vmatprep.subr.mxu0 %v3636
    %5100 = vmatpush1.msra.mxu0 %v3635
    %5101 = vmatprep.subr.mxu0 %v3640
    %5102 = vmatpush1.msra.mxu0 %v3639
    %5103 = vmatprep.subr.mxu0 %v3644
    %5104 = vmatpush1.msra.mxu0 %v3643
    %5105 = vmatprep.subr.mxu0 %v3648
    %5106 = vmatpush1.msra.mxu0 %v3647
    %5107 = vmatprep.subr.mxu0 %v3652
    %5108 = vmatpush1.msra.mxu0 %v3651
    %5109 = vmatprep.subr.mxu0 %v3656
    %5110 = vmatpush1.msra.mxu0 %v3655
    %5111 = vmatprep.subr.mxu0 %v3660
    %5112 = vmatpush1.msra.mxu0 %v3659
    %5113 = vmatprep.mubr.f32.mxu0 %v5039
    %5114 = vmatmul.mubr.f32.gmra.mrb[0].mxu0 %v5037
    %v5115 = vpop.f32.mrb[0].mxu0
    %v5116 = vadd.f32 0.0, %v5115
    %v5117 = vpop.f32.mrb[0].mxu0
    %v5118 = vadd.f32 0.0, %v5117
    %5119 = vmatprep.mubr.f32.mxu0 %v5040
    %5120 = vmatmul.mubr.f32.gmra.mrb[0].mxu0 %v5038
    %v5121 = vpop.f32.mrb[0].mxu0
    %v5122 = vadd.f32 0.0, %v5121
    %v5123 = vpop.f32.mrb[0].mxu0
    %v5124 = vadd.f32 0.0, %v5123
    %5125 = vdwg.mxu0
    %5126 = vmatprep.subr.mxu0 %v3538
    %5127 = vmatpush1.msra.mxu0 %v3537
    %5128 = vmatprep.subr.mxu0 %v3542
    %5129 = vmatpush1.msra.mxu0 %v3541
    %5130 = vmatprep.subr.mxu0 %v3546
    %5131 = vmatpush1.msra.mxu0 %v3545
    %5132 = vmatprep.subr.mxu0 %v3550
    %5133 = vmatpush1.msra.mxu0 %v3549
    %5134 = vmatprep.subr.mxu0 %v3554
    %5135 = vmatpush1.msra.mxu0 %v3553
    %5136 = vmatprep.subr.mxu0 %v3558
    %5137 = vmatpush1.msra.mxu0 %v3557
    %5138 = vmatprep.subr.mxu0 %v3562
    %5139 = vmatpush1.msra.mxu0 %v3561
    %5140 = vmatprep.subr.mxu0 %v3566
    %5141 = vmatpush1.msra.mxu0 %v3565
    %5142 = vmatprep.subr.mxu0 %v3570
    %5143 = vmatpush1.msra.mxu0 %v3569
    %5144 = vmatprep.subr.mxu0 %v3574
    %5145 = vmatpush1.msra.mxu0 %v3573
    %5146 = vmatprep.subr.mxu0 %v3578
    %5147 = vmatpush1.msra.mxu0 %v3577
    %5148 = vmatprep.subr.mxu0 %v3582
    %5149 = vmatpush1.msra.mxu0 %v3581
    %5150 = vmatprep.subr.mxu0 %v3586
    %5151 = vmatpush1.msra.mxu0 %v3585
    %5152 = vmatprep.subr.mxu0 %v3590
    %5153 = vmatpush1.msra.mxu0 %v3589
    %5154 = vmatprep.subr.mxu0 %v3594
    %5155 = vmatpush1.msra.mxu0 %v3593
    %5156 = vmatprep.subr.mxu0 %v3598
    %5157 = vmatpush1.msra.mxu0 %v3597
    %5158 = vmatprep.subr.mxu0 %v3602
    %5159 = vmatpush1.msra.mxu0 %v3601
    %5160 = vmatprep.subr.mxu0 %v3606
    %5161 = vmatpush1.msra.mxu0 %v3605
    %5162 = vmatprep.subr.mxu0 %v3610
    %5163 = vmatpush1.msra.mxu0 %v3609
    %5164 = vmatprep.subr.mxu0 %v3614
    %5165 = vmatpush1.msra.mxu0 %v3613
    %5166 = vmatprep.subr.mxu0 %v3618
    %5167 = vmatpush1.msra.mxu0 %v3617
    %5168 = vmatprep.subr.mxu0 %v3622
    %5169 = vmatpush1.msra.mxu0 %v3621
    %5170 = vmatprep.subr.mxu0 %v3626
    %5171 = vmatpush1.msra.mxu0 %v3625
    %5172 = vmatprep.subr.mxu0 %v3630
    %5173 = vmatpush1.msra.mxu0 %v3629
    %5174 = vmatprep.subr.mxu0 %v3634
    %5175 = vmatpush1.msra.mxu0 %v3633
    %5176 = vmatprep.subr.mxu0 %v3638
    %5177 = vmatpush1.msra.mxu0 %v3637
    %5178 = vmatprep.subr.mxu0 %v3642
    %5179 = vmatpush1.msra.mxu0 %v3641
    %5180 = vmatprep.subr.mxu0 %v3646
    %5181 = vmatpush1.msra.mxu0 %v3645
    %5182 = vmatprep.subr.mxu0 %v3650
    %5183 = vmatpush1.msra.mxu0 %v3649
    %5184 = vmatprep.subr.mxu0 %v3654
    %5185 = vmatpush1.msra.mxu0 %v3653
    %5186 = vmatprep.subr.mxu0 %v3658
    %5187 = vmatpush1.msra.mxu0 %v3657
    %5188 = vmatprep.subr.mxu0 %v3662
    %5189 = vmatpush1.msra.mxu0 %v3661
    %5190 = vmatprep.mubr.f32.mxu0 %v5039
    %5191 = vmatmul.mubr.f32.gmra.mrb[0].mxu0 %v5037
    %v5192 = vpop.f32.mrb[0].mxu0
    %v5193 = vadd.f32 0.0, %v5192
    %v5194 = vpop.f32.mrb[0].mxu0
    %v5195 = vadd.f32 0.0, %v5194
    %5196 = vmatprep.mubr.f32.mxu0 %v5040
    %5197 = vmatmul.mubr.f32.gmra.mrb[0].mxu0 %v5038
    %v5198 = vpop.f32.mrb[0].mxu0
    %v5199 = vadd.f32 0.0, %v5198
    %v5200 = vpop.f32.mrb[0].mxu0
    %v5201 = vadd.f32 0.0, %v5200
    %5202 = vdwg.mxu0
    %v5203 = vadd.f32 %v5041, %v5116
    %v5204 = vadd.f32 %v5042, %v5118
    %v5205 = vadd.f32 %v5043, %v5193
    %v5206 = vadd.f32 %v5044, %v5195
    %v5207 = vadd.f32 %v5045, %v5122
    %v5208 = vadd.f32 %v5046, %v5124
    %v5209 = vadd.f32 %v5047, %v5199
    %v5210 = vadd.f32 %v5048, %v5201
    %v5211 = vxor.u32 %v5203, 2147483648
    %v5212 = vxor.u32 %v5204, 2147483648
    %v5213 = vxor.u32 %v5205, 2147483648
    %v5214 = vxor.u32 %v5207, 2147483648
    %v5215 = vxor.u32 %v5208, 2147483648
    %v5216 = vxor.u32 %v5209, 2147483648
    %v5217 = vmul.f32 %v5211, 1.442695
    %v5218 = vpow.pop %v5217
    %v5219 = vmul.f32 %v5212, 1.442695
    %v5220 = vpow.pop %v5219
    %v5221 = vmul.f32 %v5213, 1.442695
    %v5222 = vpow.pop %v5221
    %v5223 = vmul.f32 %v5214, 1.442695
    %v5224 = vpow.pop %v5223
    %v5225 = vmul.f32 %v5215, 1.442695
    %v5226 = vpow.pop %v5225
    %v5227 = vmul.f32 %v5216, 1.442695
    %v5228 = vpow.pop %v5227
    %v5229 = vadd.f32 %v5218, 1.0
    %v5230 = vadd.f32 %v5220, 1.0
    %v5231 = vadd.f32 %v5222, 1.0
    %v5232 = vadd.f32 %v5224, 1.0
    %v5233 = vadd.f32 %v5226, 1.0
    %v5234 = vadd.f32 %v5228, 1.0
    %v5235 = vrcp.pop %v5229
    %v5236 = vmul.f32 1.0, %v5235
    %v5237 = vrcp.pop %v5230
    %v5238 = vmul.f32 1.0, %v5237
    %v5239 = vrcp.pop %v5231
    %v5240 = vmul.f32 1.0, %v5239
    %v5241 = vrcp.pop %v5232
    %v5242 = vmul.f32 1.0, %v5241
    %v5243 = vrcp.pop %v5233
    %v5244 = vmul.f32 1.0, %v5243
    %v5245 = vrcp.pop %v5234
    %v5246 = vmul.f32 1.0, %v5245
    %v5247 = vtanh.pop %v5206
    %v5248 = vtanh.pop %v5210
    %v5249 = vmul.f32 %v5238, %v5031
    %v5250 = vmul.f32 %v5244, %v5032
    %v5251 = vmul.f32 %v5236, %v5247
    %v5252 = vmul.f32 %v5242, %v5248
    %v5253 = vadd.f32 %v5249, %v5251
    %v5254 = vadd.f32 %v5250, %v5252
    %v5255 = vtanh.pop %v5253
    %v5256 = vtanh.pop %v5254
    %v5257 = vmul.f32 %v5240, %v5255
    %v5258 = vmul.f32 %v5246, %v5256
    %v5259 = vsel %vm1296, %v5257, %v5029
    %v5260 = vsel %vm1295, %v5258, %v5030
    %v5261 = vsel %vm1296, %v5253, %v5031
    %v5262 = vsel %vm1295, %v5254, %v5032
    %v5263 = vsel %vm1296, %v5257, 0.0
    %v5264 = vsel %vm1295, %v5258, 0.0
    %5265 = vst [vmem:[#allocation3 + $0x60] sm:$0xff] %v5263
    %5266 = vst [vmem:[#allocation3 + $0x18] sm:$0xff] %v5264
    %v5267 = vsel %vm1061, %v5259, 0.0
    %v5268 = vsel %vm1062, %v5260, 0.0
    %v5269 = vsel %vm1061, 0.0, %v5259
    %v5270 = vsel %vm1062, 0.0, %v5260
    %v5271 = vld [vmem:[#allocation2 + $0x1c0] sm:$0xff]
    %v5272 = vld [vmem:[#allocation2 + $0x1c8] sm:$0xff]
    %v5273 = vld [vmem:[#allocation2 + $0x1d0] sm:$0xff]
    %v5274 = vld [vmem:[#allocation2 + $0x1d8] sm:$0xff]
    %v5275 = vld [vmem:[#allocation2 + $0x20] sm:$0xff]
    %v5276 = vld [vmem:[#allocation2 + $0x28] sm:$0xff]
    %v5277 = vld [vmem:[#allocation2 + $0x30] sm:$0xff]
    %v5278 = vld [vmem:[#allocation2 + $0x38] sm:$0xff]
    %5279 = vmatprep.subr.mxu0 %v3536
    %5280 = vmatpush1.msra.mxu0 %v3535
    %5281 = vmatprep.subr.mxu0 %v3540
    %5282 = vmatpush1.msra.mxu0 %v3539
    %5283 = vmatprep.subr.mxu0 %v3544
    %5284 = vmatpush1.msra.mxu0 %v3543
    %5285 = vmatprep.subr.mxu0 %v3548
    %5286 = vmatpush1.msra.mxu0 %v3547
    %5287 = vmatprep.subr.mxu0 %v3552
    %5288 = vmatpush1.msra.mxu0 %v3551
    %5289 = vmatprep.subr.mxu0 %v3556
    %5290 = vmatpush1.msra.mxu0 %v3555
    %5291 = vmatprep.subr.mxu0 %v3560
    %5292 = vmatpush1.msra.mxu0 %v3559
    %5293 = vmatprep.subr.mxu0 %v3564
    %5294 = vmatpush1.msra.mxu0 %v3563
    %5295 = vmatprep.subr.mxu0 %v3568
    %5296 = vmatpush1.msra.mxu0 %v3567
    %5297 = vmatprep.subr.mxu0 %v3572
    %5298 = vmatpush1.msra.mxu0 %v3571
    %5299 = vmatprep.subr.mxu0 %v3576
    %5300 = vmatpush1.msra.mxu0 %v3575
    %5301 = vmatprep.subr.mxu0 %v3580
    %5302 = vmatpush1.msra.mxu0 %v3579
    %5303 = vmatprep.subr.mxu0 %v3584
    %5304 = vmatpush1.msra.mxu0 %v3583
    %5305 = vmatprep.subr.mxu0 %v3588
    %5306 = vmatpush1.msra.mxu0 %v3587
    %5307 = vmatprep.subr.mxu0 %v3592
    %5308 = vmatpush1.msra.mxu0 %v3591
    %5309 = vmatprep.subr.mxu0 %v3596
    %5310 = vmatpush1.msra.mxu0 %v3595
    %5311 = vmatprep.subr.mxu0 %v3600
    %5312 = vmatpush1.msra.mxu0 %v3599
    %5313 = vmatprep.subr.mxu0 %v3604
    %5314 = vmatpush1.msra.mxu0 %v3603
    %5315 = vmatprep.subr.mxu0 %v3608
    %5316 = vmatpush1.msra.mxu0 %v3607
    %5317 = vmatprep.subr.mxu0 %v3612
    %5318 = vmatpush1.msra.mxu0 %v3611
    %5319 = vmatprep.subr.mxu0 %v3616
    %5320 = vmatpush1.msra.mxu0 %v3615
    %5321 = vmatprep.subr.mxu0 %v3620
    %5322 = vmatpush1.msra.mxu0 %v3619
    %5323 = vmatprep.subr.mxu0 %v3624
    %5324 = vmatpush1.msra.mxu0 %v3623
    %5325 = vmatprep.subr.mxu0 %v3628
    %5326 = vmatpush1.msra.mxu0 %v3627
    %5327 = vmatprep.subr.mxu0 %v3632
    %5328 = vmatpush1.msra.mxu0 %v3631
    %5329 = vmatprep.subr.mxu0 %v3636
    %5330 = vmatpush1.msra.mxu0 %v3635
    %5331 = vmatprep.subr.mxu0 %v3640
    %5332 = vmatpush1.msra.mxu0 %v3639
    %5333 = vmatprep.subr.mxu0 %v3644
    %5334 = vmatpush1.msra.mxu0 %v3643
    %5335 = vmatprep.subr.mxu0 %v3648
    %5336 = vmatpush1.msra.mxu0 %v3647
    %5337 = vmatprep.subr.mxu0 %v3652
    %5338 = vmatpush1.msra.mxu0 %v3651
    %5339 = vmatprep.subr.mxu0 %v3656
    %5340 = vmatpush1.msra.mxu0 %v3655
    %5341 = vmatprep.subr.mxu0 %v3660
    %5342 = vmatpush1.msra.mxu0 %v3659
    %5343 = vmatprep.mubr.f32.mxu0 %v5269
    %5344 = vmatmul.mubr.f32.gmra.mrb[0].mxu0 %v5267
    %v5345 = vpop.f32.mrb[0].mxu0
    %v5346 = vadd.f32 0.0, %v5345
    %v5347 = vpop.f32.mrb[0].mxu0
    %v5348 = vadd.f32 0.0, %v5347
    %5349 = vmatprep.mubr.f32.mxu0 %v5270
    %5350 = vmatmul.mubr.f32.gmra.mrb[0].mxu0 %v5268
    %v5351 = vpop.f32.mrb[0].mxu0
    %v5352 = vadd.f32 0.0, %v5351
    %v5353 = vpop.f32.mrb[0].mxu0
    %v5354 = vadd.f32 0.0, %v5353
    %5355 = vdwg.mxu0
    %5356 = vmatprep.subr.mxu0 %v3538
    %5357 = vmatpush1.msra.mxu0 %v3537
    %5358 = vmatprep.subr.mxu0 %v3542
    %5359 = vmatpush1.msra.mxu0 %v3541
    %5360 = vmatprep.subr.mxu0 %v3546
    %5361 = vmatpush1.msra.mxu0 %v3545
    %5362 = vmatprep.subr.mxu0 %v3550
    %5363 = vmatpush1.msra.mxu0 %v3549
    %5364 = vmatprep.subr.mxu0 %v3554
    %5365 = vmatpush1.msra.mxu0 %v3553
    %5366 = vmatprep.subr.mxu0 %v3558
    %5367 = vmatpush1.msra.mxu0 %v3557
    %5368 = vmatprep.subr.mxu0 %v3562
    %5369 = vmatpush1.msra.mxu0 %v3561
    %5370 = vmatprep.subr.mxu0 %v3566
    %5371 = vmatpush1.msra.mxu0 %v3565
    %5372 = vmatprep.subr.mxu0 %v3570
    %5373 = vmatpush1.msra.mxu0 %v3569
    %5374 = vmatprep.subr.mxu0 %v3574
    %5375 = vmatpush1.msra.mxu0 %v3573
    %5376 = vmatprep.subr.mxu0 %v3578
    %5377 = vmatpush1.msra.mxu0 %v3577
    %5378 = vmatprep.subr.mxu0 %v3582
    %5379 = vmatpush1.msra.mxu0 %v3581
    %5380 = vmatprep.subr.mxu0 %v3586
    %5381 = vmatpush1.msra.mxu0 %v3585
    %5382 = vmatprep.subr.mxu0 %v3590
    %5383 = vmatpush1.msra.mxu0 %v3589
    %5384 = vmatprep.subr.mxu0 %v3594
    %5385 = vmatpush1.msra.mxu0 %v3593
    %5386 = vmatprep.subr.mxu0 %v3598
    %5387 = vmatpush1.msra.mxu0 %v3597
    %5388 = vmatprep.subr.mxu0 %v3602
    %5389 = vmatpush1.msra.mxu0 %v3601
    %5390 = vmatprep.subr.mxu0 %v3606
    %5391 = vmatpush1.msra.mxu0 %v3605
    %5392 = vmatprep.subr.mxu0 %v3610
    %5393 = vmatpush1.msra.mxu0 %v3609
    %5394 = vmatprep.subr.mxu0 %v3614
    %5395 = vmatpush1.msra.mxu0 %v3613
    %5396 = vmatprep.subr.mxu0 %v3618
    %5397 = vmatpush1.msra.mxu0 %v3617
    %5398 = vmatprep.subr.mxu0 %v3622
    %5399 = vmatpush1.msra.mxu0 %v3621
    %5400 = vmatprep.subr.mxu0 %v3626
    %5401 = vmatpush1.msra.mxu0 %v3625
    %5402 = vmatprep.subr.mxu0 %v3630
    %5403 = vmatpush1.msra.mxu0 %v3629
    %5404 = vmatprep.subr.mxu0 %v3634
    %5405 = vmatpush1.msra.mxu0 %v3633
    %5406 = vmatprep.subr.mxu0 %v3638
    %5407 = vmatpush1.msra.mxu0 %v3637
    %5408 = vmatprep.subr.mxu0 %v3642
    %5409 = vmatpush1.msra.mxu0 %v3641
    %5410 = vmatprep.subr.mxu0 %v3646
    %5411 = vmatpush1.msra.mxu0 %v3645
    %5412 = vmatprep.subr.mxu0 %v3650
    %5413 = vmatpush1.msra.mxu0 %v3649
    %5414 = vmatprep.subr.mxu0 %v3654
    %5415 = vmatpush1.msra.mxu0 %v3653
    %5416 = vmatprep.subr.mxu0 %v3658
    %5417 = vmatpush1.msra.mxu0 %v3657
    %5418 = vmatprep.subr.mxu0 %v3662
    %5419 = vmatpush1.msra.mxu0 %v3661
    %5420 = vmatprep.mubr.f32.mxu0 %v5269
    %5421 = vmatmul.mubr.f32.gmra.mrb[0].mxu0 %v5267
    %v5422 = vpop.f32.mrb[0].mxu0
    %v5423 = vadd.f32 0.0, %v5422
    %v5424 = vpop.f32.mrb[0].mxu0
    %v5425 = vadd.f32 0.0, %v5424
    %5426 = vmatprep.mubr.f32.mxu0 %v5270
    %5427 = vmatmul.mubr.f32.gmra.mrb[0].mxu0 %v5268
    %v5428 = vpop.f32.mrb[0].mxu0
    %v5429 = vadd.f32 0.0, %v5428
    %v5430 = vpop.f32.mrb[0].mxu0
    %v5431 = vadd.f32 0.0, %v5430
    %5432 = vdwg.mxu0
    %v5433 = vadd.f32 %v5271, %v5346
    %v5434 = vadd.f32 %v5272, %v5348
    %v5435 = vadd.f32 %v5273, %v5423
    %v5436 = vadd.f32 %v5274, %v5425
    %v5437 = vadd.f32 %v5275, %v5352
    %v5438 = vadd.f32 %v5276, %v5354
    %v5439 = vadd.f32 %v5277, %v5429
    %v5440 = vadd.f32 %v5278, %v5431
    %v5441 = vxor.u32 %v5433, 2147483648
    %v5442 = vxor.u32 %v5434, 2147483648
    %v5443 = vxor.u32 %v5435, 2147483648
    %v5444 = vxor.u32 %v5437, 2147483648
    %v5445 = vxor.u32 %v5438, 2147483648
    %v5446 = vxor.u32 %v5439, 2147483648
    %v5447 = vmul.f32 %v5441, 1.442695
    %v5448 = vpow.pop %v5447
    %v5449 = vmul.f32 %v5442, 1.442695
    %v5450 = vpow.pop %v5449
    %v5451 = vmul.f32 %v5443, 1.442695
    %v5452 = vpow.pop %v5451
    %v5453 = vmul.f32 %v5444, 1.442695
    %v5454 = vpow.pop %v5453
    %v5455 = vmul.f32 %v5445, 1.442695
    %v5456 = vpow.pop %v5455
    %v5457 = vmul.f32 %v5446, 1.442695
    %v5458 = vpow.pop %v5457
    %v5459 = vadd.f32 %v5448, 1.0
    %v5460 = vadd.f32 %v5450, 1.0
    %v5461 = vadd.f32 %v5452, 1.0
    %v5462 = vadd.f32 %v5454, 1.0
    %v5463 = vadd.f32 %v5456, 1.0
    %v5464 = vadd.f32 %v5458, 1.0
    %v5465 = vrcp.pop %v5459
    %v5466 = vmul.f32 1.0, %v5465
    %v5467 = vrcp.pop %v5460
    %v5468 = vmul.f32 1.0, %v5467
    %v5469 = vrcp.pop %v5461
    %v5470 = vmul.f32 1.0, %v5469
    %v5471 = vrcp.pop %v5462
    %v5472 = vmul.f32 1.0, %v5471
    %v5473 = vrcp.pop %v5463
    %v5474 = vmul.f32 1.0, %v5473
    %v5475 = vrcp.pop %v5464
    %v5476 = vmul.f32 1.0, %v5475
    %v5477 = vtanh.pop %v5436
    %v5478 = vtanh.pop %v5440
    %v5479 = vmul.f32 %v5468, %v5261
    %v5480 = vmul.f32 %v5474, %v5262
    %v5481 = vmul.f32 %v5466, %v5477
    %v5482 = vmul.f32 %v5472, %v5478
    %v5483 = vadd.f32 %v5479, %v5481
    %v5484 = vadd.f32 %v5480, %v5482
    %v5485 = vtanh.pop %v5483
    %v5486 = vtanh.pop %v5484
    %v5487 = vmul.f32 %v5470, %v5485
    %v5488 = vmul.f32 %v5476, %v5486
    %v5489 = vsel %vm1052, %v5487, 0.0
    %v5490 = vsel %vm1051, %v5488, 0.0
    %5491 = vst [vmem:[#allocation3 + $0x70] sm:$0xff] %v5489
    %5492 = vst [vmem:[#allocation3 + $0x8] sm:$0xff] %v5490
    %v5493 = vld [vmem:[#allocation3] sm:$0xff]
    %v5494 = vld [vmem:[#allocation3 + $0x8] sm:$0xff]
    %v5495 = vld [vmem:[#allocation3 + $0x10] sm:$0xff]
    %v5496 = vld [vmem:[#allocation3 + $0x18] sm:$0xff]
    %v5497 = vld [vmem:[#allocation3 + $0x20] sm:$0xff]
    %v5498 = vld [vmem:[#allocation3 + $0x28] sm:$0xff]
    %v5499 = vld [vmem:[#allocation3 + $0x30] sm:$0xff]
    %v5500 = vld [vmem:[#allocation3 + $0x38] sm:$0xff]
    %v5501 = vld [vmem:[#allocation3 + $0x40] sm:$0xff]
    %v5502 = vld [vmem:[#allocation3 + $0x48] sm:$0xff]
    %v5503 = vld [vmem:[#allocation3 + $0x50] sm:$0xff]
    %v5504 = vld [vmem:[#allocation3 + $0x58] sm:$0xff]
    %v5505 = vld [vmem:[#allocation3 + $0x60] sm:$0xff]
    %v5506 = vld [vmem:[#allocation3 + $0x68] sm:$0xff]
    %v5507 = vld [vmem:[#allocation3 + $0x70] sm:$0xff]
    %v5508 = vld [vmem:[#allocation3 + $0x78] sm:$0xff]
    %v5509 = vld [vmem:[#allocation9] sm:$0xff]
    %v5510 = vld [vmem:[#allocation9 + $0x8] sm:$0xff]
    %v5511 = vld [vmem:[#allocation9 + $0x10] sm:$0xff]
    %v5512 = vld [vmem:[#allocation9 + $0x18] sm:$0xff]
    %v5513 = vld [vmem:[#allocation9 + $0x20] sm:$0xff]
    %v5514 = vld [vmem:[#allocation9 + $0x28] sm:$0xff]
    %v5515 = vld [vmem:[#allocation9 + $0x30] sm:$0xff]
    %v5516 = vld [vmem:[#allocation9 + $0x38] sm:$0xff]
    %v5517 = vld [vmem:[#allocation9 + $0x40] sm:$0xff]
    %v5518 = vld [vmem:[#allocation9 + $0x48] sm:$0xff]
    %v5519 = vld [vmem:[#allocation9 + $0x50] sm:$0xff]
    %v5520 = vld [vmem:[#allocation9 + $0x58] sm:$0xff]
    %v5521 = vld [vmem:[#allocation9 + $0x60] sm:$0xff]
    %v5522 = vld [vmem:[#allocation9 + $0x68] sm:$0xff]
    %v5523 = vld [vmem:[#allocation9 + $0x70] sm:$0xff]
    %v5524 = vld [vmem:[#allocation9 + $0x78] sm:$0xff]
    %v5525 = vld [vmem:[#allocation9 + $0x80] sm:$0xff]
    %v5526 = vld [vmem:[#allocation9 + $0x88] sm:$0xff]
    %v5527 = vld [vmem:[#allocation9 + $0x90] sm:$0xff]
    %v5528 = vld [vmem:[#allocation9 + $0x98] sm:$0xff]
    %v5529 = vld [vmem:[#allocation9 + $0xa0] sm:$0xff]
    %v5530 = vld [vmem:[#allocation9 + $0xa8] sm:$0xff]
    %v5531 = vld [vmem:[#allocation9 + $0xb0] sm:$0xff]
    %v5532 = vld [vmem:[#allocation9 + $0xb8] sm:$0xff]
    %v5533 = vld [vmem:[#allocation9 + $0xc0] sm:$0xff]
    %v5534 = vld [vmem:[#allocation9 + $0xc8] sm:$0xff]
    %v5535 = vld [vmem:[#allocation9 + $0xd0] sm:$0xff]
    %v5536 = vld [vmem:[#allocation9 + $0xd8] sm:$0xff]
    %v5537 = vld [vmem:[#allocation9 + $0xe0] sm:$0xff]
    %v5538 = vld [vmem:[#allocation9 + $0xe8] sm:$0xff]
    %v5539 = vld [vmem:[#allocation9 + $0xf0] sm:$0xff]
    %v5540 = vld [vmem:[#allocation9 + $0xf8] sm:$0xff]
    %v5541 = vld [vmem:[%s9] sm:$0x1]
    %v5543 = vlaneseq
    %v5544 = vshrl.u32 %v5543, 7
    %v5545 = vsub.s32 0, %v5544
    %v5546 = vrot.slane %v5541, %v5545
    %5548 = vmatprep.subr.mxu0 0.0
    %5549 = vmatpush1.msra.mxu0 %v5509
    %5550 = vmatprep.subr.mxu0 0.0
    %5551 = vmatpush1.msra.mxu0 %v5510
    %5552 = vmatprep.subr.mxu0 0.0
    %5553 = vmatpush1.msra.mxu0 %v5511
    %5554 = vmatprep.subr.mxu0 0.0
    %5555 = vmatpush1.msra.mxu0 %v5512
    %5556 = vmatprep.subr.mxu0 0.0
    %5557 = vmatpush1.msra.mxu0 %v5513
    %5558 = vmatprep.subr.mxu0 0.0
    %5559 = vmatpush1.msra.mxu0 %v5514
    %5560 = vmatprep.subr.mxu0 0.0
    %5561 = vmatpush1.msra.mxu0 %v5515
    %5562 = vmatprep.subr.mxu0 0.0
    %5563 = vmatpush1.msra.mxu0 %v5516
    %5564 = vmatprep.subr.mxu0 0.0
    %5565 = vmatpush1.msra.mxu0 %v5517
    %5566 = vmatprep.subr.mxu0 0.0
    %5567 = vmatpush1.msra.mxu0 %v5518
    %5568 = vmatprep.subr.mxu0 0.0
    %5569 = vmatpush1.msra.mxu0 %v5519
    %5570 = vmatprep.subr.mxu0 0.0
    %5571 = vmatpush1.msra.mxu0 %v5520
    %5572 = vmatprep.subr.mxu0 0.0
    %5573 = vmatpush1.msra.mxu0 %v5521
    %5574 = vmatprep.subr.mxu0 0.0
    %5575 = vmatpush1.msra.mxu0 %v5522
    %5576 = vmatprep.subr.mxu0 0.0
    %5577 = vmatpush1.msra.mxu0 %v5523
    %5578 = vmatprep.subr.mxu0 0.0
    %5579 = vmatpush1.msra.mxu0 %v5524
    %5580 = vmatprep.subr.mxu0 0.0
    %5581 = vmatpush1.msra.mxu0 %v5525
    %5582 = vmatprep.subr.mxu0 0.0
    %5583 = vmatpush1.msra.mxu0 %v5526
    %5584 = vmatprep.subr.mxu0 0.0
    %5585 = vmatpush1.msra.mxu0 %v5527
    %5586 = vmatprep.subr.mxu0 0.0
    %5587 = vmatpush1.msra.mxu0 %v5528
    %5588 = vmatprep.subr.mxu0 0.0
    %5589 = vmatpush1.msra.mxu0 %v5529
    %5590 = vmatprep.subr.mxu0 0.0
    %5591 = vmatpush1.msra.mxu0 %v5530
    %5592 = vmatprep.subr.mxu0 0.0
    %5593 = vmatpush1.msra.mxu0 %v5531
    %5594 = vmatprep.subr.mxu0 0.0
    %5595 = vmatpush1.msra.mxu0 %v5532
    %5596 = vmatprep.subr.mxu0 0.0
    %5597 = vmatpush1.msra.mxu0 %v5533
    %5598 = vmatprep.subr.mxu0 0.0
    %5599 = vmatpush1.msra.mxu0 %v5534
    %5600 = vmatprep.subr.mxu0 0.0
    %5601 = vmatpush1.msra.mxu0 %v5535
    %5602 = vmatprep.subr.mxu0 0.0
    %5603 = vmatpush1.msra.mxu0 %v5536
    %5604 = vmatprep.subr.mxu0 0.0
    %5605 = vmatpush1.msra.mxu0 %v5537
    %5606 = vmatprep.subr.mxu0 0.0
    %5607 = vmatpush1.msra.mxu0 %v5538
    %5608 = vmatprep.subr.mxu0 0.0
    %5609 = vmatpush1.msra.mxu0 %v5539
    %5610 = vmatprep.subr.mxu0 0.0
    %5611 = vmatpush1.msra.mxu0 %v5540
    %5612 = vmatprep.mubr.f32.mxu0 %v5494
    %5613 = vmatmul.mubr.f32.gmra.mrb[0].mxu0 %v5493
    %v5614 = vpop.f32.mrb[0].mxu0
    %v5615 = vadd.f32 %v5546, %v5614
    %v5616 = vpop.f32.mrb[0].mxu0
    %5617 = vmatprep.mubr.f32.mxu0 %v5496
    %5618 = vmatmul.mubr.f32.gmra.mrb[0].mxu0 %v5495
    %v5619 = vpop.f32.mrb[0].mxu0
    %v5620 = vadd.f32 %v5546, %v5619
    %v5621 = vpop.f32.mrb[0].mxu0
    %5622 = vmatprep.mubr.f32.mxu0 %v5498
    %5623 = vmatmul.mubr.f32.gmra.mrb[0].mxu0 %v5497
    %v5624 = vpop.f32.mrb[0].mxu0
    %v5625 = vadd.f32 %v5546, %v5624
    %v5626 = vpop.f32.mrb[0].mxu0
    %5627 = vmatprep.mubr.f32.mxu0 %v5500
    %5628 = vmatmul.mubr.f32.gmra.mrb[0].mxu0 %v5499
    %v5629 = vpop.f32.mrb[0].mxu0
    %v5630 = vadd.f32 %v5546, %v5629
    %v5631 = vpop.f32.mrb[0].mxu0
    %5632 = vmatprep.mubr.f32.mxu0 %v5502
    %5633 = vmatmul.mubr.f32.gmra.mrb[0].mxu0 %v5501
    %v5634 = vpop.f32.mrb[0].mxu0
    %v5635 = vadd.f32 %v5546, %v5634
    %v5636 = vpop.f32.mrb[0].mxu0
    %5637 = vmatprep.mubr.f32.mxu0 %v5504
    %5638 = vmatmul.mubr.f32.gmra.mrb[0].mxu0 %v5503
    %v5639 = vpop.f32.mrb[0].mxu0
    %v5640 = vadd.f32 %v5546, %v5639
    %v5641 = vpop.f32.mrb[0].mxu0
    %5642 = vmatprep.mubr.f32.mxu0 %v5506
    %5643 = vmatmul.mubr.f32.gmra.mrb[0].mxu0 %v5505
    %v5644 = vpop.f32.mrb[0].mxu0
    %v5645 = vadd.f32 %v5546, %v5644
    %v5646 = vpop.f32.mrb[0].mxu0
    %5647 = vmatprep.mubr.f32.mxu0 %v5508
    %5648 = vmatmul.mubr.f32.gmra.mrb[0].mxu0 %v5507
    %v5649 = vpop.f32.mrb[0].mxu0
    %v5650 = vadd.f32 %v5546, %v5649
    %v5651 = vpop.f32.mrb[0].mxu0
    %5652 = vdwg.mxu0
    %5653 = vst [vmem:[%s10] sm:$0xff] %v5615
    %5654 = vst [vmem:[%s10 + $0x8] sm:$0xff] %v5620
    %5655 = vst [vmem:[%s10 + $0x10] sm:$0xff] %v5625
    %5656 = vst [vmem:[%s10 + $0x18] sm:$0xff] %v5630
    %5657 = vst [vmem:[%s10 + $0x20] sm:$0xff] %v5635
    %5658 = vst [vmem:[%s10 + $0x28] sm:$0xff] %v5640
    %5659 = vst [vmem:[%s10 + $0x30] sm:$0xff] %v5645
    %5660 = vst [vmem:[%s10 + $0x38] sm:$0xff] %v5650
    // Predicated region
    $region58: #{_fused_forward.1} parent=1 // pred_check
      _
    $region59: #{_fused_forward.1} parent=1 // pred_check_branch
      %5662 = sbr.rel (0) target = $region61
    $region60: #{_fused_forward.1} parent=1 // pred_region
      _
    $region61: #{_fused_forward.1} parent=1 // pred_fallthru
      _
    // Predicated region
    $region62: #{_fused_forward.1} parent=1 // pred_check
      _
    $region63: #{_fused_forward.1} parent=1 // pred_check_branch
      %5664 = sbr.rel (0) target = $region65
    $region64: #{_fused_forward.1} parent=1 // pred_region
      _
    $region65: #{_fused_forward.1} parent=1 // pred_fallthru
      _
    %5665 = vsyncpa [#allocation5], 1
    %5666 = vsyncpa [#allocation7], 1
    %5667 = vsyncpa [#allocation10], 1

</llo_original>
